<compile_context>
chip_gen: v7x
topology: tpu7x:2x2x1
jax: 0.10.0
libtpu: 0.0.40
codegen_flags: <defaults>
</compile_context>

<pallas_src>
import functools
import numpy as np
import jax
import jax.numpy as jnp
from jax.experimental import pallas as pl
from jax.experimental.pallas import tpu as pltpu

H = 100            # true GRU hidden size
HP = 128           # lane-padded GRU hidden size
G = 3 * HP         # concatenated gate width per direction: [r | z | n], 128-aligned

# row offsets inside the (800, 128) weight slab
_LW1, _LW2, _VA, _VB, _VSW, _F2W = 0, 32, 160, 288, 416, 544
# row indices inside the (8, 128) bias slab
_B_FB2, _B_LB1, _B_LB2, _B_VBIAS, _B_VSB, _B_F2B = 0, 3, 4, 5, 6, 7
# row offsets inside the (896, 768) late-use GRU slab
_G0WIM, _G0WH, _G1WI, _G1WH = 0, 128, 384, 640


# ---------------------------------------------------------------------------
# Fused forward kernel
# ---------------------------------------------------------------------------
def _union_kernel(loc_in, sub_fc7, obj_fc7, uni_fc7, x02, cats,
                  fw1, fb1, fw2, w128, b128, g0_wi, gbias, f1w, f1b, g768_hbm,
                  pv_o, enc_o,
                  g768, dma_sem):
    f32 = jnp.float32
    B = sub_fc7.shape[0]

    # Prefetch the late-use GRU slab [g0_wim | g0_wh | g1_wi | g1_wh] into VMEM
    # scratch; it overlaps with the fc7/loc/vis compute below, which only touches
    # weights that are already resident.
    cp = pltpu.make_async_copy(g768_hbm, g768, dma_sem.at[0])
    cp.start()

    def dot(a, w):
        # bf16 x bf16 MXU matmul with f32 accumulation (weights stored in bf16)
        return jnp.dot(a.astype(w.dtype), w, preferred_element_type=f32)

    bias = b128[...]            # (8, 128)  f32
    gb = gbias[...]             # (4, 768)  f32

    # ---- three fc7 branch MLPs (weights stacked along a leading branch axis) ----
    encs = []
    for i, x in enumerate((sub_fc7, obj_fc7, uni_fc7)):
        h = jnp.maximum(dot(x[...], fw1[i]) + fb1[i], 0.0)                    # (B, 512)
        e = dot(h, fw2[i]) + bias[_B_FB2 + i:_B_FB2 + i + 1]                  # (B, 128)
        enc_o[i, :, :] = e
        encs.append(e)
    sub_enc, obj_enc, uni_enc = encs

    # ---- loc MLP, 128-lane padded end to end (padded lanes stay exactly 0) ----
    lh = jnp.maximum(dot(loc_in[...], w128[_LW1:_LW1 + 32])
                     + bias[_B_LB1:_B_LB1 + 1], 0.0)                          # (B, 128)
    loc_res = dot(lh, w128[_LW2:_LW2 + 128]) + bias[_B_LB2:_B_LB2 + 1]        # (B, 128)

    # ---- combine + vis_extract + vis_fc (vis_extract weight pre-split 128/16) ----
    cf = cats[0]
    cl = cats[1]
    left = jnp.maximum(cf * (uni_enc - sub_enc - obj_enc), 0.0)               # (B, 128)
    right = jnp.maximum(cl * loc_res, 0.0)                                    # (B, 128)
    vis_feat = jnp.maximum(dot(left, w128[_VA:_VA + 128])
                           + dot(right, w128[_VB:_VB + 128])
                           + bias[_B_VBIAS:_B_VBIAS + 1], 0.0)                # (B, 128)
    vis_score = dot(vis_feat, w128[_VSW:_VSW + 128]) + bias[_B_VSB:_B_VSB + 1]
    pv_o[1, :, :] = vis_score                                                 # (B, 128), lanes 70+ zero

    # ---- layer-0 GRU input projections, direction-fused [fwd | bwd] along N ----
    # t=0 (sub_we) and t=2 (obj_we) share one matmul; the t=1 input is
    # pad(vis_feat, 86, 86), zero outside columns 86:214, so only those 128 weight
    # rows (pre-sliced on the host into the late slab) are used.
    p02 = dot(x02[...], g0_wi[...]) + gb[0:1]                                 # (2B, 768)

    cp.wait()     # the late slab is needed from here on

    p1 = dot(vis_feat, g768[_G0WIM:_G0WIM + 128]) + gb[0:1]                   # (B, 768)
    proj0_f = (p02[0:B, 0:G], p1[:, 0:G], p02[B:2 * B, 0:G])
    proj0_b = (p02[0:B, G:2 * G], p1[:, G:2 * G], p02[B:2 * B, G:2 * G])

    def bigru(proj_f, proj_b, wh_bd, bh_cat):
        # fwd and bwd directions run in lockstep; one block-diagonal (256,768)
        # hidden matmul per step covers both.  Gate math stays in f32.
        hcat = jnp.zeros((B, 2 * HP), f32)           # [h_fwd | h_bwd], 128-padded each
        hf = [None] * 3
        hb = [None] * 3
        for s in range(3):
            gi_f = proj_f[s]
            gi_b = proj_b[2 - s]
            gh = dot(hcat, wh_bd) + bh_cat                                    # (B, 768)

            def gates(gi, gh_d, h):
                r = jax.nn.sigmoid(gi[:, 0:HP] + gh_d[:, 0:HP])
                z = jax.nn.sigmoid(gi[:, HP:2 * HP] + gh_d[:, HP:2 * HP])
                n = jnp.tanh(gi[:, 2 * HP:G] + r * gh_d[:, 2 * HP:G])
                return (1.0 - z) * n + z * h

            h_f = gates(gi_f, gh[:, 0:G], hcat[:, 0:HP])
            h_b = gates(gi_b, gh[:, G:2 * G], hcat[:, HP:2 * HP])
            hcat = jnp.concatenate([h_f, h_b], axis=-1)
            hf[s] = h_f
            hb[2 - s] = h_b
        return hf, hb

    hf0, hb0 = bigru(proj0_f, proj0_b, g768[_G0WH:_G0WH + 256], gb[1:2])

    # ---- layer-1 GRU: inputs are [hf0 | hb0] per timestep (each 128-padded) ----
    x1 = jnp.concatenate(
        [jnp.concatenate([hf0[t], hb0[t]], axis=-1) for t in range(3)], axis=0)   # (3B, 256)
    p_l1 = dot(x1, g768[_G1WI:_G1WI + 256]) + gb[2:3]                             # (3B, 768)
    proj1_f = tuple(p_l1[t * B:(t + 1) * B, 0:G] for t in range(3))
    proj1_b = tuple(p_l1[t * B:(t + 1) * B, G:2 * G] for t in range(3))
    hf1, hb1 = bigru(proj1_f, proj1_b, g768[_G1WH:_G1WH + 256], gb[3:4])

    # ---- final_fc on the 128-padded gru_out_concat layout ----
    gcat = jnp.concatenate([hf1[0], hf1[1], hf1[2], hb1[2], hb1[1], hb1[0]], axis=-1)  # (B, 768)
    fh = jnp.maximum(dot(gcat, f1w[...]) + f1b[...], 0.0)                              # (B, 256)
    pred = dot(fh, w128[_F2W:_F2W + 256]) + bias[_B_F2B:_B_F2B + 1]                    # (B, 128)
    pv_o[0, :, :] = pred


# ---------------------------------------------------------------------------
# Wrapper: one fused pallas_call
# ---------------------------------------------------------------------------
@jax.jit
def union_model_forward(kparams, sub_loc, sub_fc7, obj_loc, obj_fc7, union_loc,
                        union_fc7, sub_wordemb, obj_wordemb):
    B = sub_fc7.shape[0]
    FC7 = sub_fc7.shape[1]

    # small wrapper-side packing (keeps in-kernel concats off the XLU / DMA path)
    loc_in = jnp.concatenate([sub_loc, obj_loc, union_loc], axis=-1)       # (B, 19)
    loc_in = jnp.pad(loc_in, ((0, 0), (0, 32 - loc_in.shape[1])))          # (B, 32)
    x02 = jnp.concatenate([sub_wordemb, obj_wordemb], axis=0)              # (2B, 300)

    args = (loc_in, sub_fc7, obj_fc7, union_fc7, x02, kparams['cats'],
            kparams['fw1'], kparams['fb1'], kparams['fw2'], kparams['w128'],
            kparams['b128'], kparams['g0_wi'], kparams['gbias'],
            kparams['f1w'], kparams['f1b'], kparams['g768'])

    vmem = pl.BlockSpec(memory_space=pltpu.MemorySpace.VMEM)
    smem = pl.BlockSpec(memory_space=pltpu.MemorySpace.SMEM)
    in_specs = [vmem] * 5 + [smem] + [vmem] * 9 + [pl.BlockSpec(memory_space=pl.ANY)]

    out_shape = (jax.ShapeDtypeStruct((2, B, 128), jnp.float32),   # [pred | vis_score], lane-padded
                 jax.ShapeDtypeStruct((3, B, 128), jnp.float32))   # [sub | obj | union] fc7 encodings
    out_specs = (vmem, vmem)

    g768_bytes = int(kparams['g768'].size) * kparams['g768'].dtype.itemsize
    scratch_shapes = [pltpu.VMEM(kparams['g768'].shape, kparams['g768'].dtype),
                      pltpu.SemaphoreType.DMA((1,))]

    in_bytes = sum(int(a.size) * a.dtype.itemsize for a in args)
    out_bytes = sum(int(np.prod(s.shape)) * 4 for s in out_shape)
    vmem_limit = min(2 * (in_bytes + out_bytes + g768_bytes) + (16 << 20), 64 << 20)

    flops = 2 * B * (3 * (FC7 * 512 + 512 * 128)        # fc7 branch MLPs
                     + 32 * 128 + 128 * 128             # loc MLP
                     + 3 * 128 * 128                    # vis_extract (2 dots) + vis_fc
                     + 2 * 300 * 768 + 128 * 768        # layer-0 input projections
                     + 3 * 256 * 768                    # layer-1 input projections
                     + 6 * 256 * 768                    # 2 layers x 3 steps recurrence
                     + 768 * 256 + 256 * 128)           # final_fc
    cost = pl.CostEstimate(flops=int(flops),
                           transcendentals=int(36 * 128 * B),
                           bytes_accessed=int(in_bytes + out_bytes))

    pv, enc = pl.pallas_call(
        _union_kernel,
        out_shape=out_shape,
        in_specs=in_specs,
        out_specs=out_specs,
        scratch_shapes=scratch_shapes,
        compiler_params=pltpu.CompilerParams(vmem_limit_bytes=int(vmem_limit)),
        cost_estimate=cost,
    )(*args)

    pred = pv[0, :, :70]
    vis_score = pv[1, :, :70]
    return pred, vis_score, enc[0], enc[1], enc[2]


# ---------------------------------------------------------------------------
# Deterministic "PyTorch-shaped" parameters (synthetic; mirrors __init__ shapes)
# ---------------------------------------------------------------------------
def init_params(key, fc7_dim):
    state = {'key': key}

    def nxt():
        state['key'], sub = jax.random.split(state['key'])
        return sub

    def dense(in_d, out_d):
        bound = 1.0 / np.sqrt(in_d)
        w = jax.random.uniform(nxt(), (in_d, out_d), jnp.float32, -bound, bound)
        b = jax.random.uniform(nxt(), (1, out_d), jnp.float32, -bound, bound)
        return w, b

    params = {}
    params['sub_fc7_w'] = (dense(fc7_dim, 512), dense(512, 128))
    params['obj_fc7_w'] = (dense(fc7_dim, 512), dense(512, 128))
    params['union_fc7_w'] = (dense(fc7_dim, 512), dense(512, 128))
    params['loc_w'] = (dense(2 * 5 + 9, 32), dense(32, 16))
    params['cat_unionf'] = jnp.full((1, 1), 0.5, jnp.float32)
    params['cat_unionl'] = jnp.full((1, 1), 0.5, jnp.float32)
    # cat_subf / cat_subl / cat_objf / cat_objl exist in the module but are unused in forward.
    params['vis_extract'] = dense(128 + 16, 128)
    params['vis_fc'] = dense(128, 70)
    params['final_fc'] = (dense(600, 256), dense(256, 70))

    gru = {}
    for layer in range(2):
        in_d = 300 if layer == 0 else 2 * H
        for direction in range(2):
            bound = 1.0 / np.sqrt(H)
            cell = {}
            for name, shape in [('wir', (in_d, H)), ('wiz', (in_d, H)), ('win', (in_d, H)),
                                ('whr', (H, H)), ('whz', (H, H)), ('whn', (H, H)),
                                ('bir', (1, H)), ('biz', (1, H)), ('bin', (1, H)),
                                ('bhr', (1, H)), ('bhz', (1, H)), ('bhn', (1, H))]:
                cell[name] = jax.random.uniform(nxt(), shape, jnp.float32, -bound, bound)
            gru[(layer, direction)] = cell
    params['gru'] = gru
    return params


# ---------------------------------------------------------------------------
# Repack logical params into lane-dense, kernel-ready slabs (done once at init)
# ---------------------------------------------------------------------------
def pack_params(params, weight_dtype=jnp.bfloat16):
    f32 = jnp.float32
    k = {}

    # --- fc7 branch MLPs: stack along a leading branch axis [sub, obj, union] ---
    branches = [params['sub_fc7_w'], params['obj_fc7_w'], params['union_fc7_w']]
    k['fw1'] = jnp.stack([br[0][0] for br in branches], 0).astype(weight_dtype)   # (3, fc7, 512)
    k['fb1'] = jnp.stack([br[0][1] for br in branches], 0).astype(f32)            # (3, 1, 512)
    k['fw2'] = jnp.stack([br[1][0] for br in branches], 0).astype(weight_dtype)   # (3, 512, 128)
    fb2 = jnp.stack([br[1][1][0] for br in branches], 0)                          # (3, 128)

    # --- loc MLP, lane-padded to 128 everywhere (padded rows/cols are zero) ---
    (lw1, lb1), (lw2, lb2) = params['loc_w']
    lw1p = jnp.zeros((32, 128), f32).at[:19, :32].set(lw1)
    lb1p = jnp.zeros((128,), f32).at[:32].set(lb1[0])
    lw2p = jnp.zeros((128, 128), f32).at[:32, :16].set(lw2)
    lb2p = jnp.zeros((128,), f32).at[:16].set(lb2[0])

    # --- vis_extract split into the fc7 block (128 rows) and loc block (16 rows, padded) ---
    wv, bv = params['vis_extract']
    va = wv[:128]
    vbp = jnp.zeros((128, 128), f32).at[:16].set(wv[128:])
    vbias = bv[0]

    # --- vis_fc padded 70 -> 128 output lanes ---
    wvs, bvs = params['vis_fc']
    vswp = jnp.zeros((128, 128), f32).at[:, :70].set(wvs)
    vsbp = jnp.zeros((128,), f32).at[:70].set(bvs[0])

    # --- final_fc: row-remapped first layer onto the 6 x 128-padded layout; padded second ---
    (wf1, bf1), (wf2, bf2) = params['final_fc']
    f1w = jnp.zeros((6 * HP, 256), f32)
    for j in range(6):
        f1w = f1w.at[j * HP:j * HP + H].set(wf1[j * H:(j + 1) * H])
    k['f1w'] = f1w.astype(weight_dtype)
    k['f1b'] = bf1.astype(f32)                                                    # (1, 256)
    f2wp = jnp.zeros((256, 128), f32).at[:, :70].set(wf2)
    f2bp = jnp.zeros((128,), f32).at[:70].set(bf2[0])

    # --- one slab for all 128-lane-wide weights (row offsets are module constants) ---
    k['w128'] = jnp.concatenate([lw1p, lw2p, va, vbp, vswp, f2wp], 0).astype(weight_dtype)  # (800,128)
    # --- one slab for all 128-wide biases ---
    k['b128'] = jnp.stack([fb2[0], fb2[1], fb2[2], lb1p, lb2p, vbias, vsbp, f2bp], 0)       # (8,128) f32

    # --- scalar mixing gates -> SMEM ---
    k['cats'] = jnp.concatenate([params['cat_unionf'].reshape(-1),
                                 params['cat_unionl'].reshape(-1)]).astype(f32)

    # --- GRU: gate-concatenated (r|z|n) weights, each gate padded 100 -> 128 lanes ---
    def gate_cols(wr, wz, wn):
        rows = wr.shape[0]
        w = jnp.zeros((rows, G), f32)
        return w.at[:, :H].set(wr).at[:, HP:HP + H].set(wz).at[:, 2 * HP:2 * HP + H].set(wn)

    def cell_pack(c):
        wi = gate_cols(c['wir'], c['wiz'], c['win'])                              # (in, G)
        wh = jnp.zeros((HP, G), f32).at[:H].set(gate_cols(c['whr'], c['whz'], c['whn']))
        bi = gate_cols(c['bir'], c['biz'], c['bin'])                              # (1, G)
        bh = gate_cols(c['bhr'], c['bhz'], c['bhn'])                              # (1, G)
        return wi, wh, bi, bh

    gru = params['gru']
    wi0f, wh0f, bi0f, bh0f = cell_pack(gru[(0, 0)])
    wi0b, wh0b, bi0b, bh0b = cell_pack(gru[(0, 1)])
    wi1f, wh1f, bi1f, bh1f = cell_pack(gru[(1, 0)])
    wi1b, wh1b, bi1b, bh1b = cell_pack(gru[(1, 1)])

    # direction-fused input weights: [fwd | bwd] along N
    g0_wi = jnp.concatenate([wi0f, wi0b], 1)                                      # (300, 768)
    k['g0_wi'] = g0_wi.astype(weight_dtype)
    g0_wim = g0_wi[86:214]                                 # rows acting on vis_feat (t=1 input)

    def pad_l1(wi):                                        # (200, G) -> (256, G), 128-padded halves
        return jnp.zeros((2 * HP, G), f32).at[:H].set(wi[:H]).at[HP:HP + H].set(wi[H:2 * H])

    g1_wi = jnp.concatenate([pad_l1(wi1f), pad_l1(wi1b)], 1)                      # (256, 768)

    def blockdiag(wf, wb):                                 # -> (256, 768)
        return jnp.zeros((2 * HP, 2 * G), f32).at[:HP, :G].set(wf).at[HP:, G:].set(wb)

    g0_wh = blockdiag(wh0f, wh0b)
    g1_wh = blockdiag(wh1f, wh1b)

    # late-use GRU slab, manually prefetched inside the kernel
    k['g768'] = jnp.concatenate([g0_wim, g0_wh, g1_wi, g1_wh], 0).astype(weight_dtype)   # (896, 768)

    # GRU biases, direction-fused
    k['gbias'] = jnp.concatenate([
        jnp.concatenate([bi0f, bi0b], 1),
        jnp.concatenate([bh0f, bh0b], 1),
        jnp.concatenate([bi1f, bi1b], 1),
        jnp.concatenate([bh1f, bh1b], 1)], 0)                                     # (4, 768) f32
    return k


# ---------------------------------------------------------------------------
# Pure-JAX reference of the PyTorch forward (eval mode) for correctness checking
# ---------------------------------------------------------------------------
def union_model_ref(p, sub_loc, sub_fc7, obj_loc, obj_fc7, union_loc, union_fc7,
                    sub_wordemb, obj_wordemb):
    mm = functools.partial(jnp.dot, precision=jax.lax.Precision.HIGHEST)

    def mlp2(pp, x):
        (w1, b1), (w2, b2) = pp
        return mm(jnp.maximum(mm(x, w1) + b1, 0.0), w2) + b2

    sub_enc = mlp2(p['sub_fc7_w'], sub_fc7)
    obj_enc = mlp2(p['obj_fc7_w'], obj_fc7)
    uni_enc = mlp2(p['union_fc7_w'], union_fc7)
    loc_res = mlp2(p['loc_w'], jnp.concatenate([sub_loc, obj_loc, union_loc], -1))
    fc7_res = uni_enc - sub_enc - obj_enc
    pred_vec = jnp.maximum(
        jnp.concatenate([p['cat_unionf'] * fc7_res, p['cat_unionl'] * loc_res], -1), 0.0)
    wv, bv = p['vis_extract']
    vis_feat = jnp.maximum(mm(pred_vec, wv) + bv, 0.0)
    wvs, bvs = p['vis_fc']
    vis_score = mm(vis_feat, wvs) + bvs
    vis_pred = jnp.pad(vis_feat, ((0, 0), (86, 86)))

    def cell(x, h, c):
        r = jax.nn.sigmoid(mm(x, c['wir']) + c['bir'] + mm(h, c['whr']) + c['bhr'])
        z = jax.nn.sigmoid(mm(x, c['wiz']) + c['biz'] + mm(h, c['whz']) + c['bhz'])
        n = jnp.tanh(mm(x, c['win']) + c['bin'] + r * (mm(h, c['whn']) + c['bhn']))
        return (1.0 - z) * n + z * h

    B = sub_fc7.shape[0]
    xseq = [sub_wordemb, vis_pred, obj_wordemb]
    for layer in range(2):
        cfp, cbp = p['gru'][(layer, 0)], p['gru'][(layer, 1)]
        h = jnp.zeros((B, H), jnp.float32)
        fwd = []
        for t in range(3):
            h = cell(xseq[t], h, cfp)
            fwd.append(h)
        h = jnp.zeros((B, H), jnp.float32)
        bwd = [None] * 3
        for t in (2, 1, 0):
            h = cell(xseq[t], h, cbp)
            bwd[t] = h
        xseq = [jnp.concatenate([fwd[t], bwd[t]], -1) for t in range(3)]
    out = xseq
    gcat = jnp.concatenate([out[0][:, :H], out[1][:, :H], out[2][:, :H],
                            out[2][:, H:], out[1][:, H:], out[0][:, H:]], -1)
    (wf1, bf1), (wf2, bf2) = p['final_fc']
    pred = mm(jnp.maximum(mm(gcat, wf1) + bf1, 0.0), wf2) + bf2
    return pred, vis_score, sub_enc, obj_enc, uni_enc


# ---------------------------------------------------------------------------
if __name__ == "__main__":
    B = 8          # batch
    FC7 = 64       # opt.fc7_dim (small synthetic setting)

    key = jax.random.PRNGKey(0)
    keys = jax.random.split(key, 9)
    params = init_params(keys[0], FC7)
    kparams = pack_params(params)          # bf16 weight slabs, f32 biases

    sub_loc = jax.random.normal(keys[1], (B, 5), jnp.float32)
    obj_loc = jax.random.normal(keys[2], (B, 5), jnp.float32)
    union_loc = jax.random.normal(keys[3], (B, 9), jnp.float32)
    sub_fc7 = jax.random.normal(keys[4], (B, FC7), jnp.float32)
    obj_fc7 = jax.random.normal(keys[5], (B, FC7), jnp.float32)
    union_fc7 = jax.random.normal(keys[6], (B, FC7), jnp.float32)
    sub_wordemb = jax.random.normal(keys[7], (B, 300), jnp.float32)
    obj_wordemb = jax.random.normal(keys[8], (B, 300), jnp.float32)

    outs = union_model_forward(kparams, sub_loc, sub_fc7, obj_loc, obj_fc7,
                               union_loc, union_fc7, sub_wordemb, obj_wordemb)
    outs = jax.block_until_ready(outs)
    pred, vis_score, sub_enc, obj_enc, union_enc = outs

    assert pred.shape == (B, 70) and vis_score.shape == (B, 70)
    assert sub_enc.shape == (B, 128) and obj_enc.shape == (B, 128) and union_enc.shape == (B, 128)

    # correctness vs f32 pure-JAX reference of the PyTorch forward
    # (tolerance accounts for bf16 weight/operand rounding in the kernel)
    refs = union_model_ref(params, sub_loc, sub_fc7, obj_loc, obj_fc7,
                           union_loc, union_fc7, sub_wordemb, obj_wordemb)
    for got, want in zip(outs, refs):
        np.testing.assert_allclose(np.asarray(got), np.asarray(want), rtol=5e-2, atol=5e-2)

    print("KERNEL_OK")
</pallas_src>

<mosaic_0001>
module attributes {stable_mosaic.version = 11 : i64} {
  func.func @_union_kernel(%arg0: memref<8x32xf32, #tpu.memory_space<vmem>>, %arg1: memref<8x64xf32, #tpu.memory_space<vmem>>, %arg2: memref<8x64xf32, #tpu.memory_space<vmem>>, %arg3: memref<8x64xf32, #tpu.memory_space<vmem>>, %arg4: memref<16x300xf32, #tpu.memory_space<vmem>>, %arg5: memref<2xf32, #tpu.memory_space<smem>>, %arg6: memref<3x64x512xbf16, #tpu.memory_space<vmem>>, %arg7: memref<3x1x512xf32, #tpu.memory_space<vmem>>, %arg8: memref<3x512x128xbf16, #tpu.memory_space<vmem>>, %arg9: memref<800x128xbf16, #tpu.memory_space<vmem>>, %arg10: memref<8x128xf32, #tpu.memory_space<vmem>>, %arg11: memref<300x768xbf16, #tpu.memory_space<vmem>>, %arg12: memref<4x768xf32, #tpu.memory_space<vmem>>, %arg13: memref<768x256xbf16, #tpu.memory_space<vmem>>, %arg14: memref<1x256xf32, #tpu.memory_space<vmem>>, %arg15: memref<896x768xbf16, #tpu.memory_space<any>>, %arg16: memref<2x8x128xf32, #tpu.memory_space<vmem>>, %arg17: memref<3x8x128xf32, #tpu.memory_space<vmem>>, %arg18: memref<896x768xbf16, #tpu.memory_space<vmem>>, %arg19: memref<1x!tpu.dma_semaphore, #tpu.memory_space<semaphore_mem>>) attributes {dimension_semantics = [], scalar_prefetch = 0 : i64, scratch_operands = 2 : i64, tpu.core_type = #tpu.core_type<tc>} {
    %c0_i32 = arith.constant 0 : i32
    %0 = tpu.memref_slice %arg19[%c0_i32] : memref<1x!tpu.dma_semaphore, #tpu.memory_space<semaphore_mem>> -> memref<1x!tpu.dma_semaphore, #tpu.memory_space<semaphore_mem>>
    %1 = tpu.memref_squeeze %0 : memref<1x!tpu.dma_semaphore, #tpu.memory_space<semaphore_mem>> -> memref<!tpu.dma_semaphore, #tpu.memory_space<semaphore_mem>>
    tpu.enqueue_dma source(%arg15 : memref<896x768xbf16, #tpu.memory_space<any>>) target(%arg18 : memref<896x768xbf16, #tpu.memory_space<vmem>>) target_semaphore(%1 : memref<!tpu.dma_semaphore, #tpu.memory_space<semaphore_mem>>)
    %c0 = arith.constant 0 : index
    %c0_0 = arith.constant 0 : index
    %2 = vector.load %arg10[%c0, %c0_0] : memref<8x128xf32, #tpu.memory_space<vmem>>, vector<8x128xf32>
    %c0_1 = arith.constant 0 : index
    %c0_2 = arith.constant 0 : index
    %3 = vector.load %arg12[%c0_1, %c0_2] : memref<4x768xf32, #tpu.memory_space<vmem>>, vector<4x768xf32>
    %c0_3 = arith.constant 0 : index
    %c0_4 = arith.constant 0 : index
    %4 = vector.load %arg1[%c0_3, %c0_4] : memref<8x64xf32, #tpu.memory_space<vmem>>, vector<8x64xf32>
    %c0_5 = arith.constant 0 : index
    %c0_6 = arith.constant 0 : index
    %c0_7 = arith.constant 0 : index
    %5 = vector.load %arg6[%c0_5, %c0_6, %c0_7] : memref<3x64x512xbf16, #tpu.memory_space<vmem>>, vector<1x64x512xbf16>
    %6 = vector.shape_cast %5 : vector<1x64x512xbf16> to vector<64x512xbf16>
    %7 = arith.truncf %4 : vector<8x64xf32> to vector<8x64xbf16>
    %cst = arith.constant dense<0.000000e+00> : vector<8x512xf32>
    %8 = tpu.matmul %7, %6, %cst {dimension_numbers = #tpu.dot_dimension_numbers<[1], [0], [0], [1], [0, 0, 1, 1], [], []>} : vector<8x64xbf16>, vector<64x512xbf16>, vector<8x512xf32> -> vector<8x512xf32>
    %c0_8 = arith.constant 0 : index
    %c0_9 = arith.constant 0 : index
    %c0_10 = arith.constant 0 : index
    %9 = vector.load %arg7[%c0_8, %c0_9, %c0_10] : memref<3x1x512xf32, #tpu.memory_space<vmem>>, vector<1x1x512xf32>
    %10 = vector.shape_cast %9 : vector<1x1x512xf32> to vector<1x512xf32>
    %11 = vector.broadcast %10 : vector<1x512xf32> to vector<8x512xf32>
    %12 = arith.addf %8, %11 : vector<8x512xf32>
    %cst_11 = arith.constant 0.000000e+00 : f32
    %13 = vector.broadcast %cst_11 : f32 to vector<8x512xf32>
    %14 = arith.maximumf %12, %13 : vector<8x512xf32>
    %c0_12 = arith.constant 0 : index
    %c0_13 = arith.constant 0 : index
    %c0_14 = arith.constant 0 : index
    %15 = vector.load %arg8[%c0_12, %c0_13, %c0_14] : memref<3x512x128xbf16, #tpu.memory_space<vmem>>, vector<1x512x128xbf16>
    %16 = vector.shape_cast %15 : vector<1x512x128xbf16> to vector<512x128xbf16>
    %17 = arith.truncf %14 : vector<8x512xf32> to vector<8x512xbf16>
    %cst_15 = arith.constant dense<0.000000e+00> : vector<8x128xf32>
    %18 = tpu.matmul %17, %16, %cst_15 {dimension_numbers = #tpu.dot_dimension_numbers<[1], [0], [0], [1], [0, 0, 1, 1], [], []>} : vector<8x512xbf16>, vector<512x128xbf16>, vector<8x128xf32> -> vector<8x128xf32>
    %19 = vector.extract_strided_slice %2 {offsets = [0, 0], sizes = [1, 128], strides = [1, 1]} : vector<8x128xf32> to vector<1x128xf32>
    %20 = vector.broadcast %19 : vector<1x128xf32> to vector<8x128xf32>
    %21 = arith.addf %18, %20 : vector<8x128xf32>
    %c0_16 = arith.constant 0 : index
    %c0_17 = arith.constant 0 : index
    %c0_18 = arith.constant 0 : index
    %22 = vector.load %arg17[%c0_16, %c0_17, %c0_18] : memref<3x8x128xf32, #tpu.memory_space<vmem>>, vector<1x8x128xf32>
    %23 = vector.shape_cast %22 : vector<1x8x128xf32> to vector<8x128xf32>
    %24 = vector.shape_cast %21 : vector<8x128xf32> to vector<1x8x128xf32>
    tpu.vector_store %arg17[%c0_16, %c0_17, %c0_18], %24 {strides = array<i32>} : memref<3x8x128xf32, #tpu.memory_space<vmem>>, vector<1x8x128xf32>,
    %c0_19 = arith.constant 0 : index
    %c0_20 = arith.constant 0 : index
    %25 = vector.load %arg2[%c0_19, %c0_20] : memref<8x64xf32, #tpu.memory_space<vmem>>, vector<8x64xf32>
    %c1 = arith.constant 1 : index
    %c0_21 = arith.constant 0 : index
    %c0_22 = arith.constant 0 : index
    %26 = vector.load %arg6[%c1, %c0_21, %c0_22] : memref<3x64x512xbf16, #tpu.memory_space<vmem>>, vector<1x64x512xbf16>
    %27 = vector.shape_cast %26 : vector<1x64x512xbf16> to vector<64x512xbf16>
    %28 = arith.truncf %25 : vector<8x64xf32> to vector<8x64xbf16>
    %cst_23 = arith.constant dense<0.000000e+00> : vector<8x512xf32>
    %29 = tpu.matmul %28, %27, %cst_23 {dimension_numbers = #tpu.dot_dimension_numbers<[1], [0], [0], [1], [0, 0, 1, 1], [], []>} : vector<8x64xbf16>, vector<64x512xbf16>, vector<8x512xf32> -> vector<8x512xf32>
    %c1_24 = arith.constant 1 : index
    %c0_25 = arith.constant 0 : index
    %c0_26 = arith.constant 0 : index
    %30 = vector.load %arg7[%c1_24, %c0_25, %c0_26] : memref<3x1x512xf32, #tpu.memory_space<vmem>>, vector<1x1x512xf32>
    %31 = vector.shape_cast %30 : vector<1x1x512xf32> to vector<1x512xf32>
    %32 = vector.broadcast %31 : vector<1x512xf32> to vector<8x512xf32>
    %33 = arith.addf %29, %32 : vector<8x512xf32>
    %cst_27 = arith.constant 0.000000e+00 : f32
    %34 = vector.broadcast %cst_27 : f32 to vector<8x512xf32>
    %35 = arith.maximumf %33, %34 : vector<8x512xf32>
    %c1_28 = arith.constant 1 : index
    %c0_29 = arith.constant 0 : index
    %c0_30 = arith.constant 0 : index
    %36 = vector.load %arg8[%c1_28, %c0_29, %c0_30] : memref<3x512x128xbf16, #tpu.memory_space<vmem>>, vector<1x512x128xbf16>
    %37 = vector.shape_cast %36 : vector<1x512x128xbf16> to vector<512x128xbf16>
    %38 = arith.truncf %35 : vector<8x512xf32> to vector<8x512xbf16>
    %cst_31 = arith.constant dense<0.000000e+00> : vector<8x128xf32>
    %39 = tpu.matmul %38, %37, %cst_31 {dimension_numbers = #tpu.dot_dimension_numbers<[1], [0], [0], [1], [0, 0, 1, 1], [], []>} : vector<8x512xbf16>, vector<512x128xbf16>, vector<8x128xf32> -> vector<8x128xf32>
    %40 = vector.extract_strided_slice %2 {offsets = [1, 0], sizes = [1, 128], strides = [1, 1]} : vector<8x128xf32> to vector<1x128xf32>
    %41 = vector.broadcast %40 : vector<1x128xf32> to vector<8x128xf32>
    %42 = arith.addf %39, %41 : vector<8x128xf32>
    %c1_32 = arith.constant 1 : index
    %c0_33 = arith.constant 0 : index
    %c0_34 = arith.constant 0 : index
    %43 = vector.load %arg17[%c1_32, %c0_33, %c0_34] : memref<3x8x128xf32, #tpu.memory_space<vmem>>, vector<1x8x128xf32>
    %44 = vector.shape_cast %43 : vector<1x8x128xf32> to vector<8x128xf32>
    %45 = vector.shape_cast %42 : vector<8x128xf32> to vector<1x8x128xf32>
    tpu.vector_store %arg17[%c1_32, %c0_33, %c0_34], %45 {strides = array<i32>} : memref<3x8x128xf32, #tpu.memory_space<vmem>>, vector<1x8x128xf32>,
    %c0_35 = arith.constant 0 : index
    %c0_36 = arith.constant 0 : index
    %46 = vector.load %arg3[%c0_35, %c0_36] : memref<8x64xf32, #tpu.memory_space<vmem>>, vector<8x64xf32>
    %c2 = arith.constant 2 : index
    %c0_37 = arith.constant 0 : index
    %c0_38 = arith.constant 0 : index
    %47 = vector.load %arg6[%c2, %c0_37, %c0_38] : memref<3x64x512xbf16, #tpu.memory_space<vmem>>, vector<1x64x512xbf16>
    %48 = vector.shape_cast %47 : vector<1x64x512xbf16> to vector<64x512xbf16>
    %49 = arith.truncf %46 : vector<8x64xf32> to vector<8x64xbf16>
    %cst_39 = arith.constant dense<0.000000e+00> : vector<8x512xf32>
    %50 = tpu.matmul %49, %48, %cst_39 {dimension_numbers = #tpu.dot_dimension_numbers<[1], [0], [0], [1], [0, 0, 1, 1], [], []>} : vector<8x64xbf16>, vector<64x512xbf16>, vector<8x512xf32> -> vector<8x512xf32>
    %c2_40 = arith.constant 2 : index
    %c0_41 = arith.constant 0 : index
    %c0_42 = arith.constant 0 : index
    %51 = vector.load %arg7[%c2_40, %c0_41, %c0_42] : memref<3x1x512xf32, #tpu.memory_space<vmem>>, vector<1x1x512xf32>
    %52 = vector.shape_cast %51 : vector<1x1x512xf32> to vector<1x512xf32>
    %53 = vector.broadcast %52 : vector<1x512xf32> to vector<8x512xf32>
    %54 = arith.addf %50, %53 : vector<8x512xf32>
    %cst_43 = arith.constant 0.000000e+00 : f32
    %55 = vector.broadcast %cst_43 : f32 to vector<8x512xf32>
    %56 = arith.maximumf %54, %55 : vector<8x512xf32>
    %c2_44 = arith.constant 2 : index
    %c0_45 = arith.constant 0 : index
    %c0_46 = arith.constant 0 : index
    %57 = vector.load %arg8[%c2_44, %c0_45, %c0_46] : memref<3x512x128xbf16, #tpu.memory_space<vmem>>, vector<1x512x128xbf16>
    %58 = vector.shape_cast %57 : vector<1x512x128xbf16> to vector<512x128xbf16>
    %59 = arith.truncf %56 : vector<8x512xf32> to vector<8x512xbf16>
    %cst_47 = arith.constant dense<0.000000e+00> : vector<8x128xf32>
    %60 = tpu.matmul %59, %58, %cst_47 {dimension_numbers = #tpu.dot_dimension_numbers<[1], [0], [0], [1], [0, 0, 1, 1], [], []>} : vector<8x512xbf16>, vector<512x128xbf16>, vector<8x128xf32> -> vector<8x128xf32>
    %61 = vector.extract_strided_slice %2 {offsets = [2, 0], sizes = [1, 128], strides = [1, 1]} : vector<8x128xf32> to vector<1x128xf32>
    %62 = vector.broadcast %61 : vector<1x128xf32> to vector<8x128xf32>
    %63 = arith.addf %60, %62 : vector<8x128xf32>
    %c2_48 = arith.constant 2 : index
    %c0_49 = arith.constant 0 : index
    %c0_50 = arith.constant 0 : index
    %64 = vector.load %arg17[%c2_48, %c0_49, %c0_50] : memref<3x8x128xf32, #tpu.memory_space<vmem>>, vector<1x8x128xf32>
    %65 = vector.shape_cast %64 : vector<1x8x128xf32> to vector<8x128xf32>
    %66 = vector.shape_cast %63 : vector<8x128xf32> to vector<1x8x128xf32>
    tpu.vector_store %arg17[%c2_48, %c0_49, %c0_50], %66 {strides = array<i32>} : memref<3x8x128xf32, #tpu.memory_space<vmem>>, vector<1x8x128xf32>,
    %c0_51 = arith.constant 0 : index
    %c0_52 = arith.constant 0 : index
    %67 = vector.load %arg0[%c0_51, %c0_52] : memref<8x32xf32, #tpu.memory_space<vmem>>, vector<8x32xf32>
    %c0_53 = arith.constant 0 : index
    %c0_54 = arith.constant 0 : index
    %68 = vector.load %arg9[%c0_53, %c0_54] : memref<800x128xbf16, #tpu.memory_space<vmem>>, vector<32x128xbf16>
    %69 = arith.truncf %67 : vector<8x32xf32> to vector<8x32xbf16>
    %cst_55 = arith.constant dense<0.000000e+00> : vector<8x128xf32>
    %70 = tpu.matmul %69, %68, %cst_55 {dimension_numbers = #tpu.dot_dimension_numbers<[1], [0], [0], [1], [0, 0, 1, 1], [], []>} : vector<8x32xbf16>, vector<32x128xbf16>, vector<8x128xf32> -> vector<8x128xf32>
    %71 = vector.extract_strided_slice %2 {offsets = [3, 0], sizes = [1, 128], strides = [1, 1]} : vector<8x128xf32> to vector<1x128xf32>
    %72 = vector.broadcast %71 : vector<1x128xf32> to vector<8x128xf32>
    %73 = arith.addf %70, %72 : vector<8x128xf32>
    %cst_56 = arith.constant 0.000000e+00 : f32
    %74 = vector.broadcast %cst_56 : f32 to vector<8x128xf32>
    %75 = arith.maximumf %73, %74 : vector<8x128xf32>
    %c32 = arith.constant 32 : index
    %c0_57 = arith.constant 0 : index
    %76 = vector.load %arg9[%c32, %c0_57] : memref<800x128xbf16, #tpu.memory_space<vmem>>, vector<128x128xbf16>
    %77 = arith.truncf %75 : vector<8x128xf32> to vector<8x128xbf16>
    %cst_58 = arith.constant dense<0.000000e+00> : vector<8x128xf32>
    %78 = tpu.matmul %77, %76, %cst_58 {dimension_numbers = #tpu.dot_dimension_numbers<[1], [0], [0], [1], [0, 0, 1, 1], [], []>} : vector<8x128xbf16>, vector<128x128xbf16>, vector<8x128xf32> -> vector<8x128xf32>
    %79 = vector.extract_strided_slice %2 {offsets = [4, 0], sizes = [1, 128], strides = [1, 1]} : vector<8x128xf32> to vector<1x128xf32>
    %80 = vector.broadcast %79 : vector<1x128xf32> to vector<8x128xf32>
    %81 = arith.addf %78, %80 : vector<8x128xf32>
    %c0_59 = arith.constant 0 : index
    %82 = memref.load %arg5[%c0_59] : memref<2xf32, #tpu.memory_space<smem>>
    %c1_60 = arith.constant 1 : index
    %83 = memref.load %arg5[%c1_60] : memref<2xf32, #tpu.memory_space<smem>>
    %84 = arith.subf %63, %21 : vector<8x128xf32>
    %85 = arith.subf %84, %42 : vector<8x128xf32>
    %86 = vector.broadcast %82 : f32 to vector<8x128xf32>
    %87 = arith.mulf %86, %85 : vector<8x128xf32>
    %cst_61 = arith.constant 0.000000e+00 : f32
    %88 = vector.broadcast %cst_61 : f32 to vector<8x128xf32>
    %89 = arith.maximumf %87, %88 : vector<8x128xf32>
    %90 = vector.broadcast %83 : f32 to vector<8x128xf32>
    %91 = arith.mulf %90, %81 : vector<8x128xf32>
    %cst_62 = arith.constant 0.000000e+00 : f32
    %92 = vector.broadcast %cst_62 : f32 to vector<8x128xf32>
    %93 = arith.maximumf %91, %92 : vector<8x128xf32>
    %c160 = arith.constant 160 : index
    %c0_63 = arith.constant 0 : index
    %94 = vector.load %arg9[%c160, %c0_63] : memref<800x128xbf16, #tpu.memory_space<vmem>>, vector<128x128xbf16>
    %95 = arith.truncf %89 : vector<8x128xf32> to vector<8x128xbf16>
    %cst_64 = arith.constant dense<0.000000e+00> : vector<8x128xf32>
    %96 = tpu.matmul %95, %94, %cst_64 {dimension_numbers = #tpu.dot_dimension_numbers<[1], [0], [0], [1], [0, 0, 1, 1], [], []>} : vector<8x128xbf16>, vector<128x128xbf16>, vector<8x128xf32> -> vector<8x128xf32>
    %c288 = arith.constant 288 : index
    %c0_65 = arith.constant 0 : index
    %97 = vector.load %arg9[%c288, %c0_65] : memref<800x128xbf16, #tpu.memory_space<vmem>>, vector<128x128xbf16>
    %98 = arith.truncf %93 : vector<8x128xf32> to vector<8x128xbf16>
    %cst_66 = arith.constant dense<0.000000e+00> : vector<8x128xf32>
    %99 = tpu.matmul %98, %97, %cst_66 {dimension_numbers = #tpu.dot_dimension_numbers<[1], [0], [0], [1], [0, 0, 1, 1], [], []>} : vector<8x128xbf16>, vector<128x128xbf16>, vector<8x128xf32> -> vector<8x128xf32>
    %100 = arith.addf %96, %99 : vector<8x128xf32>
    %101 = vector.extract_strided_slice %2 {offsets = [5, 0], sizes = [1, 128], strides = [1, 1]} : vector<8x128xf32> to vector<1x128xf32>
    %102 = vector.broadcast %101 : vector<1x128xf32> to vector<8x128xf32>
    %103 = arith.addf %100, %102 : vector<8x128xf32>
    %cst_67 = arith.constant 0.000000e+00 : f32
    %104 = vector.broadcast %cst_67 : f32 to vector<8x128xf32>
    %105 = arith.maximumf %103, %104 : vector<8x128xf32>
    %c416 = arith.constant 416 : index
    %c0_68 = arith.constant 0 : index
    %106 = vector.load %arg9[%c416, %c0_68] : memref<800x128xbf16, #tpu.memory_space<vmem>>, vector<128x128xbf16>
    %107 = arith.truncf %105 : vector<8x128xf32> to vector<8x128xbf16>
    %cst_69 = arith.constant dense<0.000000e+00> : vector<8x128xf32>
    %108 = tpu.matmul %107, %106, %cst_69 {dimension_numbers = #tpu.dot_dimension_numbers<[1], [0], [0], [1], [0, 0, 1, 1], [], []>} : vector<8x128xbf16>, vector<128x128xbf16>, vector<8x128xf32> -> vector<8x128xf32>
    %109 = vector.extract_strided_slice %2 {offsets = [6, 0], sizes = [1, 128], strides = [1, 1]} : vector<8x128xf32> to vector<1x128xf32>
    %110 = vector.broadcast %109 : vector<1x128xf32> to vector<8x128xf32>
    %111 = arith.addf %108, %110 : vector<8x128xf32>
    %c1_70 = arith.constant 1 : index
    %c0_71 = arith.constant 0 : index
    %c0_72 = arith.constant 0 : index
    %112 = vector.load %arg16[%c1_70, %c0_71, %c0_72] : memref<2x8x128xf32, #tpu.memory_space<vmem>>, vector<1x8x128xf32>
    %113 = vector.shape_cast %112 : vector<1x8x128xf32> to vector<8x128xf32>
    %114 = vector.shape_cast %111 : vector<8x128xf32> to vector<1x8x128xf32>
    tpu.vector_store %arg16[%c1_70, %c0_71, %c0_72], %114 {strides = array<i32>} : memref<2x8x128xf32, #tpu.memory_space<vmem>>, vector<1x8x128xf32>,
    %c0_73 = arith.constant 0 : index
    %c0_74 = arith.constant 0 : index
    %115 = vector.load %arg4[%c0_73, %c0_74] : memref<16x300xf32, #tpu.memory_space<vmem>>, vector<16x300xf32>
    %c0_75 = arith.constant 0 : index
    %c0_76 = arith.constant 0 : index
    %116 = vector.load %arg11[%c0_75, %c0_76] : memref<300x768xbf16, #tpu.memory_space<vmem>>, vector<300x768xbf16>
    %117 = arith.truncf %115 : vector<16x300xf32> to vector<16x300xbf16>
    %cst_77 = arith.constant dense<0.000000e+00> : vector<16x768xf32>
    %118 = tpu.matmul %117, %116, %cst_77 {dimension_numbers = #tpu.dot_dimension_numbers<[1], [0], [0], [1], [0, 0, 1, 1], [], []>} : vector<16x300xbf16>, vector<300x768xbf16>, vector<16x768xf32> -> vector<16x768xf32>
    %119 = vector.extract_strided_slice %3 {offsets = [0, 0], sizes = [1, 768], strides = [1, 1]} : vector<4x768xf32> to vector<1x768xf32>
    %120 = vector.broadcast %119 : vector<1x768xf32> to vector<16x768xf32>
    %121 = arith.addf %118, %120 : vector<16x768xf32>
    %c0_i32_78 = arith.constant 0 : i32
    %122 = tpu.memref_slice %arg19[%c0_i32_78] : memref<1x!tpu.dma_semaphore, #tpu.memory_space<semaphore_mem>> -> memref<1x!tpu.dma_semaphore, #tpu.memory_space<semaphore_mem>>
    %123 = tpu.memref_squeeze %122 : memref<1x!tpu.dma_semaphore, #tpu.memory_space<semaphore_mem>> -> memref<!tpu.dma_semaphore, #tpu.memory_space<semaphore_mem>>
    tpu.wait_dma2 semaphore(%123 : memref<!tpu.dma_semaphore, #tpu.memory_space<semaphore_mem>>) src(%arg15 : memref<896x768xbf16, #tpu.memory_space<any>>) dst(%arg18 : memref<896x768xbf16, #tpu.memory_space<vmem>>)
    %c0_79 = arith.constant 0 : index
    %c0_80 = arith.constant 0 : index
    %124 = vector.load %arg18[%c0_79, %c0_80] : memref<896x768xbf16, #tpu.memory_space<vmem>>, vector<128x768xbf16>
    %125 = arith.truncf %105 : vector<8x128xf32> to vector<8x128xbf16>
    %cst_81 = arith.constant dense<0.000000e+00> : vector<8x768xf32>
    %126 = tpu.matmul %125, %124, %cst_81 {dimension_numbers = #tpu.dot_dimension_numbers<[1], [0], [0], [1], [0, 0, 1, 1], [], []>} : vector<8x128xbf16>, vector<128x768xbf16>, vector<8x768xf32> -> vector<8x768xf32>
    %127 = vector.extract_strided_slice %3 {offsets = [0, 0], sizes = [1, 768], strides = [1, 1]} : vector<4x768xf32> to vector<1x768xf32>
    %128 = vector.broadcast %127 : vector<1x768xf32> to vector<8x768xf32>
    %129 = arith.addf %126, %128 : vector<8x768xf32>
    %130 = vector.extract_strided_slice %121 {offsets = [0, 0], sizes = [8, 384], strides = [1, 1]} : vector<16x768xf32> to vector<8x384xf32>
    %131 = vector.extract_strided_slice %129 {offsets = [0, 0], sizes = [8, 384], strides = [1, 1]} : vector<8x768xf32> to vector<8x384xf32>
    %132 = vector.extract_strided_slice %121 {offsets = [8, 0], sizes = [8, 384], strides = [1, 1]} : vector<16x768xf32> to vector<8x384xf32>
    %133 = vector.extract_strided_slice %121 {offsets = [0, 384], sizes = [8, 384], strides = [1, 1]} : vector<16x768xf32> to vector<8x384xf32>
    %134 = vector.extract_strided_slice %129 {offsets = [0, 384], sizes = [8, 384], strides = [1, 1]} : vector<8x768xf32> to vector<8x384xf32>
    %135 = vector.extract_strided_slice %121 {offsets = [8, 384], sizes = [8, 384], strides = [1, 1]} : vector<16x768xf32> to vector<8x384xf32>
    %c128 = arith.constant 128 : index
    %c0_82 = arith.constant 0 : index
    %136 = vector.load %arg18[%c128, %c0_82] : memref<896x768xbf16, #tpu.memory_space<vmem>>, vector<256x768xbf16>
    %137 = vector.extract_strided_slice %3 {offsets = [1, 0], sizes = [1, 768], strides = [1, 1]} : vector<4x768xf32> to vector<1x768xf32>
    %cst_83 = arith.constant 0.000000e+00 : f32
    %138 = vector.broadcast %cst_83 : f32 to vector<8x256xf32>
    %139 = arith.truncf %138 : vector<8x256xf32> to vector<8x256xbf16>
    %cst_84 = arith.constant dense<0.000000e+00> : vector<8x768xf32>
    %140 = tpu.matmul %139, %136, %cst_84 {dimension_numbers = #tpu.dot_dimension_numbers<[1], [0], [0], [1], [0, 0, 1, 1], [], []>} : vector<8x256xbf16>, vector<256x768xbf16>, vector<8x768xf32> -> vector<8x768xf32>
    %141 = vector.broadcast %137 : vector<1x768xf32> to vector<8x768xf32>
    %142 = arith.addf %140, %141 : vector<8x768xf32>
    %143 = vector.extract_strided_slice %142 {offsets = [0, 0], sizes = [8, 384], strides = [1, 1]} : vector<8x768xf32> to vector<8x384xf32>
    %144 = vector.extract_strided_slice %138 {offsets = [0, 0], sizes = [8, 128], strides = [1, 1]} : vector<8x256xf32> to vector<8x128xf32>
    %145 = vector.extract_strided_slice %130 {offsets = [0, 0], sizes = [8, 128], strides = [1, 1]} : vector<8x384xf32> to vector<8x128xf32>
    %146 = vector.extract_strided_slice %143 {offsets = [0, 0], sizes = [8, 128], strides = [1, 1]} : vector<8x384xf32> to vector<8x128xf32>
    %147 = arith.addf %145, %146 : vector<8x128xf32>
    %148 = arith.negf %147 : vector<8x128xf32>
    %149 = math.exp %148 : vector<8x128xf32>
    %cst_85 = arith.constant 1.000000e+00 : f32
    %150 = vector.broadcast %cst_85 : f32 to vector<8x128xf32>
    %151 = arith.addf %150, %149 : vector<8x128xf32>
    %152 = arith.divf %150, %151 : vector<8x128xf32>
    %153 = vector.extract_strided_slice %130 {offsets = [0, 128], sizes = [8, 128], strides = [1, 1]} : vector<8x384xf32> to vector<8x128xf32>
    %154 = vector.extract_strided_slice %143 {offsets = [0, 128], sizes = [8, 128], strides = [1, 1]} : vector<8x384xf32> to vector<8x128xf32>
    %155 = arith.addf %153, %154 : vector<8x128xf32>
    %156 = arith.negf %155 : vector<8x128xf32>
    %157 = math.exp %156 : vector<8x128xf32>
    %cst_86 = arith.constant 1.000000e+00 : f32
    %158 = vector.broadcast %cst_86 : f32 to vector<8x128xf32>
    %159 = arith.addf %158, %157 : vector<8x128xf32>
    %160 = arith.divf %158, %159 : vector<8x128xf32>
    %161 = vector.extract_strided_slice %130 {offsets = [0, 256], sizes = [8, 128], strides = [1, 1]} : vector<8x384xf32> to vector<8x128xf32>
    %162 = vector.extract_strided_slice %143 {offsets = [0, 256], sizes = [8, 128], strides = [1, 1]} : vector<8x384xf32> to vector<8x128xf32>
    %163 = arith.mulf %152, %162 : vector<8x128xf32>
    %164 = arith.addf %161, %163 : vector<8x128xf32>
    %165 = math.tanh %164 : vector<8x128xf32>
    %cst_87 = arith.constant 1.000000e+00 : f32
    %166 = vector.broadcast %cst_87 : f32 to vector<8x128xf32>
    %167 = arith.subf %166, %160 : vector<8x128xf32>
    %168 = arith.mulf %167, %165 : vector<8x128xf32>
    %169 = arith.mulf %160, %144 : vector<8x128xf32>
    %170 = arith.addf %168, %169 : vector<8x128xf32>
    %171 = vector.extract_strided_slice %142 {offsets = [0, 384], sizes = [8, 384], strides = [1, 1]} : vector<8x768xf32> to vector<8x384xf32>
    %172 = vector.extract_strided_slice %138 {offsets = [0, 128], sizes = [8, 128], strides = [1, 1]} : vector<8x256xf32> to vector<8x128xf32>
    %173 = vector.extract_strided_slice %135 {offsets = [0, 0], sizes = [8, 128], strides = [1, 1]} : vector<8x384xf32> to vector<8x128xf32>
    %174 = vector.extract_strided_slice %171 {offsets = [0, 0], sizes = [8, 128], strides = [1, 1]} : vector<8x384xf32> to vector<8x128xf32>
    %175 = arith.addf %173, %174 : vector<8x128xf32>
    %176 = arith.negf %175 : vector<8x128xf32>
    %177 = math.exp %176 : vector<8x128xf32>
    %cst_88 = arith.constant 1.000000e+00 : f32
    %178 = vector.broadcast %cst_88 : f32 to vector<8x128xf32>
    %179 = arith.addf %178, %177 : vector<8x128xf32>
    %180 = arith.divf %178, %179 : vector<8x128xf32>
    %181 = vector.extract_strided_slice %135 {offsets = [0, 128], sizes = [8, 128], strides = [1, 1]} : vector<8x384xf32> to vector<8x128xf32>
    %182 = vector.extract_strided_slice %171 {offsets = [0, 128], sizes = [8, 128], strides = [1, 1]} : vector<8x384xf32> to vector<8x128xf32>
    %183 = arith.addf %181, %182 : vector<8x128xf32>
    %184 = arith.negf %183 : vector<8x128xf32>
    %185 = math.exp %184 : vector<8x128xf32>
    %cst_89 = arith.constant 1.000000e+00 : f32
    %186 = vector.broadcast %cst_89 : f32 to vector<8x128xf32>
    %187 = arith.addf %186, %185 : vector<8x128xf32>
    %188 = arith.divf %186, %187 : vector<8x128xf32>
    %189 = vector.extract_strided_slice %135 {offsets = [0, 256], sizes = [8, 128], strides = [1, 1]} : vector<8x384xf32> to vector<8x128xf32>
    %190 = vector.extract_strided_slice %171 {offsets = [0, 256], sizes = [8, 128], strides = [1, 1]} : vector<8x384xf32> to vector<8x128xf32>
    %191 = arith.mulf %180, %190 : vector<8x128xf32>
    %192 = arith.addf %189, %191 : vector<8x128xf32>
    %193 = math.tanh %192 : vector<8x128xf32>
    %cst_90 = arith.constant 1.000000e+00 : f32
    %194 = vector.broadcast %cst_90 : f32 to vector<8x128xf32>
    %195 = arith.subf %194, %188 : vector<8x128xf32>
    %196 = arith.mulf %195, %193 : vector<8x128xf32>
    %197 = arith.mulf %188, %172 : vector<8x128xf32>
    %198 = arith.addf %196, %197 : vector<8x128xf32>
    %199 = tpu.concatenate %170, %198 in 1 : vector<8x128xf32>, vector<8x128xf32> -> vector<8x256xf32>
    %200 = arith.truncf %199 : vector<8x256xf32> to vector<8x256xbf16>
    %cst_91 = arith.constant dense<0.000000e+00> : vector<8x768xf32>
    %201 = tpu.matmul %200, %136, %cst_91 {dimension_numbers = #tpu.dot_dimension_numbers<[1], [0], [0], [1], [0, 0, 1, 1], [], []>} : vector<8x256xbf16>, vector<256x768xbf16>, vector<8x768xf32> -> vector<8x768xf32>
    %202 = vector.broadcast %137 : vector<1x768xf32> to vector<8x768xf32>
    %203 = arith.addf %201, %202 : vector<8x768xf32>
    %204 = vector.extract_strided_slice %203 {offsets = [0, 0], sizes = [8, 384], strides = [1, 1]} : vector<8x768xf32> to vector<8x384xf32>
    %205 = vector.extract_strided_slice %199 {offsets = [0, 0], sizes = [8, 128], strides = [1, 1]} : vector<8x256xf32> to vector<8x128xf32>
    %206 = vector.extract_strided_slice %131 {offsets = [0, 0], sizes = [8, 128], strides = [1, 1]} : vector<8x384xf32> to vector<8x128xf32>
    %207 = vector.extract_strided_slice %204 {offsets = [0, 0], sizes = [8, 128], strides = [1, 1]} : vector<8x384xf32> to vector<8x128xf32>
    %208 = arith.addf %206, %207 : vector<8x128xf32>
    %209 = arith.negf %208 : vector<8x128xf32>
    %210 = math.exp %209 : vector<8x128xf32>
    %cst_92 = arith.constant 1.000000e+00 : f32
    %211 = vector.broadcast %cst_92 : f32 to vector<8x128xf32>
    %212 = arith.addf %211, %210 : vector<8x128xf32>
    %213 = arith.divf %211, %212 : vector<8x128xf32>
    %214 = vector.extract_strided_slice %131 {offsets = [0, 128], sizes = [8, 128], strides = [1, 1]} : vector<8x384xf32> to vector<8x128xf32>
    %215 = vector.extract_strided_slice %204 {offsets = [0, 128], sizes = [8, 128], strides = [1, 1]} : vector<8x384xf32> to vector<8x128xf32>
    %216 = arith.addf %214, %215 : vector<8x128xf32>
    %217 = arith.negf %216 : vector<8x128xf32>
    %218 = math.exp %217 : vector<8x128xf32>
    %cst_93 = arith.constant 1.000000e+00 : f32
    %219 = vector.broadcast %cst_93 : f32 to vector<8x128xf32>
    %220 = arith.addf %219, %218 : vector<8x128xf32>
    %221 = arith.divf %219, %220 : vector<8x128xf32>
    %222 = vector.extract_strided_slice %131 {offsets = [0, 256], sizes = [8, 128], strides = [1, 1]} : vector<8x384xf32> to vector<8x128xf32>
    %223 = vector.extract_strided_slice %204 {offsets = [0, 256], sizes = [8, 128], strides = [1, 1]} : vector<8x384xf32> to vector<8x128xf32>
    %224 = arith.mulf %213, %223 : vector<8x128xf32>
    %225 = arith.addf %222, %224 : vector<8x128xf32>
    %226 = math.tanh %225 : vector<8x128xf32>
    %cst_94 = arith.constant 1.000000e+00 : f32
    %227 = vector.broadcast %cst_94 : f32 to vector<8x128xf32>
    %228 = arith.subf %227, %221 : vector<8x128xf32>
    %229 = arith.mulf %228, %226 : vector<8x128xf32>
    %230 = arith.mulf %221, %205 : vector<8x128xf32>
    %231 = arith.addf %229, %230 : vector<8x128xf32>
    %232 = vector.extract_strided_slice %203 {offsets = [0, 384], sizes = [8, 384], strides = [1, 1]} : vector<8x768xf32> to vector<8x384xf32>
    %233 = vector.extract_strided_slice %199 {offsets = [0, 128], sizes = [8, 128], strides = [1, 1]} : vector<8x256xf32> to vector<8x128xf32>
    %234 = vector.extract_strided_slice %134 {offsets = [0, 0], sizes = [8, 128], strides = [1, 1]} : vector<8x384xf32> to vector<8x128xf32>
    %235 = vector.extract_strided_slice %232 {offsets = [0, 0], sizes = [8, 128], strides = [1, 1]} : vector<8x384xf32> to vector<8x128xf32>
    %236 = arith.addf %234, %235 : vector<8x128xf32>
    %237 = arith.negf %236 : vector<8x128xf32>
    %238 = math.exp %237 : vector<8x128xf32>
    %cst_95 = arith.constant 1.000000e+00 : f32
    %239 = vector.broadcast %cst_95 : f32 to vector<8x128xf32>
    %240 = arith.addf %239, %238 : vector<8x128xf32>
    %241 = arith.divf %239, %240 : vector<8x128xf32>
    %242 = vector.extract_strided_slice %134 {offsets = [0, 128], sizes = [8, 128], strides = [1, 1]} : vector<8x384xf32> to vector<8x128xf32>
    %243 = vector.extract_strided_slice %232 {offsets = [0, 128], sizes = [8, 128], strides = [1, 1]} : vector<8x384xf32> to vector<8x128xf32>
    %244 = arith.addf %242, %243 : vector<8x128xf32>
    %245 = arith.negf %244 : vector<8x128xf32>
    %246 = math.exp %245 : vector<8x128xf32>
    %cst_96 = arith.constant 1.000000e+00 : f32
    %247 = vector.broadcast %cst_96 : f32 to vector<8x128xf32>
    %248 = arith.addf %247, %246 : vector<8x128xf32>
    %249 = arith.divf %247, %248 : vector<8x128xf32>
    %250 = vector.extract_strided_slice %134 {offsets = [0, 256], sizes = [8, 128], strides = [1, 1]} : vector<8x384xf32> to vector<8x128xf32>
    %251 = vector.extract_strided_slice %232 {offsets = [0, 256], sizes = [8, 128], strides = [1, 1]} : vector<8x384xf32> to vector<8x128xf32>
    %252 = arith.mulf %241, %251 : vector<8x128xf32>
    %253 = arith.addf %250, %252 : vector<8x128xf32>
    %254 = math.tanh %253 : vector<8x128xf32>
    %cst_97 = arith.constant 1.000000e+00 : f32
    %255 = vector.broadcast %cst_97 : f32 to vector<8x128xf32>
    %256 = arith.subf %255, %249 : vector<8x128xf32>
    %257 = arith.mulf %256, %254 : vector<8x128xf32>
    %258 = arith.mulf %249, %233 : vector<8x128xf32>
    %259 = arith.addf %257, %258 : vector<8x128xf32>
    %260 = tpu.concatenate %231, %259 in 1 : vector<8x128xf32>, vector<8x128xf32> -> vector<8x256xf32>
    %261 = arith.truncf %260 : vector<8x256xf32> to vector<8x256xbf16>
    %cst_98 = arith.constant dense<0.000000e+00> : vector<8x768xf32>
    %262 = tpu.matmul %261, %136, %cst_98 {dimension_numbers = #tpu.dot_dimension_numbers<[1], [0], [0], [1], [0, 0, 1, 1], [], []>} : vector<8x256xbf16>, vector<256x768xbf16>, vector<8x768xf32> -> vector<8x768xf32>
    %263 = vector.broadcast %137 : vector<1x768xf32> to vector<8x768xf32>
    %264 = arith.addf %262, %263 : vector<8x768xf32>
    %265 = vector.extract_strided_slice %264 {offsets = [0, 0], sizes = [8, 384], strides = [1, 1]} : vector<8x768xf32> to vector<8x384xf32>
    %266 = vector.extract_strided_slice %260 {offsets = [0, 0], sizes = [8, 128], strides = [1, 1]} : vector<8x256xf32> to vector<8x128xf32>
    %267 = vector.extract_strided_slice %132 {offsets = [0, 0], sizes = [8, 128], strides = [1, 1]} : vector<8x384xf32> to vector<8x128xf32>
    %268 = vector.extract_strided_slice %265 {offsets = [0, 0], sizes = [8, 128], strides = [1, 1]} : vector<8x384xf32> to vector<8x128xf32>
    %269 = arith.addf %267, %268 : vector<8x128xf32>
    %270 = arith.negf %269 : vector<8x128xf32>
    %271 = math.exp %270 : vector<8x128xf32>
    %cst_99 = arith.constant 1.000000e+00 : f32
    %272 = vector.broadcast %cst_99 : f32 to vector<8x128xf32>
    %273 = arith.addf %272, %271 : vector<8x128xf32>
    %274 = arith.divf %272, %273 : vector<8x128xf32>
    %275 = vector.extract_strided_slice %132 {offsets = [0, 128], sizes = [8, 128], strides = [1, 1]} : vector<8x384xf32> to vector<8x128xf32>
    %276 = vector.extract_strided_slice %265 {offsets = [0, 128], sizes = [8, 128], strides = [1, 1]} : vector<8x384xf32> to vector<8x128xf32>
    %277 = arith.addf %275, %276 : vector<8x128xf32>
    %278 = arith.negf %277 : vector<8x128xf32>
    %279 = math.exp %278 : vector<8x128xf32>
    %cst_100 = arith.constant 1.000000e+00 : f32
    %280 = vector.broadcast %cst_100 : f32 to vector<8x128xf32>
    %281 = arith.addf %280, %279 : vector<8x128xf32>
    %282 = arith.divf %280, %281 : vector<8x128xf32>
    %283 = vector.extract_strided_slice %132 {offsets = [0, 256], sizes = [8, 128], strides = [1, 1]} : vector<8x384xf32> to vector<8x128xf32>
    %284 = vector.extract_strided_slice %265 {offsets = [0, 256], sizes = [8, 128], strides = [1, 1]} : vector<8x384xf32> to vector<8x128xf32>
    %285 = arith.mulf %274, %284 : vector<8x128xf32>
    %286 = arith.addf %283, %285 : vector<8x128xf32>
    %287 = math.tanh %286 : vector<8x128xf32>
    %cst_101 = arith.constant 1.000000e+00 : f32
    %288 = vector.broadcast %cst_101 : f32 to vector<8x128xf32>
    %289 = arith.subf %288, %282 : vector<8x128xf32>
    %290 = arith.mulf %289, %287 : vector<8x128xf32>
    %291 = arith.mulf %282, %266 : vector<8x128xf32>
    %292 = arith.addf %290, %291 : vector<8x128xf32>
    %293 = vector.extract_strided_slice %264 {offsets = [0, 384], sizes = [8, 384], strides = [1, 1]} : vector<8x768xf32> to vector<8x384xf32>
    %294 = vector.extract_strided_slice %260 {offsets = [0, 128], sizes = [8, 128], strides = [1, 1]} : vector<8x256xf32> to vector<8x128xf32>
    %295 = vector.extract_strided_slice %133 {offsets = [0, 0], sizes = [8, 128], strides = [1, 1]} : vector<8x384xf32> to vector<8x128xf32>
    %296 = vector.extract_strided_slice %293 {offsets = [0, 0], sizes = [8, 128], strides = [1, 1]} : vector<8x384xf32> to vector<8x128xf32>
    %297 = arith.addf %295, %296 : vector<8x128xf32>
    %298 = arith.negf %297 : vector<8x128xf32>
    %299 = math.exp %298 : vector<8x128xf32>
    %cst_102 = arith.constant 1.000000e+00 : f32
    %300 = vector.broadcast %cst_102 : f32 to vector<8x128xf32>
    %301 = arith.addf %300, %299 : vector<8x128xf32>
    %302 = arith.divf %300, %301 : vector<8x128xf32>
    %303 = vector.extract_strided_slice %133 {offsets = [0, 128], sizes = [8, 128], strides = [1, 1]} : vector<8x384xf32> to vector<8x128xf32>
    %304 = vector.extract_strided_slice %293 {offsets = [0, 128], sizes = [8, 128], strides = [1, 1]} : vector<8x384xf32> to vector<8x128xf32>
    %305 = arith.addf %303, %304 : vector<8x128xf32>
    %306 = arith.negf %305 : vector<8x128xf32>
    %307 = math.exp %306 : vector<8x128xf32>
    %cst_103 = arith.constant 1.000000e+00 : f32
    %308 = vector.broadcast %cst_103 : f32 to vector<8x128xf32>
    %309 = arith.addf %308, %307 : vector<8x128xf32>
    %310 = arith.divf %308, %309 : vector<8x128xf32>
    %311 = vector.extract_strided_slice %133 {offsets = [0, 256], sizes = [8, 128], strides = [1, 1]} : vector<8x384xf32> to vector<8x128xf32>
    %312 = vector.extract_strided_slice %293 {offsets = [0, 256], sizes = [8, 128], strides = [1, 1]} : vector<8x384xf32> to vector<8x128xf32>
    %313 = arith.mulf %302, %312 : vector<8x128xf32>
    %314 = arith.addf %311, %313 : vector<8x128xf32>
    %315 = math.tanh %314 : vector<8x128xf32>
    %cst_104 = arith.constant 1.000000e+00 : f32
    %316 = vector.broadcast %cst_104 : f32 to vector<8x128xf32>
    %317 = arith.subf %316, %310 : vector<8x128xf32>
    %318 = arith.mulf %317, %315 : vector<8x128xf32>
    %319 = arith.mulf %310, %294 : vector<8x128xf32>
    %320 = arith.addf %318, %319 : vector<8x128xf32>
    %321 = tpu.concatenate %170, %320 in 1 : vector<8x128xf32>, vector<8x128xf32> -> vector<8x256xf32>
    %322 = tpu.concatenate %231, %259 in 1 : vector<8x128xf32>, vector<8x128xf32> -> vector<8x256xf32>
    %323 = tpu.concatenate %292, %198 in 1 : vector<8x128xf32>, vector<8x128xf32> -> vector<8x256xf32>
    %324 = tpu.concatenate %321, %322, %323 in 0 : vector<8x256xf32>, vector<8x256xf32>, vector<8x256xf32> -> vector<24x256xf32>
    %c384 = arith.constant 384 : index
    %c0_105 = arith.constant 0 : index
    %325 = vector.load %arg18[%c384, %c0_105] : memref<896x768xbf16, #tpu.memory_space<vmem>>, vector<256x768xbf16>
    %326 = arith.truncf %324 : vector<24x256xf32> to vector<24x256xbf16>
    %cst_106 = arith.constant dense<0.000000e+00> : vector<24x768xf32>
    %327 = tpu.matmul %326, %325, %cst_106 {dimension_numbers = #tpu.dot_dimension_numbers<[1], [0], [0], [1], [0, 0, 1, 1], [], []>} : vector<24x256xbf16>, vector<256x768xbf16>, vector<24x768xf32> -> vector<24x768xf32>
    %328 = vector.extract_strided_slice %3 {offsets = [2, 0], sizes = [1, 768], strides = [1, 1]} : vector<4x768xf32> to vector<1x768xf32>
    %329 = vector.broadcast %328 : vector<1x768xf32> to vector<24x768xf32>
    %330 = arith.addf %327, %329 : vector<24x768xf32>
    %331 = vector.extract_strided_slice %330 {offsets = [0, 0], sizes = [8, 384], strides = [1, 1]} : vector<24x768xf32> to vector<8x384xf32>
    %332 = vector.extract_strided_slice %330 {offsets = [8, 0], sizes = [8, 384], strides = [1, 1]} : vector<24x768xf32> to vector<8x384xf32>
    %333 = vector.extract_strided_slice %330 {offsets = [16, 0], sizes = [8, 384], strides = [1, 1]} : vector<24x768xf32> to vector<8x384xf32>
    %334 = vector.extract_strided_slice %330 {offsets = [0, 384], sizes = [8, 384], strides = [1, 1]} : vector<24x768xf32> to vector<8x384xf32>
    %335 = vector.extract_strided_slice %330 {offsets = [8, 384], sizes = [8, 384], strides = [1, 1]} : vector<24x768xf32> to vector<8x384xf32>
    %336 = vector.extract_strided_slice %330 {offsets = [16, 384], sizes = [8, 384], strides = [1, 1]} : vector<24x768xf32> to vector<8x384xf32>
    %c640 = arith.constant 640 : index
    %c0_107 = arith.constant 0 : index
    %337 = vector.load %arg18[%c640, %c0_107] : memref<896x768xbf16, #tpu.memory_space<vmem>>, vector<256x768xbf16>
    %338 = vector.extract_strided_slice %3 {offsets = [3, 0], sizes = [1, 768], strides = [1, 1]} : vector<4x768xf32> to vector<1x768xf32>
    %cst_108 = arith.constant 0.000000e+00 : f32
    %339 = vector.broadcast %cst_108 : f32 to vector<8x256xf32>
    %340 = arith.truncf %339 : vector<8x256xf32> to vector<8x256xbf16>
    %cst_109 = arith.constant dense<0.000000e+00> : vector<8x768xf32>
    %341 = tpu.matmul %340, %337, %cst_109 {dimension_numbers = #tpu.dot_dimension_numbers<[1], [0], [0], [1], [0, 0, 1, 1], [], []>} : vector<8x256xbf16>, vector<256x768xbf16>, vector<8x768xf32> -> vector<8x768xf32>
    %342 = vector.broadcast %338 : vector<1x768xf32> to vector<8x768xf32>
    %343 = arith.addf %341, %342 : vector<8x768xf32>
    %344 = vector.extract_strided_slice %343 {offsets = [0, 0], sizes = [8, 384], strides = [1, 1]} : vector<8x768xf32> to vector<8x384xf32>
    %345 = vector.extract_strided_slice %339 {offsets = [0, 0], sizes = [8, 128], strides = [1, 1]} : vector<8x256xf32> to vector<8x128xf32>
    %346 = vector.extract_strided_slice %331 {offsets = [0, 0], sizes = [8, 128], strides = [1, 1]} : vector<8x384xf32> to vector<8x128xf32>
    %347 = vector.extract_strided_slice %344 {offsets = [0, 0], sizes = [8, 128], strides = [1, 1]} : vector<8x384xf32> to vector<8x128xf32>
    %348 = arith.addf %346, %347 : vector<8x128xf32>
    %349 = arith.negf %348 : vector<8x128xf32>
    %350 = math.exp %349 : vector<8x128xf32>
    %cst_110 = arith.constant 1.000000e+00 : f32
    %351 = vector.broadcast %cst_110 : f32 to vector<8x128xf32>
    %352 = arith.addf %351, %350 : vector<8x128xf32>
    %353 = arith.divf %351, %352 : vector<8x128xf32>
    %354 = vector.extract_strided_slice %331 {offsets = [0, 128], sizes = [8, 128], strides = [1, 1]} : vector<8x384xf32> to vector<8x128xf32>
    %355 = vector.extract_strided_slice %344 {offsets = [0, 128], sizes = [8, 128], strides = [1, 1]} : vector<8x384xf32> to vector<8x128xf32>
    %356 = arith.addf %354, %355 : vector<8x128xf32>
    %357 = arith.negf %356 : vector<8x128xf32>
    %358 = math.exp %357 : vector<8x128xf32>
    %cst_111 = arith.constant 1.000000e+00 : f32
    %359 = vector.broadcast %cst_111 : f32 to vector<8x128xf32>
    %360 = arith.addf %359, %358 : vector<8x128xf32>
    %361 = arith.divf %359, %360 : vector<8x128xf32>
    %362 = vector.extract_strided_slice %331 {offsets = [0, 256], sizes = [8, 128], strides = [1, 1]} : vector<8x384xf32> to vector<8x128xf32>
    %363 = vector.extract_strided_slice %344 {offsets = [0, 256], sizes = [8, 128], strides = [1, 1]} : vector<8x384xf32> to vector<8x128xf32>
    %364 = arith.mulf %353, %363 : vector<8x128xf32>
    %365 = arith.addf %362, %364 : vector<8x128xf32>
    %366 = math.tanh %365 : vector<8x128xf32>
    %cst_112 = arith.constant 1.000000e+00 : f32
    %367 = vector.broadcast %cst_112 : f32 to vector<8x128xf32>
    %368 = arith.subf %367, %361 : vector<8x128xf32>
    %369 = arith.mulf %368, %366 : vector<8x128xf32>
    %370 = arith.mulf %361, %345 : vector<8x128xf32>
    %371 = arith.addf %369, %370 : vector<8x128xf32>
    %372 = vector.extract_strided_slice %343 {offsets = [0, 384], sizes = [8, 384], strides = [1, 1]} : vector<8x768xf32> to vector<8x384xf32>
    %373 = vector.extract_strided_slice %339 {offsets = [0, 128], sizes = [8, 128], strides = [1, 1]} : vector<8x256xf32> to vector<8x128xf32>
    %374 = vector.extract_strided_slice %336 {offsets = [0, 0], sizes = [8, 128], strides = [1, 1]} : vector<8x384xf32> to vector<8x128xf32>
    %375 = vector.extract_strided_slice %372 {offsets = [0, 0], sizes = [8, 128], strides = [1, 1]} : vector<8x384xf32> to vector<8x128xf32>
    %376 = arith.addf %374, %375 : vector<8x128xf32>
    %377 = arith.negf %376 : vector<8x128xf32>
    %378 = math.exp %377 : vector<8x128xf32>
    %cst_113 = arith.constant 1.000000e+00 : f32
    %379 = vector.broadcast %cst_113 : f32 to vector<8x128xf32>
    %380 = arith.addf %379, %378 : vector<8x128xf32>
    %381 = arith.divf %379, %380 : vector<8x128xf32>
    %382 = vector.extract_strided_slice %336 {offsets = [0, 128], sizes = [8, 128], strides = [1, 1]} : vector<8x384xf32> to vector<8x128xf32>
    %383 = vector.extract_strided_slice %372 {offsets = [0, 128], sizes = [8, 128], strides = [1, 1]} : vector<8x384xf32> to vector<8x128xf32>
    %384 = arith.addf %382, %383 : vector<8x128xf32>
    %385 = arith.negf %384 : vector<8x128xf32>
    %386 = math.exp %385 : vector<8x128xf32>
    %cst_114 = arith.constant 1.000000e+00 : f32
    %387 = vector.broadcast %cst_114 : f32 to vector<8x128xf32>
    %388 = arith.addf %387, %386 : vector<8x128xf32>
    %389 = arith.divf %387, %388 : vector<8x128xf32>
    %390 = vector.extract_strided_slice %336 {offsets = [0, 256], sizes = [8, 128], strides = [1, 1]} : vector<8x384xf32> to vector<8x128xf32>
    %391 = vector.extract_strided_slice %372 {offsets = [0, 256], sizes = [8, 128], strides = [1, 1]} : vector<8x384xf32> to vector<8x128xf32>
    %392 = arith.mulf %381, %391 : vector<8x128xf32>
    %393 = arith.addf %390, %392 : vector<8x128xf32>
    %394 = math.tanh %393 : vector<8x128xf32>
    %cst_115 = arith.constant 1.000000e+00 : f32
    %395 = vector.broadcast %cst_115 : f32 to vector<8x128xf32>
    %396 = arith.subf %395, %389 : vector<8x128xf32>
    %397 = arith.mulf %396, %394 : vector<8x128xf32>
    %398 = arith.mulf %389, %373 : vector<8x128xf32>
    %399 = arith.addf %397, %398 : vector<8x128xf32>
    %400 = tpu.concatenate %371, %399 in 1 : vector<8x128xf32>, vector<8x128xf32> -> vector<8x256xf32>
    %401 = arith.truncf %400 : vector<8x256xf32> to vector<8x256xbf16>
    %cst_116 = arith.constant dense<0.000000e+00> : vector<8x768xf32>
    %402 = tpu.matmul %401, %337, %cst_116 {dimension_numbers = #tpu.dot_dimension_numbers<[1], [0], [0], [1], [0, 0, 1, 1], [], []>} : vector<8x256xbf16>, vector<256x768xbf16>, vector<8x768xf32> -> vector<8x768xf32>
    %403 = vector.broadcast %338 : vector<1x768xf32> to vector<8x768xf32>
    %404 = arith.addf %402, %403 : vector<8x768xf32>
    %405 = vector.extract_strided_slice %404 {offsets = [0, 0], sizes = [8, 384], strides = [1, 1]} : vector<8x768xf32> to vector<8x384xf32>
    %406 = vector.extract_strided_slice %400 {offsets = [0, 0], sizes = [8, 128], strides = [1, 1]} : vector<8x256xf32> to vector<8x128xf32>
    %407 = vector.extract_strided_slice %332 {offsets = [0, 0], sizes = [8, 128], strides = [1, 1]} : vector<8x384xf32> to vector<8x128xf32>
    %408 = vector.extract_strided_slice %405 {offsets = [0, 0], sizes = [8, 128], strides = [1, 1]} : vector<8x384xf32> to vector<8x128xf32>
    %409 = arith.addf %407, %408 : vector<8x128xf32>
    %410 = arith.negf %409 : vector<8x128xf32>
    %411 = math.exp %410 : vector<8x128xf32>
    %cst_117 = arith.constant 1.000000e+00 : f32
    %412 = vector.broadcast %cst_117 : f32 to vector<8x128xf32>
    %413 = arith.addf %412, %411 : vector<8x128xf32>
    %414 = arith.divf %412, %413 : vector<8x128xf32>
    %415 = vector.extract_strided_slice %332 {offsets = [0, 128], sizes = [8, 128], strides = [1, 1]} : vector<8x384xf32> to vector<8x128xf32>
    %416 = vector.extract_strided_slice %405 {offsets = [0, 128], sizes = [8, 128], strides = [1, 1]} : vector<8x384xf32> to vector<8x128xf32>
    %417 = arith.addf %415, %416 : vector<8x128xf32>
    %418 = arith.negf %417 : vector<8x128xf32>
    %419 = math.exp %418 : vector<8x128xf32>
    %cst_118 = arith.constant 1.000000e+00 : f32
    %420 = vector.broadcast %cst_118 : f32 to vector<8x128xf32>
    %421 = arith.addf %420, %419 : vector<8x128xf32>
    %422 = arith.divf %420, %421 : vector<8x128xf32>
    %423 = vector.extract_strided_slice %332 {offsets = [0, 256], sizes = [8, 128], strides = [1, 1]} : vector<8x384xf32> to vector<8x128xf32>
    %424 = vector.extract_strided_slice %405 {offsets = [0, 256], sizes = [8, 128], strides = [1, 1]} : vector<8x384xf32> to vector<8x128xf32>
    %425 = arith.mulf %414, %424 : vector<8x128xf32>
    %426 = arith.addf %423, %425 : vector<8x128xf32>
    %427 = math.tanh %426 : vector<8x128xf32>
    %cst_119 = arith.constant 1.000000e+00 : f32
    %428 = vector.broadcast %cst_119 : f32 to vector<8x128xf32>
    %429 = arith.subf %428, %422 : vector<8x128xf32>
    %430 = arith.mulf %429, %427 : vector<8x128xf32>
    %431 = arith.mulf %422, %406 : vector<8x128xf32>
    %432 = arith.addf %430, %431 : vector<8x128xf32>
    %433 = vector.extract_strided_slice %404 {offsets = [0, 384], sizes = [8, 384], strides = [1, 1]} : vector<8x768xf32> to vector<8x384xf32>
    %434 = vector.extract_strided_slice %400 {offsets = [0, 128], sizes = [8, 128], strides = [1, 1]} : vector<8x256xf32> to vector<8x128xf32>
    %435 = vector.extract_strided_slice %335 {offsets = [0, 0], sizes = [8, 128], strides = [1, 1]} : vector<8x384xf32> to vector<8x128xf32>
    %436 = vector.extract_strided_slice %433 {offsets = [0, 0], sizes = [8, 128], strides = [1, 1]} : vector<8x384xf32> to vector<8x128xf32>
    %437 = arith.addf %435, %436 : vector<8x128xf32>
    %438 = arith.negf %437 : vector<8x128xf32>
    %439 = math.exp %438 : vector<8x128xf32>
    %cst_120 = arith.constant 1.000000e+00 : f32
    %440 = vector.broadcast %cst_120 : f32 to vector<8x128xf32>
    %441 = arith.addf %440, %439 : vector<8x128xf32>
    %442 = arith.divf %440, %441 : vector<8x128xf32>
    %443 = vector.extract_strided_slice %335 {offsets = [0, 128], sizes = [8, 128], strides = [1, 1]} : vector<8x384xf32> to vector<8x128xf32>
    %444 = vector.extract_strided_slice %433 {offsets = [0, 128], sizes = [8, 128], strides = [1, 1]} : vector<8x384xf32> to vector<8x128xf32>
    %445 = arith.addf %443, %444 : vector<8x128xf32>
    %446 = arith.negf %445 : vector<8x128xf32>
    %447 = math.exp %446 : vector<8x128xf32>
    %cst_121 = arith.constant 1.000000e+00 : f32
    %448 = vector.broadcast %cst_121 : f32 to vector<8x128xf32>
    %449 = arith.addf %448, %447 : vector<8x128xf32>
    %450 = arith.divf %448, %449 : vector<8x128xf32>
    %451 = vector.extract_strided_slice %335 {offsets = [0, 256], sizes = [8, 128], strides = [1, 1]} : vector<8x384xf32> to vector<8x128xf32>
    %452 = vector.extract_strided_slice %433 {offsets = [0, 256], sizes = [8, 128], strides = [1, 1]} : vector<8x384xf32> to vector<8x128xf32>
    %453 = arith.mulf %442, %452 : vector<8x128xf32>
    %454 = arith.addf %451, %453 : vector<8x128xf32>
    %455 = math.tanh %454 : vector<8x128xf32>
    %cst_122 = arith.constant 1.000000e+00 : f32
    %456 = vector.broadcast %cst_122 : f32 to vector<8x128xf32>
    %457 = arith.subf %456, %450 : vector<8x128xf32>
    %458 = arith.mulf %457, %455 : vector<8x128xf32>
    %459 = arith.mulf %450, %434 : vector<8x128xf32>
    %460 = arith.addf %458, %459 : vector<8x128xf32>
    %461 = tpu.concatenate %432, %460 in 1 : vector<8x128xf32>, vector<8x128xf32> -> vector<8x256xf32>
    %462 = arith.truncf %461 : vector<8x256xf32> to vector<8x256xbf16>
    %cst_123 = arith.constant dense<0.000000e+00> : vector<8x768xf32>
    %463 = tpu.matmul %462, %337, %cst_123 {dimension_numbers = #tpu.dot_dimension_numbers<[1], [0], [0], [1], [0, 0, 1, 1], [], []>} : vector<8x256xbf16>, vector<256x768xbf16>, vector<8x768xf32> -> vector<8x768xf32>
    %464 = vector.broadcast %338 : vector<1x768xf32> to vector<8x768xf32>
    %465 = arith.addf %463, %464 : vector<8x768xf32>
    %466 = vector.extract_strided_slice %465 {offsets = [0, 0], sizes = [8, 384], strides = [1, 1]} : vector<8x768xf32> to vector<8x384xf32>
    %467 = vector.extract_strided_slice %461 {offsets = [0, 0], sizes = [8, 128], strides = [1, 1]} : vector<8x256xf32> to vector<8x128xf32>
    %468 = vector.extract_strided_slice %333 {offsets = [0, 0], sizes = [8, 128], strides = [1, 1]} : vector<8x384xf32> to vector<8x128xf32>
    %469 = vector.extract_strided_slice %466 {offsets = [0, 0], sizes = [8, 128], strides = [1, 1]} : vector<8x384xf32> to vector<8x128xf32>
    %470 = arith.addf %468, %469 : vector<8x128xf32>
    %471 = arith.negf %470 : vector<8x128xf32>
    %472 = math.exp %471 : vector<8x128xf32>
    %cst_124 = arith.constant 1.000000e+00 : f32
    %473 = vector.broadcast %cst_124 : f32 to vector<8x128xf32>
    %474 = arith.addf %473, %472 : vector<8x128xf32>
    %475 = arith.divf %473, %474 : vector<8x128xf32>
    %476 = vector.extract_strided_slice %333 {offsets = [0, 128], sizes = [8, 128], strides = [1, 1]} : vector<8x384xf32> to vector<8x128xf32>
    %477 = vector.extract_strided_slice %466 {offsets = [0, 128], sizes = [8, 128], strides = [1, 1]} : vector<8x384xf32> to vector<8x128xf32>
    %478 = arith.addf %476, %477 : vector<8x128xf32>
    %479 = arith.negf %478 : vector<8x128xf32>
    %480 = math.exp %479 : vector<8x128xf32>
    %cst_125 = arith.constant 1.000000e+00 : f32
    %481 = vector.broadcast %cst_125 : f32 to vector<8x128xf32>
    %482 = arith.addf %481, %480 : vector<8x128xf32>
    %483 = arith.divf %481, %482 : vector<8x128xf32>
    %484 = vector.extract_strided_slice %333 {offsets = [0, 256], sizes = [8, 128], strides = [1, 1]} : vector<8x384xf32> to vector<8x128xf32>
    %485 = vector.extract_strided_slice %466 {offsets = [0, 256], sizes = [8, 128], strides = [1, 1]} : vector<8x384xf32> to vector<8x128xf32>
    %486 = arith.mulf %475, %485 : vector<8x128xf32>
    %487 = arith.addf %484, %486 : vector<8x128xf32>
    %488 = math.tanh %487 : vector<8x128xf32>
    %cst_126 = arith.constant 1.000000e+00 : f32
    %489 = vector.broadcast %cst_126 : f32 to vector<8x128xf32>
    %490 = arith.subf %489, %483 : vector<8x128xf32>
    %491 = arith.mulf %490, %488 : vector<8x128xf32>
    %492 = arith.mulf %483, %467 : vector<8x128xf32>
    %493 = arith.addf %491, %492 : vector<8x128xf32>
    %494 = vector.extract_strided_slice %465 {offsets = [0, 384], sizes = [8, 384], strides = [1, 1]} : vector<8x768xf32> to vector<8x384xf32>
    %495 = vector.extract_strided_slice %461 {offsets = [0, 128], sizes = [8, 128], strides = [1, 1]} : vector<8x256xf32> to vector<8x128xf32>
    %496 = vector.extract_strided_slice %334 {offsets = [0, 0], sizes = [8, 128], strides = [1, 1]} : vector<8x384xf32> to vector<8x128xf32>
    %497 = vector.extract_strided_slice %494 {offsets = [0, 0], sizes = [8, 128], strides = [1, 1]} : vector<8x384xf32> to vector<8x128xf32>
    %498 = arith.addf %496, %497 : vector<8x128xf32>
    %499 = arith.negf %498 : vector<8x128xf32>
    %500 = math.exp %499 : vector<8x128xf32>
    %cst_127 = arith.constant 1.000000e+00 : f32
    %501 = vector.broadcast %cst_127 : f32 to vector<8x128xf32>
    %502 = arith.addf %501, %500 : vector<8x128xf32>
    %503 = arith.divf %501, %502 : vector<8x128xf32>
    %504 = vector.extract_strided_slice %334 {offsets = [0, 128], sizes = [8, 128], strides = [1, 1]} : vector<8x384xf32> to vector<8x128xf32>
    %505 = vector.extract_strided_slice %494 {offsets = [0, 128], sizes = [8, 128], strides = [1, 1]} : vector<8x384xf32> to vector<8x128xf32>
    %506 = arith.addf %504, %505 : vector<8x128xf32>
    %507 = arith.negf %506 : vector<8x128xf32>
    %508 = math.exp %507 : vector<8x128xf32>
    %cst_128 = arith.constant 1.000000e+00 : f32
    %509 = vector.broadcast %cst_128 : f32 to vector<8x128xf32>
    %510 = arith.addf %509, %508 : vector<8x128xf32>
    %511 = arith.divf %509, %510 : vector<8x128xf32>
    %512 = vector.extract_strided_slice %334 {offsets = [0, 256], sizes = [8, 128], strides = [1, 1]} : vector<8x384xf32> to vector<8x128xf32>
    %513 = vector.extract_strided_slice %494 {offsets = [0, 256], sizes = [8, 128], strides = [1, 1]} : vector<8x384xf32> to vector<8x128xf32>
    %514 = arith.mulf %503, %513 : vector<8x128xf32>
    %515 = arith.addf %512, %514 : vector<8x128xf32>
    %516 = math.tanh %515 : vector<8x128xf32>
    %cst_129 = arith.constant 1.000000e+00 : f32
    %517 = vector.broadcast %cst_129 : f32 to vector<8x128xf32>
    %518 = arith.subf %517, %511 : vector<8x128xf32>
    %519 = arith.mulf %518, %516 : vector<8x128xf32>
    %520 = arith.mulf %511, %495 : vector<8x128xf32>
    %521 = arith.addf %519, %520 : vector<8x128xf32>
    %522 = tpu.concatenate %371, %432, %493, %399, %460, %521 in 1 : vector<8x128xf32>, vector<8x128xf32>, vector<8x128xf32>, vector<8x128xf32>, vector<8x128xf32>, vector<8x128xf32> -> vector<8x768xf32>
    %c0_130 = arith.constant 0 : index
    %c0_131 = arith.constant 0 : index
    %523 = vector.load %arg13[%c0_130, %c0_131] : memref<768x256xbf16, #tpu.memory_space<vmem>>, vector<768x256xbf16>
    %524 = arith.truncf %522 : vector<8x768xf32> to vector<8x768xbf16>
    %cst_132 = arith.constant dense<0.000000e+00> : vector<8x256xf32>
    %525 = tpu.matmul %524, %523, %cst_132 {dimension_numbers = #tpu.dot_dimension_numbers<[1], [0], [0], [1], [0, 0, 1, 1], [], []>} : vector<8x768xbf16>, vector<768x256xbf16>, vector<8x256xf32> -> vector<8x256xf32>
    %c0_133 = arith.constant 0 : index
    %c0_134 = arith.constant 0 : index
    %526 = vector.load %arg14[%c0_133, %c0_134] : memref<1x256xf32, #tpu.memory_space<vmem>>, vector<1x256xf32>
    %527 = vector.broadcast %526 : vector<1x256xf32> to vector<8x256xf32>
    %528 = arith.addf %525, %527 : vector<8x256xf32>
    %cst_135 = arith.constant 0.000000e+00 : f32
    %529 = vector.broadcast %cst_135 : f32 to vector<8x256xf32>
    %530 = arith.maximumf %528, %529 : vector<8x256xf32>
    %c544 = arith.constant 544 : index
    %c0_136 = arith.constant 0 : index
    %531 = vector.load %arg9[%c544, %c0_136] : memref<800x128xbf16, #tpu.memory_space<vmem>>, vector<256x128xbf16>
    %532 = arith.truncf %530 : vector<8x256xf32> to vector<8x256xbf16>
    %cst_137 = arith.constant dense<0.000000e+00> : vector<8x128xf32>
    %533 = tpu.matmul %532, %531, %cst_137 {dimension_numbers = #tpu.dot_dimension_numbers<[1], [0], [0], [1], [0, 0, 1, 1], [], []>} : vector<8x256xbf16>, vector<256x128xbf16>, vector<8x128xf32> -> vector<8x128xf32>
    %534 = vector.extract_strided_slice %2 {offsets = [7, 0], sizes = [1, 128], strides = [1, 1]} : vector<8x128xf32> to vector<1x128xf32>
    %535 = vector.broadcast %534 : vector<1x128xf32> to vector<8x128xf32>
    %536 = arith.addf %533, %535 : vector<8x128xf32>
    %c0_138 = arith.constant 0 : index
    %c0_139 = arith.constant 0 : index
    %c0_140 = arith.constant 0 : index
    %537 = vector.load %arg16[%c0_138, %c0_139, %c0_140] : memref<2x8x128xf32, #tpu.memory_space<vmem>>, vector<1x8x128xf32>
    %538 = vector.shape_cast %537 : vector<1x8x128xf32> to vector<8x128xf32>
    %539 = vector.shape_cast %536 : vector<8x128xf32> to vector<1x8x128xf32>
    tpu.vector_store %arg16[%c0_138, %c0_139, %c0_140], %539 {strides = array<i32>} : memref<2x8x128xf32, #tpu.memory_space<vmem>>, vector<1x8x128xf32>,
    return
  }
}

</mosaic_0001>

<llo_original>
// kernel: union_model_forward.1
$region0: #{union_model_forward.1}
  #allocation0 [shape = 'u32[]', space=smem, size = 0x4, offset = 0x4, fixed_abs, tag = 'smem constant byte address 0x4 - core index']
  #allocation1 [shape = 'u32[144,128]{1,0:T(1,128)}', space=vmem, size = 0x12000, scoped, tag = 'internal scratch']
  #allocation2 [shape = 'bf16[896,768]{1,0:T(16,128)(2,1)}', space=vmem, size = 0x150000, scoped, tag = 'scratch operand']
  #allocation3 [shape = 's32[1]{0}', space=sflag, size = 0x4, scoped, tag = 'scratch operand']
  #allocation25 [shape = 's32[]', space=sflag, size = 0x4, offset = 0, fixed_abs, tag = 'sflag constant byte address 0x0 - dummy sync flag']
  %s0 = inlined_call_operand.vmem [shape: f32[8,32], index: 0, kind: input, shape index: {}]
  %s1 = inlined_call_operand.hbm [shape: f32[8,64], index: 1, kind: input, shape index: {}]
  %s2 = inlined_call_operand.hbm [shape: f32[8,64], index: 2, kind: input, shape index: {}]
  %s3 = inlined_call_operand.hbm [shape: f32[8,64], index: 3, kind: input, shape index: {}]
  %s4 = inlined_call_operand.vmem [shape: f32[16,300], index: 4, kind: input, shape index: {}]
  %s5 = inlined_call_operand.hbm [shape: f32[2], index: 5, kind: input, shape index: {}]
  %s6 = inlined_call_operand.hbm [shape: bf16[3,64,512], index: 6, kind: input, shape index: {}]
  %s7 = inlined_call_operand.hbm [shape: f32[3,1,512], index: 7, kind: input, shape index: {}]
  %s8 = inlined_call_operand.hbm [shape: bf16[3,512,128], index: 8, kind: input, shape index: {}]
  %s9 = inlined_call_operand.hbm [shape: bf16[800,128], index: 9, kind: input, shape index: {}]
  %s10 = inlined_call_operand.hbm [shape: f32[8,128], index: 10, kind: input, shape index: {}]
  %s11 = inlined_call_operand.hbm [shape: bf16[300,768], index: 11, kind: input, shape index: {}]
  %s12 = inlined_call_operand.hbm [shape: f32[4,768], index: 12, kind: input, shape index: {}]
  %s13 = inlined_call_operand.hbm [shape: bf16[768,256], index: 13, kind: input, shape index: {}]
  %s14 = inlined_call_operand.hbm [shape: f32[1,256], index: 14, kind: input, shape index: {}]
  %s15 = inlined_call_operand.hbm [shape: bf16[896,768], index: 15, kind: input, shape index: {}]
  %s16 = inlined_call_operand.vmem [shape: f32[2,8,128], index: 16, kind: output, shape index: {0}]
  %s17 = inlined_call_operand.vmem [shape: f32[3,8,128], index: 17, kind: output, shape index: {1}]
  %18 = xla_tuple %s16, %s17
  %s19 = sld [smem:[#allocation0]]
  $region130: #{union_model_forward.1} parent=0
    _
  %s21 = ssub.s32 1, %s19
  %s22 = scalar_select 0, %s21, %s19
  $region1: #{union_model_forward.1} parent=0
    #allocation4 [shape = 'u8[4096]{0}', space=vmem, size = 0x1000, scoped, tag = 'input window, operand 1, single buffered']
    #allocation5 [shape = 's32[1]{0}', space=sflag, size = 0x4, scoped, tag = 'scoped memory for union_model_forward.1']
    #allocation6 [shape = 's32[1]{0}', space=sflag, size = 0x4, scoped, tag = 'scoped memory for union_model_forward.1']
    #allocation7 [shape = 'u8[4096]{0}', space=vmem, size = 0x1000, scoped, tag = 'input window, operand 2, single buffered']
    #allocation8 [shape = 's32[1]{0}', space=sflag, size = 0x4, scoped, tag = 'scoped memory for union_model_forward.1']
    #allocation9 [shape = 'u8[4096]{0}', space=vmem, size = 0x1000, scoped, tag = 'input window, operand 3, single buffered']
    #allocation10 [shape = 'u8[512]{0}', space=smem, size = 0x200, scoped, tag = 'input window, operand 5, single buffered']
    #allocation11 [shape = 'u8[196608]{0}', space=vmem, size = 0x30000, scoped, tag = 'input window, operand 6, single buffered']
    #allocation12 [shape = 's32[1]{0}', space=sflag, size = 0x4, scoped, tag = 'scoped memory for union_model_forward.1']
    #allocation13 [shape = 'u8[6144]{0}', space=vmem, size = 0x1800, scoped, tag = 'input window, operand 7, single buffered']
    #allocation14 [shape = 'u8[393216]{0}', space=vmem, size = 0x60000, scoped, tag = 'input window, operand 8, single buffered']
    #allocation15 [shape = 's32[1]{0}', space=sflag, size = 0x4, scoped, tag = 'scoped memory for union_model_forward.1']
    #allocation16 [shape = 'u8[204800]{0}', space=vmem, size = 0x32000, scoped, tag = 'input window, operand 9, single buffered']
    #allocation17 [shape = 'u8[4096]{0}', space=vmem, size = 0x1000, scoped, tag = 'input window, operand 10, single buffered']
    #allocation18 [shape = 's32[1]{0}', space=sflag, size = 0x4, scoped, tag = 'scoped memory for union_model_forward.1']
    #allocation19 [shape = 'u8[466944]{0}', space=vmem, size = 0x72000, scoped, tag = 'input window, operand 11, single buffered']
    #allocation20 [shape = 'u8[12288]{0}', space=vmem, size = 0x3000, scoped, tag = 'input window, operand 12, single buffered']
    #allocation21 [shape = 's32[1]{0}', space=sflag, size = 0x4, scoped, tag = 'scoped memory for union_model_forward.1']
    #allocation22 [shape = 'u8[393216]{0}', space=vmem, size = 0x60000, scoped, tag = 'input window, operand 13, single buffered']
    #allocation23 [shape = 'u8[1024]{0}', space=vmem, size = 0x400, scoped, tag = 'input window, operand 14, single buffered']
    #allocation24 [shape = 's32[1]{0}', space=sflag, size = 0x4, scoped, tag = 'scoped memory for union_model_forward.1']
    #allocation26 [shape = 'u32[9]{0}', space=smem, size = 0x24, scoped, tag = 'DMA stride descriptor']
    %23 = vsyncpa [#allocation5], 0
    %24 = vsyncpa [#allocation8], 0
    %25 = vsyncpa [#allocation6], 0
    %26 = vsyncpa [#allocation12], 0
    %27 = vsyncpa [#allocation15], 0
    %28 = vsyncpa [#allocation18], 0
    %29 = vsyncpa [#allocation21], 0
    %30 = vsyncpa [#allocation24], 0
    // Predicated region
    $region2: #{union_model_forward.1} parent=1 // pred_check
      _
    $region3: #{union_model_forward.1} parent=1 // pred_check_branch
      %32 = sbr.rel (0) target = $region5
    $region4: #{union_model_forward.1} parent=1 // pred_region
      _
    $region5: #{union_model_forward.1} parent=1 // pred_fallthru
      _
    // Predicated region
    $region6: #{union_model_forward.1} parent=1 // pred_check
      _
    $region7: #{union_model_forward.1} parent=1 // pred_check_branch
      %34 = sbr.rel (0) target = $region9
    $region8: #{union_model_forward.1} parent=1 // pred_region
      %s36 = ssub.s32 128, 128
      %37 = vsyncadd [#allocation5], %s36
      %s39 = sshll.u32 [#allocation4], 4
      %s40 = int_to_ptr.vmem [resolvable:$true] %s39
      %42 = dma.hbm_to_vmem [thread:$0]  %s1, 128, %s40, [#allocation5]
    $region9: #{union_model_forward.1} parent=1 // pred_fallthru
      _
    // Predicated region
    $region10: #{union_model_forward.1} parent=1 // pred_check
      _
    $region11: #{union_model_forward.1} parent=1 // pred_check_branch
      %44 = sbr.rel (0) target = $region13
    $region12: #{union_model_forward.1} parent=1 // pred_region
      %s46 = ssub.s32 128, 128
      %47 = vsyncadd [#allocation8], %s46
      %s49 = sshll.u32 [#allocation7], 4
      %s50 = int_to_ptr.vmem [resolvable:$true] %s49
      %52 = dma.hbm_to_vmem [thread:$0]  %s2, 128, %s50, [#allocation8]
    $region13: #{union_model_forward.1} parent=1 // pred_fallthru
      _
    // Predicated region
    $region14: #{union_model_forward.1} parent=1 // pred_check
      _
    $region15: #{union_model_forward.1} parent=1 // pred_check_branch
      %54 = sbr.rel (0) target = $region17
    $region16: #{union_model_forward.1} parent=1 // pred_region
      %s56 = ssub.s32 128, 128
      %57 = vsyncadd [#allocation8], %s56
      %s59 = sshll.u32 [#allocation9], 4
      %s60 = int_to_ptr.vmem [resolvable:$true] %s59
      %62 = dma.hbm_to_vmem [thread:$0]  %s3, 128, %s60, [#allocation8]
    $region17: #{union_model_forward.1} parent=1 // pred_fallthru
      _
    // Predicated region
    $region18: #{union_model_forward.1} parent=1 // pred_check
      _
    $region19: #{union_model_forward.1} parent=1 // pred_check_branch
      %64 = sbr.rel (0) target = $region21
    $region20: #{union_model_forward.1} parent=1 // pred_region
      _
    $region21: #{union_model_forward.1} parent=1 // pred_fallthru
      _
    // Predicated region
    $region22: #{union_model_forward.1} parent=1 // pred_check
      _
    $region23: #{union_model_forward.1} parent=1 // pred_check_branch
      %66 = sbr.rel (0) target = $region25
    $region24: #{union_model_forward.1} parent=1 // pred_region
      %s68 = ssub.s32 16, 16
      %69 = vsyncadd [#allocation6], %s68
      %72 = dma.hbm_to_smem %s5, 16, [#allocation10], [#allocation6]
    $region25: #{union_model_forward.1} parent=1 // pred_fallthru
      _
    // Predicated region
    $region26: #{union_model_forward.1} parent=1 // pred_check
      _
    $region27: #{union_model_forward.1} parent=1 // pred_check_branch
      %74 = sbr.rel (0) target = $region29
    $region28: #{union_model_forward.1} parent=1 // pred_region
      %s76 = ssub.s32 6144, 6144
      %77 = vsyncadd [#allocation12], %s76
      %s78 = sshll.u32 [#allocation11], 4
      %s79 = int_to_ptr.vmem [resolvable:$true] %s78
      %84 = dma.hbm_to_vmem [thread:$0]  %s6, 6144, %s79, [#allocation12], 256, 256, 16
    $region29: #{union_model_forward.1} parent=1 // pred_fallthru
      _
    // Predicated region
    $region30: #{union_model_forward.1} parent=1 // pred_check
      _
    $region31: #{union_model_forward.1} parent=1 // pred_check_branch
      %86 = sbr.rel (0) target = $region33
    $region32: #{union_model_forward.1} parent=1 // pred_region
      %s88 = ssub.s32 192, 192
      %89 = vsyncadd [#allocation12], %s88
      %s90 = sshll.u32 [#allocation13], 4
      %s91 = int_to_ptr.vmem [resolvable:$true] %s90
      %96 = dma.hbm_to_vmem [thread:$0]  %s7, 192, %s91, [#allocation12], 64, 64, 4
    $region33: #{union_model_forward.1} parent=1 // pred_fallthru
      _
    // Predicated region
    $region34: #{union_model_forward.1} parent=1 // pred_check
      _
    $region35: #{union_model_forward.1} parent=1 // pred_check_branch
      %98 = sbr.rel (0) target = $region37
    $region36: #{union_model_forward.1} parent=1 // pred_region
      %s100 = ssub.s32 12288, 12288
      %101 = vsyncadd [#allocation15], %s100
      %s102 = sshll.u32 [#allocation14], 4
      %s103 = int_to_ptr.vmem [resolvable:$true] %s102
      %108 = dma.hbm_to_vmem [thread:$0]  %s8, 12288, %s103, [#allocation15], 64, 64, 4
    $region37: #{union_model_forward.1} parent=1 // pred_fallthru
      _
    // Predicated region
    $region38: #{union_model_forward.1} parent=1 // pred_check
      _
    $region39: #{union_model_forward.1} parent=1 // pred_check_branch
      %110 = sbr.rel (0) target = $region41
    $region40: #{union_model_forward.1} parent=1 // pred_region
      %s112 = ssub.s32 6400, 6400
      %113 = vsyncadd [#allocation15], %s112
      %s114 = sshll.u32 [#allocation16], 4
      %s115 = int_to_ptr.vmem [resolvable:$true] %s114
      %120 = dma.hbm_to_vmem [thread:$0]  %s9, 6400, %s115, [#allocation15], 64, 64, 4
    $region41: #{union_model_forward.1} parent=1 // pred_fallthru
      _
    // Predicated region
    $region42: #{union_model_forward.1} parent=1 // pred_check
      _
    $region43: #{union_model_forward.1} parent=1 // pred_check_branch
      %122 = sbr.rel (0) target = $region45
    $region44: #{union_model_forward.1} parent=1 // pred_region
      %s124 = ssub.s32 128, 128
      %125 = vsyncadd [#allocation18], %s124
      %s127 = sshll.u32 [#allocation17], 4
      %s128 = int_to_ptr.vmem [resolvable:$true] %s127
      %130 = dma.hbm_to_vmem [thread:$0]  %s10, 128, %s128, [#allocation18]
    $region45: #{union_model_forward.1} parent=1 // pred_fallthru
      _
    // Predicated region
    $region46: #{union_model_forward.1} parent=1 // pred_check
      _
    $region47: #{union_model_forward.1} parent=1 // pred_check_branch
      %132 = sbr.rel (0) target = $region49
    $region48: #{union_model_forward.1} parent=1 // pred_region
      %s134 = ssub.s32 14592, 14592
      %135 = vsyncadd [#allocation18], %s134
      %s136 = sshll.u32 [#allocation19], 4
      %s137 = int_to_ptr.vmem [resolvable:$true] %s136
      %142 = dma.hbm_to_vmem [thread:$0]  %s11, 14592, %s137, [#allocation18], 384, 384, 24
    $region49: #{union_model_forward.1} parent=1 // pred_fallthru
      _
    // Predicated region
    $region50: #{union_model_forward.1} parent=1 // pred_check
      _
    $region51: #{union_model_forward.1} parent=1 // pred_check_branch
      %144 = sbr.rel (0) target = $region53
    $region52: #{union_model_forward.1} parent=1 // pred_region
      %s146 = ssub.s32 384, 384
      %147 = vsyncadd [#allocation21], %s146
      %s149 = sshll.u32 [#allocation20], 4
      %s150 = int_to_ptr.vmem [resolvable:$true] %s149
      %152 = dma.hbm_to_vmem [thread:$0]  %s12, 384, %s150, [#allocation21]
    $region53: #{union_model_forward.1} parent=1 // pred_fallthru
      _
    // Predicated region
    $region54: #{union_model_forward.1} parent=1 // pred_check
      _
    $region55: #{union_model_forward.1} parent=1 // pred_check_branch
      %154 = sbr.rel (0) target = $region57
    $region56: #{union_model_forward.1} parent=1 // pred_region
      %s156 = ssub.s32 12288, 12288
      %157 = vsyncadd [#allocation21], %s156
      %s158 = sshll.u32 [#allocation22], 4
      %s159 = int_to_ptr.vmem [resolvable:$true] %s158
      %164 = dma.hbm_to_vmem [thread:$0]  %s13, 12288, %s159, [#allocation21], 128, 128, 8
    $region57: #{union_model_forward.1} parent=1 // pred_fallthru
      _
    // Predicated region
    $region58: #{union_model_forward.1} parent=1 // pred_check
      _
    $region59: #{union_model_forward.1} parent=1 // pred_check_branch
      %166 = sbr.rel (0) target = $region61
    $region60: #{union_model_forward.1} parent=1 // pred_region
      %s168 = ssub.s32 32, 32
      %169 = vsyncadd [#allocation24], %s168
      %s171 = sshll.u32 [#allocation23], 4
      %s172 = int_to_ptr.vmem [resolvable:$true] %s171
      %174 = dma.hbm_to_vmem [thread:$0]  %s14, 32, %s172, [#allocation24]
    $region61: #{union_model_forward.1} parent=1 // pred_fallthru
      _
    // Predicated region
    $region62: #{union_model_forward.1} parent=1 // pred_check
      _
    $region63: #{union_model_forward.1} parent=1 // pred_check_branch
      %176 = sbr.rel (0) target = $region65
    $region64: #{union_model_forward.1} parent=1 // pred_region
      %177 = dma.done [#allocation5], 128
    $region65: #{union_model_forward.1} parent=1 // pred_fallthru
      _
    // Predicated region
    $region66: #{union_model_forward.1} parent=1 // pred_check
      _
    $region67: #{union_model_forward.1} parent=1 // pred_check_branch
      %179 = sbr.rel (0) target = $region69
    $region68: #{union_model_forward.1} parent=1 // pred_region
      %180 = dma.done [#allocation8], 128
    $region69: #{union_model_forward.1} parent=1 // pred_fallthru
      _
    // Predicated region
    $region70: #{union_model_forward.1} parent=1 // pred_check
      _
    $region71: #{union_model_forward.1} parent=1 // pred_check_branch
      %182 = sbr.rel (0) target = $region73
    $region72: #{union_model_forward.1} parent=1 // pred_region
      %183 = dma.done [#allocation8], 128
    $region73: #{union_model_forward.1} parent=1 // pred_fallthru
      _
    // Predicated region
    $region74: #{union_model_forward.1} parent=1 // pred_check
      _
    $region75: #{union_model_forward.1} parent=1 // pred_check_branch
      %185 = sbr.rel (0) target = $region77
    $region76: #{union_model_forward.1} parent=1 // pred_region
      %186 = dma.done [#allocation6], 16
    $region77: #{union_model_forward.1} parent=1 // pred_fallthru
      _
    // Predicated region
    $region78: #{union_model_forward.1} parent=1 // pred_check
      _
    $region79: #{union_model_forward.1} parent=1 // pred_check_branch
      %188 = sbr.rel (0) target = $region81
    $region80: #{union_model_forward.1} parent=1 // pred_region
      %189 = dma.done [#allocation12], 6144
    $region81: #{union_model_forward.1} parent=1 // pred_fallthru
      _
    // Predicated region
    $region82: #{union_model_forward.1} parent=1 // pred_check
      _
    $region83: #{union_model_forward.1} parent=1 // pred_check_branch
      %191 = sbr.rel (0) target = $region85
    $region84: #{union_model_forward.1} parent=1 // pred_region
      %192 = dma.done [#allocation12], 192
    $region85: #{union_model_forward.1} parent=1 // pred_fallthru
      _
    // Predicated region
    $region86: #{union_model_forward.1} parent=1 // pred_check
      _
    $region87: #{union_model_forward.1} parent=1 // pred_check_branch
      %194 = sbr.rel (0) target = $region89
    $region88: #{union_model_forward.1} parent=1 // pred_region
      %195 = dma.done [#allocation15], 12288
    $region89: #{union_model_forward.1} parent=1 // pred_fallthru
      _
    // Predicated region
    $region90: #{union_model_forward.1} parent=1 // pred_check
      _
    $region91: #{union_model_forward.1} parent=1 // pred_check_branch
      %197 = sbr.rel (0) target = $region93
    $region92: #{union_model_forward.1} parent=1 // pred_region
      %198 = dma.done [#allocation15], 6400
    $region93: #{union_model_forward.1} parent=1 // pred_fallthru
      _
    // Predicated region
    $region94: #{union_model_forward.1} parent=1 // pred_check
      _
    $region95: #{union_model_forward.1} parent=1 // pred_check_branch
      %200 = sbr.rel (0) target = $region97
    $region96: #{union_model_forward.1} parent=1 // pred_region
      %201 = dma.done [#allocation18], 128
    $region97: #{union_model_forward.1} parent=1 // pred_fallthru
      _
    // Predicated region
    $region98: #{union_model_forward.1} parent=1 // pred_check
      _
    $region99: #{union_model_forward.1} parent=1 // pred_check_branch
      %203 = sbr.rel (0) target = $region101
    $region100: #{union_model_forward.1} parent=1 // pred_region
      %204 = dma.done [#allocation18], 14592
    $region101: #{union_model_forward.1} parent=1 // pred_fallthru
      _
    // Predicated region
    $region102: #{union_model_forward.1} parent=1 // pred_check
      _
    $region103: #{union_model_forward.1} parent=1 // pred_check_branch
      %206 = sbr.rel (0) target = $region105
    $region104: #{union_model_forward.1} parent=1 // pred_region
      %207 = dma.done [#allocation21], 384
    $region105: #{union_model_forward.1} parent=1 // pred_fallthru
      _
    // Predicated region
    $region106: #{union_model_forward.1} parent=1 // pred_check
      _
    $region107: #{union_model_forward.1} parent=1 // pred_check_branch
      %209 = sbr.rel (0) target = $region109
    $region108: #{union_model_forward.1} parent=1 // pred_region
      %210 = dma.done [#allocation21], 12288
    $region109: #{union_model_forward.1} parent=1 // pred_fallthru
      _
    // Predicated region
    $region110: #{union_model_forward.1} parent=1 // pred_check
      _
    $region111: #{union_model_forward.1} parent=1 // pred_check_branch
      %212 = sbr.rel (0) target = $region113
    $region112: #{union_model_forward.1} parent=1 // pred_region
      %213 = dma.done [#allocation24], 32
    $region113: #{union_model_forward.1} parent=1 // pred_fallthru
      _
    %214 = sfence
    %s217 = sshll.u32 1, 14
    %s218 = sxor.u32 4294967295, %s217
    %s220 = sld [smem:[#allocation0]]
    %s221 = sadd.s32 2, %s220
    %s223 = sshll.u32 7, 26
    %s224 = sxor.u32 4294967295, %s223
    %s225 = sand.u32 0, %s224
    %s226 = sshll.u32 %s221, 26
    %s227 = sor.u32 %s225, %s226
    %s228 = sshll.u32 [#allocation2], 4
    %s229 = int_to_ptr.vmem [resolvable:$true] %s228
    %232 = sst [smem:[#allocation26]] 768
    %s233 = scalar_lea.smem [#allocation26], 1
    %234 = sst [smem:[%s233]] 768
    %s235 = scalar_lea.smem [#allocation26], 2
    %236 = sst [smem:[%s235]] 6
    %s237 = scalar_lea.smem [#allocation26], 3
    %238 = sst [smem:[%s237]] 64
    %s239 = scalar_lea.smem [#allocation26], 4
    %240 = sst [smem:[%s239]] 128
    %s241 = scalar_lea.smem [#allocation26], 5
    %242 = sst [smem:[%s241]] 2
    %s243 = scalar_lea.smem [#allocation26], 6
    %244 = sst [smem:[%s243]] 384
    %s245 = scalar_lea.smem [#allocation26], 7
    %246 = sst [smem:[%s245]] 64
    %s247 = scalar_lea.smem [#allocation26], 8
    %248 = sst [smem:[%s247]] 4
    %250 = dma.general %s15, 43008, %s229, [#allocation3], [#allocation25], [#allocation26], %s227, 0
    %v251 = vld [vmem:[#allocation17] sm:$0xff]
    %v252 = vld [vmem:[#allocation20] sm:$0xff]
    %v253 = vld [vmem:[#allocation20 + $0x8] sm:$0xff]
    %v254 = vld [vmem:[#allocation20 + $0x10] sm:$0xff]
    %v255 = vld [vmem:[#allocation4] sm:$0xff]
    %v256 = vld [vmem:[#allocation11] sm:$0xff]
    %v257 = vld [vmem:[#allocation11 + $0x8] sm:$0xff]
    %v258 = vld [vmem:[#allocation11 + $0x10] sm:$0xff]
    %v259 = vld [vmem:[#allocation11 + $0x18] sm:$0xff]
    %v260 = vld [vmem:[#allocation11 + $0x20] sm:$0xff]
    %v261 = vld [vmem:[#allocation11 + $0x28] sm:$0xff]
    %v262 = vld [vmem:[#allocation11 + $0x30] sm:$0xff]
    %v263 = vld [vmem:[#allocation11 + $0x38] sm:$0xff]
    %v264 = vld [vmem:[#allocation11 + $0x40] sm:$0xff]
    %v265 = vld [vmem:[#allocation11 + $0x48] sm:$0xff]
    %v266 = vld [vmem:[#allocation11 + $0x50] sm:$0xff]
    %v267 = vld [vmem:[#allocation11 + $0x58] sm:$0xff]
    %v268 = vld [vmem:[#allocation11 + $0x60] sm:$0xff]
    %v269 = vld [vmem:[#allocation11 + $0x68] sm:$0xff]
    %v270 = vld [vmem:[#allocation11 + $0x70] sm:$0xff]
    %v271 = vld [vmem:[#allocation11 + $0x78] sm:$0xff]
    %v272 = vpack.c.bf16 %v255, %v255
    %v273 = vld [vmem:[#allocation13] sm:$0xf]
    %v275 = vlaneseq
    %v276 = vshrl.u32 %v275, 7
    %v277 = vsub.s32 0, %v276
    %v278 = vrot.slane %v273, %v277
    %v279 = vlaneseq
    %v280 = vshrl.u32 %v279, 7
    %v281 = vsub.s32 1, %v280
    %v282 = vrot.slane %v273, %v281
    %v283 = vlaneseq
    %v284 = vshrl.u32 %v283, 7
    %v285 = vsub.s32 2, %v284
    %v286 = vrot.slane %v273, %v285
    %v287 = vlaneseq
    %v288 = vshrl.u32 %v287, 7
    %v289 = vsub.s32 3, %v288
    %v290 = vrot.slane %v273, %v289
    %v311 = vunpack.c.l.b16 %v256
    %v312 = vunpack.c.h.b16 %v256
    %v313 = vunpack.c.l.b16 %v257
    %v314 = vunpack.c.h.b16 %v257
    %v315 = vunpack.c.l.b16 %v258
    %v316 = vunpack.c.h.b16 %v258
    %v317 = vunpack.c.l.b16 %v259
    %v318 = vunpack.c.h.b16 %v259
    %v319 = vunpack.c.l.b16 %v260
    %v320 = vunpack.c.h.b16 %v260
    %v321 = vunpack.c.l.b16 %v261
    %v322 = vunpack.c.h.b16 %v261
    %v323 = vunpack.c.l.b16 %v262
    %v324 = vunpack.c.h.b16 %v262
    %v325 = vunpack.c.l.b16 %v263
    %v326 = vunpack.c.h.b16 %v263
    %v327 = vunpack.c.l.b16 %v264
    %v328 = vunpack.c.h.b16 %v264
    %v329 = vunpack.c.l.b16 %v265
    %v330 = vunpack.c.h.b16 %v265
    %v331 = vunpack.c.l.b16 %v266
    %v332 = vunpack.c.h.b16 %v266
    %v333 = vunpack.c.l.b16 %v267
    %v334 = vunpack.c.h.b16 %v267
    %v335 = vunpack.c.l.b16 %v268
    %v336 = vunpack.c.h.b16 %v268
    %v337 = vunpack.c.l.b16 %v269
    %v338 = vunpack.c.h.b16 %v269
    %v339 = vunpack.c.l.b16 %v270
    %v340 = vunpack.c.h.b16 %v270
    %v341 = vunpack.c.l.b16 %v271
    %v342 = vunpack.c.h.b16 %v271
    %v343 = vpack.c.b16 %v315, %v311
    %v344 = vpack.c.b16 %v316, %v312
    %v345 = vpack.c.b16 %v317, %v313
    %v346 = vpack.c.b16 %v318, %v314
    %v347 = vpack.c.b16 %v323, %v319
    %v348 = vpack.c.b16 %v324, %v320
    %v349 = vpack.c.b16 %v325, %v321
    %v350 = vpack.c.b16 %v326, %v322
    %v351 = vpack.c.b16 %v331, %v327
    %v352 = vpack.c.b16 %v332, %v328
    %v353 = vpack.c.b16 %v333, %v329
    %v354 = vpack.c.b16 %v334, %v330
    %v355 = vpack.c.b16 %v339, %v335
    %v356 = vpack.c.b16 %v340, %v336
    %v357 = vpack.c.b16 %v341, %v337
    %v358 = vpack.c.b16 %v342, %v338
    %vm375 = vcmask 523264
    %v377 = vsel %vm375, %v272, 0
    %379 = vmatprep.subr.bf16.mxu0 %v344
    %380 = vmatpush1.bf16.msra.mxu0 %v343
    %381 = vmatprep.subr.bf16.mxu0 %v348
    %382 = vmatpush1.bf16.msra.mxu0 %v347
    %383 = vmatprep.subr.bf16.mxu0 %v352
    %384 = vmatpush1.bf16.msra.mxu0 %v351
    %385 = vmatprep.subr.bf16.mxu0 %v356
    %386 = vmatpush1.bf16.msra.mxu0 %v355
    %387 = vmatprep.subr.bf16.mxu0 0
    %388 = vmatpush1.bf16.msra.mxu0 0
    %389 = vmatprep.subr.bf16.mxu0 0
    %390 = vmatpush1.bf16.msra.mxu0 0
    %391 = vmatprep.subr.bf16.mxu0 0
    %392 = vmatpush1.bf16.msra.mxu0 0
    %393 = vmatprep.subr.bf16.mxu0 0
    %394 = vmatpush1.bf16.msra.mxu0 0
    %395 = vmatprep.subr.bf16.mxu0 0
    %396 = vmatpush1.bf16.msra.mxu0 0
    %397 = vmatprep.subr.bf16.mxu0 0
    %398 = vmatpush1.bf16.msra.mxu0 0
    %399 = vmatprep.subr.bf16.mxu0 0
    %400 = vmatpush1.bf16.msra.mxu0 0
    %401 = vmatprep.subr.bf16.mxu0 0
    %402 = vmatpush1.bf16.msra.mxu0 0
    %403 = vmatprep.subr.bf16.mxu0 0
    %404 = vmatpush1.bf16.msra.mxu0 0
    %405 = vmatprep.subr.bf16.mxu0 0
    %406 = vmatpush1.bf16.msra.mxu0 0
    %407 = vmatprep.subr.bf16.mxu0 0
    %408 = vmatpush1.bf16.msra.mxu0 0
    %409 = vmatprep.subr.bf16.mxu0 0
    %410 = vmatpush1.bf16.msra.mxu0 0
    %411 = vmatprep.mubr.bf16.mxu0 0
    %412 = vmatmul.mubr.bf16.gmra.mrb[0].mxu0 %v377
    %v413 = vpop.f32.mrb[0].mxu0
    %v414 = vadd.f32 %v278, %v413
    %v415 = vpop.f32.mrb[0].mxu0
    %v416 = vadd.f32 %v282, %v415
    %v417 = vpop.f32.mrb[0].mxu0
    %v418 = vpop.f32.mrb[0].mxu0
    %419 = vdwg.mxu0
    %420 = vmatprep.subr.bf16.mxu0 %v346
    %421 = vmatpush1.bf16.msra.mxu0 %v345
    %422 = vmatprep.subr.bf16.mxu0 %v350
    %423 = vmatpush1.bf16.msra.mxu0 %v349
    %424 = vmatprep.subr.bf16.mxu0 %v354
    %425 = vmatpush1.bf16.msra.mxu0 %v353
    %426 = vmatprep.subr.bf16.mxu0 %v358
    %427 = vmatpush1.bf16.msra.mxu0 %v357
    %428 = vmatprep.subr.bf16.mxu0 0
    %429 = vmatpush1.bf16.msra.mxu0 0
    %430 = vmatprep.subr.bf16.mxu0 0
    %431 = vmatpush1.bf16.msra.mxu0 0
    %432 = vmatprep.subr.bf16.mxu0 0
    %433 = vmatpush1.bf16.msra.mxu0 0
    %434 = vmatprep.subr.bf16.mxu0 0
    %435 = vmatpush1.bf16.msra.mxu0 0
    %436 = vmatprep.subr.bf16.mxu0 0
    %437 = vmatpush1.bf16.msra.mxu0 0
    %438 = vmatprep.subr.bf16.mxu0 0
    %439 = vmatpush1.bf16.msra.mxu0 0
    %440 = vmatprep.subr.bf16.mxu0 0
    %441 = vmatpush1.bf16.msra.mxu0 0
    %442 = vmatprep.subr.bf16.mxu0 0
    %443 = vmatpush1.bf16.msra.mxu0 0
    %444 = vmatprep.subr.bf16.mxu0 0
    %445 = vmatpush1.bf16.msra.mxu0 0
    %446 = vmatprep.subr.bf16.mxu0 0
    %447 = vmatpush1.bf16.msra.mxu0 0
    %448 = vmatprep.subr.bf16.mxu0 0
    %449 = vmatpush1.bf16.msra.mxu0 0
    %450 = vmatprep.subr.bf16.mxu0 0
    %451 = vmatpush1.bf16.msra.mxu0 0
    %452 = vmatprep.mubr.bf16.mxu0 0
    %453 = vmatmul.mubr.bf16.gmra.mrb[0].mxu0 %v377
    %v454 = vpop.f32.mrb[0].mxu0
    %v455 = vadd.f32 %v286, %v454
    %v456 = vpop.f32.mrb[0].mxu0
    %v457 = vadd.f32 %v290, %v456
    %v458 = vpop.f32.mrb[0].mxu0
    %v459 = vpop.f32.mrb[0].mxu0
    %460 = vdwg.mxu0
    %v461 = vmax.f32 %v414, 0.0
    %v462 = vmax.f32 %v416, 0.0
    %v463 = vmax.f32 %v455, 0.0
    %v464 = vmax.f32 %v457, 0.0
    %v465 = vld [vmem:[#allocation14] sm:$0xf]
    %v466 = vld [vmem:[#allocation14 + $0x4] sm:$0xf]
    %v467 = vld [vmem:[#allocation14 + $0x8] sm:$0xf]
    %v468 = vld [vmem:[#allocation14 + $0xc] sm:$0xf]
    %v469 = vld [vmem:[#allocation14 + $0x10] sm:$0xf]
    %v470 = vld [vmem:[#allocation14 + $0x14] sm:$0xf]
    %v471 = vld [vmem:[#allocation14 + $0x18] sm:$0xf]
    %v472 = vld [vmem:[#allocation14 + $0x1c] sm:$0xf]
    %v473 = vld [vmem:[#allocation14 + $0x20] sm:$0xf]
    %v474 = vld [vmem:[#allocation14 + $0x24] sm:$0xf]
    %v475 = vld [vmem:[#allocation14 + $0x28] sm:$0xf]
    %v476 = vld [vmem:[#allocation14 + $0x2c] sm:$0xf]
    %v477 = vld [vmem:[#allocation14 + $0x30] sm:$0xf]
    %v478 = vld [vmem:[#allocation14 + $0x34] sm:$0xf]
    %v479 = vld [vmem:[#allocation14 + $0x38] sm:$0xf]
    %v480 = vld [vmem:[#allocation14 + $0x3c] sm:$0xf]
    %v481 = vld [vmem:[#allocation14 + $0x40] sm:$0xf]
    %v482 = vld [vmem:[#allocation14 + $0x44] sm:$0xf]
    %v483 = vld [vmem:[#allocation14 + $0x48] sm:$0xf]
    %v484 = vld [vmem:[#allocation14 + $0x4c] sm:$0xf]
    %v485 = vld [vmem:[#allocation14 + $0x50] sm:$0xf]
    %v486 = vld [vmem:[#allocation14 + $0x54] sm:$0xf]
    %v487 = vld [vmem:[#allocation14 + $0x58] sm:$0xf]
    %v488 = vld [vmem:[#allocation14 + $0x5c] sm:$0xf]
    %v489 = vld [vmem:[#allocation14 + $0x60] sm:$0xf]
    %v490 = vld [vmem:[#allocation14 + $0x64] sm:$0xf]
    %v491 = vld [vmem:[#allocation14 + $0x68] sm:$0xf]
    %v492 = vld [vmem:[#allocation14 + $0x6c] sm:$0xf]
    %v493 = vld [vmem:[#allocation14 + $0x70] sm:$0xf]
    %v494 = vld [vmem:[#allocation14 + $0x74] sm:$0xf]
    %v495 = vld [vmem:[#allocation14 + $0x78] sm:$0xf]
    %v496 = vld [vmem:[#allocation14 + $0x7c] sm:$0xf]
    %v497 = vld [vmem:[#allocation14 + $0x80] sm:$0xf]
    %v498 = vld [vmem:[#allocation14 + $0x84] sm:$0xf]
    %v499 = vld [vmem:[#allocation14 + $0x88] sm:$0xf]
    %v500 = vld [vmem:[#allocation14 + $0x8c] sm:$0xf]
    %v501 = vld [vmem:[#allocation14 + $0x90] sm:$0xf]
    %v502 = vld [vmem:[#allocation14 + $0x94] sm:$0xf]
    %v503 = vld [vmem:[#allocation14 + $0x98] sm:$0xf]
    %v504 = vld [vmem:[#allocation14 + $0x9c] sm:$0xf]
    %v505 = vld [vmem:[#allocation14 + $0xa0] sm:$0xf]
    %v506 = vld [vmem:[#allocation14 + $0xa4] sm:$0xf]
    %v507 = vld [vmem:[#allocation14 + $0xa8] sm:$0xf]
    %v508 = vld [vmem:[#allocation14 + $0xac] sm:$0xf]
    %v509 = vld [vmem:[#allocation14 + $0xb0] sm:$0xf]
    %v510 = vld [vmem:[#allocation14 + $0xb4] sm:$0xf]
    %v511 = vld [vmem:[#allocation14 + $0xb8] sm:$0xf]
    %v512 = vld [vmem:[#allocation14 + $0xbc] sm:$0xf]
    %v513 = vld [vmem:[#allocation14 + $0xc0] sm:$0xf]
    %v514 = vld [vmem:[#allocation14 + $0xc4] sm:$0xf]
    %v515 = vld [vmem:[#allocation14 + $0xc8] sm:$0xf]
    %v516 = vld [vmem:[#allocation14 + $0xcc] sm:$0xf]
    %v517 = vld [vmem:[#allocation14 + $0xd0] sm:$0xf]
    %v518 = vld [vmem:[#allocation14 + $0xd4] sm:$0xf]
    %v519 = vld [vmem:[#allocation14 + $0xd8] sm:$0xf]
    %v520 = vld [vmem:[#allocation14 + $0xdc] sm:$0xf]
    %v521 = vld [vmem:[#allocation14 + $0xe0] sm:$0xf]
    %v522 = vld [vmem:[#allocation14 + $0xe4] sm:$0xf]
    %v523 = vld [vmem:[#allocation14 + $0xe8] sm:$0xf]
    %v524 = vld [vmem:[#allocation14 + $0xec] sm:$0xf]
    %v525 = vld [vmem:[#allocation14 + $0xf0] sm:$0xf]
    %v526 = vld [vmem:[#allocation14 + $0xf4] sm:$0xf]
    %v527 = vld [vmem:[#allocation14 + $0xf8] sm:$0xf]
    %v528 = vld [vmem:[#allocation14 + $0xfc] sm:$0xf]
    %v529 = vpack.c.bf16 %v461, %v461
    %v530 = vpack.c.bf16 %v462, %v462
    %v531 = vpack.c.bf16 %v463, %v463
    %v532 = vpack.c.bf16 %v464, %v464
    %v533 = vlaneseq
    %v534 = vshrl.u32 %v533, 7
    %v535 = vsub.s32 0, %v534
    %v536 = vrot.slane %v251, %v535
    %v601 = vunpack.c.l.b16 %v465
    %v602 = vunpack.c.l.b16 %v466
    %v603 = vunpack.c.l.b16 %v467
    %v604 = vunpack.c.l.b16 %v468
    %v605 = vunpack.c.l.b16 %v469
    %v606 = vunpack.c.l.b16 %v470
    %v607 = vunpack.c.l.b16 %v471
    %v608 = vunpack.c.l.b16 %v472
    %v609 = vunpack.c.l.b16 %v473
    %v610 = vunpack.c.l.b16 %v474
    %v611 = vunpack.c.l.b16 %v475
    %v612 = vunpack.c.l.b16 %v476
    %v613 = vunpack.c.l.b16 %v477
    %v614 = vunpack.c.l.b16 %v478
    %v615 = vunpack.c.l.b16 %v479
    %v616 = vunpack.c.l.b16 %v480
    %v617 = vunpack.c.l.b16 %v481
    %v618 = vunpack.c.l.b16 %v482
    %v619 = vunpack.c.l.b16 %v483
    %v620 = vunpack.c.l.b16 %v484
    %v621 = vunpack.c.l.b16 %v485
    %v622 = vunpack.c.l.b16 %v486
    %v623 = vunpack.c.l.b16 %v487
    %v624 = vunpack.c.l.b16 %v488
    %v625 = vunpack.c.l.b16 %v489
    %v626 = vunpack.c.l.b16 %v490
    %v627 = vunpack.c.l.b16 %v491
    %v628 = vunpack.c.l.b16 %v492
    %v629 = vunpack.c.l.b16 %v493
    %v630 = vunpack.c.l.b16 %v494
    %v631 = vunpack.c.l.b16 %v495
    %v632 = vunpack.c.l.b16 %v496
    %v633 = vunpack.c.l.b16 %v497
    %v634 = vunpack.c.l.b16 %v498
    %v635 = vunpack.c.l.b16 %v499
    %v636 = vunpack.c.l.b16 %v500
    %v637 = vunpack.c.l.b16 %v501
    %v638 = vunpack.c.l.b16 %v502
    %v639 = vunpack.c.l.b16 %v503
    %v640 = vunpack.c.l.b16 %v504
    %v641 = vunpack.c.l.b16 %v505
    %v642 = vunpack.c.l.b16 %v506
    %v643 = vunpack.c.l.b16 %v507
    %v644 = vunpack.c.l.b16 %v508
    %v645 = vunpack.c.l.b16 %v509
    %v646 = vunpack.c.l.b16 %v510
    %v647 = vunpack.c.l.b16 %v511
    %v648 = vunpack.c.l.b16 %v512
    %v649 = vunpack.c.l.b16 %v513
    %v650 = vunpack.c.l.b16 %v514
    %v651 = vunpack.c.l.b16 %v515
    %v652 = vunpack.c.l.b16 %v516
    %v653 = vunpack.c.l.b16 %v517
    %v654 = vunpack.c.l.b16 %v518
    %v655 = vunpack.c.l.b16 %v519
    %v656 = vunpack.c.l.b16 %v520
    %v657 = vunpack.c.l.b16 %v521
    %v658 = vunpack.c.l.b16 %v522
    %v659 = vunpack.c.l.b16 %v523
    %v660 = vunpack.c.l.b16 %v524
    %v661 = vunpack.c.l.b16 %v525
    %v662 = vunpack.c.l.b16 %v526
    %v663 = vunpack.c.l.b16 %v527
    %v664 = vunpack.c.l.b16 %v528
    %v665 = vpack.c.b16 %v602, %v601
    %v666 = vpack.c.b16 %v604, %v603
    %v667 = vpack.c.b16 %v606, %v605
    %v668 = vpack.c.b16 %v608, %v607
    %v669 = vpack.c.b16 %v610, %v609
    %v670 = vpack.c.b16 %v612, %v611
    %v671 = vpack.c.b16 %v614, %v613
    %v672 = vpack.c.b16 %v616, %v615
    %v673 = vpack.c.b16 %v618, %v617
    %v674 = vpack.c.b16 %v620, %v619
    %v675 = vpack.c.b16 %v622, %v621
    %v676 = vpack.c.b16 %v624, %v623
    %v677 = vpack.c.b16 %v626, %v625
    %v678 = vpack.c.b16 %v628, %v627
    %v679 = vpack.c.b16 %v630, %v629
    %v680 = vpack.c.b16 %v632, %v631
    %v681 = vpack.c.b16 %v634, %v633
    %v682 = vpack.c.b16 %v636, %v635
    %v683 = vpack.c.b16 %v638, %v637
    %v684 = vpack.c.b16 %v640, %v639
    %v685 = vpack.c.b16 %v642, %v641
    %v686 = vpack.c.b16 %v644, %v643
    %v687 = vpack.c.b16 %v646, %v645
    %v688 = vpack.c.b16 %v648, %v647
    %v689 = vpack.c.b16 %v650, %v649
    %v690 = vpack.c.b16 %v652, %v651
    %v691 = vpack.c.b16 %v654, %v653
    %v692 = vpack.c.b16 %v656, %v655
    %v693 = vpack.c.b16 %v658, %v657
    %v694 = vpack.c.b16 %v660, %v659
    %v695 = vpack.c.b16 %v662, %v661
    %v696 = vpack.c.b16 %v664, %v663
    %729 = vmatprep.subr.bf16.mxu0 0
    %730 = vmatpush1.bf16.msra.mxu0 %v665
    %731 = vmatprep.subr.bf16.mxu0 0
    %732 = vmatpush1.bf16.msra.mxu0 %v666
    %733 = vmatprep.subr.bf16.mxu0 0
    %734 = vmatpush1.bf16.msra.mxu0 %v667
    %735 = vmatprep.subr.bf16.mxu0 0
    %736 = vmatpush1.bf16.msra.mxu0 %v668
    %737 = vmatprep.subr.bf16.mxu0 0
    %738 = vmatpush1.bf16.msra.mxu0 %v669
    %739 = vmatprep.subr.bf16.mxu0 0
    %740 = vmatpush1.bf16.msra.mxu0 %v670
    %741 = vmatprep.subr.bf16.mxu0 0
    %742 = vmatpush1.bf16.msra.mxu0 %v671
    %743 = vmatprep.subr.bf16.mxu0 0
    %744 = vmatpush1.bf16.msra.mxu0 %v672
    %745 = vmatprep.subr.bf16.mxu0 0
    %746 = vmatpush1.bf16.msra.mxu0 %v673
    %747 = vmatprep.subr.bf16.mxu0 0
    %748 = vmatpush1.bf16.msra.mxu0 %v674
    %749 = vmatprep.subr.bf16.mxu0 0
    %750 = vmatpush1.bf16.msra.mxu0 %v675
    %751 = vmatprep.subr.bf16.mxu0 0
    %752 = vmatpush1.bf16.msra.mxu0 %v676
    %753 = vmatprep.subr.bf16.mxu0 0
    %754 = vmatpush1.bf16.msra.mxu0 %v677
    %755 = vmatprep.subr.bf16.mxu0 0
    %756 = vmatpush1.bf16.msra.mxu0 %v678
    %757 = vmatprep.subr.bf16.mxu0 0
    %758 = vmatpush1.bf16.msra.mxu0 %v679
    %759 = vmatprep.subr.bf16.mxu0 0
    %760 = vmatpush1.bf16.msra.mxu0 %v680
    %761 = vmatprep.mubr.bf16.mxu0 %v530
    %762 = vmatmul.mubr.bf16.gmra.mrb[0].mxu0 %v529
    %v763 = vpop.f32.mrb[0].mxu0
    %v764 = vadd.f32 %v536, %v763
    %v765 = vpop.f32.mrb[0].mxu0
    %v766 = vpop.f32.mrb[0].mxu0
    %v767 = vpop.f32.mrb[0].mxu0
    %768 = vdwg.mxu0
    %769 = vmatprep.subr.bf16.mxu0 0
    %770 = vmatpush1.bf16.msra.mxu0 %v681
    %771 = vmatprep.subr.bf16.mxu0 0
    %772 = vmatpush1.bf16.msra.mxu0 %v682
    %773 = vmatprep.subr.bf16.mxu0 0
    %774 = vmatpush1.bf16.msra.mxu0 %v683
    %775 = vmatprep.subr.bf16.mxu0 0
    %776 = vmatpush1.bf16.msra.mxu0 %v684
    %777 = vmatprep.subr.bf16.mxu0 0
    %778 = vmatpush1.bf16.msra.mxu0 %v685
    %779 = vmatprep.subr.bf16.mxu0 0
    %780 = vmatpush1.bf16.msra.mxu0 %v686
    %781 = vmatprep.subr.bf16.mxu0 0
    %782 = vmatpush1.bf16.msra.mxu0 %v687
    %783 = vmatprep.subr.bf16.mxu0 0
    %784 = vmatpush1.bf16.msra.mxu0 %v688
    %785 = vmatprep.subr.bf16.mxu0 0
    %786 = vmatpush1.bf16.msra.mxu0 %v689
    %787 = vmatprep.subr.bf16.mxu0 0
    %788 = vmatpush1.bf16.msra.mxu0 %v690
    %789 = vmatprep.subr.bf16.mxu0 0
    %790 = vmatpush1.bf16.msra.mxu0 %v691
    %791 = vmatprep.subr.bf16.mxu0 0
    %792 = vmatpush1.bf16.msra.mxu0 %v692
    %793 = vmatprep.subr.bf16.mxu0 0
    %794 = vmatpush1.bf16.msra.mxu0 %v693
    %795 = vmatprep.subr.bf16.mxu0 0
    %796 = vmatpush1.bf16.msra.mxu0 %v694
    %797 = vmatprep.subr.bf16.mxu0 0
    %798 = vmatpush1.bf16.msra.mxu0 %v695
    %799 = vmatprep.subr.bf16.mxu0 0
    %800 = vmatpush1.bf16.msra.mxu0 %v696
    %801 = vmatprep.mubr.bf16.mxu0 %v532
    %802 = vmatmul.mubr.bf16.gmra.mrb[0].mxu0 %v531
    %v803 = vpop.f32.mrb[0].mxu0
    %v804 = vadd.f32 %v764, %v803
    %v805 = vpop.f32.mrb[0].mxu0
    %v806 = vpop.f32.mrb[0].mxu0
    %v807 = vpop.f32.mrb[0].mxu0
    %808 = vdwg.mxu0
    %809 = vst [vmem:[%s17] sm:$0xff] %v804
    %v810 = vld [vmem:[#allocation7] sm:$0xff]
    %s811 = scalar_lea.vmem [#allocation11], 128
    %v812 = vld [vmem:[%s811] sm:$0xff]
    %v813 = vld [vmem:[%s811 + $0x8] sm:$0xff]
    %v814 = vld [vmem:[%s811 + $0x10] sm:$0xff]
    %v815 = vld [vmem:[%s811 + $0x18] sm:$0xff]
    %v816 = vld [vmem:[%s811 + $0x20] sm:$0xff]
    %v817 = vld [vmem:[%s811 + $0x28] sm:$0xff]
    %v818 = vld [vmem:[%s811 + $0x30] sm:$0xff]
    %v819 = vld [vmem:[%s811 + $0x38] sm:$0xff]
    %v820 = vld [vmem:[%s811 + $0x40] sm:$0xff]
    %v821 = vld [vmem:[%s811 + $0x48] sm:$0xff]
    %v822 = vld [vmem:[%s811 + $0x50] sm:$0xff]
    %v823 = vld [vmem:[%s811 + $0x58] sm:$0xff]
    %v824 = vld [vmem:[%s811 + $0x60] sm:$0xff]
    %v825 = vld [vmem:[%s811 + $0x68] sm:$0xff]
    %v826 = vld [vmem:[%s811 + $0x70] sm:$0xff]
    %v827 = vld [vmem:[%s811 + $0x78] sm:$0xff]
    %v828 = vpack.c.bf16 %v810, %v810
    %s829 = scalar_lea.vmem [#allocation13], 4
    %v830 = vld [vmem:[%s829] sm:$0xf]
    %v832 = vlaneseq
    %v833 = vshrl.u32 %v832, 7
    %v834 = vsub.s32 0, %v833
    %v835 = vrot.slane %v830, %v834
    %v836 = vlaneseq
    %v837 = vshrl.u32 %v836, 7
    %v838 = vsub.s32 1, %v837
    %v839 = vrot.slane %v830, %v838
    %v840 = vlaneseq
    %v841 = vshrl.u32 %v840, 7
    %v842 = vsub.s32 2, %v841
    %v843 = vrot.slane %v830, %v842
    %v844 = vlaneseq
    %v845 = vshrl.u32 %v844, 7
    %v846 = vsub.s32 3, %v845
    %v847 = vrot.slane %v830, %v846
    %v868 = vunpack.c.l.b16 %v812
    %v869 = vunpack.c.h.b16 %v812
    %v870 = vunpack.c.l.b16 %v813
    %v871 = vunpack.c.h.b16 %v813
    %v872 = vunpack.c.l.b16 %v814
    %v873 = vunpack.c.h.b16 %v814
    %v874 = vunpack.c.l.b16 %v815
    %v875 = vunpack.c.h.b16 %v815
    %v876 = vunpack.c.l.b16 %v816
    %v877 = vunpack.c.h.b16 %v816
    %v878 = vunpack.c.l.b16 %v817
    %v879 = vunpack.c.h.b16 %v817
    %v880 = vunpack.c.l.b16 %v818
    %v881 = vunpack.c.h.b16 %v818
    %v882 = vunpack.c.l.b16 %v819
    %v883 = vunpack.c.h.b16 %v819
    %v884 = vunpack.c.l.b16 %v820
    %v885 = vunpack.c.h.b16 %v820
    %v886 = vunpack.c.l.b16 %v821
    %v887 = vunpack.c.h.b16 %v821
    %v888 = vunpack.c.l.b16 %v822
    %v889 = vunpack.c.h.b16 %v822
    %v890 = vunpack.c.l.b16 %v823
    %v891 = vunpack.c.h.b16 %v823
    %v892 = vunpack.c.l.b16 %v824
    %v893 = vunpack.c.h.b16 %v824
    %v894 = vunpack.c.l.b16 %v825
    %v895 = vunpack.c.h.b16 %v825
    %v896 = vunpack.c.l.b16 %v826
    %v897 = vunpack.c.h.b16 %v826
    %v898 = vunpack.c.l.b16 %v827
    %v899 = vunpack.c.h.b16 %v827
    %v900 = vpack.c.b16 %v872, %v868
    %v901 = vpack.c.b16 %v873, %v869
    %v902 = vpack.c.b16 %v874, %v870
    %v903 = vpack.c.b16 %v875, %v871
    %v904 = vpack.c.b16 %v880, %v876
    %v905 = vpack.c.b16 %v881, %v877
    %v906 = vpack.c.b16 %v882, %v878
    %v907 = vpack.c.b16 %v883, %v879
    %v908 = vpack.c.b16 %v888, %v884
    %v909 = vpack.c.b16 %v889, %v885
    %v910 = vpack.c.b16 %v890, %v886
    %v911 = vpack.c.b16 %v891, %v887
    %v912 = vpack.c.b16 %v896, %v892
    %v913 = vpack.c.b16 %v897, %v893
    %v914 = vpack.c.b16 %v898, %v894
    %v915 = vpack.c.b16 %v899, %v895
    %v933 = vsel %vm375, %v828, 0
    %935 = vmatprep.subr.bf16.mxu0 %v901
    %936 = vmatpush1.bf16.msra.mxu0 %v900
    %937 = vmatprep.subr.bf16.mxu0 %v905
    %938 = vmatpush1.bf16.msra.mxu0 %v904
    %939 = vmatprep.subr.bf16.mxu0 %v909
    %940 = vmatpush1.bf16.msra.mxu0 %v908
    %941 = vmatprep.subr.bf16.mxu0 %v913
    %942 = vmatpush1.bf16.msra.mxu0 %v912
    %943 = vmatprep.subr.bf16.mxu0 0
    %944 = vmatpush1.bf16.msra.mxu0 0
    %945 = vmatprep.subr.bf16.mxu0 0
    %946 = vmatpush1.bf16.msra.mxu0 0
    %947 = vmatprep.subr.bf16.mxu0 0
    %948 = vmatpush1.bf16.msra.mxu0 0
    %949 = vmatprep.subr.bf16.mxu0 0
    %950 = vmatpush1.bf16.msra.mxu0 0
    %951 = vmatprep.subr.bf16.mxu0 0
    %952 = vmatpush1.bf16.msra.mxu0 0
    %953 = vmatprep.subr.bf16.mxu0 0
    %954 = vmatpush1.bf16.msra.mxu0 0
    %955 = vmatprep.subr.bf16.mxu0 0
    %956 = vmatpush1.bf16.msra.mxu0 0
    %957 = vmatprep.subr.bf16.mxu0 0
    %958 = vmatpush1.bf16.msra.mxu0 0
    %959 = vmatprep.subr.bf16.mxu0 0
    %960 = vmatpush1.bf16.msra.mxu0 0
    %961 = vmatprep.subr.bf16.mxu0 0
    %962 = vmatpush1.bf16.msra.mxu0 0
    %963 = vmatprep.subr.bf16.mxu0 0
    %964 = vmatpush1.bf16.msra.mxu0 0
    %965 = vmatprep.subr.bf16.mxu0 0
    %966 = vmatpush1.bf16.msra.mxu0 0
    %967 = vmatprep.mubr.bf16.mxu0 0
    %968 = vmatmul.mubr.bf16.gmra.mrb[0].mxu0 %v933
    %v969 = vpop.f32.mrb[0].mxu0
    %v970 = vadd.f32 %v835, %v969
    %v971 = vpop.f32.mrb[0].mxu0
    %v972 = vadd.f32 %v839, %v971
    %v973 = vpop.f32.mrb[0].mxu0
    %v974 = vpop.f32.mrb[0].mxu0
    %975 = vdwg.mxu0
    %976 = vmatprep.subr.bf16.mxu0 %v903
    %977 = vmatpush1.bf16.msra.mxu0 %v902
    %978 = vmatprep.subr.bf16.mxu0 %v907
    %979 = vmatpush1.bf16.msra.mxu0 %v906
    %980 = vmatprep.subr.bf16.mxu0 %v911
    %981 = vmatpush1.bf16.msra.mxu0 %v910
    %982 = vmatprep.subr.bf16.mxu0 %v915
    %983 = vmatpush1.bf16.msra.mxu0 %v914
    %984 = vmatprep.subr.bf16.mxu0 0
    %985 = vmatpush1.bf16.msra.mxu0 0
    %986 = vmatprep.subr.bf16.mxu0 0
    %987 = vmatpush1.bf16.msra.mxu0 0
    %988 = vmatprep.subr.bf16.mxu0 0
    %989 = vmatpush1.bf16.msra.mxu0 0
    %990 = vmatprep.subr.bf16.mxu0 0
    %991 = vmatpush1.bf16.msra.mxu0 0
    %992 = vmatprep.subr.bf16.mxu0 0
    %993 = vmatpush1.bf16.msra.mxu0 0
    %994 = vmatprep.subr.bf16.mxu0 0
    %995 = vmatpush1.bf16.msra.mxu0 0
    %996 = vmatprep.subr.bf16.mxu0 0
    %997 = vmatpush1.bf16.msra.mxu0 0
    %998 = vmatprep.subr.bf16.mxu0 0
    %999 = vmatpush1.bf16.msra.mxu0 0
    %1000 = vmatprep.subr.bf16.mxu0 0
    %1001 = vmatpush1.bf16.msra.mxu0 0
    %1002 = vmatprep.subr.bf16.mxu0 0
    %1003 = vmatpush1.bf16.msra.mxu0 0
    %1004 = vmatprep.subr.bf16.mxu0 0
    %1005 = vmatpush1.bf16.msra.mxu0 0
    %1006 = vmatprep.subr.bf16.mxu0 0
    %1007 = vmatpush1.bf16.msra.mxu0 0
    %1008 = vmatprep.mubr.bf16.mxu0 0
    %1009 = vmatmul.mubr.bf16.gmra.mrb[0].mxu0 %v933
    %v1010 = vpop.f32.mrb[0].mxu0
    %v1011 = vadd.f32 %v843, %v1010
    %v1012 = vpop.f32.mrb[0].mxu0
    %v1013 = vadd.f32 %v847, %v1012
    %v1014 = vpop.f32.mrb[0].mxu0
    %v1015 = vpop.f32.mrb[0].mxu0
    %1016 = vdwg.mxu0
    %v1017 = vmax.f32 %v970, 0.0
    %v1018 = vmax.f32 %v972, 0.0
    %v1019 = vmax.f32 %v1011, 0.0
    %v1020 = vmax.f32 %v1013, 0.0
    %s1021 = scalar_lea.vmem [#allocation14], 256
    %v1022 = vld [vmem:[%s1021] sm:$0xf]
    %v1023 = vld [vmem:[%s1021 + $0x4] sm:$0xf]
    %v1024 = vld [vmem:[%s1021 + $0x8] sm:$0xf]
    %v1025 = vld [vmem:[%s1021 + $0xc] sm:$0xf]
    %v1026 = vld [vmem:[%s1021 + $0x10] sm:$0xf]
    %v1027 = vld [vmem:[%s1021 + $0x14] sm:$0xf]
    %v1028 = vld [vmem:[%s1021 + $0x18] sm:$0xf]
    %v1029 = vld [vmem:[%s1021 + $0x1c] sm:$0xf]
    %v1030 = vld [vmem:[%s1021 + $0x20] sm:$0xf]
    %v1031 = vld [vmem:[%s1021 + $0x24] sm:$0xf]
    %v1032 = vld [vmem:[%s1021 + $0x28] sm:$0xf]
    %v1033 = vld [vmem:[%s1021 + $0x2c] sm:$0xf]
    %v1034 = vld [vmem:[%s1021 + $0x30] sm:$0xf]
    %v1035 = vld [vmem:[%s1021 + $0x34] sm:$0xf]
    %v1036 = vld [vmem:[%s1021 + $0x38] sm:$0xf]
    %v1037 = vld [vmem:[%s1021 + $0x3c] sm:$0xf]
    %v1038 = vld [vmem:[%s1021 + $0x40] sm:$0xf]
    %v1039 = vld [vmem:[%s1021 + $0x44] sm:$0xf]
    %v1040 = vld [vmem:[%s1021 + $0x48] sm:$0xf]
    %v1041 = vld [vmem:[%s1021 + $0x4c] sm:$0xf]
    %v1042 = vld [vmem:[%s1021 + $0x50] sm:$0xf]
    %v1043 = vld [vmem:[%s1021 + $0x54] sm:$0xf]
    %v1044 = vld [vmem:[%s1021 + $0x58] sm:$0xf]
    %v1045 = vld [vmem:[%s1021 + $0x5c] sm:$0xf]
    %v1046 = vld [vmem:[%s1021 + $0x60] sm:$0xf]
    %v1047 = vld [vmem:[%s1021 + $0x64] sm:$0xf]
    %v1048 = vld [vmem:[%s1021 + $0x68] sm:$0xf]
    %v1049 = vld [vmem:[%s1021 + $0x6c] sm:$0xf]
    %v1050 = vld [vmem:[%s1021 + $0x70] sm:$0xf]
    %v1051 = vld [vmem:[%s1021 + $0x74] sm:$0xf]
    %v1052 = vld [vmem:[%s1021 + $0x78] sm:$0xf]
    %v1053 = vld [vmem:[%s1021 + $0x7c] sm:$0xf]
    %v1054 = vld [vmem:[%s1021 + $0x80] sm:$0xf]
    %v1055 = vld [vmem:[%s1021 + $0x84] sm:$0xf]
    %v1056 = vld [vmem:[%s1021 + $0x88] sm:$0xf]
    %v1057 = vld [vmem:[%s1021 + $0x8c] sm:$0xf]
    %v1058 = vld [vmem:[%s1021 + $0x90] sm:$0xf]
    %v1059 = vld [vmem:[%s1021 + $0x94] sm:$0xf]
    %v1060 = vld [vmem:[%s1021 + $0x98] sm:$0xf]
    %v1061 = vld [vmem:[%s1021 + $0x9c] sm:$0xf]
    %v1062 = vld [vmem:[%s1021 + $0xa0] sm:$0xf]
    %v1063 = vld [vmem:[%s1021 + $0xa4] sm:$0xf]
    %v1064 = vld [vmem:[%s1021 + $0xa8] sm:$0xf]
    %v1065 = vld [vmem:[%s1021 + $0xac] sm:$0xf]
    %v1066 = vld [vmem:[%s1021 + $0xb0] sm:$0xf]
    %v1067 = vld [vmem:[%s1021 + $0xb4] sm:$0xf]
    %v1068 = vld [vmem:[%s1021 + $0xb8] sm:$0xf]
    %v1069 = vld [vmem:[%s1021 + $0xbc] sm:$0xf]
    %v1070 = vld [vmem:[%s1021 + $0xc0] sm:$0xf]
    %v1071 = vld [vmem:[%s1021 + $0xc4] sm:$0xf]
    %v1072 = vld [vmem:[%s1021 + $0xc8] sm:$0xf]
    %v1073 = vld [vmem:[%s1021 + $0xcc] sm:$0xf]
    %v1074 = vld [vmem:[%s1021 + $0xd0] sm:$0xf]
    %v1075 = vld [vmem:[%s1021 + $0xd4] sm:$0xf]
    %v1076 = vld [vmem:[%s1021 + $0xd8] sm:$0xf]
    %v1077 = vld [vmem:[%s1021 + $0xdc] sm:$0xf]
    %v1078 = vld [vmem:[%s1021 + $0xe0] sm:$0xf]
    %v1079 = vld [vmem:[%s1021 + $0xe4] sm:$0xf]
    %v1080 = vld [vmem:[%s1021 + $0xe8] sm:$0xf]
    %v1081 = vld [vmem:[%s1021 + $0xec] sm:$0xf]
    %v1082 = vld [vmem:[%s1021 + $0xf0] sm:$0xf]
    %v1083 = vld [vmem:[%s1021 + $0xf4] sm:$0xf]
    %v1084 = vld [vmem:[%s1021 + $0xf8] sm:$0xf]
    %v1085 = vld [vmem:[%s1021 + $0xfc] sm:$0xf]
    %v1086 = vpack.c.bf16 %v1017, %v1017
    %v1087 = vpack.c.bf16 %v1018, %v1018
    %v1088 = vpack.c.bf16 %v1019, %v1019
    %v1089 = vpack.c.bf16 %v1020, %v1020
    %v1090 = vlaneseq
    %v1091 = vshrl.u32 %v1090, 7
    %v1092 = vsub.s32 1, %v1091
    %v1093 = vrot.slane %v251, %v1092
    %v1158 = vunpack.c.l.b16 %v1022
    %v1159 = vunpack.c.l.b16 %v1023
    %v1160 = vunpack.c.l.b16 %v1024
    %v1161 = vunpack.c.l.b16 %v1025
    %v1162 = vunpack.c.l.b16 %v1026
    %v1163 = vunpack.c.l.b16 %v1027
    %v1164 = vunpack.c.l.b16 %v1028
    %v1165 = vunpack.c.l.b16 %v1029
    %v1166 = vunpack.c.l.b16 %v1030
    %v1167 = vunpack.c.l.b16 %v1031
    %v1168 = vunpack.c.l.b16 %v1032
    %v1169 = vunpack.c.l.b16 %v1033
    %v1170 = vunpack.c.l.b16 %v1034
    %v1171 = vunpack.c.l.b16 %v1035
    %v1172 = vunpack.c.l.b16 %v1036
    %v1173 = vunpack.c.l.b16 %v1037
    %v1174 = vunpack.c.l.b16 %v1038
    %v1175 = vunpack.c.l.b16 %v1039
    %v1176 = vunpack.c.l.b16 %v1040
    %v1177 = vunpack.c.l.b16 %v1041
    %v1178 = vunpack.c.l.b16 %v1042
    %v1179 = vunpack.c.l.b16 %v1043
    %v1180 = vunpack.c.l.b16 %v1044
    %v1181 = vunpack.c.l.b16 %v1045
    %v1182 = vunpack.c.l.b16 %v1046
    %v1183 = vunpack.c.l.b16 %v1047
    %v1184 = vunpack.c.l.b16 %v1048
    %v1185 = vunpack.c.l.b16 %v1049
    %v1186 = vunpack.c.l.b16 %v1050
    %v1187 = vunpack.c.l.b16 %v1051
    %v1188 = vunpack.c.l.b16 %v1052
    %v1189 = vunpack.c.l.b16 %v1053
    %v1190 = vunpack.c.l.b16 %v1054
    %v1191 = vunpack.c.l.b16 %v1055
    %v1192 = vunpack.c.l.b16 %v1056
    %v1193 = vunpack.c.l.b16 %v1057
    %v1194 = vunpack.c.l.b16 %v1058
    %v1195 = vunpack.c.l.b16 %v1059
    %v1196 = vunpack.c.l.b16 %v1060
    %v1197 = vunpack.c.l.b16 %v1061
    %v1198 = vunpack.c.l.b16 %v1062
    %v1199 = vunpack.c.l.b16 %v1063
    %v1200 = vunpack.c.l.b16 %v1064
    %v1201 = vunpack.c.l.b16 %v1065
    %v1202 = vunpack.c.l.b16 %v1066
    %v1203 = vunpack.c.l.b16 %v1067
    %v1204 = vunpack.c.l.b16 %v1068
    %v1205 = vunpack.c.l.b16 %v1069
    %v1206 = vunpack.c.l.b16 %v1070
    %v1207 = vunpack.c.l.b16 %v1071
    %v1208 = vunpack.c.l.b16 %v1072
    %v1209 = vunpack.c.l.b16 %v1073
    %v1210 = vunpack.c.l.b16 %v1074
    %v1211 = vunpack.c.l.b16 %v1075
    %v1212 = vunpack.c.l.b16 %v1076
    %v1213 = vunpack.c.l.b16 %v1077
    %v1214 = vunpack.c.l.b16 %v1078
    %v1215 = vunpack.c.l.b16 %v1079
    %v1216 = vunpack.c.l.b16 %v1080
    %v1217 = vunpack.c.l.b16 %v1081
    %v1218 = vunpack.c.l.b16 %v1082
    %v1219 = vunpack.c.l.b16 %v1083
    %v1220 = vunpack.c.l.b16 %v1084
    %v1221 = vunpack.c.l.b16 %v1085
    %v1222 = vpack.c.b16 %v1159, %v1158
    %v1223 = vpack.c.b16 %v1161, %v1160
    %v1224 = vpack.c.b16 %v1163, %v1162
    %v1225 = vpack.c.b16 %v1165, %v1164
    %v1226 = vpack.c.b16 %v1167, %v1166
    %v1227 = vpack.c.b16 %v1169, %v1168
    %v1228 = vpack.c.b16 %v1171, %v1170
    %v1229 = vpack.c.b16 %v1173, %v1172
    %v1230 = vpack.c.b16 %v1175, %v1174
    %v1231 = vpack.c.b16 %v1177, %v1176
    %v1232 = vpack.c.b16 %v1179, %v1178
    %v1233 = vpack.c.b16 %v1181, %v1180
    %v1234 = vpack.c.b16 %v1183, %v1182
    %v1235 = vpack.c.b16 %v1185, %v1184
    %v1236 = vpack.c.b16 %v1187, %v1186
    %v1237 = vpack.c.b16 %v1189, %v1188
    %v1238 = vpack.c.b16 %v1191, %v1190
    %v1239 = vpack.c.b16 %v1193, %v1192
    %v1240 = vpack.c.b16 %v1195, %v1194
    %v1241 = vpack.c.b16 %v1197, %v1196
    %v1242 = vpack.c.b16 %v1199, %v1198
    %v1243 = vpack.c.b16 %v1201, %v1200
    %v1244 = vpack.c.b16 %v1203, %v1202
    %v1245 = vpack.c.b16 %v1205, %v1204
    %v1246 = vpack.c.b16 %v1207, %v1206
    %v1247 = vpack.c.b16 %v1209, %v1208
    %v1248 = vpack.c.b16 %v1211, %v1210
    %v1249 = vpack.c.b16 %v1213, %v1212
    %v1250 = vpack.c.b16 %v1215, %v1214
    %v1251 = vpack.c.b16 %v1217, %v1216
    %v1252 = vpack.c.b16 %v1219, %v1218
    %v1253 = vpack.c.b16 %v1221, %v1220
    %1286 = vmatprep.subr.bf16.mxu0 0
    %1287 = vmatpush1.bf16.msra.mxu0 %v1222
    %1288 = vmatprep.subr.bf16.mxu0 0
    %1289 = vmatpush1.bf16.msra.mxu0 %v1223
    %1290 = vmatprep.subr.bf16.mxu0 0
    %1291 = vmatpush1.bf16.msra.mxu0 %v1224
    %1292 = vmatprep.subr.bf16.mxu0 0
    %1293 = vmatpush1.bf16.msra.mxu0 %v1225
    %1294 = vmatprep.subr.bf16.mxu0 0
    %1295 = vmatpush1.bf16.msra.mxu0 %v1226
    %1296 = vmatprep.subr.bf16.mxu0 0
    %1297 = vmatpush1.bf16.msra.mxu0 %v1227
    %1298 = vmatprep.subr.bf16.mxu0 0
    %1299 = vmatpush1.bf16.msra.mxu0 %v1228
    %1300 = vmatprep.subr.bf16.mxu0 0
    %1301 = vmatpush1.bf16.msra.mxu0 %v1229
    %1302 = vmatprep.subr.bf16.mxu0 0
    %1303 = vmatpush1.bf16.msra.mxu0 %v1230
    %1304 = vmatprep.subr.bf16.mxu0 0
    %1305 = vmatpush1.bf16.msra.mxu0 %v1231
    %1306 = vmatprep.subr.bf16.mxu0 0
    %1307 = vmatpush1.bf16.msra.mxu0 %v1232
    %1308 = vmatprep.subr.bf16.mxu0 0
    %1309 = vmatpush1.bf16.msra.mxu0 %v1233
    %1310 = vmatprep.subr.bf16.mxu0 0
    %1311 = vmatpush1.bf16.msra.mxu0 %v1234
    %1312 = vmatprep.subr.bf16.mxu0 0
    %1313 = vmatpush1.bf16.msra.mxu0 %v1235
    %1314 = vmatprep.subr.bf16.mxu0 0
    %1315 = vmatpush1.bf16.msra.mxu0 %v1236
    %1316 = vmatprep.subr.bf16.mxu0 0
    %1317 = vmatpush1.bf16.msra.mxu0 %v1237
    %1318 = vmatprep.mubr.bf16.mxu0 %v1087
    %1319 = vmatmul.mubr.bf16.gmra.mrb[0].mxu0 %v1086
    %v1320 = vpop.f32.mrb[0].mxu0
    %v1321 = vadd.f32 %v1093, %v1320
    %v1322 = vpop.f32.mrb[0].mxu0
    %v1323 = vpop.f32.mrb[0].mxu0
    %v1324 = vpop.f32.mrb[0].mxu0
    %1325 = vdwg.mxu0
    %1326 = vmatprep.subr.bf16.mxu0 0
    %1327 = vmatpush1.bf16.msra.mxu0 %v1238
    %1328 = vmatprep.subr.bf16.mxu0 0
    %1329 = vmatpush1.bf16.msra.mxu0 %v1239
    %1330 = vmatprep.subr.bf16.mxu0 0
    %1331 = vmatpush1.bf16.msra.mxu0 %v1240
    %1332 = vmatprep.subr.bf16.mxu0 0
    %1333 = vmatpush1.bf16.msra.mxu0 %v1241
    %1334 = vmatprep.subr.bf16.mxu0 0
    %1335 = vmatpush1.bf16.msra.mxu0 %v1242
    %1336 = vmatprep.subr.bf16.mxu0 0
    %1337 = vmatpush1.bf16.msra.mxu0 %v1243
    %1338 = vmatprep.subr.bf16.mxu0 0
    %1339 = vmatpush1.bf16.msra.mxu0 %v1244
    %1340 = vmatprep.subr.bf16.mxu0 0
    %1341 = vmatpush1.bf16.msra.mxu0 %v1245
    %1342 = vmatprep.subr.bf16.mxu0 0
    %1343 = vmatpush1.bf16.msra.mxu0 %v1246
    %1344 = vmatprep.subr.bf16.mxu0 0
    %1345 = vmatpush1.bf16.msra.mxu0 %v1247
    %1346 = vmatprep.subr.bf16.mxu0 0
    %1347 = vmatpush1.bf16.msra.mxu0 %v1248
    %1348 = vmatprep.subr.bf16.mxu0 0
    %1349 = vmatpush1.bf16.msra.mxu0 %v1249
    %1350 = vmatprep.subr.bf16.mxu0 0
    %1351 = vmatpush1.bf16.msra.mxu0 %v1250
    %1352 = vmatprep.subr.bf16.mxu0 0
    %1353 = vmatpush1.bf16.msra.mxu0 %v1251
    %1354 = vmatprep.subr.bf16.mxu0 0
    %1355 = vmatpush1.bf16.msra.mxu0 %v1252
    %1356 = vmatprep.subr.bf16.mxu0 0
    %1357 = vmatpush1.bf16.msra.mxu0 %v1253
    %1358 = vmatprep.mubr.bf16.mxu0 %v1089
    %1359 = vmatmul.mubr.bf16.gmra.mrb[0].mxu0 %v1088
    %v1360 = vpop.f32.mrb[0].mxu0
    %v1361 = vadd.f32 %v1321, %v1360
    %v1362 = vpop.f32.mrb[0].mxu0
    %v1363 = vpop.f32.mrb[0].mxu0
    %v1364 = vpop.f32.mrb[0].mxu0
    %1365 = vdwg.mxu0
    %s1366 = scalar_lea.vmem %s17, 8
    %1367 = vst [vmem:[%s1366] sm:$0xff] %v1361
    %v1368 = vld [vmem:[#allocation9] sm:$0xff]
    %s1369 = scalar_lea.vmem [#allocation11], 256
    %v1370 = vld [vmem:[%s1369] sm:$0xff]
    %v1371 = vld [vmem:[%s1369 + $0x8] sm:$0xff]
    %v1372 = vld [vmem:[%s1369 + $0x10] sm:$0xff]
    %v1373 = vld [vmem:[%s1369 + $0x18] sm:$0xff]
    %v1374 = vld [vmem:[%s1369 + $0x20] sm:$0xff]
    %v1375 = vld [vmem:[%s1369 + $0x28] sm:$0xff]
    %v1376 = vld [vmem:[%s1369 + $0x30] sm:$0xff]
    %v1377 = vld [vmem:[%s1369 + $0x38] sm:$0xff]
    %v1378 = vld [vmem:[%s1369 + $0x40] sm:$0xff]
    %v1379 = vld [vmem:[%s1369 + $0x48] sm:$0xff]
    %v1380 = vld [vmem:[%s1369 + $0x50] sm:$0xff]
    %v1381 = vld [vmem:[%s1369 + $0x58] sm:$0xff]
    %v1382 = vld [vmem:[%s1369 + $0x60] sm:$0xff]
    %v1383 = vld [vmem:[%s1369 + $0x68] sm:$0xff]
    %v1384 = vld [vmem:[%s1369 + $0x70] sm:$0xff]
    %v1385 = vld [vmem:[%s1369 + $0x78] sm:$0xff]
    %v1386 = vpack.c.bf16 %v1368, %v1368
    %s1387 = scalar_lea.vmem [#allocation13], 8
    %v1388 = vld [vmem:[%s1387] sm:$0xf]
    %v1390 = vlaneseq
    %v1391 = vshrl.u32 %v1390, 7
    %v1392 = vsub.s32 0, %v1391
    %v1393 = vrot.slane %v1388, %v1392
    %v1394 = vlaneseq
    %v1395 = vshrl.u32 %v1394, 7
    %v1396 = vsub.s32 1, %v1395
    %v1397 = vrot.slane %v1388, %v1396
    %v1398 = vlaneseq
    %v1399 = vshrl.u32 %v1398, 7
    %v1400 = vsub.s32 2, %v1399
    %v1401 = vrot.slane %v1388, %v1400
    %v1402 = vlaneseq
    %v1403 = vshrl.u32 %v1402, 7
    %v1404 = vsub.s32 3, %v1403
    %v1405 = vrot.slane %v1388, %v1404
    %v1426 = vunpack.c.l.b16 %v1370
    %v1427 = vunpack.c.h.b16 %v1370
    %v1428 = vunpack.c.l.b16 %v1371
    %v1429 = vunpack.c.h.b16 %v1371
    %v1430 = vunpack.c.l.b16 %v1372
    %v1431 = vunpack.c.h.b16 %v1372
    %v1432 = vunpack.c.l.b16 %v1373
    %v1433 = vunpack.c.h.b16 %v1373
    %v1434 = vunpack.c.l.b16 %v1374
    %v1435 = vunpack.c.h.b16 %v1374
    %v1436 = vunpack.c.l.b16 %v1375
    %v1437 = vunpack.c.h.b16 %v1375
    %v1438 = vunpack.c.l.b16 %v1376
    %v1439 = vunpack.c.h.b16 %v1376
    %v1440 = vunpack.c.l.b16 %v1377
    %v1441 = vunpack.c.h.b16 %v1377
    %v1442 = vunpack.c.l.b16 %v1378
    %v1443 = vunpack.c.h.b16 %v1378
    %v1444 = vunpack.c.l.b16 %v1379
    %v1445 = vunpack.c.h.b16 %v1379
    %v1446 = vunpack.c.l.b16 %v1380
    %v1447 = vunpack.c.h.b16 %v1380
    %v1448 = vunpack.c.l.b16 %v1381
    %v1449 = vunpack.c.h.b16 %v1381
    %v1450 = vunpack.c.l.b16 %v1382
    %v1451 = vunpack.c.h.b16 %v1382
    %v1452 = vunpack.c.l.b16 %v1383
    %v1453 = vunpack.c.h.b16 %v1383
    %v1454 = vunpack.c.l.b16 %v1384
    %v1455 = vunpack.c.h.b16 %v1384
    %v1456 = vunpack.c.l.b16 %v1385
    %v1457 = vunpack.c.h.b16 %v1385
    %v1458 = vpack.c.b16 %v1430, %v1426
    %v1459 = vpack.c.b16 %v1431, %v1427
    %v1460 = vpack.c.b16 %v1432, %v1428
    %v1461 = vpack.c.b16 %v1433, %v1429
    %v1462 = vpack.c.b16 %v1438, %v1434
    %v1463 = vpack.c.b16 %v1439, %v1435
    %v1464 = vpack.c.b16 %v1440, %v1436
    %v1465 = vpack.c.b16 %v1441, %v1437
    %v1466 = vpack.c.b16 %v1446, %v1442
    %v1467 = vpack.c.b16 %v1447, %v1443
    %v1468 = vpack.c.b16 %v1448, %v1444
    %v1469 = vpack.c.b16 %v1449, %v1445
    %v1470 = vpack.c.b16 %v1454, %v1450
    %v1471 = vpack.c.b16 %v1455, %v1451
    %v1472 = vpack.c.b16 %v1456, %v1452
    %v1473 = vpack.c.b16 %v1457, %v1453
    %v1491 = vsel %vm375, %v1386, 0
    %1493 = vmatprep.subr.bf16.mxu0 %v1459
    %1494 = vmatpush1.bf16.msra.mxu0 %v1458
    %1495 = vmatprep.subr.bf16.mxu0 %v1463
    %1496 = vmatpush1.bf16.msra.mxu0 %v1462
    %1497 = vmatprep.subr.bf16.mxu0 %v1467
    %1498 = vmatpush1.bf16.msra.mxu0 %v1466
    %1499 = vmatprep.subr.bf16.mxu0 %v1471
    %1500 = vmatpush1.bf16.msra.mxu0 %v1470
    %1501 = vmatprep.subr.bf16.mxu0 0
    %1502 = vmatpush1.bf16.msra.mxu0 0
    %1503 = vmatprep.subr.bf16.mxu0 0
    %1504 = vmatpush1.bf16.msra.mxu0 0
    %1505 = vmatprep.subr.bf16.mxu0 0
    %1506 = vmatpush1.bf16.msra.mxu0 0
    %1507 = vmatprep.subr.bf16.mxu0 0
    %1508 = vmatpush1.bf16.msra.mxu0 0
    %1509 = vmatprep.subr.bf16.mxu0 0
    %1510 = vmatpush1.bf16.msra.mxu0 0
    %1511 = vmatprep.subr.bf16.mxu0 0
    %1512 = vmatpush1.bf16.msra.mxu0 0
    %1513 = vmatprep.subr.bf16.mxu0 0
    %1514 = vmatpush1.bf16.msra.mxu0 0
    %1515 = vmatprep.subr.bf16.mxu0 0
    %1516 = vmatpush1.bf16.msra.mxu0 0
    %1517 = vmatprep.subr.bf16.mxu0 0
    %1518 = vmatpush1.bf16.msra.mxu0 0
    %1519 = vmatprep.subr.bf16.mxu0 0
    %1520 = vmatpush1.bf16.msra.mxu0 0
    %1521 = vmatprep.subr.bf16.mxu0 0
    %1522 = vmatpush1.bf16.msra.mxu0 0
    %1523 = vmatprep.subr.bf16.mxu0 0
    %1524 = vmatpush1.bf16.msra.mxu0 0
    %1525 = vmatprep.mubr.bf16.mxu0 0
    %1526 = vmatmul.mubr.bf16.gmra.mrb[0].mxu0 %v1491
    %v1527 = vpop.f32.mrb[0].mxu0
    %v1528 = vadd.f32 %v1393, %v1527
    %v1529 = vpop.f32.mrb[0].mxu0
    %v1530 = vadd.f32 %v1397, %v1529
    %v1531 = vpop.f32.mrb[0].mxu0
    %v1532 = vpop.f32.mrb[0].mxu0
    %1533 = vdwg.mxu0
    %1534 = vmatprep.subr.bf16.mxu0 %v1461
    %1535 = vmatpush1.bf16.msra.mxu0 %v1460
    %1536 = vmatprep.subr.bf16.mxu0 %v1465
    %1537 = vmatpush1.bf16.msra.mxu0 %v1464
    %1538 = vmatprep.subr.bf16.mxu0 %v1469
    %1539 = vmatpush1.bf16.msra.mxu0 %v1468
    %1540 = vmatprep.subr.bf16.mxu0 %v1473
    %1541 = vmatpush1.bf16.msra.mxu0 %v1472
    %1542 = vmatprep.subr.bf16.mxu0 0
    %1543 = vmatpush1.bf16.msra.mxu0 0
    %1544 = vmatprep.subr.bf16.mxu0 0
    %1545 = vmatpush1.bf16.msra.mxu0 0
    %1546 = vmatprep.subr.bf16.mxu0 0
    %1547 = vmatpush1.bf16.msra.mxu0 0
    %1548 = vmatprep.subr.bf16.mxu0 0
    %1549 = vmatpush1.bf16.msra.mxu0 0
    %1550 = vmatprep.subr.bf16.mxu0 0
    %1551 = vmatpush1.bf16.msra.mxu0 0
    %1552 = vmatprep.subr.bf16.mxu0 0
    %1553 = vmatpush1.bf16.msra.mxu0 0
    %1554 = vmatprep.subr.bf16.mxu0 0
    %1555 = vmatpush1.bf16.msra.mxu0 0
    %1556 = vmatprep.subr.bf16.mxu0 0
    %1557 = vmatpush1.bf16.msra.mxu0 0
    %1558 = vmatprep.subr.bf16.mxu0 0
    %1559 = vmatpush1.bf16.msra.mxu0 0
    %1560 = vmatprep.subr.bf16.mxu0 0
    %1561 = vmatpush1.bf16.msra.mxu0 0
    %1562 = vmatprep.subr.bf16.mxu0 0
    %1563 = vmatpush1.bf16.msra.mxu0 0
    %1564 = vmatprep.subr.bf16.mxu0 0
    %1565 = vmatpush1.bf16.msra.mxu0 0
    %1566 = vmatprep.mubr.bf16.mxu0 0
    %1567 = vmatmul.mubr.bf16.gmra.mrb[0].mxu0 %v1491
    %v1568 = vpop.f32.mrb[0].mxu0
    %v1569 = vadd.f32 %v1401, %v1568
    %v1570 = vpop.f32.mrb[0].mxu0
    %v1571 = vadd.f32 %v1405, %v1570
    %v1572 = vpop.f32.mrb[0].mxu0
    %v1573 = vpop.f32.mrb[0].mxu0
    %1574 = vdwg.mxu0
    %v1575 = vmax.f32 %v1528, 0.0
    %v1576 = vmax.f32 %v1530, 0.0
    %v1577 = vmax.f32 %v1569, 0.0
    %v1578 = vmax.f32 %v1571, 0.0
    %s1579 = scalar_lea.vmem [#allocation14], 512
    %v1580 = vld [vmem:[%s1579] sm:$0xf]
    %v1581 = vld [vmem:[%s1579 + $0x4] sm:$0xf]
    %v1582 = vld [vmem:[%s1579 + $0x8] sm:$0xf]
    %v1583 = vld [vmem:[%s1579 + $0xc] sm:$0xf]
    %v1584 = vld [vmem:[%s1579 + $0x10] sm:$0xf]
    %v1585 = vld [vmem:[%s1579 + $0x14] sm:$0xf]
    %v1586 = vld [vmem:[%s1579 + $0x18] sm:$0xf]
    %v1587 = vld [vmem:[%s1579 + $0x1c] sm:$0xf]
    %v1588 = vld [vmem:[%s1579 + $0x20] sm:$0xf]
    %v1589 = vld [vmem:[%s1579 + $0x24] sm:$0xf]
    %v1590 = vld [vmem:[%s1579 + $0x28] sm:$0xf]
    %v1591 = vld [vmem:[%s1579 + $0x2c] sm:$0xf]
    %v1592 = vld [vmem:[%s1579 + $0x30] sm:$0xf]
    %v1593 = vld [vmem:[%s1579 + $0x34] sm:$0xf]
    %v1594 = vld [vmem:[%s1579 + $0x38] sm:$0xf]
    %v1595 = vld [vmem:[%s1579 + $0x3c] sm:$0xf]
    %v1596 = vld [vmem:[%s1579 + $0x40] sm:$0xf]
    %v1597 = vld [vmem:[%s1579 + $0x44] sm:$0xf]
    %v1598 = vld [vmem:[%s1579 + $0x48] sm:$0xf]
    %v1599 = vld [vmem:[%s1579 + $0x4c] sm:$0xf]
    %v1600 = vld [vmem:[%s1579 + $0x50] sm:$0xf]
    %v1601 = vld [vmem:[%s1579 + $0x54] sm:$0xf]
    %v1602 = vld [vmem:[%s1579 + $0x58] sm:$0xf]
    %v1603 = vld [vmem:[%s1579 + $0x5c] sm:$0xf]
    %v1604 = vld [vmem:[%s1579 + $0x60] sm:$0xf]
    %v1605 = vld [vmem:[%s1579 + $0x64] sm:$0xf]
    %v1606 = vld [vmem:[%s1579 + $0x68] sm:$0xf]
    %v1607 = vld [vmem:[%s1579 + $0x6c] sm:$0xf]
    %v1608 = vld [vmem:[%s1579 + $0x70] sm:$0xf]
    %v1609 = vld [vmem:[%s1579 + $0x74] sm:$0xf]
    %v1610 = vld [vmem:[%s1579 + $0x78] sm:$0xf]
    %v1611 = vld [vmem:[%s1579 + $0x7c] sm:$0xf]
    %v1612 = vld [vmem:[%s1579 + $0x80] sm:$0xf]
    %v1613 = vld [vmem:[%s1579 + $0x84] sm:$0xf]
    %v1614 = vld [vmem:[%s1579 + $0x88] sm:$0xf]
    %v1615 = vld [vmem:[%s1579 + $0x8c] sm:$0xf]
    %v1616 = vld [vmem:[%s1579 + $0x90] sm:$0xf]
    %v1617 = vld [vmem:[%s1579 + $0x94] sm:$0xf]
    %v1618 = vld [vmem:[%s1579 + $0x98] sm:$0xf]
    %v1619 = vld [vmem:[%s1579 + $0x9c] sm:$0xf]
    %v1620 = vld [vmem:[%s1579 + $0xa0] sm:$0xf]
    %v1621 = vld [vmem:[%s1579 + $0xa4] sm:$0xf]
    %v1622 = vld [vmem:[%s1579 + $0xa8] sm:$0xf]
    %v1623 = vld [vmem:[%s1579 + $0xac] sm:$0xf]
    %v1624 = vld [vmem:[%s1579 + $0xb0] sm:$0xf]
    %v1625 = vld [vmem:[%s1579 + $0xb4] sm:$0xf]
    %v1626 = vld [vmem:[%s1579 + $0xb8] sm:$0xf]
    %v1627 = vld [vmem:[%s1579 + $0xbc] sm:$0xf]
    %v1628 = vld [vmem:[%s1579 + $0xc0] sm:$0xf]
    %v1629 = vld [vmem:[%s1579 + $0xc4] sm:$0xf]
    %v1630 = vld [vmem:[%s1579 + $0xc8] sm:$0xf]
    %v1631 = vld [vmem:[%s1579 + $0xcc] sm:$0xf]
    %v1632 = vld [vmem:[%s1579 + $0xd0] sm:$0xf]
    %v1633 = vld [vmem:[%s1579 + $0xd4] sm:$0xf]
    %v1634 = vld [vmem:[%s1579 + $0xd8] sm:$0xf]
    %v1635 = vld [vmem:[%s1579 + $0xdc] sm:$0xf]
    %v1636 = vld [vmem:[%s1579 + $0xe0] sm:$0xf]
    %v1637 = vld [vmem:[%s1579 + $0xe4] sm:$0xf]
    %v1638 = vld [vmem:[%s1579 + $0xe8] sm:$0xf]
    %v1639 = vld [vmem:[%s1579 + $0xec] sm:$0xf]
    %v1640 = vld [vmem:[%s1579 + $0xf0] sm:$0xf]
    %v1641 = vld [vmem:[%s1579 + $0xf4] sm:$0xf]
    %v1642 = vld [vmem:[%s1579 + $0xf8] sm:$0xf]
    %v1643 = vld [vmem:[%s1579 + $0xfc] sm:$0xf]
    %v1644 = vpack.c.bf16 %v1575, %v1575
    %v1645 = vpack.c.bf16 %v1576, %v1576
    %v1646 = vpack.c.bf16 %v1577, %v1577
    %v1647 = vpack.c.bf16 %v1578, %v1578
    %v1648 = vlaneseq
    %v1649 = vshrl.u32 %v1648, 7
    %v1650 = vsub.s32 2, %v1649
    %v1651 = vrot.slane %v251, %v1650
    %v1716 = vunpack.c.l.b16 %v1580
    %v1717 = vunpack.c.l.b16 %v1581
    %v1718 = vunpack.c.l.b16 %v1582
    %v1719 = vunpack.c.l.b16 %v1583
    %v1720 = vunpack.c.l.b16 %v1584
    %v1721 = vunpack.c.l.b16 %v1585
    %v1722 = vunpack.c.l.b16 %v1586
    %v1723 = vunpack.c.l.b16 %v1587
    %v1724 = vunpack.c.l.b16 %v1588
    %v1725 = vunpack.c.l.b16 %v1589
    %v1726 = vunpack.c.l.b16 %v1590
    %v1727 = vunpack.c.l.b16 %v1591
    %v1728 = vunpack.c.l.b16 %v1592
    %v1729 = vunpack.c.l.b16 %v1593
    %v1730 = vunpack.c.l.b16 %v1594
    %v1731 = vunpack.c.l.b16 %v1595
    %v1732 = vunpack.c.l.b16 %v1596
    %v1733 = vunpack.c.l.b16 %v1597
    %v1734 = vunpack.c.l.b16 %v1598
    %v1735 = vunpack.c.l.b16 %v1599
    %v1736 = vunpack.c.l.b16 %v1600
    %v1737 = vunpack.c.l.b16 %v1601
    %v1738 = vunpack.c.l.b16 %v1602
    %v1739 = vunpack.c.l.b16 %v1603
    %v1740 = vunpack.c.l.b16 %v1604
    %v1741 = vunpack.c.l.b16 %v1605
    %v1742 = vunpack.c.l.b16 %v1606
    %v1743 = vunpack.c.l.b16 %v1607
    %v1744 = vunpack.c.l.b16 %v1608
    %v1745 = vunpack.c.l.b16 %v1609
    %v1746 = vunpack.c.l.b16 %v1610
    %v1747 = vunpack.c.l.b16 %v1611
    %v1748 = vunpack.c.l.b16 %v1612
    %v1749 = vunpack.c.l.b16 %v1613
    %v1750 = vunpack.c.l.b16 %v1614
    %v1751 = vunpack.c.l.b16 %v1615
    %v1752 = vunpack.c.l.b16 %v1616
    %v1753 = vunpack.c.l.b16 %v1617
    %v1754 = vunpack.c.l.b16 %v1618
    %v1755 = vunpack.c.l.b16 %v1619
    %v1756 = vunpack.c.l.b16 %v1620
    %v1757 = vunpack.c.l.b16 %v1621
    %v1758 = vunpack.c.l.b16 %v1622
    %v1759 = vunpack.c.l.b16 %v1623
    %v1760 = vunpack.c.l.b16 %v1624
    %v1761 = vunpack.c.l.b16 %v1625
    %v1762 = vunpack.c.l.b16 %v1626
    %v1763 = vunpack.c.l.b16 %v1627
    %v1764 = vunpack.c.l.b16 %v1628
    %v1765 = vunpack.c.l.b16 %v1629
    %v1766 = vunpack.c.l.b16 %v1630
    %v1767 = vunpack.c.l.b16 %v1631
    %v1768 = vunpack.c.l.b16 %v1632
    %v1769 = vunpack.c.l.b16 %v1633
    %v1770 = vunpack.c.l.b16 %v1634
    %v1771 = vunpack.c.l.b16 %v1635
    %v1772 = vunpack.c.l.b16 %v1636
    %v1773 = vunpack.c.l.b16 %v1637
    %v1774 = vunpack.c.l.b16 %v1638
    %v1775 = vunpack.c.l.b16 %v1639
    %v1776 = vunpack.c.l.b16 %v1640
    %v1777 = vunpack.c.l.b16 %v1641
    %v1778 = vunpack.c.l.b16 %v1642
    %v1779 = vunpack.c.l.b16 %v1643
    %v1780 = vpack.c.b16 %v1717, %v1716
    %v1781 = vpack.c.b16 %v1719, %v1718
    %v1782 = vpack.c.b16 %v1721, %v1720
    %v1783 = vpack.c.b16 %v1723, %v1722
    %v1784 = vpack.c.b16 %v1725, %v1724
    %v1785 = vpack.c.b16 %v1727, %v1726
    %v1786 = vpack.c.b16 %v1729, %v1728
    %v1787 = vpack.c.b16 %v1731, %v1730
    %v1788 = vpack.c.b16 %v1733, %v1732
    %v1789 = vpack.c.b16 %v1735, %v1734
    %v1790 = vpack.c.b16 %v1737, %v1736
    %v1791 = vpack.c.b16 %v1739, %v1738
    %v1792 = vpack.c.b16 %v1741, %v1740
    %v1793 = vpack.c.b16 %v1743, %v1742
    %v1794 = vpack.c.b16 %v1745, %v1744
    %v1795 = vpack.c.b16 %v1747, %v1746
    %v1796 = vpack.c.b16 %v1749, %v1748
    %v1797 = vpack.c.b16 %v1751, %v1750
    %v1798 = vpack.c.b16 %v1753, %v1752
    %v1799 = vpack.c.b16 %v1755, %v1754
    %v1800 = vpack.c.b16 %v1757, %v1756
    %v1801 = vpack.c.b16 %v1759, %v1758
    %v1802 = vpack.c.b16 %v1761, %v1760
    %v1803 = vpack.c.b16 %v1763, %v1762
    %v1804 = vpack.c.b16 %v1765, %v1764
    %v1805 = vpack.c.b16 %v1767, %v1766
    %v1806 = vpack.c.b16 %v1769, %v1768
    %v1807 = vpack.c.b16 %v1771, %v1770
    %v1808 = vpack.c.b16 %v1773, %v1772
    %v1809 = vpack.c.b16 %v1775, %v1774
    %v1810 = vpack.c.b16 %v1777, %v1776
    %v1811 = vpack.c.b16 %v1779, %v1778
    %1844 = vmatprep.subr.bf16.mxu0 0
    %1845 = vmatpush1.bf16.msra.mxu0 %v1780
    %1846 = vmatprep.subr.bf16.mxu0 0
    %1847 = vmatpush1.bf16.msra.mxu0 %v1781
    %1848 = vmatprep.subr.bf16.mxu0 0
    %1849 = vmatpush1.bf16.msra.mxu0 %v1782
    %1850 = vmatprep.subr.bf16.mxu0 0
    %1851 = vmatpush1.bf16.msra.mxu0 %v1783
    %1852 = vmatprep.subr.bf16.mxu0 0
    %1853 = vmatpush1.bf16.msra.mxu0 %v1784
    %1854 = vmatprep.subr.bf16.mxu0 0
    %1855 = vmatpush1.bf16.msra.mxu0 %v1785
    %1856 = vmatprep.subr.bf16.mxu0 0
    %1857 = vmatpush1.bf16.msra.mxu0 %v1786
    %1858 = vmatprep.subr.bf16.mxu0 0
    %1859 = vmatpush1.bf16.msra.mxu0 %v1787
    %1860 = vmatprep.subr.bf16.mxu0 0
    %1861 = vmatpush1.bf16.msra.mxu0 %v1788
    %1862 = vmatprep.subr.bf16.mxu0 0
    %1863 = vmatpush1.bf16.msra.mxu0 %v1789
    %1864 = vmatprep.subr.bf16.mxu0 0
    %1865 = vmatpush1.bf16.msra.mxu0 %v1790
    %1866 = vmatprep.subr.bf16.mxu0 0
    %1867 = vmatpush1.bf16.msra.mxu0 %v1791
    %1868 = vmatprep.subr.bf16.mxu0 0
    %1869 = vmatpush1.bf16.msra.mxu0 %v1792
    %1870 = vmatprep.subr.bf16.mxu0 0
    %1871 = vmatpush1.bf16.msra.mxu0 %v1793
    %1872 = vmatprep.subr.bf16.mxu0 0
    %1873 = vmatpush1.bf16.msra.mxu0 %v1794
    %1874 = vmatprep.subr.bf16.mxu0 0
    %1875 = vmatpush1.bf16.msra.mxu0 %v1795
    %1876 = vmatprep.mubr.bf16.mxu0 %v1645
    %1877 = vmatmul.mubr.bf16.gmra.mrb[0].mxu0 %v1644
    %v1878 = vpop.f32.mrb[0].mxu0
    %v1879 = vadd.f32 %v1651, %v1878
    %v1880 = vpop.f32.mrb[0].mxu0
    %v1881 = vpop.f32.mrb[0].mxu0
    %v1882 = vpop.f32.mrb[0].mxu0
    %1883 = vdwg.mxu0
    %1884 = vmatprep.subr.bf16.mxu0 0
    %1885 = vmatpush1.bf16.msra.mxu0 %v1796
    %1886 = vmatprep.subr.bf16.mxu0 0
    %1887 = vmatpush1.bf16.msra.mxu0 %v1797
    %1888 = vmatprep.subr.bf16.mxu0 0
    %1889 = vmatpush1.bf16.msra.mxu0 %v1798
    %1890 = vmatprep.subr.bf16.mxu0 0
    %1891 = vmatpush1.bf16.msra.mxu0 %v1799
    %1892 = vmatprep.subr.bf16.mxu0 0
    %1893 = vmatpush1.bf16.msra.mxu0 %v1800
    %1894 = vmatprep.subr.bf16.mxu0 0
    %1895 = vmatpush1.bf16.msra.mxu0 %v1801
    %1896 = vmatprep.subr.bf16.mxu0 0
    %1897 = vmatpush1.bf16.msra.mxu0 %v1802
    %1898 = vmatprep.subr.bf16.mxu0 0
    %1899 = vmatpush1.bf16.msra.mxu0 %v1803
    %1900 = vmatprep.subr.bf16.mxu0 0
    %1901 = vmatpush1.bf16.msra.mxu0 %v1804
    %1902 = vmatprep.subr.bf16.mxu0 0
    %1903 = vmatpush1.bf16.msra.mxu0 %v1805
    %1904 = vmatprep.subr.bf16.mxu0 0
    %1905 = vmatpush1.bf16.msra.mxu0 %v1806
    %1906 = vmatprep.subr.bf16.mxu0 0
    %1907 = vmatpush1.bf16.msra.mxu0 %v1807
    %1908 = vmatprep.subr.bf16.mxu0 0
    %1909 = vmatpush1.bf16.msra.mxu0 %v1808
    %1910 = vmatprep.subr.bf16.mxu0 0
    %1911 = vmatpush1.bf16.msra.mxu0 %v1809
    %1912 = vmatprep.subr.bf16.mxu0 0
    %1913 = vmatpush1.bf16.msra.mxu0 %v1810
    %1914 = vmatprep.subr.bf16.mxu0 0
    %1915 = vmatpush1.bf16.msra.mxu0 %v1811
    %1916 = vmatprep.mubr.bf16.mxu0 %v1647
    %1917 = vmatmul.mubr.bf16.gmra.mrb[0].mxu0 %v1646
    %v1918 = vpop.f32.mrb[0].mxu0
    %v1919 = vadd.f32 %v1879, %v1918
    %v1920 = vpop.f32.mrb[0].mxu0
    %v1921 = vpop.f32.mrb[0].mxu0
    %v1922 = vpop.f32.mrb[0].mxu0
    %1923 = vdwg.mxu0
    %s1924 = scalar_lea.vmem %s17, 16
    %1925 = vst [vmem:[%s1924] sm:$0xff] %v1919
    %v1926 = vld [vmem:[%s0] sm:$0xff]
    %v1927 = vld [vmem:[#allocation16] sm:$0xf]
    %v1928 = vld [vmem:[#allocation16 + $0x4] sm:$0xf]
    %v1929 = vld [vmem:[#allocation16 + $0x8] sm:$0xf]
    %v1930 = vld [vmem:[#allocation16 + $0xc] sm:$0xf]
    %v1931 = vpack.c.bf16 %v1926, %v1926
    %v1932 = vlaneseq
    %v1933 = vshrl.u32 %v1932, 7
    %v1934 = vsub.s32 3, %v1933
    %v1935 = vrot.slane %v251, %v1934
    %v1940 = vunpack.c.l.b16 %v1927
    %v1941 = vunpack.c.l.b16 %v1928
    %v1942 = vunpack.c.l.b16 %v1929
    %v1943 = vunpack.c.l.b16 %v1930
    %v1944 = vpack.c.b16 %v1941, %v1940
    %v1945 = vpack.c.b16 %v1943, %v1942
    %vm1948 = vcmask 261120
    %v1950 = vsel %vm1948, %v1931, 0
    %1952 = vmatprep.subr.bf16.mxu0 0
    %1953 = vmatpush1.bf16.msra.mxu0 %v1944
    %1954 = vmatprep.subr.bf16.mxu0 0
    %1955 = vmatpush1.bf16.msra.mxu0 %v1945
    %1956 = vmatprep.subr.bf16.mxu0 0
    %1957 = vmatpush1.bf16.msra.mxu0 0
    %1958 = vmatprep.subr.bf16.mxu0 0
    %1959 = vmatpush1.bf16.msra.mxu0 0
    %1960 = vmatprep.subr.bf16.mxu0 0
    %1961 = vmatpush1.bf16.msra.mxu0 0
    %1962 = vmatprep.subr.bf16.mxu0 0
    %1963 = vmatpush1.bf16.msra.mxu0 0
    %1964 = vmatprep.subr.bf16.mxu0 0
    %1965 = vmatpush1.bf16.msra.mxu0 0
    %1966 = vmatprep.subr.bf16.mxu0 0
    %1967 = vmatpush1.bf16.msra.mxu0 0
    %1968 = vmatprep.subr.bf16.mxu0 0
    %1969 = vmatpush1.bf16.msra.mxu0 0
    %1970 = vmatprep.subr.bf16.mxu0 0
    %1971 = vmatpush1.bf16.msra.mxu0 0
    %1972 = vmatprep.subr.bf16.mxu0 0
    %1973 = vmatpush1.bf16.msra.mxu0 0
    %1974 = vmatprep.subr.bf16.mxu0 0
    %1975 = vmatpush1.bf16.msra.mxu0 0
    %1976 = vmatprep.subr.bf16.mxu0 0
    %1977 = vmatpush1.bf16.msra.mxu0 0
    %1978 = vmatprep.subr.bf16.mxu0 0
    %1979 = vmatpush1.bf16.msra.mxu0 0
    %1980 = vmatprep.subr.bf16.mxu0 0
    %1981 = vmatpush1.bf16.msra.mxu0 0
    %1982 = vmatprep.subr.bf16.mxu0 0
    %1983 = vmatpush1.bf16.msra.mxu0 0
    %1984 = vmatprep.mubr.bf16.mxu0 0
    %1985 = vmatmul.mubr.bf16.gmra.mrb[0].mxu0 %v1950
    %v1986 = vpop.f32.mrb[0].mxu0
    %v1987 = vadd.f32 %v1935, %v1986
    %v1988 = vpop.f32.mrb[0].mxu0
    %v1989 = vpop.f32.mrb[0].mxu0
    %v1990 = vpop.f32.mrb[0].mxu0
    %1991 = vdwg.mxu0
    %v1992 = vmax.f32 %v1987, 0.0
    %v1993 = vld [vmem:[#allocation16 + $0x10] sm:$0xf]
    %v1994 = vld [vmem:[#allocation16 + $0x14] sm:$0xf]
    %v1995 = vld [vmem:[#allocation16 + $0x18] sm:$0xf]
    %v1996 = vld [vmem:[#allocation16 + $0x1c] sm:$0xf]
    %v1997 = vld [vmem:[#allocation16 + $0x20] sm:$0xf]
    %v1998 = vld [vmem:[#allocation16 + $0x24] sm:$0xf]
    %v1999 = vld [vmem:[#allocation16 + $0x28] sm:$0xf]
    %v2000 = vld [vmem:[#allocation16 + $0x2c] sm:$0xf]
    %v2001 = vld [vmem:[#allocation16 + $0x30] sm:$0xf]
    %v2002 = vld [vmem:[#allocation16 + $0x34] sm:$0xf]
    %v2003 = vld [vmem:[#allocation16 + $0x38] sm:$0xf]
    %v2004 = vld [vmem:[#allocation16 + $0x3c] sm:$0xf]
    %v2005 = vld [vmem:[#allocation16 + $0x40] sm:$0xf]
    %v2006 = vld [vmem:[#allocation16 + $0x44] sm:$0xf]
    %v2007 = vld [vmem:[#allocation16 + $0x48] sm:$0xf]
    %v2008 = vld [vmem:[#allocation16 + $0x4c] sm:$0xf]
    %v2009 = vpack.c.bf16 %v1992, %v1992
    %v2010 = vlaneseq
    %v2011 = vshrl.u32 %v2010, 7
    %v2012 = vsub.s32 4, %v2011
    %v2013 = vrot.slane %v251, %v2012
    %v2030 = vunpack.c.l.b16 %v1993
    %v2031 = vunpack.c.l.b16 %v1994
    %v2032 = vunpack.c.l.b16 %v1995
    %v2033 = vunpack.c.l.b16 %v1996
    %v2034 = vunpack.c.l.b16 %v1997
    %v2035 = vunpack.c.l.b16 %v1998
    %v2036 = vunpack.c.l.b16 %v1999
    %v2037 = vunpack.c.l.b16 %v2000
    %v2038 = vunpack.c.l.b16 %v2001
    %v2039 = vunpack.c.l.b16 %v2002
    %v2040 = vunpack.c.l.b16 %v2003
    %v2041 = vunpack.c.l.b16 %v2004
    %v2042 = vunpack.c.l.b16 %v2005
    %v2043 = vunpack.c.l.b16 %v2006
    %v2044 = vunpack.c.l.b16 %v2007
    %v2045 = vunpack.c.l.b16 %v2008
    %v2046 = vpack.c.b16 %v2031, %v2030
    %v2047 = vpack.c.b16 %v2033, %v2032
    %v2048 = vpack.c.b16 %v2035, %v2034
    %v2049 = vpack.c.b16 %v2037, %v2036
    %v2050 = vpack.c.b16 %v2039, %v2038
    %v2051 = vpack.c.b16 %v2041, %v2040
    %v2052 = vpack.c.b16 %v2043, %v2042
    %v2053 = vpack.c.b16 %v2045, %v2044
    %2062 = vmatprep.subr.bf16.mxu0 0
    %2063 = vmatpush1.bf16.msra.mxu0 %v2046
    %2064 = vmatprep.subr.bf16.mxu0 0
    %2065 = vmatpush1.bf16.msra.mxu0 %v2047
    %2066 = vmatprep.subr.bf16.mxu0 0
    %2067 = vmatpush1.bf16.msra.mxu0 %v2048
    %2068 = vmatprep.subr.bf16.mxu0 0
    %2069 = vmatpush1.bf16.msra.mxu0 %v2049
    %2070 = vmatprep.subr.bf16.mxu0 0
    %2071 = vmatpush1.bf16.msra.mxu0 %v2050
    %2072 = vmatprep.subr.bf16.mxu0 0
    %2073 = vmatpush1.bf16.msra.mxu0 %v2051
    %2074 = vmatprep.subr.bf16.mxu0 0
    %2075 = vmatpush1.bf16.msra.mxu0 %v2052
    %2076 = vmatprep.subr.bf16.mxu0 0
    %2077 = vmatpush1.bf16.msra.mxu0 %v2053
    %2078 = vmatprep.subr.bf16.mxu0 0
    %2079 = vmatpush1.bf16.msra.mxu0 0
    %2080 = vmatprep.subr.bf16.mxu0 0
    %2081 = vmatpush1.bf16.msra.mxu0 0
    %2082 = vmatprep.subr.bf16.mxu0 0
    %2083 = vmatpush1.bf16.msra.mxu0 0
    %2084 = vmatprep.subr.bf16.mxu0 0
    %2085 = vmatpush1.bf16.msra.mxu0 0
    %2086 = vmatprep.subr.bf16.mxu0 0
    %2087 = vmatpush1.bf16.msra.mxu0 0
    %2088 = vmatprep.subr.bf16.mxu0 0
    %2089 = vmatpush1.bf16.msra.mxu0 0
    %2090 = vmatprep.subr.bf16.mxu0 0
    %2091 = vmatpush1.bf16.msra.mxu0 0
    %2092 = vmatprep.subr.bf16.mxu0 0
    %2093 = vmatpush1.bf16.msra.mxu0 0
    %2094 = vmatprep.mubr.bf16.mxu0 0
    %2095 = vmatmul.mubr.bf16.gmra.mrb[0].mxu0 %v2009
    %v2096 = vpop.f32.mrb[0].mxu0
    %v2097 = vadd.f32 %v2013, %v2096
    %v2098 = vpop.f32.mrb[0].mxu0
    %v2099 = vpop.f32.mrb[0].mxu0
    %v2100 = vpop.f32.mrb[0].mxu0
    %2101 = vdwg.mxu0
    %s2102 = sld [smem:[#allocation10]]
    %s2103 = sld [smem:[#allocation10 + $0x1]]
    %v2104 = vsub.f32 %v1919, %v804
    %v2105 = vsub.f32 %v2104, %v1361
    %v2106 = vstv %s2102
    %v2107 = vmul.f32 %v2106, %v2105
    %v2108 = vmax.f32 %v2107, 0.0
    %v2109 = vstv %s2103
    %v2110 = vmul.f32 %v2109, %v2097
    %v2111 = vmax.f32 %v2110, 0.0
    %v2112 = vld [vmem:[#allocation16 + $0x50] sm:$0xf]
    %v2113 = vld [vmem:[#allocation16 + $0x54] sm:$0xf]
    %v2114 = vld [vmem:[#allocation16 + $0x58] sm:$0xf]
    %v2115 = vld [vmem:[#allocation16 + $0x5c] sm:$0xf]
    %v2116 = vld [vmem:[#allocation16 + $0x60] sm:$0xf]
    %v2117 = vld [vmem:[#allocation16 + $0x64] sm:$0xf]
    %v2118 = vld [vmem:[#allocation16 + $0x68] sm:$0xf]
    %v2119 = vld [vmem:[#allocation16 + $0x6c] sm:$0xf]
    %v2120 = vld [vmem:[#allocation16 + $0x70] sm:$0xf]
    %v2121 = vld [vmem:[#allocation16 + $0x74] sm:$0xf]
    %v2122 = vld [vmem:[#allocation16 + $0x78] sm:$0xf]
    %v2123 = vld [vmem:[#allocation16 + $0x7c] sm:$0xf]
    %v2124 = vld [vmem:[#allocation16 + $0x80] sm:$0xf]
    %v2125 = vld [vmem:[#allocation16 + $0x84] sm:$0xf]
    %v2126 = vld [vmem:[#allocation16 + $0x88] sm:$0xf]
    %v2127 = vld [vmem:[#allocation16 + $0x8c] sm:$0xf]
    %v2128 = vpack.c.bf16 %v2108, %v2108
    %v2129 = vld [vmem:[#allocation16 + $0x90] sm:$0xf]
    %v2130 = vld [vmem:[#allocation16 + $0x94] sm:$0xf]
    %v2131 = vld [vmem:[#allocation16 + $0x98] sm:$0xf]
    %v2132 = vld [vmem:[#allocation16 + $0x9c] sm:$0xf]
    %v2133 = vld [vmem:[#allocation16 + $0xa0] sm:$0xf]
    %v2134 = vld [vmem:[#allocation16 + $0xa4] sm:$0xf]
    %v2135 = vld [vmem:[#allocation16 + $0xa8] sm:$0xf]
    %v2136 = vld [vmem:[#allocation16 + $0xac] sm:$0xf]
    %v2137 = vld [vmem:[#allocation16 + $0xb0] sm:$0xf]
    %v2138 = vld [vmem:[#allocation16 + $0xb4] sm:$0xf]
    %v2139 = vld [vmem:[#allocation16 + $0xb8] sm:$0xf]
    %v2140 = vld [vmem:[#allocation16 + $0xbc] sm:$0xf]
    %v2141 = vld [vmem:[#allocation16 + $0xc0] sm:$0xf]
    %v2142 = vld [vmem:[#allocation16 + $0xc4] sm:$0xf]
    %v2143 = vld [vmem:[#allocation16 + $0xc8] sm:$0xf]
    %v2144 = vld [vmem:[#allocation16 + $0xcc] sm:$0xf]
    %v2145 = vpack.c.bf16 %v2111, %v2111
    %v2162 = vunpack.c.l.b16 %v2129
    %v2163 = vunpack.c.l.b16 %v2130
    %v2164 = vunpack.c.l.b16 %v2131
    %v2165 = vunpack.c.l.b16 %v2132
    %v2166 = vunpack.c.l.b16 %v2133
    %v2167 = vunpack.c.l.b16 %v2134
    %v2168 = vunpack.c.l.b16 %v2135
    %v2169 = vunpack.c.l.b16 %v2136
    %v2170 = vunpack.c.l.b16 %v2137
    %v2171 = vunpack.c.l.b16 %v2138
    %v2172 = vunpack.c.l.b16 %v2139
    %v2173 = vunpack.c.l.b16 %v2140
    %v2174 = vunpack.c.l.b16 %v2141
    %v2175 = vunpack.c.l.b16 %v2142
    %v2176 = vunpack.c.l.b16 %v2143
    %v2177 = vunpack.c.l.b16 %v2144
    %v2178 = vpack.c.b16 %v2163, %v2162
    %v2179 = vpack.c.b16 %v2165, %v2164
    %v2180 = vpack.c.b16 %v2167, %v2166
    %v2181 = vpack.c.b16 %v2169, %v2168
    %v2182 = vpack.c.b16 %v2171, %v2170
    %v2183 = vpack.c.b16 %v2173, %v2172
    %v2184 = vpack.c.b16 %v2175, %v2174
    %v2185 = vpack.c.b16 %v2177, %v2176
    %2194 = vmatprep.subr.bf16.mxu0 0
    %2195 = vmatpush1.bf16.msra.mxu0 %v2178
    %2196 = vmatprep.subr.bf16.mxu0 0
    %2197 = vmatpush1.bf16.msra.mxu0 %v2179
    %2198 = vmatprep.subr.bf16.mxu0 0
    %2199 = vmatpush1.bf16.msra.mxu0 %v2180
    %2200 = vmatprep.subr.bf16.mxu0 0
    %2201 = vmatpush1.bf16.msra.mxu0 %v2181
    %2202 = vmatprep.subr.bf16.mxu0 0
    %2203 = vmatpush1.bf16.msra.mxu0 %v2182
    %2204 = vmatprep.subr.bf16.mxu0 0
    %2205 = vmatpush1.bf16.msra.mxu0 %v2183
    %2206 = vmatprep.subr.bf16.mxu0 0
    %2207 = vmatpush1.bf16.msra.mxu0 %v2184
    %2208 = vmatprep.subr.bf16.mxu0 0
    %2209 = vmatpush1.bf16.msra.mxu0 %v2185
    %2210 = vmatprep.subr.bf16.mxu0 0
    %2211 = vmatpush1.bf16.msra.mxu0 0
    %2212 = vmatprep.subr.bf16.mxu0 0
    %2213 = vmatpush1.bf16.msra.mxu0 0
    %2214 = vmatprep.subr.bf16.mxu0 0
    %2215 = vmatpush1.bf16.msra.mxu0 0
    %2216 = vmatprep.subr.bf16.mxu0 0
    %2217 = vmatpush1.bf16.msra.mxu0 0
    %2218 = vmatprep.subr.bf16.mxu0 0
    %2219 = vmatpush1.bf16.msra.mxu0 0
    %2220 = vmatprep.subr.bf16.mxu0 0
    %2221 = vmatpush1.bf16.msra.mxu0 0
    %2222 = vmatprep.subr.bf16.mxu0 0
    %2223 = vmatpush1.bf16.msra.mxu0 0
    %2224 = vmatprep.subr.bf16.mxu0 0
    %2225 = vmatpush1.bf16.msra.mxu0 0
    %2226 = vmatprep.mubr.bf16.mxu0 0
    %2227 = vmatmul.mubr.bf16.gmra.mrb[0].mxu0 %v2145
    %v2228 = vpop.f32.mrb[0].mxu0
    %v2229 = vadd.f32 0.0, %v2228
    %v2230 = vpop.f32.mrb[0].mxu0
    %v2231 = vpop.f32.mrb[0].mxu0
    %v2232 = vpop.f32.mrb[0].mxu0
    %2233 = vdwg.mxu0
    %v2250 = vunpack.c.l.b16 %v2112
    %v2251 = vunpack.c.l.b16 %v2113
    %v2252 = vunpack.c.l.b16 %v2114
    %v2253 = vunpack.c.l.b16 %v2115
    %v2254 = vunpack.c.l.b16 %v2116
    %v2255 = vunpack.c.l.b16 %v2117
    %v2256 = vunpack.c.l.b16 %v2118
    %v2257 = vunpack.c.l.b16 %v2119
    %v2258 = vunpack.c.l.b16 %v2120
    %v2259 = vunpack.c.l.b16 %v2121
    %v2260 = vunpack.c.l.b16 %v2122
    %v2261 = vunpack.c.l.b16 %v2123
    %v2262 = vunpack.c.l.b16 %v2124
    %v2263 = vunpack.c.l.b16 %v2125
    %v2264 = vunpack.c.l.b16 %v2126
    %v2265 = vunpack.c.l.b16 %v2127
    %v2266 = vpack.c.b16 %v2251, %v2250
    %v2267 = vpack.c.b16 %v2253, %v2252
    %v2268 = vpack.c.b16 %v2255, %v2254
    %v2269 = vpack.c.b16 %v2257, %v2256
    %v2270 = vpack.c.b16 %v2259, %v2258
    %v2271 = vpack.c.b16 %v2261, %v2260
    %v2272 = vpack.c.b16 %v2263, %v2262
    %v2273 = vpack.c.b16 %v2265, %v2264
    %2282 = vmatprep.subr.bf16.mxu0 0
    %2283 = vmatpush1.bf16.msra.mxu0 %v2266
    %2284 = vmatprep.subr.bf16.mxu0 0
    %2285 = vmatpush1.bf16.msra.mxu0 %v2267
    %2286 = vmatprep.subr.bf16.mxu0 0
    %2287 = vmatpush1.bf16.msra.mxu0 %v2268
    %2288 = vmatprep.subr.bf16.mxu0 0
    %2289 = vmatpush1.bf16.msra.mxu0 %v2269
    %2290 = vmatprep.subr.bf16.mxu0 0
    %2291 = vmatpush1.bf16.msra.mxu0 %v2270
    %2292 = vmatprep.subr.bf16.mxu0 0
    %2293 = vmatpush1.bf16.msra.mxu0 %v2271
    %2294 = vmatprep.subr.bf16.mxu0 0
    %2295 = vmatpush1.bf16.msra.mxu0 %v2272
    %2296 = vmatprep.subr.bf16.mxu0 0
    %2297 = vmatpush1.bf16.msra.mxu0 %v2273
    %2298 = vmatprep.subr.bf16.mxu0 0
    %2299 = vmatpush1.bf16.msra.mxu0 0
    %2300 = vmatprep.subr.bf16.mxu0 0
    %2301 = vmatpush1.bf16.msra.mxu0 0
    %2302 = vmatprep.subr.bf16.mxu0 0
    %2303 = vmatpush1.bf16.msra.mxu0 0
    %2304 = vmatprep.subr.bf16.mxu0 0
    %2305 = vmatpush1.bf16.msra.mxu0 0
    %2306 = vmatprep.subr.bf16.mxu0 0
    %2307 = vmatpush1.bf16.msra.mxu0 0
    %2308 = vmatprep.subr.bf16.mxu0 0
    %2309 = vmatpush1.bf16.msra.mxu0 0
    %2310 = vmatprep.subr.bf16.mxu0 0
    %2311 = vmatpush1.bf16.msra.mxu0 0
    %2312 = vmatprep.subr.bf16.mxu0 0
    %2313 = vmatpush1.bf16.msra.mxu0 0
    %2314 = vmatprep.mubr.bf16.mxu0 0
    %2315 = vmatmul.mubr.bf16.gmra.mrb[0].mxu0 %v2128
    %v2316 = vpop.f32.mrb[0].mxu0
    %v2317 = vadd.f32 %v2229, %v2316
    %v2318 = vpop.f32.mrb[0].mxu0
    %v2319 = vpop.f32.mrb[0].mxu0
    %v2320 = vpop.f32.mrb[0].mxu0
    %2321 = vdwg.mxu0
    %v2322 = vlaneseq
    %v2323 = vshrl.u32 %v2322, 7
    %v2324 = vsub.s32 5, %v2323
    %v2325 = vrot.slane %v251, %v2324
    %v2326 = vadd.f32 %v2317, %v2325
    %v2327 = vmax.f32 %v2326, 0.0
    %v2328 = vld [vmem:[#allocation16 + $0xd0] sm:$0xf]
    %v2329 = vld [vmem:[#allocation16 + $0xd4] sm:$0xf]
    %v2330 = vld [vmem:[#allocation16 + $0xd8] sm:$0xf]
    %v2331 = vld [vmem:[#allocation16 + $0xdc] sm:$0xf]
    %v2332 = vld [vmem:[#allocation16 + $0xe0] sm:$0xf]
    %v2333 = vld [vmem:[#allocation16 + $0xe4] sm:$0xf]
    %v2334 = vld [vmem:[#allocation16 + $0xe8] sm:$0xf]
    %v2335 = vld [vmem:[#allocation16 + $0xec] sm:$0xf]
    %v2336 = vld [vmem:[#allocation16 + $0xf0] sm:$0xf]
    %v2337 = vld [vmem:[#allocation16 + $0xf4] sm:$0xf]
    %v2338 = vld [vmem:[#allocation16 + $0xf8] sm:$0xf]
    %v2339 = vld [vmem:[#allocation16 + $0xfc] sm:$0xf]
    %v2340 = vld [vmem:[#allocation16 + $0x100] sm:$0xf]
    %v2341 = vld [vmem:[#allocation16 + $0x104] sm:$0xf]
    %v2342 = vld [vmem:[#allocation16 + $0x108] sm:$0xf]
    %v2343 = vld [vmem:[#allocation16 + $0x10c] sm:$0xf]
    %v2344 = vpack.c.bf16 %v2327, %v2327
    %v2345 = vlaneseq
    %v2346 = vshrl.u32 %v2345, 7
    %v2347 = vsub.s32 6, %v2346
    %v2348 = vrot.slane %v251, %v2347
    %v2365 = vunpack.c.l.b16 %v2328
    %v2366 = vunpack.c.l.b16 %v2329
    %v2367 = vunpack.c.l.b16 %v2330
    %v2368 = vunpack.c.l.b16 %v2331
    %v2369 = vunpack.c.l.b16 %v2332
    %v2370 = vunpack.c.l.b16 %v2333
    %v2371 = vunpack.c.l.b16 %v2334
    %v2372 = vunpack.c.l.b16 %v2335
    %v2373 = vunpack.c.l.b16 %v2336
    %v2374 = vunpack.c.l.b16 %v2337
    %v2375 = vunpack.c.l.b16 %v2338
    %v2376 = vunpack.c.l.b16 %v2339
    %v2377 = vunpack.c.l.b16 %v2340
    %v2378 = vunpack.c.l.b16 %v2341
    %v2379 = vunpack.c.l.b16 %v2342
    %v2380 = vunpack.c.l.b16 %v2343
    %v2381 = vpack.c.b16 %v2366, %v2365
    %v2382 = vpack.c.b16 %v2368, %v2367
    %v2383 = vpack.c.b16 %v2370, %v2369
    %v2384 = vpack.c.b16 %v2372, %v2371
    %v2385 = vpack.c.b16 %v2374, %v2373
    %v2386 = vpack.c.b16 %v2376, %v2375
    %v2387 = vpack.c.b16 %v2378, %v2377
    %v2388 = vpack.c.b16 %v2380, %v2379
    %2397 = vmatprep.subr.bf16.mxu0 0
    %2398 = vmatpush1.bf16.msra.mxu0 %v2381
    %2399 = vmatprep.subr.bf16.mxu0 0
    %2400 = vmatpush1.bf16.msra.mxu0 %v2382
    %2401 = vmatprep.subr.bf16.mxu0 0
    %2402 = vmatpush1.bf16.msra.mxu0 %v2383
    %2403 = vmatprep.subr.bf16.mxu0 0
    %2404 = vmatpush1.bf16.msra.mxu0 %v2384
    %2405 = vmatprep.subr.bf16.mxu0 0
    %2406 = vmatpush1.bf16.msra.mxu0 %v2385
    %2407 = vmatprep.subr.bf16.mxu0 0
    %2408 = vmatpush1.bf16.msra.mxu0 %v2386
    %2409 = vmatprep.subr.bf16.mxu0 0
    %2410 = vmatpush1.bf16.msra.mxu0 %v2387
    %2411 = vmatprep.subr.bf16.mxu0 0
    %2412 = vmatpush1.bf16.msra.mxu0 %v2388
    %2413 = vmatprep.subr.bf16.mxu0 0
    %2414 = vmatpush1.bf16.msra.mxu0 0
    %2415 = vmatprep.subr.bf16.mxu0 0
    %2416 = vmatpush1.bf16.msra.mxu0 0
    %2417 = vmatprep.subr.bf16.mxu0 0
    %2418 = vmatpush1.bf16.msra.mxu0 0
    %2419 = vmatprep.subr.bf16.mxu0 0
    %2420 = vmatpush1.bf16.msra.mxu0 0
    %2421 = vmatprep.subr.bf16.mxu0 0
    %2422 = vmatpush1.bf16.msra.mxu0 0
    %2423 = vmatprep.subr.bf16.mxu0 0
    %2424 = vmatpush1.bf16.msra.mxu0 0
    %2425 = vmatprep.subr.bf16.mxu0 0
    %2426 = vmatpush1.bf16.msra.mxu0 0
    %2427 = vmatprep.subr.bf16.mxu0 0
    %2428 = vmatpush1.bf16.msra.mxu0 0
    %2429 = vmatprep.mubr.bf16.mxu0 0
    %2430 = vmatmul.mubr.bf16.gmra.mrb[0].mxu0 %v2344
    %v2431 = vpop.f32.mrb[0].mxu0
    %v2432 = vadd.f32 %v2348, %v2431
    %v2433 = vpop.f32.mrb[0].mxu0
    %v2434 = vpop.f32.mrb[0].mxu0
    %v2435 = vpop.f32.mrb[0].mxu0
    %2436 = vdwg.mxu0
    %s2437 = scalar_lea.vmem %s16, 8
    %2438 = vst [vmem:[%s2437] sm:$0xff] %v2432
    %v2439 = vld [vmem:[%s4] sm:$0xff]
    %v2440 = vld [vmem:[%s4 + $0x8] sm:$0xff]
    %v2441 = vld [vmem:[%s4 + $0x10] sm:$0xff]
    %v2442 = vld [vmem:[%s4 + $0x18] sm:$0xff]
    %v2443 = vld [vmem:[%s4 + $0x20] sm:$0xff]
    %v2444 = vld [vmem:[%s4 + $0x28] sm:$0xff]
    %v2445 = vld [vmem:[#allocation19] sm:$0xff]
    %v2446 = vld [vmem:[#allocation19 + $0x8] sm:$0xff]
    %v2447 = vld [vmem:[#allocation19 + $0x10] sm:$0xff]
    %v2448 = vld [vmem:[#allocation19 + $0x18] sm:$0xff]
    %v2449 = vld [vmem:[#allocation19 + $0x20] sm:$0xff]
    %v2450 = vld [vmem:[#allocation19 + $0x28] sm:$0xff]
    %v2451 = vld [vmem:[#allocation19 + $0x30] sm:$0xff]
    %v2452 = vld [vmem:[#allocation19 + $0x38] sm:$0xff]
    %v2453 = vld [vmem:[#allocation19 + $0x40] sm:$0xff]
    %v2454 = vld [vmem:[#allocation19 + $0x48] sm:$0xff]
    %v2455 = vld [vmem:[#allocation19 + $0x50] sm:$0xff]
    %v2456 = vld [vmem:[#allocation19 + $0x58] sm:$0xff]
    %v2457 = vld [vmem:[#allocation19 + $0x60] sm:$0xff]
    %v2458 = vld [vmem:[#allocation19 + $0x68] sm:$0xff]
    %v2459 = vld [vmem:[#allocation19 + $0x70] sm:$0xff]
    %v2460 = vld [vmem:[#allocation19 + $0x78] sm:$0xff]
    %v2461 = vld [vmem:[#allocation19 + $0x80] sm:$0xff]
    %v2462 = vld [vmem:[#allocation19 + $0x88] sm:$0xff]
    %v2463 = vld [vmem:[#allocation19 + $0x90] sm:$0xff]
    %v2464 = vld [vmem:[#allocation19 + $0x98] sm:$0xff]
    %v2465 = vld [vmem:[#allocation19 + $0xa0] sm:$0xff]
    %v2466 = vld [vmem:[#allocation19 + $0xa8] sm:$0xff]
    %v2467 = vld [vmem:[#allocation19 + $0xb0] sm:$0xff]
    %v2468 = vld [vmem:[#allocation19 + $0xb8] sm:$0xff]
    %v2469 = vld [vmem:[#allocation19 + $0xc0] sm:$0xff]
    %v2470 = vld [vmem:[#allocation19 + $0xc8] sm:$0xff]
    %v2471 = vld [vmem:[#allocation19 + $0xd0] sm:$0xff]
    %v2472 = vld [vmem:[#allocation19 + $0xd8] sm:$0xff]
    %v2473 = vld [vmem:[#allocation19 + $0xe0] sm:$0xff]
    %v2474 = vld [vmem:[#allocation19 + $0xe8] sm:$0xff]
    %v2475 = vld [vmem:[#allocation19 + $0xf0] sm:$0xff]
    %v2476 = vld [vmem:[#allocation19 + $0xf8] sm:$0xff]
    %v2477 = vld [vmem:[#allocation19 + $0x100] sm:$0xff]
    %v2478 = vld [vmem:[#allocation19 + $0x108] sm:$0xff]
    %v2479 = vld [vmem:[#allocation19 + $0x110] sm:$0xff]
    %v2480 = vld [vmem:[#allocation19 + $0x118] sm:$0xff]
    %v2481 = vld [vmem:[#allocation19 + $0x120] sm:$0xff]
    %v2482 = vld [vmem:[#allocation19 + $0x128] sm:$0xff]
    %v2483 = vld [vmem:[#allocation19 + $0x130] sm:$0xff]
    %v2484 = vld [vmem:[#allocation19 + $0x138] sm:$0xff]
    %v2485 = vld [vmem:[#allocation19 + $0x140] sm:$0xff]
    %v2486 = vld [vmem:[#allocation19 + $0x148] sm:$0xff]
    %v2487 = vld [vmem:[#allocation19 + $0x150] sm:$0xff]
    %v2488 = vld [vmem:[#allocation19 + $0x158] sm:$0xff]
    %v2489 = vld [vmem:[#allocation19 + $0x160] sm:$0xff]
    %v2490 = vld [vmem:[#allocation19 + $0x168] sm:$0xff]
    %v2491 = vld [vmem:[#allocation19 + $0x170] sm:$0xff]
    %v2492 = vld [vmem:[#allocation19 + $0x178] sm:$0xff]
    %v2493 = vld [vmem:[#allocation19 + $0x180] sm:$0xff]
    %v2494 = vld [vmem:[#allocation19 + $0x188] sm:$0xff]
    %v2495 = vld [vmem:[#allocation19 + $0x190] sm:$0xff]
    %v2496 = vld [vmem:[#allocation19 + $0x198] sm:$0xff]
    %v2497 = vld [vmem:[#allocation19 + $0x1a0] sm:$0xff]
    %v2498 = vld [vmem:[#allocation19 + $0x1a8] sm:$0xff]
    %v2499 = vld [vmem:[#allocation19 + $0x1b0] sm:$0xff]
    %v2500 = vld [vmem:[#allocation19 + $0x1b8] sm:$0xff]
    %v2501 = vld [vmem:[#allocation19 + $0x1c0] sm:$0xff]
    %v2502 = vld [vmem:[#allocation19 + $0x1c8] sm:$0xff]
    %v2503 = vld [vmem:[#allocation19 + $0x1d0] sm:$0xff]
    %v2504 = vld [vmem:[#allocation19 + $0x1d8] sm:$0xff]
    %v2505 = vld [vmem:[#allocation19 + $0x1e0] sm:$0xff]
    %v2506 = vld [vmem:[#allocation19 + $0x1e8] sm:$0xff]
    %v2507 = vld [vmem:[#allocation19 + $0x1f0] sm:$0xff]
    %v2508 = vld [vmem:[#allocation19 + $0x1f8] sm:$0xff]
    %v2509 = vld [vmem:[#allocation19 + $0x200] sm:$0xff]
    %v2510 = vld [vmem:[#allocation19 + $0x208] sm:$0xff]
    %v2511 = vld [vmem:[#allocation19 + $0x210] sm:$0xff]
    %v2512 = vld [vmem:[#allocation19 + $0x218] sm:$0xff]
    %v2513 = vld [vmem:[#allocation19 + $0x220] sm:$0xff]
    %v2514 = vld [vmem:[#allocation19 + $0x228] sm:$0xff]
    %v2515 = vld [vmem:[#allocation19 + $0x230] sm:$0xff]
    %v2516 = vld [vmem:[#allocation19 + $0x238] sm:$0xff]
    %v2517 = vld [vmem:[#allocation19 + $0x240] sm:$0xff]
    %v2518 = vld [vmem:[#allocation19 + $0x248] sm:$0xff]
    %v2519 = vld [vmem:[#allocation19 + $0x250] sm:$0xff]
    %v2520 = vld [vmem:[#allocation19 + $0x258] sm:$0xff]
    %v2521 = vld [vmem:[#allocation19 + $0x260] sm:$0xff]
    %v2522 = vld [vmem:[#allocation19 + $0x268] sm:$0xff]
    %v2523 = vld [vmem:[#allocation19 + $0x270] sm:$0xff]
    %v2524 = vld [vmem:[#allocation19 + $0x278] sm:$0xff]
    %v2525 = vld [vmem:[#allocation19 + $0x280] sm:$0xff]
    %v2526 = vld [vmem:[#allocation19 + $0x288] sm:$0xff]
    %v2527 = vld [vmem:[#allocation19 + $0x290] sm:$0xff]
    %v2528 = vld [vmem:[#allocation19 + $0x298] sm:$0xff]
    %v2529 = vld [vmem:[#allocation19 + $0x2a0] sm:$0xff]
    %v2530 = vld [vmem:[#allocation19 + $0x2a8] sm:$0xff]
    %v2531 = vld [vmem:[#allocation19 + $0x2b0] sm:$0xff]
    %v2532 = vld [vmem:[#allocation19 + $0x2b8] sm:$0xff]
    %v2533 = vld [vmem:[#allocation19 + $0x2c0] sm:$0xff]
    %v2534 = vld [vmem:[#allocation19 + $0x2c8] sm:$0xff]
    %v2535 = vld [vmem:[#allocation19 + $0x2d0] sm:$0xff]
    %v2536 = vld [vmem:[#allocation19 + $0x2d8] sm:$0xff]
    %v2537 = vld [vmem:[#allocation19 + $0x2e0] sm:$0xff]
    %v2538 = vld [vmem:[#allocation19 + $0x2e8] sm:$0xff]
    %v2539 = vld [vmem:[#allocation19 + $0x2f0] sm:$0xff]
    %v2540 = vld [vmem:[#allocation19 + $0x2f8] sm:$0xff]
    %v2541 = vld [vmem:[#allocation19 + $0x300] sm:$0xff]
    %v2542 = vld [vmem:[#allocation19 + $0x308] sm:$0xff]
    %v2543 = vld [vmem:[#allocation19 + $0x310] sm:$0xff]
    %v2544 = vld [vmem:[#allocation19 + $0x318] sm:$0xff]
    %v2545 = vld [vmem:[#allocation19 + $0x320] sm:$0xff]
    %v2546 = vld [vmem:[#allocation19 + $0x328] sm:$0xff]
    %v2547 = vld [vmem:[#allocation19 + $0x330] sm:$0xff]
    %v2548 = vld [vmem:[#allocation19 + $0x338] sm:$0xff]
    %v2549 = vld [vmem:[#allocation19 + $0x340] sm:$0xff]
    %v2550 = vld [vmem:[#allocation19 + $0x348] sm:$0xff]
    %v2551 = vld [vmem:[#allocation19 + $0x350] sm:$0xff]
    %v2552 = vld [vmem:[#allocation19 + $0x358] sm:$0xff]
    %v2553 = vld [vmem:[#allocation19 + $0x360] sm:$0xff]
    %v2554 = vld [vmem:[#allocation19 + $0x368] sm:$0xff]
    %v2555 = vld [vmem:[#allocation19 + $0x370] sm:$0xff]
    %v2556 = vld [vmem:[#allocation19 + $0x378] sm:$0x33]
    %v2557 = vld [vmem:[#allocation19 + $0x380] sm:$0x33]
    %v2558 = vld [vmem:[#allocation19 + $0x388] sm:$0x33]
    %v2559 = vpack.c.bf16 %v2442, %v2439
    %v2560 = vpack.c.bf16 %v2443, %v2440
    %v2561 = vpack.c.bf16 %v2444, %v2441
    %v2565 = vlaneseq
    %v2566 = vshrl.u32 %v2565, 7
    %v2567 = vsub.s32 0, %v2566
    %v2568 = vrot.slane %v252, %v2567
    %v2569 = vlaneseq
    %v2570 = vshrl.u32 %v2569, 7
    %v2571 = vsub.s32 4, %v2570
    %v2572 = vrot.slane %v252, %v2571
    %v2573 = vlaneseq
    %v2574 = vshrl.u32 %v2573, 7
    %v2575 = vsub.s32 0, %v2574
    %v2576 = vrot.slane %v253, %v2575
    %v2577 = vlaneseq
    %v2578 = vshrl.u32 %v2577, 7
    %v2579 = vsub.s32 4, %v2578
    %v2580 = vrot.slane %v253, %v2579
    %v2581 = vlaneseq
    %v2582 = vshrl.u32 %v2581, 7
    %v2583 = vsub.s32 0, %v2582
    %v2584 = vrot.slane %v254, %v2583
    %v2585 = vlaneseq
    %v2586 = vshrl.u32 %v2585, 7
    %v2587 = vsub.s32 4, %v2586
    %v2588 = vrot.slane %v254, %v2587
    %v2595 = vlaneseq
    %v2596 = vshrl.u32 %v2595, 7
    %v2597 = vsub.s32 0, %v2596
    %v2598 = vrot.slane %v2568, %v2597
    %v2599 = vlaneseq
    %v2600 = vshrl.u32 %v2599, 7
    %v2601 = vsub.s32 0, %v2600
    %v2602 = vrot.slane %v2572, %v2601
    %v2603 = vlaneseq
    %v2604 = vshrl.u32 %v2603, 7
    %v2605 = vsub.s32 0, %v2604
    %v2606 = vrot.slane %v2576, %v2605
    %v2607 = vlaneseq
    %v2608 = vshrl.u32 %v2607, 7
    %v2609 = vsub.s32 0, %v2608
    %v2610 = vrot.slane %v2580, %v2609
    %v2611 = vlaneseq
    %v2612 = vshrl.u32 %v2611, 7
    %v2613 = vsub.s32 0, %v2612
    %v2614 = vrot.slane %v2584, %v2613
    %v2615 = vlaneseq
    %v2616 = vshrl.u32 %v2615, 7
    %v2617 = vsub.s32 0, %v2616
    %v2618 = vrot.slane %v2588, %v2617
    %v2733 = vunpack.c.l.b16 %v2445
    %v2734 = vunpack.c.h.b16 %v2445
    %v2735 = vunpack.c.l.b16 %v2446
    %v2736 = vunpack.c.h.b16 %v2446
    %v2737 = vunpack.c.l.b16 %v2447
    %v2738 = vunpack.c.h.b16 %v2447
    %v2739 = vunpack.c.l.b16 %v2448
    %v2740 = vunpack.c.h.b16 %v2448
    %v2741 = vunpack.c.l.b16 %v2449
    %v2742 = vunpack.c.h.b16 %v2449
    %v2743 = vunpack.c.l.b16 %v2450
    %v2744 = vunpack.c.h.b16 %v2450
    %v2745 = vunpack.c.l.b16 %v2451
    %v2746 = vunpack.c.h.b16 %v2451
    %v2747 = vunpack.c.l.b16 %v2452
    %v2748 = vunpack.c.h.b16 %v2452
    %v2749 = vunpack.c.l.b16 %v2453
    %v2750 = vunpack.c.h.b16 %v2453
    %v2751 = vunpack.c.l.b16 %v2454
    %v2752 = vunpack.c.h.b16 %v2454
    %v2753 = vunpack.c.l.b16 %v2455
    %v2754 = vunpack.c.h.b16 %v2455
    %v2755 = vunpack.c.l.b16 %v2456
    %v2756 = vunpack.c.h.b16 %v2456
    %v2757 = vunpack.c.l.b16 %v2457
    %v2758 = vunpack.c.h.b16 %v2457
    %v2759 = vunpack.c.l.b16 %v2458
    %v2760 = vunpack.c.h.b16 %v2458
    %v2761 = vunpack.c.l.b16 %v2459
    %v2762 = vunpack.c.h.b16 %v2459
    %v2763 = vunpack.c.l.b16 %v2460
    %v2764 = vunpack.c.h.b16 %v2460
    %v2765 = vunpack.c.l.b16 %v2461
    %v2766 = vunpack.c.h.b16 %v2461
    %v2767 = vunpack.c.l.b16 %v2462
    %v2768 = vunpack.c.h.b16 %v2462
    %v2769 = vunpack.c.l.b16 %v2463
    %v2770 = vunpack.c.h.b16 %v2463
    %v2771 = vunpack.c.l.b16 %v2464
    %v2772 = vunpack.c.h.b16 %v2464
    %v2773 = vunpack.c.l.b16 %v2465
    %v2774 = vunpack.c.h.b16 %v2465
    %v2775 = vunpack.c.l.b16 %v2466
    %v2776 = vunpack.c.h.b16 %v2466
    %v2777 = vunpack.c.l.b16 %v2467
    %v2778 = vunpack.c.h.b16 %v2467
    %v2779 = vunpack.c.l.b16 %v2468
    %v2780 = vunpack.c.h.b16 %v2468
    %v2781 = vunpack.c.l.b16 %v2469
    %v2782 = vunpack.c.h.b16 %v2469
    %v2783 = vunpack.c.l.b16 %v2470
    %v2784 = vunpack.c.h.b16 %v2470
    %v2785 = vunpack.c.l.b16 %v2471
    %v2786 = vunpack.c.h.b16 %v2471
    %v2787 = vunpack.c.l.b16 %v2472
    %v2788 = vunpack.c.h.b16 %v2472
    %v2789 = vunpack.c.l.b16 %v2473
    %v2790 = vunpack.c.h.b16 %v2473
    %v2791 = vunpack.c.l.b16 %v2474
    %v2792 = vunpack.c.h.b16 %v2474
    %v2793 = vunpack.c.l.b16 %v2475
    %v2794 = vunpack.c.h.b16 %v2475
    %v2795 = vunpack.c.l.b16 %v2476
    %v2796 = vunpack.c.h.b16 %v2476
    %v2797 = vunpack.c.l.b16 %v2477
    %v2798 = vunpack.c.h.b16 %v2477
    %v2799 = vunpack.c.l.b16 %v2478
    %v2800 = vunpack.c.h.b16 %v2478
    %v2801 = vunpack.c.l.b16 %v2479
    %v2802 = vunpack.c.h.b16 %v2479
    %v2803 = vunpack.c.l.b16 %v2480
    %v2804 = vunpack.c.h.b16 %v2480
    %v2805 = vunpack.c.l.b16 %v2481
    %v2806 = vunpack.c.h.b16 %v2481
    %v2807 = vunpack.c.l.b16 %v2482
    %v2808 = vunpack.c.h.b16 %v2482
    %v2809 = vunpack.c.l.b16 %v2483
    %v2810 = vunpack.c.h.b16 %v2483
    %v2811 = vunpack.c.l.b16 %v2484
    %v2812 = vunpack.c.h.b16 %v2484
    %v2813 = vunpack.c.l.b16 %v2485
    %v2814 = vunpack.c.h.b16 %v2485
    %v2815 = vunpack.c.l.b16 %v2486
    %v2816 = vunpack.c.h.b16 %v2486
    %v2817 = vunpack.c.l.b16 %v2487
    %v2818 = vunpack.c.h.b16 %v2487
    %v2819 = vunpack.c.l.b16 %v2488
    %v2820 = vunpack.c.h.b16 %v2488
    %v2821 = vunpack.c.l.b16 %v2489
    %v2822 = vunpack.c.h.b16 %v2489
    %v2823 = vunpack.c.l.b16 %v2490
    %v2824 = vunpack.c.h.b16 %v2490
    %v2825 = vunpack.c.l.b16 %v2491
    %v2826 = vunpack.c.h.b16 %v2491
    %v2827 = vunpack.c.l.b16 %v2492
    %v2828 = vunpack.c.h.b16 %v2492
    %v2829 = vunpack.c.l.b16 %v2493
    %v2830 = vunpack.c.h.b16 %v2493
    %v2831 = vunpack.c.l.b16 %v2494
    %v2832 = vunpack.c.h.b16 %v2494
    %v2833 = vunpack.c.l.b16 %v2495
    %v2834 = vunpack.c.h.b16 %v2495
    %v2835 = vunpack.c.l.b16 %v2496
    %v2836 = vunpack.c.h.b16 %v2496
    %v2837 = vunpack.c.l.b16 %v2497
    %v2838 = vunpack.c.h.b16 %v2497
    %v2839 = vunpack.c.l.b16 %v2498
    %v2840 = vunpack.c.h.b16 %v2498
    %v2841 = vunpack.c.l.b16 %v2499
    %v2842 = vunpack.c.h.b16 %v2499
    %v2843 = vunpack.c.l.b16 %v2500
    %v2844 = vunpack.c.h.b16 %v2500
    %v2845 = vunpack.c.l.b16 %v2501
    %v2846 = vunpack.c.h.b16 %v2501
    %v2847 = vunpack.c.l.b16 %v2502
    %v2848 = vunpack.c.h.b16 %v2502
    %v2849 = vunpack.c.l.b16 %v2503
    %v2850 = vunpack.c.h.b16 %v2503
    %v2851 = vunpack.c.l.b16 %v2504
    %v2852 = vunpack.c.h.b16 %v2504
    %v2853 = vunpack.c.l.b16 %v2505
    %v2854 = vunpack.c.h.b16 %v2505
    %v2855 = vunpack.c.l.b16 %v2506
    %v2856 = vunpack.c.h.b16 %v2506
    %v2857 = vunpack.c.l.b16 %v2507
    %v2858 = vunpack.c.h.b16 %v2507
    %v2859 = vunpack.c.l.b16 %v2508
    %v2860 = vunpack.c.h.b16 %v2508
    %v2861 = vunpack.c.l.b16 %v2509
    %v2862 = vunpack.c.h.b16 %v2509
    %v2863 = vunpack.c.l.b16 %v2510
    %v2864 = vunpack.c.h.b16 %v2510
    %v2865 = vunpack.c.l.b16 %v2511
    %v2866 = vunpack.c.h.b16 %v2511
    %v2867 = vunpack.c.l.b16 %v2512
    %v2868 = vunpack.c.h.b16 %v2512
    %v2869 = vunpack.c.l.b16 %v2513
    %v2870 = vunpack.c.h.b16 %v2513
    %v2871 = vunpack.c.l.b16 %v2514
    %v2872 = vunpack.c.h.b16 %v2514
    %v2873 = vunpack.c.l.b16 %v2515
    %v2874 = vunpack.c.h.b16 %v2515
    %v2875 = vunpack.c.l.b16 %v2516
    %v2876 = vunpack.c.h.b16 %v2516
    %v2877 = vunpack.c.l.b16 %v2517
    %v2878 = vunpack.c.h.b16 %v2517
    %v2879 = vunpack.c.l.b16 %v2518
    %v2880 = vunpack.c.h.b16 %v2518
    %v2881 = vunpack.c.l.b16 %v2519
    %v2882 = vunpack.c.h.b16 %v2519
    %v2883 = vunpack.c.l.b16 %v2520
    %v2884 = vunpack.c.h.b16 %v2520
    %v2885 = vunpack.c.l.b16 %v2521
    %v2886 = vunpack.c.h.b16 %v2521
    %v2887 = vunpack.c.l.b16 %v2522
    %v2888 = vunpack.c.h.b16 %v2522
    %v2889 = vunpack.c.l.b16 %v2523
    %v2890 = vunpack.c.h.b16 %v2523
    %v2891 = vunpack.c.l.b16 %v2524
    %v2892 = vunpack.c.h.b16 %v2524
    %v2893 = vunpack.c.l.b16 %v2525
    %v2894 = vunpack.c.h.b16 %v2525
    %v2895 = vunpack.c.l.b16 %v2526
    %v2896 = vunpack.c.h.b16 %v2526
    %v2897 = vunpack.c.l.b16 %v2527
    %v2898 = vunpack.c.h.b16 %v2527
    %v2899 = vunpack.c.l.b16 %v2528
    %v2900 = vunpack.c.h.b16 %v2528
    %v2901 = vunpack.c.l.b16 %v2529
    %v2902 = vunpack.c.h.b16 %v2529
    %v2903 = vunpack.c.l.b16 %v2530
    %v2904 = vunpack.c.h.b16 %v2530
    %v2905 = vunpack.c.l.b16 %v2531
    %v2906 = vunpack.c.h.b16 %v2531
    %v2907 = vunpack.c.l.b16 %v2532
    %v2908 = vunpack.c.h.b16 %v2532
    %v2909 = vunpack.c.l.b16 %v2533
    %v2910 = vunpack.c.h.b16 %v2533
    %v2911 = vunpack.c.l.b16 %v2534
    %v2912 = vunpack.c.h.b16 %v2534
    %v2913 = vunpack.c.l.b16 %v2535
    %v2914 = vunpack.c.h.b16 %v2535
    %v2915 = vunpack.c.l.b16 %v2536
    %v2916 = vunpack.c.h.b16 %v2536
    %v2917 = vunpack.c.l.b16 %v2537
    %v2918 = vunpack.c.h.b16 %v2537
    %v2919 = vunpack.c.l.b16 %v2538
    %v2920 = vunpack.c.h.b16 %v2538
    %v2921 = vunpack.c.l.b16 %v2539
    %v2922 = vunpack.c.h.b16 %v2539
    %v2923 = vunpack.c.l.b16 %v2540
    %v2924 = vunpack.c.h.b16 %v2540
    %v2925 = vunpack.c.l.b16 %v2541
    %v2926 = vunpack.c.h.b16 %v2541
    %v2927 = vunpack.c.l.b16 %v2542
    %v2928 = vunpack.c.h.b16 %v2542
    %v2929 = vunpack.c.l.b16 %v2543
    %v2930 = vunpack.c.h.b16 %v2543
    %v2931 = vunpack.c.l.b16 %v2544
    %v2932 = vunpack.c.h.b16 %v2544
    %v2933 = vunpack.c.l.b16 %v2545
    %v2934 = vunpack.c.h.b16 %v2545
    %v2935 = vunpack.c.l.b16 %v2546
    %v2936 = vunpack.c.h.b16 %v2546
    %v2937 = vunpack.c.l.b16 %v2547
    %v2938 = vunpack.c.h.b16 %v2547
    %v2939 = vunpack.c.l.b16 %v2548
    %v2940 = vunpack.c.h.b16 %v2548
    %v2941 = vunpack.c.l.b16 %v2549
    %v2942 = vunpack.c.h.b16 %v2549
    %v2943 = vunpack.c.l.b16 %v2550
    %v2944 = vunpack.c.h.b16 %v2550
    %v2945 = vunpack.c.l.b16 %v2551
    %v2946 = vunpack.c.h.b16 %v2551
    %v2947 = vunpack.c.l.b16 %v2552
    %v2948 = vunpack.c.h.b16 %v2552
    %v2949 = vunpack.c.l.b16 %v2553
    %v2950 = vunpack.c.h.b16 %v2553
    %v2951 = vunpack.c.l.b16 %v2554
    %v2952 = vunpack.c.h.b16 %v2554
    %v2953 = vunpack.c.l.b16 %v2555
    %v2954 = vunpack.c.h.b16 %v2555
    %v2955 = vunpack.c.l.b16 %v2556
    %v2956 = vunpack.c.h.b16 %v2556
    %v2957 = vunpack.c.l.b16 %v2557
    %v2958 = vunpack.c.h.b16 %v2557
    %v2959 = vunpack.c.l.b16 %v2558
    %v2960 = vunpack.c.h.b16 %v2558
    %v2961 = vpack.c.b16 %v2739, %v2733
    %v2962 = vpack.c.b16 %v2740, %v2734
    %v2963 = vpack.c.b16 %v2741, %v2735
    %v2964 = vpack.c.b16 %v2742, %v2736
    %v2965 = vpack.c.b16 %v2743, %v2737
    %v2966 = vpack.c.b16 %v2744, %v2738
    %v2967 = vpack.c.b16 %v2751, %v2745
    %v2968 = vpack.c.b16 %v2752, %v2746
    %v2969 = vpack.c.b16 %v2753, %v2747
    %v2970 = vpack.c.b16 %v2754, %v2748
    %v2971 = vpack.c.b16 %v2755, %v2749
    %v2972 = vpack.c.b16 %v2756, %v2750
    %v2973 = vpack.c.b16 %v2763, %v2757
    %v2974 = vpack.c.b16 %v2764, %v2758
    %v2975 = vpack.c.b16 %v2765, %v2759
    %v2976 = vpack.c.b16 %v2766, %v2760
    %v2977 = vpack.c.b16 %v2767, %v2761
    %v2978 = vpack.c.b16 %v2768, %v2762
    %v2979 = vpack.c.b16 %v2775, %v2769
    %v2980 = vpack.c.b16 %v2776, %v2770
    %v2981 = vpack.c.b16 %v2777, %v2771
    %v2982 = vpack.c.b16 %v2778, %v2772
    %v2983 = vpack.c.b16 %v2779, %v2773
    %v2984 = vpack.c.b16 %v2780, %v2774
    %v2985 = vpack.c.b16 %v2787, %v2781
    %v2986 = vpack.c.b16 %v2788, %v2782
    %v2987 = vpack.c.b16 %v2789, %v2783
    %v2988 = vpack.c.b16 %v2790, %v2784
    %v2989 = vpack.c.b16 %v2791, %v2785
    %v2990 = vpack.c.b16 %v2792, %v2786
    %v2991 = vpack.c.b16 %v2799, %v2793
    %v2992 = vpack.c.b16 %v2800, %v2794
    %v2993 = vpack.c.b16 %v2801, %v2795
    %v2994 = vpack.c.b16 %v2802, %v2796
    %v2995 = vpack.c.b16 %v2803, %v2797
    %v2996 = vpack.c.b16 %v2804, %v2798
    %v2997 = vpack.c.b16 %v2811, %v2805
    %v2998 = vpack.c.b16 %v2812, %v2806
    %v2999 = vpack.c.b16 %v2813, %v2807
    %v3000 = vpack.c.b16 %v2814, %v2808
    %v3001 = vpack.c.b16 %v2815, %v2809
    %v3002 = vpack.c.b16 %v2816, %v2810
    %v3003 = vpack.c.b16 %v2823, %v2817
    %v3004 = vpack.c.b16 %v2824, %v2818
    %v3005 = vpack.c.b16 %v2825, %v2819
    %v3006 = vpack.c.b16 %v2826, %v2820
    %v3007 = vpack.c.b16 %v2827, %v2821
    %v3008 = vpack.c.b16 %v2828, %v2822
    %v3009 = vpack.c.b16 %v2835, %v2829
    %v3010 = vpack.c.b16 %v2836, %v2830
    %v3011 = vpack.c.b16 %v2837, %v2831
    %v3012 = vpack.c.b16 %v2838, %v2832
    %v3013 = vpack.c.b16 %v2839, %v2833
    %v3014 = vpack.c.b16 %v2840, %v2834
    %v3015 = vpack.c.b16 %v2847, %v2841
    %v3016 = vpack.c.b16 %v2848, %v2842
    %v3017 = vpack.c.b16 %v2849, %v2843
    %v3018 = vpack.c.b16 %v2850, %v2844
    %v3019 = vpack.c.b16 %v2851, %v2845
    %v3020 = vpack.c.b16 %v2852, %v2846
    %v3021 = vpack.c.b16 %v2859, %v2853
    %v3022 = vpack.c.b16 %v2860, %v2854
    %v3023 = vpack.c.b16 %v2861, %v2855
    %v3024 = vpack.c.b16 %v2862, %v2856
    %v3025 = vpack.c.b16 %v2863, %v2857
    %v3026 = vpack.c.b16 %v2864, %v2858
    %v3027 = vpack.c.b16 %v2871, %v2865
    %v3028 = vpack.c.b16 %v2872, %v2866
    %v3029 = vpack.c.b16 %v2873, %v2867
    %v3030 = vpack.c.b16 %v2874, %v2868
    %v3031 = vpack.c.b16 %v2875, %v2869
    %v3032 = vpack.c.b16 %v2876, %v2870
    %v3033 = vpack.c.b16 %v2883, %v2877
    %v3034 = vpack.c.b16 %v2884, %v2878
    %v3035 = vpack.c.b16 %v2885, %v2879
    %v3036 = vpack.c.b16 %v2886, %v2880
    %v3037 = vpack.c.b16 %v2887, %v2881
    %v3038 = vpack.c.b16 %v2888, %v2882
    %v3039 = vpack.c.b16 %v2895, %v2889
    %v3040 = vpack.c.b16 %v2896, %v2890
    %v3041 = vpack.c.b16 %v2897, %v2891
    %v3042 = vpack.c.b16 %v2898, %v2892
    %v3043 = vpack.c.b16 %v2899, %v2893
    %v3044 = vpack.c.b16 %v2900, %v2894
    %v3045 = vpack.c.b16 %v2907, %v2901
    %v3046 = vpack.c.b16 %v2908, %v2902
    %v3047 = vpack.c.b16 %v2909, %v2903
    %v3048 = vpack.c.b16 %v2910, %v2904
    %v3049 = vpack.c.b16 %v2911, %v2905
    %v3050 = vpack.c.b16 %v2912, %v2906
    %v3051 = vpack.c.b16 %v2919, %v2913
    %v3052 = vpack.c.b16 %v2920, %v2914
    %v3053 = vpack.c.b16 %v2921, %v2915
    %v3054 = vpack.c.b16 %v2922, %v2916
    %v3055 = vpack.c.b16 %v2923, %v2917
    %v3056 = vpack.c.b16 %v2924, %v2918
    %v3057 = vpack.c.b16 %v2931, %v2925
    %v3058 = vpack.c.b16 %v2932, %v2926
    %v3059 = vpack.c.b16 %v2933, %v2927
    %v3060 = vpack.c.b16 %v2934, %v2928
    %v3061 = vpack.c.b16 %v2935, %v2929
    %v3062 = vpack.c.b16 %v2936, %v2930
    %v3063 = vpack.c.b16 %v2943, %v2937
    %v3064 = vpack.c.b16 %v2944, %v2938
    %v3065 = vpack.c.b16 %v2945, %v2939
    %v3066 = vpack.c.b16 %v2946, %v2940
    %v3067 = vpack.c.b16 %v2947, %v2941
    %v3068 = vpack.c.b16 %v2948, %v2942
    %v3069 = vpack.c.b16 %v2955, %v2949
    %v3070 = vpack.c.b16 %v2956, %v2950
    %v3071 = vpack.c.b16 %v2957, %v2951
    %v3072 = vpack.c.b16 %v2958, %v2952
    %v3073 = vpack.c.b16 %v2959, %v2953
    %v3074 = vpack.c.b16 %v2960, %v2954
    %vm3183 = vcmask 359424
    %v3185 = vsel %vm3183, %v2561, 0
    %vm3187 = vcmask 1045504
    %v3189 = vsel %vm3187, %v3069, 0
    %v3192 = vsel %vm3187, %v3070, 0
    %v3195 = vsel %vm3187, %v3071, 0
    %v3198 = vsel %vm3187, %v3072, 0
    %v3201 = vsel %vm3187, %v3073, 0
    %v3204 = vsel %vm3187, %v3074, 0
    %3206 = vmatprep.subr.bf16.mxu0 %v2962
    %3207 = vmatpush1.bf16.msra.mxu0 %v2961
    %3208 = vmatprep.subr.bf16.mxu0 %v2968
    %3209 = vmatpush1.bf16.msra.mxu0 %v2967
    %3210 = vmatprep.subr.bf16.mxu0 %v2974
    %3211 = vmatpush1.bf16.msra.mxu0 %v2973
    %3212 = vmatprep.subr.bf16.mxu0 %v2980
    %3213 = vmatpush1.bf16.msra.mxu0 %v2979
    %3214 = vmatprep.subr.bf16.mxu0 %v2986
    %3215 = vmatpush1.bf16.msra.mxu0 %v2985
    %3216 = vmatprep.subr.bf16.mxu0 %v2992
    %3217 = vmatpush1.bf16.msra.mxu0 %v2991
    %3218 = vmatprep.subr.bf16.mxu0 %v2998
    %3219 = vmatpush1.bf16.msra.mxu0 %v2997
    %3220 = vmatprep.subr.bf16.mxu0 %v3004
    %3221 = vmatpush1.bf16.msra.mxu0 %v3003
    %3222 = vmatprep.subr.bf16.mxu0 %v3010
    %3223 = vmatpush1.bf16.msra.mxu0 %v3009
    %3224 = vmatprep.subr.bf16.mxu0 %v3016
    %3225 = vmatpush1.bf16.msra.mxu0 %v3015
    %3226 = vmatprep.subr.bf16.mxu0 %v3022
    %3227 = vmatpush1.bf16.msra.mxu0 %v3021
    %3228 = vmatprep.subr.bf16.mxu0 %v3028
    %3229 = vmatpush1.bf16.msra.mxu0 %v3027
    %3230 = vmatprep.subr.bf16.mxu0 %v3034
    %3231 = vmatpush1.bf16.msra.mxu0 %v3033
    %3232 = vmatprep.subr.bf16.mxu0 %v3040
    %3233 = vmatpush1.bf16.msra.mxu0 %v3039
    %3234 = vmatprep.subr.bf16.mxu0 %v3046
    %3235 = vmatpush1.bf16.msra.mxu0 %v3045
    %3236 = vmatprep.subr.bf16.mxu0 %v3052
    %3237 = vmatpush1.bf16.msra.mxu0 %v3051
    %3238 = vmatprep.mubr.bf16.mxu0 %v2560
    %3239 = vmatmul.mubr.bf16.gmra.mrb[0].mxu0 %v2559
    %v3240 = vpop.f32.mrb[0].mxu0
    %v3241 = vadd.f32 %v2598, %v3240
    %v3242 = vpop.f32.mrb[0].mxu0
    %v3243 = vadd.f32 %v2602, %v3242
    %v3244 = vpop.f32.mrb[0].mxu0
    %v3245 = vadd.f32 %v2598, %v3244
    %v3246 = vpop.f32.mrb[0].mxu0
    %v3247 = vadd.f32 %v2602, %v3246
    %3248 = vdwg.mxu0
    %3249 = vmatprep.subr.bf16.mxu0 %v3058
    %3250 = vmatpush1.bf16.msra.mxu0 %v3057
    %3251 = vmatprep.subr.bf16.mxu0 %v3064
    %3252 = vmatpush1.bf16.msra.mxu0 %v3063
    %3253 = vmatprep.subr.bf16.mxu0 %v3192
    %3254 = vmatpush1.bf16.msra.mxu0 %v3189
    %3255 = vmatprep.subr.bf16.mxu0 0
    %3256 = vmatpush1.bf16.msra.mxu0 0
    %3257 = vmatprep.subr.bf16.mxu0 0
    %3258 = vmatpush1.bf16.msra.mxu0 0
    %3259 = vmatprep.subr.bf16.mxu0 0
    %3260 = vmatpush1.bf16.msra.mxu0 0
    %3261 = vmatprep.subr.bf16.mxu0 0
    %3262 = vmatpush1.bf16.msra.mxu0 0
    %3263 = vmatprep.subr.bf16.mxu0 0
    %3264 = vmatpush1.bf16.msra.mxu0 0
    %3265 = vmatprep.subr.bf16.mxu0 0
    %3266 = vmatpush1.bf16.msra.mxu0 0
    %3267 = vmatprep.subr.bf16.mxu0 0
    %3268 = vmatpush1.bf16.msra.mxu0 0
    %3269 = vmatprep.subr.bf16.mxu0 0
    %3270 = vmatpush1.bf16.msra.mxu0 0
    %3271 = vmatprep.subr.bf16.mxu0 0
    %3272 = vmatpush1.bf16.msra.mxu0 0
    %3273 = vmatprep.subr.bf16.mxu0 0
    %3274 = vmatpush1.bf16.msra.mxu0 0
    %3275 = vmatprep.subr.bf16.mxu0 0
    %3276 = vmatpush1.bf16.msra.mxu0 0
    %3277 = vmatprep.subr.bf16.mxu0 0
    %3278 = vmatpush1.bf16.msra.mxu0 0
    %3279 = vmatprep.subr.bf16.mxu0 0
    %3280 = vmatpush1.bf16.msra.mxu0 0
    %3281 = vmatprep.mubr.bf16.mxu0 0
    %3282 = vmatmul.mubr.bf16.gmra.mrb[0].mxu0 %v3185
    %v3283 = vpop.f32.mrb[0].mxu0
    %v3284 = vadd.f32 %v3241, %v3283
    %v3285 = vpop.f32.mrb[0].mxu0
    %v3286 = vadd.f32 %v3243, %v3285
    %v3287 = vpop.f32.mrb[0].mxu0
    %v3288 = vadd.f32 %v3245, %v3287
    %v3289 = vpop.f32.mrb[0].mxu0
    %v3290 = vadd.f32 %v3247, %v3289
    %3291 = vdwg.mxu0
    %3292 = vmatprep.subr.bf16.mxu0 %v2964
    %3293 = vmatpush1.bf16.msra.mxu0 %v2963
    %3294 = vmatprep.subr.bf16.mxu0 %v2970
    %3295 = vmatpush1.bf16.msra.mxu0 %v2969
    %3296 = vmatprep.subr.bf16.mxu0 %v2976
    %3297 = vmatpush1.bf16.msra.mxu0 %v2975
    %3298 = vmatprep.subr.bf16.mxu0 %v2982
    %3299 = vmatpush1.bf16.msra.mxu0 %v2981
    %3300 = vmatprep.subr.bf16.mxu0 %v2988
    %3301 = vmatpush1.bf16.msra.mxu0 %v2987
    %3302 = vmatprep.subr.bf16.mxu0 %v2994
    %3303 = vmatpush1.bf16.msra.mxu0 %v2993
    %3304 = vmatprep.subr.bf16.mxu0 %v3000
    %3305 = vmatpush1.bf16.msra.mxu0 %v2999
    %3306 = vmatprep.subr.bf16.mxu0 %v3006
    %3307 = vmatpush1.bf16.msra.mxu0 %v3005
    %3308 = vmatprep.subr.bf16.mxu0 %v3012
    %3309 = vmatpush1.bf16.msra.mxu0 %v3011
    %3310 = vmatprep.subr.bf16.mxu0 %v3018
    %3311 = vmatpush1.bf16.msra.mxu0 %v3017
    %3312 = vmatprep.subr.bf16.mxu0 %v3024
    %3313 = vmatpush1.bf16.msra.mxu0 %v3023
    %3314 = vmatprep.subr.bf16.mxu0 %v3030
    %3315 = vmatpush1.bf16.msra.mxu0 %v3029
    %3316 = vmatprep.subr.bf16.mxu0 %v3036
    %3317 = vmatpush1.bf16.msra.mxu0 %v3035
    %3318 = vmatprep.subr.bf16.mxu0 %v3042
    %3319 = vmatpush1.bf16.msra.mxu0 %v3041
    %3320 = vmatprep.subr.bf16.mxu0 %v3048
    %3321 = vmatpush1.bf16.msra.mxu0 %v3047
    %3322 = vmatprep.subr.bf16.mxu0 %v3054
    %3323 = vmatpush1.bf16.msra.mxu0 %v3053
    %3324 = vmatprep.mubr.bf16.mxu0 %v2560
    %3325 = vmatmul.mubr.bf16.gmra.mrb[0].mxu0 %v2559
    %v3326 = vpop.f32.mrb[0].mxu0
    %v3327 = vadd.f32 %v2606, %v3326
    %v3328 = vpop.f32.mrb[0].mxu0
    %v3329 = vadd.f32 %v2610, %v3328
    %v3330 = vpop.f32.mrb[0].mxu0
    %v3331 = vadd.f32 %v2606, %v3330
    %v3332 = vpop.f32.mrb[0].mxu0
    %v3333 = vadd.f32 %v2610, %v3332
    %3334 = vdwg.mxu0
    %3335 = vmatprep.subr.bf16.mxu0 %v3060
    %3336 = vmatpush1.bf16.msra.mxu0 %v3059
    %3337 = vmatprep.subr.bf16.mxu0 %v3066
    %3338 = vmatpush1.bf16.msra.mxu0 %v3065
    %3339 = vmatprep.subr.bf16.mxu0 %v3198
    %3340 = vmatpush1.bf16.msra.mxu0 %v3195
    %3341 = vmatprep.subr.bf16.mxu0 0
    %3342 = vmatpush1.bf16.msra.mxu0 0
    %3343 = vmatprep.subr.bf16.mxu0 0
    %3344 = vmatpush1.bf16.msra.mxu0 0
    %3345 = vmatprep.subr.bf16.mxu0 0
    %3346 = vmatpush1.bf16.msra.mxu0 0
    %3347 = vmatprep.subr.bf16.mxu0 0
    %3348 = vmatpush1.bf16.msra.mxu0 0
    %3349 = vmatprep.subr.bf16.mxu0 0
    %3350 = vmatpush1.bf16.msra.mxu0 0
    %3351 = vmatprep.subr.bf16.mxu0 0
    %3352 = vmatpush1.bf16.msra.mxu0 0
    %3353 = vmatprep.subr.bf16.mxu0 0
    %3354 = vmatpush1.bf16.msra.mxu0 0
    %3355 = vmatprep.subr.bf16.mxu0 0
    %3356 = vmatpush1.bf16.msra.mxu0 0
    %3357 = vmatprep.subr.bf16.mxu0 0
    %3358 = vmatpush1.bf16.msra.mxu0 0
    %3359 = vmatprep.subr.bf16.mxu0 0
    %3360 = vmatpush1.bf16.msra.mxu0 0
    %3361 = vmatprep.subr.bf16.mxu0 0
    %3362 = vmatpush1.bf16.msra.mxu0 0
    %3363 = vmatprep.subr.bf16.mxu0 0
    %3364 = vmatpush1.bf16.msra.mxu0 0
    %3365 = vmatprep.subr.bf16.mxu0 0
    %3366 = vmatpush1.bf16.msra.mxu0 0
    %3367 = vmatprep.mubr.bf16.mxu0 0
    %3368 = vmatmul.mubr.bf16.gmra.mrb[0].mxu0 %v3185
    %v3369 = vpop.f32.mrb[0].mxu0
    %v3370 = vadd.f32 %v3327, %v3369
    %v3371 = vpop.f32.mrb[0].mxu0
    %v3372 = vadd.f32 %v3329, %v3371
    %v3373 = vpop.f32.mrb[0].mxu0
    %v3374 = vadd.f32 %v3331, %v3373
    %v3375 = vpop.f32.mrb[0].mxu0
    %v3376 = vadd.f32 %v3333, %v3375
    %3377 = vdwg.mxu0
    %3378 = vmatprep.subr.bf16.mxu0 %v2966
    %3379 = vmatpush1.bf16.msra.mxu0 %v2965
    %3380 = vmatprep.subr.bf16.mxu0 %v2972
    %3381 = vmatpush1.bf16.msra.mxu0 %v2971
    %3382 = vmatprep.subr.bf16.mxu0 %v2978
    %3383 = vmatpush1.bf16.msra.mxu0 %v2977
    %3384 = vmatprep.subr.bf16.mxu0 %v2984
    %3385 = vmatpush1.bf16.msra.mxu0 %v2983
    %3386 = vmatprep.subr.bf16.mxu0 %v2990
    %3387 = vmatpush1.bf16.msra.mxu0 %v2989
    %3388 = vmatprep.subr.bf16.mxu0 %v2996
    %3389 = vmatpush1.bf16.msra.mxu0 %v2995
    %3390 = vmatprep.subr.bf16.mxu0 %v3002
    %3391 = vmatpush1.bf16.msra.mxu0 %v3001
    %3392 = vmatprep.subr.bf16.mxu0 %v3008
    %3393 = vmatpush1.bf16.msra.mxu0 %v3007
    %3394 = vmatprep.subr.bf16.mxu0 %v3014
    %3395 = vmatpush1.bf16.msra.mxu0 %v3013
    %3396 = vmatprep.subr.bf16.mxu0 %v3020
    %3397 = vmatpush1.bf16.msra.mxu0 %v3019
    %3398 = vmatprep.subr.bf16.mxu0 %v3026
    %3399 = vmatpush1.bf16.msra.mxu0 %v3025
    %3400 = vmatprep.subr.bf16.mxu0 %v3032
    %3401 = vmatpush1.bf16.msra.mxu0 %v3031
    %3402 = vmatprep.subr.bf16.mxu0 %v3038
    %3403 = vmatpush1.bf16.msra.mxu0 %v3037
    %3404 = vmatprep.subr.bf16.mxu0 %v3044
    %3405 = vmatpush1.bf16.msra.mxu0 %v3043
    %3406 = vmatprep.subr.bf16.mxu0 %v3050
    %3407 = vmatpush1.bf16.msra.mxu0 %v3049
    %3408 = vmatprep.subr.bf16.mxu0 %v3056
    %3409 = vmatpush1.bf16.msra.mxu0 %v3055
    %3410 = vmatprep.mubr.bf16.mxu0 %v2560
    %3411 = vmatmul.mubr.bf16.gmra.mrb[0].mxu0 %v2559
    %v3412 = vpop.f32.mrb[0].mxu0
    %v3413 = vadd.f32 %v2614, %v3412
    %v3414 = vpop.f32.mrb[0].mxu0
    %v3415 = vadd.f32 %v2618, %v3414
    %v3416 = vpop.f32.mrb[0].mxu0
    %v3417 = vadd.f32 %v2614, %v3416
    %v3418 = vpop.f32.mrb[0].mxu0
    %v3419 = vadd.f32 %v2618, %v3418
    %3420 = vdwg.mxu0
    %3421 = vmatprep.subr.bf16.mxu0 %v3062
    %3422 = vmatpush1.bf16.msra.mxu0 %v3061
    %3423 = vmatprep.subr.bf16.mxu0 %v3068
    %3424 = vmatpush1.bf16.msra.mxu0 %v3067
    %3425 = vmatprep.subr.bf16.mxu0 %v3204
    %3426 = vmatpush1.bf16.msra.mxu0 %v3201
    %3427 = vmatprep.subr.bf16.mxu0 0
    %3428 = vmatpush1.bf16.msra.mxu0 0
    %3429 = vmatprep.subr.bf16.mxu0 0
    %3430 = vmatpush1.bf16.msra.mxu0 0
    %3431 = vmatprep.subr.bf16.mxu0 0
    %3432 = vmatpush1.bf16.msra.mxu0 0
    %3433 = vmatprep.subr.bf16.mxu0 0
    %3434 = vmatpush1.bf16.msra.mxu0 0
    %3435 = vmatprep.subr.bf16.mxu0 0
    %3436 = vmatpush1.bf16.msra.mxu0 0
    %3437 = vmatprep.subr.bf16.mxu0 0
    %3438 = vmatpush1.bf16.msra.mxu0 0
    %3439 = vmatprep.subr.bf16.mxu0 0
    %3440 = vmatpush1.bf16.msra.mxu0 0
    %3441 = vmatprep.subr.bf16.mxu0 0
    %3442 = vmatpush1.bf16.msra.mxu0 0
    %3443 = vmatprep.subr.bf16.mxu0 0
    %3444 = vmatpush1.bf16.msra.mxu0 0
    %3445 = vmatprep.subr.bf16.mxu0 0
    %3446 = vmatpush1.bf16.msra.mxu0 0
    %3447 = vmatprep.subr.bf16.mxu0 0
    %3448 = vmatpush1.bf16.msra.mxu0 0
    %3449 = vmatprep.subr.bf16.mxu0 0
    %3450 = vmatpush1.bf16.msra.mxu0 0
    %3451 = vmatprep.subr.bf16.mxu0 0
    %3452 = vmatpush1.bf16.msra.mxu0 0
    %3453 = vmatprep.mubr.bf16.mxu0 0
    %3454 = vmatmul.mubr.bf16.gmra.mrb[0].mxu0 %v3185
    %v3455 = vpop.f32.mrb[0].mxu0
    %v3456 = vadd.f32 %v3413, %v3455
    %v3457 = vpop.f32.mrb[0].mxu0
    %v3458 = vadd.f32 %v3415, %v3457
    %v3459 = vpop.f32.mrb[0].mxu0
    %v3460 = vadd.f32 %v3417, %v3459
    %v3461 = vpop.f32.mrb[0].mxu0
    %v3462 = vadd.f32 %v3419, %v3461
    %3463 = vdwg.mxu0
    %s3464 = smul.u32 4, 112
    %s3465 = smul.u32 %s3464, 6
    %s3466 = sshll.u32 %s3465, 4
    %3467 = dma.done [#allocation3], %s3466
    %v3468 = vld [vmem:[#allocation2] sm:$0xff]
    %v3469 = vld [vmem:[#allocation2 + $0x8] sm:$0xff]
    %v3470 = vld [vmem:[#allocation2 + $0x10] sm:$0xff]
    %v3471 = vld [vmem:[#allocation2 + $0x18] sm:$0xff]
    %v3472 = vld [vmem:[#allocation2 + $0x20] sm:$0xff]
    %v3473 = vld [vmem:[#allocation2 + $0x28] sm:$0xff]
    %v3474 = vld [vmem:[#allocation2 + $0x30] sm:$0xff]
    %v3475 = vld [vmem:[#allocation2 + $0x38] sm:$0xff]
    %v3476 = vld [vmem:[#allocation2 + $0x40] sm:$0xff]
    %v3477 = vld [vmem:[#allocation2 + $0x48] sm:$0xff]
    %v3478 = vld [vmem:[#allocation2 + $0x50] sm:$0xff]
    %v3479 = vld [vmem:[#allocation2 + $0x58] sm:$0xff]
    %v3480 = vld [vmem:[#allocation2 + $0x60] sm:$0xff]
    %v3481 = vld [vmem:[#allocation2 + $0x68] sm:$0xff]
    %v3482 = vld [vmem:[#allocation2 + $0x70] sm:$0xff]
    %v3483 = vld [vmem:[#allocation2 + $0x78] sm:$0xff]
    %v3484 = vld [vmem:[#allocation2 + $0x80] sm:$0xff]
    %v3485 = vld [vmem:[#allocation2 + $0x88] sm:$0xff]
    %v3486 = vld [vmem:[#allocation2 + $0x90] sm:$0xff]
    %v3487 = vld [vmem:[#allocation2 + $0x98] sm:$0xff]
    %v3488 = vld [vmem:[#allocation2 + $0xa0] sm:$0xff]
    %v3489 = vld [vmem:[#allocation2 + $0xa8] sm:$0xff]
    %v3490 = vld [vmem:[#allocation2 + $0xb0] sm:$0xff]
    %v3491 = vld [vmem:[#allocation2 + $0xb8] sm:$0xff]
    %v3492 = vld [vmem:[#allocation2 + $0xc0] sm:$0xff]
    %v3493 = vld [vmem:[#allocation2 + $0xc8] sm:$0xff]
    %v3494 = vld [vmem:[#allocation2 + $0xd0] sm:$0xff]
    %v3495 = vld [vmem:[#allocation2 + $0xd8] sm:$0xff]
    %v3496 = vld [vmem:[#allocation2 + $0xe0] sm:$0xff]
    %v3497 = vld [vmem:[#allocation2 + $0xe8] sm:$0xff]
    %v3498 = vld [vmem:[#allocation2 + $0xf0] sm:$0xff]
    %v3499 = vld [vmem:[#allocation2 + $0xf8] sm:$0xff]
    %v3500 = vld [vmem:[#allocation2 + $0x100] sm:$0xff]
    %v3501 = vld [vmem:[#allocation2 + $0x108] sm:$0xff]
    %v3502 = vld [vmem:[#allocation2 + $0x110] sm:$0xff]
    %v3503 = vld [vmem:[#allocation2 + $0x118] sm:$0xff]
    %v3504 = vld [vmem:[#allocation2 + $0x120] sm:$0xff]
    %v3505 = vld [vmem:[#allocation2 + $0x128] sm:$0xff]
    %v3506 = vld [vmem:[#allocation2 + $0x130] sm:$0xff]
    %v3507 = vld [vmem:[#allocation2 + $0x138] sm:$0xff]
    %v3508 = vld [vmem:[#allocation2 + $0x140] sm:$0xff]
    %v3509 = vld [vmem:[#allocation2 + $0x148] sm:$0xff]
    %v3510 = vld [vmem:[#allocation2 + $0x150] sm:$0xff]
    %v3511 = vld [vmem:[#allocation2 + $0x158] sm:$0xff]
    %v3512 = vld [vmem:[#allocation2 + $0x160] sm:$0xff]
    %v3513 = vld [vmem:[#allocation2 + $0x168] sm:$0xff]
    %v3514 = vld [vmem:[#allocation2 + $0x170] sm:$0xff]
    %v3515 = vld [vmem:[#allocation2 + $0x178] sm:$0xff]
    %3516 = vmatprep.subr.bf16.mxu0 %v3469
    %3517 = vmatpush1.bf16.msra.mxu0 %v3468
    %3518 = vmatprep.subr.bf16.mxu0 %v3475
    %3519 = vmatpush1.bf16.msra.mxu0 %v3474
    %3520 = vmatprep.subr.bf16.mxu0 %v3481
    %3521 = vmatpush1.bf16.msra.mxu0 %v3480
    %3522 = vmatprep.subr.bf16.mxu0 %v3487
    %3523 = vmatpush1.bf16.msra.mxu0 %v3486
    %3524 = vmatprep.subr.bf16.mxu0 %v3493
    %3525 = vmatpush1.bf16.msra.mxu0 %v3492
    %3526 = vmatprep.subr.bf16.mxu0 %v3499
    %3527 = vmatpush1.bf16.msra.mxu0 %v3498
    %3528 = vmatprep.subr.bf16.mxu0 %v3505
    %3529 = vmatpush1.bf16.msra.mxu0 %v3504
    %3530 = vmatprep.subr.bf16.mxu0 %v3511
    %3531 = vmatpush1.bf16.msra.mxu0 %v3510
    %3532 = vmatprep.subr.bf16.mxu0 0
    %3533 = vmatpush1.bf16.msra.mxu0 0
    %3534 = vmatprep.subr.bf16.mxu0 0
    %3535 = vmatpush1.bf16.msra.mxu0 0
    %3536 = vmatprep.subr.bf16.mxu0 0
    %3537 = vmatpush1.bf16.msra.mxu0 0
    %3538 = vmatprep.subr.bf16.mxu0 0
    %3539 = vmatpush1.bf16.msra.mxu0 0
    %3540 = vmatprep.subr.bf16.mxu0 0
    %3541 = vmatpush1.bf16.msra.mxu0 0
    %3542 = vmatprep.subr.bf16.mxu0 0
    %3543 = vmatpush1.bf16.msra.mxu0 0
    %3544 = vmatprep.subr.bf16.mxu0 0
    %3545 = vmatpush1.bf16.msra.mxu0 0
    %3546 = vmatprep.subr.bf16.mxu0 0
    %3547 = vmatpush1.bf16.msra.mxu0 0
    %3548 = vmatprep.mubr.bf16.mxu0 0
    %3549 = vmatmul.mubr.bf16.gmra.mrb[0].mxu0 %v2344
    %v3550 = vpop.f32.mrb[0].mxu0
    %v3551 = vadd.f32 %v2598, %v3550
    %v3552 = vpop.f32.mrb[0].mxu0
    %v3553 = vadd.f32 %v2602, %v3552
    %v3554 = vpop.f32.mrb[0].mxu0
    %v3555 = vpop.f32.mrb[0].mxu0
    %3556 = vdwg.mxu0
    %3557 = vmatprep.subr.bf16.mxu0 %v3471
    %3558 = vmatpush1.bf16.msra.mxu0 %v3470
    %3559 = vmatprep.subr.bf16.mxu0 %v3477
    %3560 = vmatpush1.bf16.msra.mxu0 %v3476
    %3561 = vmatprep.subr.bf16.mxu0 %v3483
    %3562 = vmatpush1.bf16.msra.mxu0 %v3482
    %3563 = vmatprep.subr.bf16.mxu0 %v3489
    %3564 = vmatpush1.bf16.msra.mxu0 %v3488
    %3565 = vmatprep.subr.bf16.mxu0 %v3495
    %3566 = vmatpush1.bf16.msra.mxu0 %v3494
    %3567 = vmatprep.subr.bf16.mxu0 %v3501
    %3568 = vmatpush1.bf16.msra.mxu0 %v3500
    %3569 = vmatprep.subr.bf16.mxu0 %v3507
    %3570 = vmatpush1.bf16.msra.mxu0 %v3506
    %3571 = vmatprep.subr.bf16.mxu0 %v3513
    %3572 = vmatpush1.bf16.msra.mxu0 %v3512
    %3573 = vmatprep.subr.bf16.mxu0 0
    %3574 = vmatpush1.bf16.msra.mxu0 0
    %3575 = vmatprep.subr.bf16.mxu0 0
    %3576 = vmatpush1.bf16.msra.mxu0 0
    %3577 = vmatprep.subr.bf16.mxu0 0
    %3578 = vmatpush1.bf16.msra.mxu0 0
    %3579 = vmatprep.subr.bf16.mxu0 0
    %3580 = vmatpush1.bf16.msra.mxu0 0
    %3581 = vmatprep.subr.bf16.mxu0 0
    %3582 = vmatpush1.bf16.msra.mxu0 0
    %3583 = vmatprep.subr.bf16.mxu0 0
    %3584 = vmatpush1.bf16.msra.mxu0 0
    %3585 = vmatprep.subr.bf16.mxu0 0
    %3586 = vmatpush1.bf16.msra.mxu0 0
    %3587 = vmatprep.subr.bf16.mxu0 0
    %3588 = vmatpush1.bf16.msra.mxu0 0
    %3589 = vmatprep.mubr.bf16.mxu0 0
    %3590 = vmatmul.mubr.bf16.gmra.mrb[0].mxu0 %v2344
    %v3591 = vpop.f32.mrb[0].mxu0
    %v3592 = vadd.f32 %v2606, %v3591
    %v3593 = vpop.f32.mrb[0].mxu0
    %v3594 = vadd.f32 %v2610, %v3593
    %v3595 = vpop.f32.mrb[0].mxu0
    %v3596 = vpop.f32.mrb[0].mxu0
    %3597 = vdwg.mxu0
    %3598 = vmatprep.subr.bf16.mxu0 %v3473
    %3599 = vmatpush1.bf16.msra.mxu0 %v3472
    %3600 = vmatprep.subr.bf16.mxu0 %v3479
    %3601 = vmatpush1.bf16.msra.mxu0 %v3478
    %3602 = vmatprep.subr.bf16.mxu0 %v3485
    %3603 = vmatpush1.bf16.msra.mxu0 %v3484
    %3604 = vmatprep.subr.bf16.mxu0 %v3491
    %3605 = vmatpush1.bf16.msra.mxu0 %v3490
    %3606 = vmatprep.subr.bf16.mxu0 %v3497
    %3607 = vmatpush1.bf16.msra.mxu0 %v3496
    %3608 = vmatprep.subr.bf16.mxu0 %v3503
    %3609 = vmatpush1.bf16.msra.mxu0 %v3502
    %3610 = vmatprep.subr.bf16.mxu0 %v3509
    %3611 = vmatpush1.bf16.msra.mxu0 %v3508
    %3612 = vmatprep.subr.bf16.mxu0 %v3515
    %3613 = vmatpush1.bf16.msra.mxu0 %v3514
    %3614 = vmatprep.subr.bf16.mxu0 0
    %3615 = vmatpush1.bf16.msra.mxu0 0
    %3616 = vmatprep.subr.bf16.mxu0 0
    %3617 = vmatpush1.bf16.msra.mxu0 0
    %3618 = vmatprep.subr.bf16.mxu0 0
    %3619 = vmatpush1.bf16.msra.mxu0 0
    %3620 = vmatprep.subr.bf16.mxu0 0
    %3621 = vmatpush1.bf16.msra.mxu0 0
    %3622 = vmatprep.subr.bf16.mxu0 0
    %3623 = vmatpush1.bf16.msra.mxu0 0
    %3624 = vmatprep.subr.bf16.mxu0 0
    %3625 = vmatpush1.bf16.msra.mxu0 0
    %3626 = vmatprep.subr.bf16.mxu0 0
    %3627 = vmatpush1.bf16.msra.mxu0 0
    %3628 = vmatprep.subr.bf16.mxu0 0
    %3629 = vmatpush1.bf16.msra.mxu0 0
    %3630 = vmatprep.mubr.bf16.mxu0 0
    %3631 = vmatmul.mubr.bf16.gmra.mrb[0].mxu0 %v2344
    %v3632 = vpop.f32.mrb[0].mxu0
    %v3633 = vadd.f32 %v2614, %v3632
    %v3634 = vpop.f32.mrb[0].mxu0
    %v3635 = vadd.f32 %v2618, %v3634
    %v3636 = vpop.f32.mrb[0].mxu0
    %v3637 = vpop.f32.mrb[0].mxu0
    %3638 = vdwg.mxu0
    %v3639 = vld [vmem:[#allocation2 + $0x180] sm:$0xff]
    %v3640 = vld [vmem:[#allocation2 + $0x188] sm:$0xff]
    %v3641 = vld [vmem:[#allocation2 + $0x190] sm:$0xff]
    %v3642 = vld [vmem:[#allocation2 + $0x198] sm:$0xff]
    %v3643 = vld [vmem:[#allocation2 + $0x1a0] sm:$0xff]
    %v3644 = vld [vmem:[#allocation2 + $0x1a8] sm:$0xff]
    %v3645 = vld [vmem:[#allocation2 + $0x1b0] sm:$0xff]
    %v3646 = vld [vmem:[#allocation2 + $0x1b8] sm:$0xff]
    %v3647 = vld [vmem:[#allocation2 + $0x1c0] sm:$0xff]
    %v3648 = vld [vmem:[#allocation2 + $0x1c8] sm:$0xff]
    %v3649 = vld [vmem:[#allocation2 + $0x1d0] sm:$0xff]
    %v3650 = vld [vmem:[#allocation2 + $0x1d8] sm:$0xff]
    %v3651 = vld [vmem:[#allocation2 + $0x1e0] sm:$0xff]
    %v3652 = vld [vmem:[#allocation2 + $0x1e8] sm:$0xff]
    %v3653 = vld [vmem:[#allocation2 + $0x1f0] sm:$0xff]
    %v3654 = vld [vmem:[#allocation2 + $0x1f8] sm:$0xff]
    %v3655 = vld [vmem:[#allocation2 + $0x200] sm:$0xff]
    %v3656 = vld [vmem:[#allocation2 + $0x208] sm:$0xff]
    %v3657 = vld [vmem:[#allocation2 + $0x210] sm:$0xff]
    %v3658 = vld [vmem:[#allocation2 + $0x218] sm:$0xff]
    %v3659 = vld [vmem:[#allocation2 + $0x220] sm:$0xff]
    %v3660 = vld [vmem:[#allocation2 + $0x228] sm:$0xff]
    %v3661 = vld [vmem:[#allocation2 + $0x230] sm:$0xff]
    %v3662 = vld [vmem:[#allocation2 + $0x238] sm:$0xff]
    %v3663 = vld [vmem:[#allocation2 + $0x240] sm:$0xff]
    %v3664 = vld [vmem:[#allocation2 + $0x248] sm:$0xff]
    %v3665 = vld [vmem:[#allocation2 + $0x250] sm:$0xff]
    %v3666 = vld [vmem:[#allocation2 + $0x258] sm:$0xff]
    %v3667 = vld [vmem:[#allocation2 + $0x260] sm:$0xff]
    %v3668 = vld [vmem:[#allocation2 + $0x268] sm:$0xff]
    %v3669 = vld [vmem:[#allocation2 + $0x270] sm:$0xff]
    %v3670 = vld [vmem:[#allocation2 + $0x278] sm:$0xff]
    %v3671 = vld [vmem:[#allocation2 + $0x280] sm:$0xff]
    %v3672 = vld [vmem:[#allocation2 + $0x288] sm:$0xff]
    %v3673 = vld [vmem:[#allocation2 + $0x290] sm:$0xff]
    %v3674 = vld [vmem:[#allocation2 + $0x298] sm:$0xff]
    %v3675 = vld [vmem:[#allocation2 + $0x2a0] sm:$0xff]
    %v3676 = vld [vmem:[#allocation2 + $0x2a8] sm:$0xff]
    %v3677 = vld [vmem:[#allocation2 + $0x2b0] sm:$0xff]
    %v3678 = vld [vmem:[#allocation2 + $0x2b8] sm:$0xff]
    %v3679 = vld [vmem:[#allocation2 + $0x2c0] sm:$0xff]
    %v3680 = vld [vmem:[#allocation2 + $0x2c8] sm:$0xff]
    %v3681 = vld [vmem:[#allocation2 + $0x2d0] sm:$0xff]
    %v3682 = vld [vmem:[#allocation2 + $0x2d8] sm:$0xff]
    %v3683 = vld [vmem:[#allocation2 + $0x2e0] sm:$0xff]
    %v3684 = vld [vmem:[#allocation2 + $0x2e8] sm:$0xff]
    %v3685 = vld [vmem:[#allocation2 + $0x2f0] sm:$0xff]
    %v3686 = vld [vmem:[#allocation2 + $0x2f8] sm:$0xff]
    %v3687 = vld [vmem:[#allocation2 + $0x300] sm:$0xff]
    %v3688 = vld [vmem:[#allocation2 + $0x308] sm:$0xff]
    %v3689 = vld [vmem:[#allocation2 + $0x310] sm:$0xff]
    %v3690 = vld [vmem:[#allocation2 + $0x318] sm:$0xff]
    %v3691 = vld [vmem:[#allocation2 + $0x320] sm:$0xff]
    %v3692 = vld [vmem:[#allocation2 + $0x328] sm:$0xff]
    %v3693 = vld [vmem:[#allocation2 + $0x330] sm:$0xff]
    %v3694 = vld [vmem:[#allocation2 + $0x338] sm:$0xff]
    %v3695 = vld [vmem:[#allocation2 + $0x340] sm:$0xff]
    %v3696 = vld [vmem:[#allocation2 + $0x348] sm:$0xff]
    %v3697 = vld [vmem:[#allocation2 + $0x350] sm:$0xff]
    %v3698 = vld [vmem:[#allocation2 + $0x358] sm:$0xff]
    %v3699 = vld [vmem:[#allocation2 + $0x360] sm:$0xff]
    %v3700 = vld [vmem:[#allocation2 + $0x368] sm:$0xff]
    %v3701 = vld [vmem:[#allocation2 + $0x370] sm:$0xff]
    %v3702 = vld [vmem:[#allocation2 + $0x378] sm:$0xff]
    %v3703 = vld [vmem:[#allocation2 + $0x380] sm:$0xff]
    %v3704 = vld [vmem:[#allocation2 + $0x388] sm:$0xff]
    %v3705 = vld [vmem:[#allocation2 + $0x390] sm:$0xff]
    %v3706 = vld [vmem:[#allocation2 + $0x398] sm:$0xff]
    %v3707 = vld [vmem:[#allocation2 + $0x3a0] sm:$0xff]
    %v3708 = vld [vmem:[#allocation2 + $0x3a8] sm:$0xff]
    %v3709 = vld [vmem:[#allocation2 + $0x3b0] sm:$0xff]
    %v3710 = vld [vmem:[#allocation2 + $0x3b8] sm:$0xff]
    %v3711 = vld [vmem:[#allocation2 + $0x3c0] sm:$0xff]
    %v3712 = vld [vmem:[#allocation2 + $0x3c8] sm:$0xff]
    %v3713 = vld [vmem:[#allocation2 + $0x3d0] sm:$0xff]
    %v3714 = vld [vmem:[#allocation2 + $0x3d8] sm:$0xff]
    %v3715 = vld [vmem:[#allocation2 + $0x3e0] sm:$0xff]
    %v3716 = vld [vmem:[#allocation2 + $0x3e8] sm:$0xff]
    %v3717 = vld [vmem:[#allocation2 + $0x3f0] sm:$0xff]
    %v3718 = vld [vmem:[#allocation2 + $0x3f8] sm:$0xff]
    %v3719 = vld [vmem:[#allocation2 + $0x400] sm:$0xff]
    %v3720 = vld [vmem:[#allocation2 + $0x408] sm:$0xff]
    %v3721 = vld [vmem:[#allocation2 + $0x410] sm:$0xff]
    %v3722 = vld [vmem:[#allocation2 + $0x418] sm:$0xff]
    %v3723 = vld [vmem:[#allocation2 + $0x420] sm:$0xff]
    %v3724 = vld [vmem:[#allocation2 + $0x428] sm:$0xff]
    %v3725 = vld [vmem:[#allocation2 + $0x430] sm:$0xff]
    %v3726 = vld [vmem:[#allocation2 + $0x438] sm:$0xff]
    %v3727 = vld [vmem:[#allocation2 + $0x440] sm:$0xff]
    %v3728 = vld [vmem:[#allocation2 + $0x448] sm:$0xff]
    %v3729 = vld [vmem:[#allocation2 + $0x450] sm:$0xff]
    %v3730 = vld [vmem:[#allocation2 + $0x458] sm:$0xff]
    %v3731 = vld [vmem:[#allocation2 + $0x460] sm:$0xff]
    %v3732 = vld [vmem:[#allocation2 + $0x468] sm:$0xff]
    %v3733 = vld [vmem:[#allocation2 + $0x470] sm:$0xff]
    %v3734 = vld [vmem:[#allocation2 + $0x478] sm:$0xff]
    %v3735 = vlaneseq
    %v3736 = vshrl.u32 %v3735, 7
    %v3737 = vsub.s32 1, %v3736
    %v3738 = vrot.slane %v252, %v3737
    %v3739 = vlaneseq
    %v3740 = vshrl.u32 %v3739, 7
    %v3741 = vsub.s32 5, %v3740
    %v3742 = vrot.slane %v252, %v3741
    %v3743 = vlaneseq
    %v3744 = vshrl.u32 %v3743, 7
    %v3745 = vsub.s32 1, %v3744
    %v3746 = vrot.slane %v253, %v3745
    %v3747 = vlaneseq
    %v3748 = vshrl.u32 %v3747, 7
    %v3749 = vsub.s32 5, %v3748
    %v3750 = vrot.slane %v253, %v3749
    %v3751 = vlaneseq
    %v3752 = vshrl.u32 %v3751, 7
    %v3753 = vsub.s32 1, %v3752
    %v3754 = vrot.slane %v254, %v3753
    %v3755 = vlaneseq
    %v3756 = vshrl.u32 %v3755, 7
    %v3757 = vsub.s32 5, %v3756
    %v3758 = vrot.slane %v254, %v3757
    %v3765 = vlaneseq
    %v3766 = vshrl.u32 %v3765, 7
    %v3767 = vsub.s32 1, %v3766
    %v3768 = vrot.slane %v3738, %v3767
    %v3769 = vlaneseq
    %v3770 = vshrl.u32 %v3769, 7
    %v3771 = vsub.s32 1, %v3770
    %v3772 = vrot.slane %v3742, %v3771
    %v3773 = vlaneseq
    %v3774 = vshrl.u32 %v3773, 7
    %v3775 = vsub.s32 1, %v3774
    %v3776 = vrot.slane %v3746, %v3775
    %v3777 = vlaneseq
    %v3778 = vshrl.u32 %v3777, 7
    %v3779 = vsub.s32 1, %v3778
    %v3780 = vrot.slane %v3750, %v3779
    %v3781 = vlaneseq
    %v3782 = vshrl.u32 %v3781, 7
    %v3783 = vsub.s32 1, %v3782
    %v3784 = vrot.slane %v3754, %v3783
    %v3785 = vlaneseq
    %v3786 = vshrl.u32 %v3785, 7
    %v3787 = vsub.s32 1, %v3786
    %v3788 = vrot.slane %v3758, %v3787
    %3789 = vmatprep.subr.bf16.mxu0 %v3640
    %3790 = vmatpush1.bf16.msra.mxu0 %v3639
    %3791 = vmatprep.subr.bf16.mxu0 %v3646
    %3792 = vmatpush1.bf16.msra.mxu0 %v3645
    %3793 = vmatprep.subr.bf16.mxu0 %v3652
    %3794 = vmatpush1.bf16.msra.mxu0 %v3651
    %3795 = vmatprep.subr.bf16.mxu0 %v3658
    %3796 = vmatpush1.bf16.msra.mxu0 %v3657
    %3797 = vmatprep.subr.bf16.mxu0 %v3664
    %3798 = vmatpush1.bf16.msra.mxu0 %v3663
    %3799 = vmatprep.subr.bf16.mxu0 %v3670
    %3800 = vmatpush1.bf16.msra.mxu0 %v3669
    %3801 = vmatprep.subr.bf16.mxu0 %v3676
    %3802 = vmatpush1.bf16.msra.mxu0 %v3675
    %3803 = vmatprep.subr.bf16.mxu0 %v3682
    %3804 = vmatpush1.bf16.msra.mxu0 %v3681
    %3805 = vmatprep.subr.bf16.mxu0 %v3688
    %3806 = vmatpush1.bf16.msra.mxu0 %v3687
    %3807 = vmatprep.subr.bf16.mxu0 %v3694
    %3808 = vmatpush1.bf16.msra.mxu0 %v3693
    %3809 = vmatprep.subr.bf16.mxu0 %v3700
    %3810 = vmatpush1.bf16.msra.mxu0 %v3699
    %3811 = vmatprep.subr.bf16.mxu0 %v3706
    %3812 = vmatpush1.bf16.msra.mxu0 %v3705
    %3813 = vmatprep.subr.bf16.mxu0 %v3712
    %3814 = vmatpush1.bf16.msra.mxu0 %v3711
    %3815 = vmatprep.subr.bf16.mxu0 %v3718
    %3816 = vmatpush1.bf16.msra.mxu0 %v3717
    %3817 = vmatprep.subr.bf16.mxu0 %v3724
    %3818 = vmatpush1.bf16.msra.mxu0 %v3723
    %3819 = vmatprep.subr.bf16.mxu0 %v3730
    %3820 = vmatpush1.bf16.msra.mxu0 %v3729
    %3821 = vmatprep.mubr.bf16.mxu0 0
    %3822 = vmatmul.mubr.bf16.gmra.mrb[0].mxu0 0
    %v3823 = vpop.f32.mrb[0].mxu0
    %v3824 = vadd.f32 %v3768, %v3823
    %v3825 = vpop.f32.mrb[0].mxu0
    %v3826 = vadd.f32 %v3772, %v3825
    %v3827 = vpop.f32.mrb[0].mxu0
    %v3828 = vpop.f32.mrb[0].mxu0
    %3829 = vdwg.mxu0
    %3830 = vmatprep.subr.bf16.mxu0 %v3642
    %3831 = vmatpush1.bf16.msra.mxu0 %v3641
    %3832 = vmatprep.subr.bf16.mxu0 %v3648
    %3833 = vmatpush1.bf16.msra.mxu0 %v3647
    %3834 = vmatprep.subr.bf16.mxu0 %v3654
    %3835 = vmatpush1.bf16.msra.mxu0 %v3653
    %3836 = vmatprep.subr.bf16.mxu0 %v3660
    %3837 = vmatpush1.bf16.msra.mxu0 %v3659
    %3838 = vmatprep.subr.bf16.mxu0 %v3666
    %3839 = vmatpush1.bf16.msra.mxu0 %v3665
    %3840 = vmatprep.subr.bf16.mxu0 %v3672
    %3841 = vmatpush1.bf16.msra.mxu0 %v3671
    %3842 = vmatprep.subr.bf16.mxu0 %v3678
    %3843 = vmatpush1.bf16.msra.mxu0 %v3677
    %3844 = vmatprep.subr.bf16.mxu0 %v3684
    %3845 = vmatpush1.bf16.msra.mxu0 %v3683
    %3846 = vmatprep.subr.bf16.mxu0 %v3690
    %3847 = vmatpush1.bf16.msra.mxu0 %v3689
    %3848 = vmatprep.subr.bf16.mxu0 %v3696
    %3849 = vmatpush1.bf16.msra.mxu0 %v3695
    %3850 = vmatprep.subr.bf16.mxu0 %v3702
    %3851 = vmatpush1.bf16.msra.mxu0 %v3701
    %3852 = vmatprep.subr.bf16.mxu0 %v3708
    %3853 = vmatpush1.bf16.msra.mxu0 %v3707
    %3854 = vmatprep.subr.bf16.mxu0 %v3714
    %3855 = vmatpush1.bf16.msra.mxu0 %v3713
    %3856 = vmatprep.subr.bf16.mxu0 %v3720
    %3857 = vmatpush1.bf16.msra.mxu0 %v3719
    %3858 = vmatprep.subr.bf16.mxu0 %v3726
    %3859 = vmatpush1.bf16.msra.mxu0 %v3725
    %3860 = vmatprep.subr.bf16.mxu0 %v3732
    %3861 = vmatpush1.bf16.msra.mxu0 %v3731
    %3862 = vmatprep.mubr.bf16.mxu0 0
    %3863 = vmatmul.mubr.bf16.gmra.mrb[0].mxu0 0
    %v3864 = vpop.f32.mrb[0].mxu0
    %v3865 = vadd.f32 %v3776, %v3864
    %v3866 = vpop.f32.mrb[0].mxu0
    %v3867 = vadd.f32 %v3780, %v3866
    %v3868 = vpop.f32.mrb[0].mxu0
    %v3869 = vpop.f32.mrb[0].mxu0
    %3870 = vdwg.mxu0
    %3871 = vmatprep.subr.bf16.mxu0 %v3644
    %3872 = vmatpush1.bf16.msra.mxu0 %v3643
    %3873 = vmatprep.subr.bf16.mxu0 %v3650
    %3874 = vmatpush1.bf16.msra.mxu0 %v3649
    %3875 = vmatprep.subr.bf16.mxu0 %v3656
    %3876 = vmatpush1.bf16.msra.mxu0 %v3655
    %3877 = vmatprep.subr.bf16.mxu0 %v3662
    %3878 = vmatpush1.bf16.msra.mxu0 %v3661
    %3879 = vmatprep.subr.bf16.mxu0 %v3668
    %3880 = vmatpush1.bf16.msra.mxu0 %v3667
    %3881 = vmatprep.subr.bf16.mxu0 %v3674
    %3882 = vmatpush1.bf16.msra.mxu0 %v3673
    %3883 = vmatprep.subr.bf16.mxu0 %v3680
    %3884 = vmatpush1.bf16.msra.mxu0 %v3679
    %3885 = vmatprep.subr.bf16.mxu0 %v3686
    %3886 = vmatpush1.bf16.msra.mxu0 %v3685
    %3887 = vmatprep.subr.bf16.mxu0 %v3692
    %3888 = vmatpush1.bf16.msra.mxu0 %v3691
    %3889 = vmatprep.subr.bf16.mxu0 %v3698
    %3890 = vmatpush1.bf16.msra.mxu0 %v3697
    %3891 = vmatprep.subr.bf16.mxu0 %v3704
    %3892 = vmatpush1.bf16.msra.mxu0 %v3703
    %3893 = vmatprep.subr.bf16.mxu0 %v3710
    %3894 = vmatpush1.bf16.msra.mxu0 %v3709
    %3895 = vmatprep.subr.bf16.mxu0 %v3716
    %3896 = vmatpush1.bf16.msra.mxu0 %v3715
    %3897 = vmatprep.subr.bf16.mxu0 %v3722
    %3898 = vmatpush1.bf16.msra.mxu0 %v3721
    %3899 = vmatprep.subr.bf16.mxu0 %v3728
    %3900 = vmatpush1.bf16.msra.mxu0 %v3727
    %3901 = vmatprep.subr.bf16.mxu0 %v3734
    %3902 = vmatpush1.bf16.msra.mxu0 %v3733
    %3903 = vmatprep.mubr.bf16.mxu0 0
    %3904 = vmatmul.mubr.bf16.gmra.mrb[0].mxu0 0
    %v3905 = vpop.f32.mrb[0].mxu0
    %v3906 = vadd.f32 %v3784, %v3905
    %v3907 = vpop.f32.mrb[0].mxu0
    %v3908 = vadd.f32 %v3788, %v3907
    %v3909 = vpop.f32.mrb[0].mxu0
    %v3910 = vpop.f32.mrb[0].mxu0
    %3911 = vdwg.mxu0
    %v3912 = vadd.f32 %v3284, %v3824
    %v3913 = vxor.u32 %v3912, 2147483648
    %v3914 = vmul.f32 %v3913, 1.442695
    %v3915 = vpow.pop %v3914
    %v3916 = vadd.f32 %v3915, 1.0
    %v3917 = vrcp.pop %v3916
    %v3918 = vmul.f32 1.0, %v3917
    %v3919 = vadd.f32 %v3286, %v3826
    %v3920 = vxor.u32 %v3919, 2147483648
    %v3921 = vmul.f32 %v3920, 1.442695
    %v3922 = vpow.pop %v3921
    %v3923 = vadd.f32 %v3922, 1.0
    %v3924 = vrcp.pop %v3923
    %v3925 = vmul.f32 1.0, %v3924
    %v3926 = vmul.f32 %v3918, %v3865
    %v3927 = vadd.f32 %v3370, %v3926
    %v3928 = vtanh.pop %v3927
    %v3929 = vsub.f32 1.0, %v3925
    %v3930 = vmul.f32 %v3929, %v3928
    %v3931 = vmul.f32 %v3925, 0.0
    %v3932 = vadd.f32 %v3930, %v3931
    %v3933 = vadd.f32 %v3376, %v3867
    %v3934 = vxor.u32 %v3933, 2147483648
    %v3935 = vmul.f32 %v3934, 1.442695
    %v3936 = vpow.pop %v3935
    %v3937 = vadd.f32 %v3936, 1.0
    %v3938 = vrcp.pop %v3937
    %v3939 = vmul.f32 1.0, %v3938
    %v3940 = vadd.f32 %v3460, %v3906
    %v3941 = vxor.u32 %v3940, 2147483648
    %v3942 = vmul.f32 %v3941, 1.442695
    %v3943 = vpow.pop %v3942
    %v3944 = vadd.f32 %v3943, 1.0
    %v3945 = vrcp.pop %v3944
    %v3946 = vmul.f32 1.0, %v3945
    %v3947 = vmul.f32 %v3939, %v3908
    %v3948 = vadd.f32 %v3462, %v3947
    %v3949 = vtanh.pop %v3948
    %v3950 = vsub.f32 1.0, %v3946
    %v3951 = vmul.f32 %v3950, %v3949
    %v3952 = vmul.f32 %v3946, 0.0
    %v3953 = vadd.f32 %v3951, %v3952
    %v3954 = vpack.c.bf16 %v3932, %v3932
    %v3955 = vpack.c.bf16 %v3953, %v3953
    %3956 = vmatprep.subr.bf16.mxu0 %v3640
    %3957 = vmatpush1.bf16.msra.mxu0 %v3639
    %3958 = vmatprep.subr.bf16.mxu0 %v3646
    %3959 = vmatpush1.bf16.msra.mxu0 %v3645
    %3960 = vmatprep.subr.bf16.mxu0 %v3652
    %3961 = vmatpush1.bf16.msra.mxu0 %v3651
    %3962 = vmatprep.subr.bf16.mxu0 %v3658
    %3963 = vmatpush1.bf16.msra.mxu0 %v3657
    %3964 = vmatprep.subr.bf16.mxu0 %v3664
    %3965 = vmatpush1.bf16.msra.mxu0 %v3663
    %3966 = vmatprep.subr.bf16.mxu0 %v3670
    %3967 = vmatpush1.bf16.msra.mxu0 %v3669
    %3968 = vmatprep.subr.bf16.mxu0 %v3676
    %3969 = vmatpush1.bf16.msra.mxu0 %v3675
    %3970 = vmatprep.subr.bf16.mxu0 %v3682
    %3971 = vmatpush1.bf16.msra.mxu0 %v3681
    %3972 = vmatprep.subr.bf16.mxu0 %v3688
    %3973 = vmatpush1.bf16.msra.mxu0 %v3687
    %3974 = vmatprep.subr.bf16.mxu0 %v3694
    %3975 = vmatpush1.bf16.msra.mxu0 %v3693
    %3976 = vmatprep.subr.bf16.mxu0 %v3700
    %3977 = vmatpush1.bf16.msra.mxu0 %v3699
    %3978 = vmatprep.subr.bf16.mxu0 %v3706
    %3979 = vmatpush1.bf16.msra.mxu0 %v3705
    %3980 = vmatprep.subr.bf16.mxu0 %v3712
    %3981 = vmatpush1.bf16.msra.mxu0 %v3711
    %3982 = vmatprep.subr.bf16.mxu0 %v3718
    %3983 = vmatpush1.bf16.msra.mxu0 %v3717
    %3984 = vmatprep.subr.bf16.mxu0 %v3724
    %3985 = vmatpush1.bf16.msra.mxu0 %v3723
    %3986 = vmatprep.subr.bf16.mxu0 %v3730
    %3987 = vmatpush1.bf16.msra.mxu0 %v3729
    %3988 = vmatprep.mubr.bf16.mxu0 %v3955
    %3989 = vmatmul.mubr.bf16.gmra.mrb[0].mxu0 %v3954
    %v3990 = vpop.f32.mrb[0].mxu0
    %v3991 = vadd.f32 %v3768, %v3990
    %v3992 = vpop.f32.mrb[0].mxu0
    %v3993 = vadd.f32 %v3772, %v3992
    %v3994 = vpop.f32.mrb[0].mxu0
    %v3995 = vpop.f32.mrb[0].mxu0
    %3996 = vdwg.mxu0
    %3997 = vmatprep.subr.bf16.mxu0 %v3642
    %3998 = vmatpush1.bf16.msra.mxu0 %v3641
    %3999 = vmatprep.subr.bf16.mxu0 %v3648
    %4000 = vmatpush1.bf16.msra.mxu0 %v3647
    %4001 = vmatprep.subr.bf16.mxu0 %v3654
    %4002 = vmatpush1.bf16.msra.mxu0 %v3653
    %4003 = vmatprep.subr.bf16.mxu0 %v3660
    %4004 = vmatpush1.bf16.msra.mxu0 %v3659
    %4005 = vmatprep.subr.bf16.mxu0 %v3666
    %4006 = vmatpush1.bf16.msra.mxu0 %v3665
    %4007 = vmatprep.subr.bf16.mxu0 %v3672
    %4008 = vmatpush1.bf16.msra.mxu0 %v3671
    %4009 = vmatprep.subr.bf16.mxu0 %v3678
    %4010 = vmatpush1.bf16.msra.mxu0 %v3677
    %4011 = vmatprep.subr.bf16.mxu0 %v3684
    %4012 = vmatpush1.bf16.msra.mxu0 %v3683
    %4013 = vmatprep.subr.bf16.mxu0 %v3690
    %4014 = vmatpush1.bf16.msra.mxu0 %v3689
    %4015 = vmatprep.subr.bf16.mxu0 %v3696
    %4016 = vmatpush1.bf16.msra.mxu0 %v3695
    %4017 = vmatprep.subr.bf16.mxu0 %v3702
    %4018 = vmatpush1.bf16.msra.mxu0 %v3701
    %4019 = vmatprep.subr.bf16.mxu0 %v3708
    %4020 = vmatpush1.bf16.msra.mxu0 %v3707
    %4021 = vmatprep.subr.bf16.mxu0 %v3714
    %4022 = vmatpush1.bf16.msra.mxu0 %v3713
    %4023 = vmatprep.subr.bf16.mxu0 %v3720
    %4024 = vmatpush1.bf16.msra.mxu0 %v3719
    %4025 = vmatprep.subr.bf16.mxu0 %v3726
    %4026 = vmatpush1.bf16.msra.mxu0 %v3725
    %4027 = vmatprep.subr.bf16.mxu0 %v3732
    %4028 = vmatpush1.bf16.msra.mxu0 %v3731
    %4029 = vmatprep.mubr.bf16.mxu0 %v3955
    %4030 = vmatmul.mubr.bf16.gmra.mrb[0].mxu0 %v3954
    %v4031 = vpop.f32.mrb[0].mxu0
    %v4032 = vadd.f32 %v3776, %v4031
    %v4033 = vpop.f32.mrb[0].mxu0
    %v4034 = vadd.f32 %v3780, %v4033
    %v4035 = vpop.f32.mrb[0].mxu0
    %v4036 = vpop.f32.mrb[0].mxu0
    %4037 = vdwg.mxu0
    %4038 = vmatprep.subr.bf16.mxu0 %v3644
    %4039 = vmatpush1.bf16.msra.mxu0 %v3643
    %4040 = vmatprep.subr.bf16.mxu0 %v3650
    %4041 = vmatpush1.bf16.msra.mxu0 %v3649
    %4042 = vmatprep.subr.bf16.mxu0 %v3656
    %4043 = vmatpush1.bf16.msra.mxu0 %v3655
    %4044 = vmatprep.subr.bf16.mxu0 %v3662
    %4045 = vmatpush1.bf16.msra.mxu0 %v3661
    %4046 = vmatprep.subr.bf16.mxu0 %v3668
    %4047 = vmatpush1.bf16.msra.mxu0 %v3667
    %4048 = vmatprep.subr.bf16.mxu0 %v3674
    %4049 = vmatpush1.bf16.msra.mxu0 %v3673
    %4050 = vmatprep.subr.bf16.mxu0 %v3680
    %4051 = vmatpush1.bf16.msra.mxu0 %v3679
    %4052 = vmatprep.subr.bf16.mxu0 %v3686
    %4053 = vmatpush1.bf16.msra.mxu0 %v3685
    %4054 = vmatprep.subr.bf16.mxu0 %v3692
    %4055 = vmatpush1.bf16.msra.mxu0 %v3691
    %4056 = vmatprep.subr.bf16.mxu0 %v3698
    %4057 = vmatpush1.bf16.msra.mxu0 %v3697
    %4058 = vmatprep.subr.bf16.mxu0 %v3704
    %4059 = vmatpush1.bf16.msra.mxu0 %v3703
    %4060 = vmatprep.subr.bf16.mxu0 %v3710
    %4061 = vmatpush1.bf16.msra.mxu0 %v3709
    %4062 = vmatprep.subr.bf16.mxu0 %v3716
    %4063 = vmatpush1.bf16.msra.mxu0 %v3715
    %4064 = vmatprep.subr.bf16.mxu0 %v3722
    %4065 = vmatpush1.bf16.msra.mxu0 %v3721
    %4066 = vmatprep.subr.bf16.mxu0 %v3728
    %4067 = vmatpush1.bf16.msra.mxu0 %v3727
    %4068 = vmatprep.subr.bf16.mxu0 %v3734
    %4069 = vmatpush1.bf16.msra.mxu0 %v3733
    %4070 = vmatprep.mubr.bf16.mxu0 %v3955
    %4071 = vmatmul.mubr.bf16.gmra.mrb[0].mxu0 %v3954
    %v4072 = vpop.f32.mrb[0].mxu0
    %v4073 = vadd.f32 %v3784, %v4072
    %v4074 = vpop.f32.mrb[0].mxu0
    %v4075 = vadd.f32 %v3788, %v4074
    %v4076 = vpop.f32.mrb[0].mxu0
    %v4077 = vpop.f32.mrb[0].mxu0
    %4078 = vdwg.mxu0
    %v4079 = vadd.f32 %v3551, %v3991
    %v4080 = vxor.u32 %v4079, 2147483648
    %v4081 = vmul.f32 %v4080, 1.442695
    %v4082 = vpow.pop %v4081
    %v4083 = vadd.f32 %v4082, 1.0
    %v4084 = vrcp.pop %v4083
    %v4085 = vmul.f32 1.0, %v4084
    %v4086 = vadd.f32 %v3553, %v3993
    %v4087 = vxor.u32 %v4086, 2147483648
    %v4088 = vmul.f32 %v4087, 1.442695
    %v4089 = vpow.pop %v4088
    %v4090 = vadd.f32 %v4089, 1.0
    %v4091 = vrcp.pop %v4090
    %v4092 = vmul.f32 1.0, %v4091
    %v4093 = vmul.f32 %v4085, %v4032
    %v4094 = vadd.f32 %v3592, %v4093
    %v4095 = vtanh.pop %v4094
    %v4096 = vsub.f32 1.0, %v4092
    %v4097 = vmul.f32 %v4096, %v4095
    %v4098 = vmul.f32 %v4092, %v3932
    %v4099 = vadd.f32 %v4097, %v4098
    %v4100 = vadd.f32 %v3594, %v4034
    %v4101 = vxor.u32 %v4100, 2147483648
    %v4102 = vmul.f32 %v4101, 1.442695
    %v4103 = vpow.pop %v4102
    %v4104 = vadd.f32 %v4103, 1.0
    %v4105 = vrcp.pop %v4104
    %v4106 = vmul.f32 1.0, %v4105
    %v4107 = vadd.f32 %v3633, %v4073
    %v4108 = vxor.u32 %v4107, 2147483648
    %v4109 = vmul.f32 %v4108, 1.442695
    %v4110 = vpow.pop %v4109
    %v4111 = vadd.f32 %v4110, 1.0
    %v4112 = vrcp.pop %v4111
    %v4113 = vmul.f32 1.0, %v4112
    %v4114 = vmul.f32 %v4106, %v4075
    %v4115 = vadd.f32 %v3635, %v4114
    %v4116 = vtanh.pop %v4115
    %v4117 = vsub.f32 1.0, %v4113
    %v4118 = vmul.f32 %v4117, %v4116
    %v4119 = vmul.f32 %v4113, %v3953
    %v4120 = vadd.f32 %v4118, %v4119
    %v4121 = vpack.c.bf16 %v4099, %v4099
    %v4122 = vpack.c.bf16 %v4120, %v4120
    %4123 = vmatprep.subr.bf16.mxu0 %v3640
    %4124 = vmatpush1.bf16.msra.mxu0 %v3639
    %4125 = vmatprep.subr.bf16.mxu0 %v3646
    %4126 = vmatpush1.bf16.msra.mxu0 %v3645
    %4127 = vmatprep.subr.bf16.mxu0 %v3652
    %4128 = vmatpush1.bf16.msra.mxu0 %v3651
    %4129 = vmatprep.subr.bf16.mxu0 %v3658
    %4130 = vmatpush1.bf16.msra.mxu0 %v3657
    %4131 = vmatprep.subr.bf16.mxu0 %v3664
    %4132 = vmatpush1.bf16.msra.mxu0 %v3663
    %4133 = vmatprep.subr.bf16.mxu0 %v3670
    %4134 = vmatpush1.bf16.msra.mxu0 %v3669
    %4135 = vmatprep.subr.bf16.mxu0 %v3676
    %4136 = vmatpush1.bf16.msra.mxu0 %v3675
    %4137 = vmatprep.subr.bf16.mxu0 %v3682
    %4138 = vmatpush1.bf16.msra.mxu0 %v3681
    %4139 = vmatprep.subr.bf16.mxu0 %v3688
    %4140 = vmatpush1.bf16.msra.mxu0 %v3687
    %4141 = vmatprep.subr.bf16.mxu0 %v3694
    %4142 = vmatpush1.bf16.msra.mxu0 %v3693
    %4143 = vmatprep.subr.bf16.mxu0 %v3700
    %4144 = vmatpush1.bf16.msra.mxu0 %v3699
    %4145 = vmatprep.subr.bf16.mxu0 %v3706
    %4146 = vmatpush1.bf16.msra.mxu0 %v3705
    %4147 = vmatprep.subr.bf16.mxu0 %v3712
    %4148 = vmatpush1.bf16.msra.mxu0 %v3711
    %4149 = vmatprep.subr.bf16.mxu0 %v3718
    %4150 = vmatpush1.bf16.msra.mxu0 %v3717
    %4151 = vmatprep.subr.bf16.mxu0 %v3724
    %4152 = vmatpush1.bf16.msra.mxu0 %v3723
    %4153 = vmatprep.subr.bf16.mxu0 %v3730
    %4154 = vmatpush1.bf16.msra.mxu0 %v3729
    %4155 = vmatprep.mubr.bf16.mxu0 %v4122
    %4156 = vmatmul.mubr.bf16.gmra.mrb[0].mxu0 %v4121
    %v4157 = vpop.f32.mrb[0].mxu0
    %v4158 = vadd.f32 %v3768, %v4157
    %v4159 = vpop.f32.mrb[0].mxu0
    %v4160 = vadd.f32 %v3772, %v4159
    %v4161 = vpop.f32.mrb[0].mxu0
    %v4162 = vpop.f32.mrb[0].mxu0
    %4163 = vdwg.mxu0
    %4164 = vmatprep.subr.bf16.mxu0 %v3642
    %4165 = vmatpush1.bf16.msra.mxu0 %v3641
    %4166 = vmatprep.subr.bf16.mxu0 %v3648
    %4167 = vmatpush1.bf16.msra.mxu0 %v3647
    %4168 = vmatprep.subr.bf16.mxu0 %v3654
    %4169 = vmatpush1.bf16.msra.mxu0 %v3653
    %4170 = vmatprep.subr.bf16.mxu0 %v3660
    %4171 = vmatpush1.bf16.msra.mxu0 %v3659
    %4172 = vmatprep.subr.bf16.mxu0 %v3666
    %4173 = vmatpush1.bf16.msra.mxu0 %v3665
    %4174 = vmatprep.subr.bf16.mxu0 %v3672
    %4175 = vmatpush1.bf16.msra.mxu0 %v3671
    %4176 = vmatprep.subr.bf16.mxu0 %v3678
    %4177 = vmatpush1.bf16.msra.mxu0 %v3677
    %4178 = vmatprep.subr.bf16.mxu0 %v3684
    %4179 = vmatpush1.bf16.msra.mxu0 %v3683
    %4180 = vmatprep.subr.bf16.mxu0 %v3690
    %4181 = vmatpush1.bf16.msra.mxu0 %v3689
    %4182 = vmatprep.subr.bf16.mxu0 %v3696
    %4183 = vmatpush1.bf16.msra.mxu0 %v3695
    %4184 = vmatprep.subr.bf16.mxu0 %v3702
    %4185 = vmatpush1.bf16.msra.mxu0 %v3701
    %4186 = vmatprep.subr.bf16.mxu0 %v3708
    %4187 = vmatpush1.bf16.msra.mxu0 %v3707
    %4188 = vmatprep.subr.bf16.mxu0 %v3714
    %4189 = vmatpush1.bf16.msra.mxu0 %v3713
    %4190 = vmatprep.subr.bf16.mxu0 %v3720
    %4191 = vmatpush1.bf16.msra.mxu0 %v3719
    %4192 = vmatprep.subr.bf16.mxu0 %v3726
    %4193 = vmatpush1.bf16.msra.mxu0 %v3725
    %4194 = vmatprep.subr.bf16.mxu0 %v3732
    %4195 = vmatpush1.bf16.msra.mxu0 %v3731
    %4196 = vmatprep.mubr.bf16.mxu0 %v4122
    %4197 = vmatmul.mubr.bf16.gmra.mrb[0].mxu0 %v4121
    %v4198 = vpop.f32.mrb[0].mxu0
    %v4199 = vadd.f32 %v3776, %v4198
    %v4200 = vpop.f32.mrb[0].mxu0
    %v4201 = vadd.f32 %v3780, %v4200
    %v4202 = vpop.f32.mrb[0].mxu0
    %v4203 = vpop.f32.mrb[0].mxu0
    %4204 = vdwg.mxu0
    %4205 = vmatprep.subr.bf16.mxu0 %v3644
    %4206 = vmatpush1.bf16.msra.mxu0 %v3643
    %4207 = vmatprep.subr.bf16.mxu0 %v3650
    %4208 = vmatpush1.bf16.msra.mxu0 %v3649
    %4209 = vmatprep.subr.bf16.mxu0 %v3656
    %4210 = vmatpush1.bf16.msra.mxu0 %v3655
    %4211 = vmatprep.subr.bf16.mxu0 %v3662
    %4212 = vmatpush1.bf16.msra.mxu0 %v3661
    %4213 = vmatprep.subr.bf16.mxu0 %v3668
    %4214 = vmatpush1.bf16.msra.mxu0 %v3667
    %4215 = vmatprep.subr.bf16.mxu0 %v3674
    %4216 = vmatpush1.bf16.msra.mxu0 %v3673
    %4217 = vmatprep.subr.bf16.mxu0 %v3680
    %4218 = vmatpush1.bf16.msra.mxu0 %v3679
    %4219 = vmatprep.subr.bf16.mxu0 %v3686
    %4220 = vmatpush1.bf16.msra.mxu0 %v3685
    %4221 = vmatprep.subr.bf16.mxu0 %v3692
    %4222 = vmatpush1.bf16.msra.mxu0 %v3691
    %4223 = vmatprep.subr.bf16.mxu0 %v3698
    %4224 = vmatpush1.bf16.msra.mxu0 %v3697
    %4225 = vmatprep.subr.bf16.mxu0 %v3704
    %4226 = vmatpush1.bf16.msra.mxu0 %v3703
    %4227 = vmatprep.subr.bf16.mxu0 %v3710
    %4228 = vmatpush1.bf16.msra.mxu0 %v3709
    %4229 = vmatprep.subr.bf16.mxu0 %v3716
    %4230 = vmatpush1.bf16.msra.mxu0 %v3715
    %4231 = vmatprep.subr.bf16.mxu0 %v3722
    %4232 = vmatpush1.bf16.msra.mxu0 %v3721
    %4233 = vmatprep.subr.bf16.mxu0 %v3728
    %4234 = vmatpush1.bf16.msra.mxu0 %v3727
    %4235 = vmatprep.subr.bf16.mxu0 %v3734
    %4236 = vmatpush1.bf16.msra.mxu0 %v3733
    %4237 = vmatprep.mubr.bf16.mxu0 %v4122
    %4238 = vmatmul.mubr.bf16.gmra.mrb[0].mxu0 %v4121
    %v4239 = vpop.f32.mrb[0].mxu0
    %v4240 = vadd.f32 %v3784, %v4239
    %v4241 = vpop.f32.mrb[0].mxu0
    %v4242 = vadd.f32 %v3788, %v4241
    %v4243 = vpop.f32.mrb[0].mxu0
    %v4244 = vpop.f32.mrb[0].mxu0
    %4245 = vdwg.mxu0
    %v4246 = vadd.f32 %v3288, %v4158
    %v4247 = vxor.u32 %v4246, 2147483648
    %v4248 = vmul.f32 %v4247, 1.442695
    %v4249 = vpow.pop %v4248
    %v4250 = vadd.f32 %v4249, 1.0
    %v4251 = vrcp.pop %v4250
    %v4252 = vmul.f32 1.0, %v4251
    %v4253 = vadd.f32 %v3290, %v4160
    %v4254 = vxor.u32 %v4253, 2147483648
    %v4255 = vmul.f32 %v4254, 1.442695
    %v4256 = vpow.pop %v4255
    %v4257 = vadd.f32 %v4256, 1.0
    %v4258 = vrcp.pop %v4257
    %v4259 = vmul.f32 1.0, %v4258
    %v4260 = vmul.f32 %v4252, %v4199
    %v4261 = vadd.f32 %v3374, %v4260
    %v4262 = vtanh.pop %v4261
    %v4263 = vsub.f32 1.0, %v4259
    %v4264 = vmul.f32 %v4263, %v4262
    %v4265 = vmul.f32 %v4259, %v4099
    %v4266 = vadd.f32 %v4264, %v4265
    %v4267 = vadd.f32 %v3372, %v4201
    %v4268 = vxor.u32 %v4267, 2147483648
    %v4269 = vmul.f32 %v4268, 1.442695
    %v4270 = vpow.pop %v4269
    %v4271 = vadd.f32 %v4270, 1.0
    %v4272 = vrcp.pop %v4271
    %v4273 = vmul.f32 1.0, %v4272
    %v4274 = vadd.f32 %v3456, %v4240
    %v4275 = vxor.u32 %v4274, 2147483648
    %v4276 = vmul.f32 %v4275, 1.442695
    %v4277 = vpow.pop %v4276
    %v4278 = vadd.f32 %v4277, 1.0
    %v4279 = vrcp.pop %v4278
    %v4280 = vmul.f32 1.0, %v4279
    %v4281 = vmul.f32 %v4273, %v4242
    %v4282 = vadd.f32 %v3458, %v4281
    %v4283 = vtanh.pop %v4282
    %v4284 = vsub.f32 1.0, %v4280
    %v4285 = vmul.f32 %v4284, %v4283
    %v4286 = vmul.f32 %v4280, %v4120
    %v4287 = vadd.f32 %v4285, %v4286
    %v4288 = vld [vmem:[#allocation2 + $0x480] sm:$0xff]
    %v4289 = vld [vmem:[#allocation2 + $0x488] sm:$0xff]
    %v4290 = vld [vmem:[#allocation2 + $0x490] sm:$0xff]
    %v4291 = vld [vmem:[#allocation2 + $0x498] sm:$0xff]
    %v4292 = vld [vmem:[#allocation2 + $0x4a0] sm:$0xff]
    %v4293 = vld [vmem:[#allocation2 + $0x4a8] sm:$0xff]
    %v4294 = vld [vmem:[#allocation2 + $0x4b0] sm:$0xff]
    %v4295 = vld [vmem:[#allocation2 + $0x4b8] sm:$0xff]
    %v4296 = vld [vmem:[#allocation2 + $0x4c0] sm:$0xff]
    %v4297 = vld [vmem:[#allocation2 + $0x4c8] sm:$0xff]
    %v4298 = vld [vmem:[#allocation2 + $0x4d0] sm:$0xff]
    %v4299 = vld [vmem:[#allocation2 + $0x4d8] sm:$0xff]
    %v4300 = vld [vmem:[#allocation2 + $0x4e0] sm:$0xff]
    %v4301 = vld [vmem:[#allocation2 + $0x4e8] sm:$0xff]
    %v4302 = vld [vmem:[#allocation2 + $0x4f0] sm:$0xff]
    %v4303 = vld [vmem:[#allocation2 + $0x4f8] sm:$0xff]
    %v4304 = vld [vmem:[#allocation2 + $0x500] sm:$0xff]
    %v4305 = vld [vmem:[#allocation2 + $0x508] sm:$0xff]
    %v4306 = vld [vmem:[#allocation2 + $0x510] sm:$0xff]
    %v4307 = vld [vmem:[#allocation2 + $0x518] sm:$0xff]
    %v4308 = vld [vmem:[#allocation2 + $0x520] sm:$0xff]
    %v4309 = vld [vmem:[#allocation2 + $0x528] sm:$0xff]
    %v4310 = vld [vmem:[#allocation2 + $0x530] sm:$0xff]
    %v4311 = vld [vmem:[#allocation2 + $0x538] sm:$0xff]
    %v4312 = vld [vmem:[#allocation2 + $0x540] sm:$0xff]
    %v4313 = vld [vmem:[#allocation2 + $0x548] sm:$0xff]
    %v4314 = vld [vmem:[#allocation2 + $0x550] sm:$0xff]
    %v4315 = vld [vmem:[#allocation2 + $0x558] sm:$0xff]
    %v4316 = vld [vmem:[#allocation2 + $0x560] sm:$0xff]
    %v4317 = vld [vmem:[#allocation2 + $0x568] sm:$0xff]
    %v4318 = vld [vmem:[#allocation2 + $0x570] sm:$0xff]
    %v4319 = vld [vmem:[#allocation2 + $0x578] sm:$0xff]
    %v4320 = vld [vmem:[#allocation2 + $0x580] sm:$0xff]
    %v4321 = vld [vmem:[#allocation2 + $0x588] sm:$0xff]
    %v4322 = vld [vmem:[#allocation2 + $0x590] sm:$0xff]
    %v4323 = vld [vmem:[#allocation2 + $0x598] sm:$0xff]
    %v4324 = vld [vmem:[#allocation2 + $0x5a0] sm:$0xff]
    %v4325 = vld [vmem:[#allocation2 + $0x5a8] sm:$0xff]
    %v4326 = vld [vmem:[#allocation2 + $0x5b0] sm:$0xff]
    %v4327 = vld [vmem:[#allocation2 + $0x5b8] sm:$0xff]
    %v4328 = vld [vmem:[#allocation2 + $0x5c0] sm:$0xff]
    %v4329 = vld [vmem:[#allocation2 + $0x5c8] sm:$0xff]
    %v4330 = vld [vmem:[#allocation2 + $0x5d0] sm:$0xff]
    %v4331 = vld [vmem:[#allocation2 + $0x5d8] sm:$0xff]
    %v4332 = vld [vmem:[#allocation2 + $0x5e0] sm:$0xff]
    %v4333 = vld [vmem:[#allocation2 + $0x5e8] sm:$0xff]
    %v4334 = vld [vmem:[#allocation2 + $0x5f0] sm:$0xff]
    %v4335 = vld [vmem:[#allocation2 + $0x5f8] sm:$0xff]
    %v4336 = vld [vmem:[#allocation2 + $0x600] sm:$0xff]
    %v4337 = vld [vmem:[#allocation2 + $0x608] sm:$0xff]
    %v4338 = vld [vmem:[#allocation2 + $0x610] sm:$0xff]
    %v4339 = vld [vmem:[#allocation2 + $0x618] sm:$0xff]
    %v4340 = vld [vmem:[#allocation2 + $0x620] sm:$0xff]
    %v4341 = vld [vmem:[#allocation2 + $0x628] sm:$0xff]
    %v4342 = vld [vmem:[#allocation2 + $0x630] sm:$0xff]
    %v4343 = vld [vmem:[#allocation2 + $0x638] sm:$0xff]
    %v4344 = vld [vmem:[#allocation2 + $0x640] sm:$0xff]
    %v4345 = vld [vmem:[#allocation2 + $0x648] sm:$0xff]
    %v4346 = vld [vmem:[#allocation2 + $0x650] sm:$0xff]
    %v4347 = vld [vmem:[#allocation2 + $0x658] sm:$0xff]
    %v4348 = vld [vmem:[#allocation2 + $0x660] sm:$0xff]
    %v4349 = vld [vmem:[#allocation2 + $0x668] sm:$0xff]
    %v4350 = vld [vmem:[#allocation2 + $0x670] sm:$0xff]
    %v4351 = vld [vmem:[#allocation2 + $0x678] sm:$0xff]
    %v4352 = vld [vmem:[#allocation2 + $0x680] sm:$0xff]
    %v4353 = vld [vmem:[#allocation2 + $0x688] sm:$0xff]
    %v4354 = vld [vmem:[#allocation2 + $0x690] sm:$0xff]
    %v4355 = vld [vmem:[#allocation2 + $0x698] sm:$0xff]
    %v4356 = vld [vmem:[#allocation2 + $0x6a0] sm:$0xff]
    %v4357 = vld [vmem:[#allocation2 + $0x6a8] sm:$0xff]
    %v4358 = vld [vmem:[#allocation2 + $0x6b0] sm:$0xff]
    %v4359 = vld [vmem:[#allocation2 + $0x6b8] sm:$0xff]
    %v4360 = vld [vmem:[#allocation2 + $0x6c0] sm:$0xff]
    %v4361 = vld [vmem:[#allocation2 + $0x6c8] sm:$0xff]
    %v4362 = vld [vmem:[#allocation2 + $0x6d0] sm:$0xff]
    %v4363 = vld [vmem:[#allocation2 + $0x6d8] sm:$0xff]
    %v4364 = vld [vmem:[#allocation2 + $0x6e0] sm:$0xff]
    %v4365 = vld [vmem:[#allocation2 + $0x6e8] sm:$0xff]
    %v4366 = vld [vmem:[#allocation2 + $0x6f0] sm:$0xff]
    %v4367 = vld [vmem:[#allocation2 + $0x6f8] sm:$0xff]
    %v4368 = vld [vmem:[#allocation2 + $0x700] sm:$0xff]
    %v4369 = vld [vmem:[#allocation2 + $0x708] sm:$0xff]
    %v4370 = vld [vmem:[#allocation2 + $0x710] sm:$0xff]
    %v4371 = vld [vmem:[#allocation2 + $0x718] sm:$0xff]
    %v4372 = vld [vmem:[#allocation2 + $0x720] sm:$0xff]
    %v4373 = vld [vmem:[#allocation2 + $0x728] sm:$0xff]
    %v4374 = vld [vmem:[#allocation2 + $0x730] sm:$0xff]
    %v4375 = vld [vmem:[#allocation2 + $0x738] sm:$0xff]
    %v4376 = vld [vmem:[#allocation2 + $0x740] sm:$0xff]
    %v4377 = vld [vmem:[#allocation2 + $0x748] sm:$0xff]
    %v4378 = vld [vmem:[#allocation2 + $0x750] sm:$0xff]
    %v4379 = vld [vmem:[#allocation2 + $0x758] sm:$0xff]
    %v4380 = vld [vmem:[#allocation2 + $0x760] sm:$0xff]
    %v4381 = vld [vmem:[#allocation2 + $0x768] sm:$0xff]
    %v4382 = vld [vmem:[#allocation2 + $0x770] sm:$0xff]
    %v4383 = vld [vmem:[#allocation2 + $0x778] sm:$0xff]
    %v4384 = vpack.c.bf16 %v4099, %v3932
    %v4385 = vpack.c.bf16 %v4120, %v4287
    %v4386 = vpack.c.bf16 %v4266, %v4266
    %v4387 = vlaneseq
    %v4388 = vshrl.u32 %v4387, 7
    %v4389 = vsub.s32 2, %v4388
    %v4390 = vrot.slane %v252, %v4389
    %v4391 = vlaneseq
    %v4392 = vshrl.u32 %v4391, 7
    %v4393 = vsub.s32 6, %v4392
    %v4394 = vrot.slane %v252, %v4393
    %v4395 = vlaneseq
    %v4396 = vshrl.u32 %v4395, 7
    %v4397 = vsub.s32 2, %v4396
    %v4398 = vrot.slane %v253, %v4397
    %v4399 = vlaneseq
    %v4400 = vshrl.u32 %v4399, 7
    %v4401 = vsub.s32 6, %v4400
    %v4402 = vrot.slane %v253, %v4401
    %v4403 = vlaneseq
    %v4404 = vshrl.u32 %v4403, 7
    %v4405 = vsub.s32 2, %v4404
    %v4406 = vrot.slane %v254, %v4405
    %v4407 = vlaneseq
    %v4408 = vshrl.u32 %v4407, 7
    %v4409 = vsub.s32 6, %v4408
    %v4410 = vrot.slane %v254, %v4409
    %v4417 = vlaneseq
    %v4418 = vshrl.u32 %v4417, 7
    %v4419 = vsub.s32 2, %v4418
    %v4420 = vrot.slane %v4390, %v4419
    %v4421 = vlaneseq
    %v4422 = vshrl.u32 %v4421, 7
    %v4423 = vsub.s32 2, %v4422
    %v4424 = vrot.slane %v4394, %v4423
    %v4425 = vlaneseq
    %v4426 = vshrl.u32 %v4425, 7
    %v4427 = vsub.s32 2, %v4426
    %v4428 = vrot.slane %v4398, %v4427
    %v4429 = vlaneseq
    %v4430 = vshrl.u32 %v4429, 7
    %v4431 = vsub.s32 2, %v4430
    %v4432 = vrot.slane %v4402, %v4431
    %v4433 = vlaneseq
    %v4434 = vshrl.u32 %v4433, 7
    %v4435 = vsub.s32 2, %v4434
    %v4436 = vrot.slane %v4406, %v4435
    %v4437 = vlaneseq
    %v4438 = vshrl.u32 %v4437, 7
    %v4439 = vsub.s32 2, %v4438
    %v4440 = vrot.slane %v4410, %v4439
    %4441 = vmatprep.subr.bf16.mxu0 %v4289
    %4442 = vmatpush1.bf16.msra.mxu0 %v4288
    %4443 = vmatprep.subr.bf16.mxu0 %v4295
    %4444 = vmatpush1.bf16.msra.mxu0 %v4294
    %4445 = vmatprep.subr.bf16.mxu0 %v4301
    %4446 = vmatpush1.bf16.msra.mxu0 %v4300
    %4447 = vmatprep.subr.bf16.mxu0 %v4307
    %4448 = vmatpush1.bf16.msra.mxu0 %v4306
    %4449 = vmatprep.subr.bf16.mxu0 %v4313
    %4450 = vmatpush1.bf16.msra.mxu0 %v4312
    %4451 = vmatprep.subr.bf16.mxu0 %v4319
    %4452 = vmatpush1.bf16.msra.mxu0 %v4318
    %4453 = vmatprep.subr.bf16.mxu0 %v4325
    %4454 = vmatpush1.bf16.msra.mxu0 %v4324
    %4455 = vmatprep.subr.bf16.mxu0 %v4331
    %4456 = vmatpush1.bf16.msra.mxu0 %v4330
    %4457 = vmatprep.subr.bf16.mxu0 %v4337
    %4458 = vmatpush1.bf16.msra.mxu0 %v4336
    %4459 = vmatprep.subr.bf16.mxu0 %v4343
    %4460 = vmatpush1.bf16.msra.mxu0 %v4342
    %4461 = vmatprep.subr.bf16.mxu0 %v4349
    %4462 = vmatpush1.bf16.msra.mxu0 %v4348
    %4463 = vmatprep.subr.bf16.mxu0 %v4355
    %4464 = vmatpush1.bf16.msra.mxu0 %v4354
    %4465 = vmatprep.subr.bf16.mxu0 %v4361
    %4466 = vmatpush1.bf16.msra.mxu0 %v4360
    %4467 = vmatprep.subr.bf16.mxu0 %v4367
    %4468 = vmatpush1.bf16.msra.mxu0 %v4366
    %4469 = vmatprep.subr.bf16.mxu0 %v4373
    %4470 = vmatpush1.bf16.msra.mxu0 %v4372
    %4471 = vmatprep.subr.bf16.mxu0 %v4379
    %4472 = vmatpush1.bf16.msra.mxu0 %v4378
    %4473 = vmatprep.mubr.bf16.mxu0 %v4385
    %4474 = vmatmul.mubr.bf16.gmra.mrb[0].mxu0 %v4384
    %v4475 = vpop.f32.mrb[0].mxu0
    %v4476 = vadd.f32 %v4420, %v4475
    %v4477 = vpop.f32.mrb[0].mxu0
    %v4478 = vadd.f32 %v4424, %v4477
    %v4479 = vpop.f32.mrb[0].mxu0
    %v4480 = vadd.f32 %v4420, %v4479
    %v4481 = vpop.f32.mrb[0].mxu0
    %v4482 = vadd.f32 %v4424, %v4481
    %4483 = vmatprep.mubr.bf16.mxu0 %v3955
    %4484 = vmatmul.mubr.bf16.gmra.mrb[0].mxu0 %v4386
    %v4485 = vpop.f32.mrb[0].mxu0
    %v4486 = vadd.f32 %v4420, %v4485
    %v4487 = vpop.f32.mrb[0].mxu0
    %v4488 = vadd.f32 %v4424, %v4487
    %v4489 = vpop.f32.mrb[0].mxu0
    %v4490 = vpop.f32.mrb[0].mxu0
    %4491 = vdwg.mxu0
    %4492 = vmatprep.subr.bf16.mxu0 %v4291
    %4493 = vmatpush1.bf16.msra.mxu0 %v4290
    %4494 = vmatprep.subr.bf16.mxu0 %v4297
    %4495 = vmatpush1.bf16.msra.mxu0 %v4296
    %4496 = vmatprep.subr.bf16.mxu0 %v4303
    %4497 = vmatpush1.bf16.msra.mxu0 %v4302
    %4498 = vmatprep.subr.bf16.mxu0 %v4309
    %4499 = vmatpush1.bf16.msra.mxu0 %v4308
    %4500 = vmatprep.subr.bf16.mxu0 %v4315
    %4501 = vmatpush1.bf16.msra.mxu0 %v4314
    %4502 = vmatprep.subr.bf16.mxu0 %v4321
    %4503 = vmatpush1.bf16.msra.mxu0 %v4320
    %4504 = vmatprep.subr.bf16.mxu0 %v4327
    %4505 = vmatpush1.bf16.msra.mxu0 %v4326
    %4506 = vmatprep.subr.bf16.mxu0 %v4333
    %4507 = vmatpush1.bf16.msra.mxu0 %v4332
    %4508 = vmatprep.subr.bf16.mxu0 %v4339
    %4509 = vmatpush1.bf16.msra.mxu0 %v4338
    %4510 = vmatprep.subr.bf16.mxu0 %v4345
    %4511 = vmatpush1.bf16.msra.mxu0 %v4344
    %4512 = vmatprep.subr.bf16.mxu0 %v4351
    %4513 = vmatpush1.bf16.msra.mxu0 %v4350
    %4514 = vmatprep.subr.bf16.mxu0 %v4357
    %4515 = vmatpush1.bf16.msra.mxu0 %v4356
    %4516 = vmatprep.subr.bf16.mxu0 %v4363
    %4517 = vmatpush1.bf16.msra.mxu0 %v4362
    %4518 = vmatprep.subr.bf16.mxu0 %v4369
    %4519 = vmatpush1.bf16.msra.mxu0 %v4368
    %4520 = vmatprep.subr.bf16.mxu0 %v4375
    %4521 = vmatpush1.bf16.msra.mxu0 %v4374
    %4522 = vmatprep.subr.bf16.mxu0 %v4381
    %4523 = vmatpush1.bf16.msra.mxu0 %v4380
    %4524 = vmatprep.mubr.bf16.mxu0 %v4385
    %4525 = vmatmul.mubr.bf16.gmra.mrb[0].mxu0 %v4384
    %v4526 = vpop.f32.mrb[0].mxu0
    %v4527 = vadd.f32 %v4428, %v4526
    %v4528 = vpop.f32.mrb[0].mxu0
    %v4529 = vadd.f32 %v4432, %v4528
    %v4530 = vpop.f32.mrb[0].mxu0
    %v4531 = vadd.f32 %v4428, %v4530
    %v4532 = vpop.f32.mrb[0].mxu0
    %v4533 = vadd.f32 %v4432, %v4532
    %4534 = vmatprep.mubr.bf16.mxu0 %v3955
    %4535 = vmatmul.mubr.bf16.gmra.mrb[0].mxu0 %v4386
    %v4536 = vpop.f32.mrb[0].mxu0
    %v4537 = vadd.f32 %v4428, %v4536
    %v4538 = vpop.f32.mrb[0].mxu0
    %v4539 = vadd.f32 %v4432, %v4538
    %v4540 = vpop.f32.mrb[0].mxu0
    %v4541 = vpop.f32.mrb[0].mxu0
    %4542 = vdwg.mxu0
    %4543 = vmatprep.subr.bf16.mxu0 %v4293
    %4544 = vmatpush1.bf16.msra.mxu0 %v4292
    %4545 = vmatprep.subr.bf16.mxu0 %v4299
    %4546 = vmatpush1.bf16.msra.mxu0 %v4298
    %4547 = vmatprep.subr.bf16.mxu0 %v4305
    %4548 = vmatpush1.bf16.msra.mxu0 %v4304
    %4549 = vmatprep.subr.bf16.mxu0 %v4311
    %4550 = vmatpush1.bf16.msra.mxu0 %v4310
    %4551 = vmatprep.subr.bf16.mxu0 %v4317
    %4552 = vmatpush1.bf16.msra.mxu0 %v4316
    %4553 = vmatprep.subr.bf16.mxu0 %v4323
    %4554 = vmatpush1.bf16.msra.mxu0 %v4322
    %4555 = vmatprep.subr.bf16.mxu0 %v4329
    %4556 = vmatpush1.bf16.msra.mxu0 %v4328
    %4557 = vmatprep.subr.bf16.mxu0 %v4335
    %4558 = vmatpush1.bf16.msra.mxu0 %v4334
    %4559 = vmatprep.subr.bf16.mxu0 %v4341
    %4560 = vmatpush1.bf16.msra.mxu0 %v4340
    %4561 = vmatprep.subr.bf16.mxu0 %v4347
    %4562 = vmatpush1.bf16.msra.mxu0 %v4346
    %4563 = vmatprep.subr.bf16.mxu0 %v4353
    %4564 = vmatpush1.bf16.msra.mxu0 %v4352
    %4565 = vmatprep.subr.bf16.mxu0 %v4359
    %4566 = vmatpush1.bf16.msra.mxu0 %v4358
    %4567 = vmatprep.subr.bf16.mxu0 %v4365
    %4568 = vmatpush1.bf16.msra.mxu0 %v4364
    %4569 = vmatprep.subr.bf16.mxu0 %v4371
    %4570 = vmatpush1.bf16.msra.mxu0 %v4370
    %4571 = vmatprep.subr.bf16.mxu0 %v4377
    %4572 = vmatpush1.bf16.msra.mxu0 %v4376
    %4573 = vmatprep.subr.bf16.mxu0 %v4383
    %4574 = vmatpush1.bf16.msra.mxu0 %v4382
    %4575 = vmatprep.mubr.bf16.mxu0 %v4385
    %4576 = vmatmul.mubr.bf16.gmra.mrb[0].mxu0 %v4384
    %v4577 = vpop.f32.mrb[0].mxu0
    %v4578 = vadd.f32 %v4436, %v4577
    %v4579 = vpop.f32.mrb[0].mxu0
    %v4580 = vadd.f32 %v4440, %v4579
    %v4581 = vpop.f32.mrb[0].mxu0
    %v4582 = vadd.f32 %v4436, %v4581
    %v4583 = vpop.f32.mrb[0].mxu0
    %v4584 = vadd.f32 %v4440, %v4583
    %4585 = vmatprep.mubr.bf16.mxu0 %v3955
    %4586 = vmatmul.mubr.bf16.gmra.mrb[0].mxu0 %v4386
    %v4587 = vpop.f32.mrb[0].mxu0
    %v4588 = vadd.f32 %v4436, %v4587
    %v4589 = vpop.f32.mrb[0].mxu0
    %v4590 = vadd.f32 %v4440, %v4589
    %v4591 = vpop.f32.mrb[0].mxu0
    %v4592 = vpop.f32.mrb[0].mxu0
    %4593 = vdwg.mxu0
    %v4594 = vld [vmem:[#allocation2 + $0x780] sm:$0xff]
    %v4595 = vld [vmem:[#allocation2 + $0x788] sm:$0xff]
    %v4596 = vld [vmem:[#allocation2 + $0x790] sm:$0xff]
    %v4597 = vld [vmem:[#allocation2 + $0x798] sm:$0xff]
    %v4598 = vld [vmem:[#allocation2 + $0x7a0] sm:$0xff]
    %v4599 = vld [vmem:[#allocation2 + $0x7a8] sm:$0xff]
    %v4600 = vld [vmem:[#allocation2 + $0x7b0] sm:$0xff]
    %v4601 = vld [vmem:[#allocation2 + $0x7b8] sm:$0xff]
    %v4602 = vld [vmem:[#allocation2 + $0x7c0] sm:$0xff]
    %v4603 = vld [vmem:[#allocation2 + $0x7c8] sm:$0xff]
    %v4604 = vld [vmem:[#allocation2 + $0x7d0] sm:$0xff]
    %v4605 = vld [vmem:[#allocation2 + $0x7d8] sm:$0xff]
    %v4606 = vld [vmem:[#allocation2 + $0x7e0] sm:$0xff]
    %v4607 = vld [vmem:[#allocation2 + $0x7e8] sm:$0xff]
    %v4608 = vld [vmem:[#allocation2 + $0x7f0] sm:$0xff]
    %v4609 = vld [vmem:[#allocation2 + $0x7f8] sm:$0xff]
    %v4610 = vld [vmem:[#allocation2 + $0x800] sm:$0xff]
    %v4611 = vld [vmem:[#allocation2 + $0x808] sm:$0xff]
    %v4612 = vld [vmem:[#allocation2 + $0x810] sm:$0xff]
    %v4613 = vld [vmem:[#allocation2 + $0x818] sm:$0xff]
    %v4614 = vld [vmem:[#allocation2 + $0x820] sm:$0xff]
    %v4615 = vld [vmem:[#allocation2 + $0x828] sm:$0xff]
    %v4616 = vld [vmem:[#allocation2 + $0x830] sm:$0xff]
    %v4617 = vld [vmem:[#allocation2 + $0x838] sm:$0xff]
    %v4618 = vld [vmem:[#allocation2 + $0x840] sm:$0xff]
    %v4619 = vld [vmem:[#allocation2 + $0x848] sm:$0xff]
    %v4620 = vld [vmem:[#allocation2 + $0x850] sm:$0xff]
    %v4621 = vld [vmem:[#allocation2 + $0x858] sm:$0xff]
    %v4622 = vld [vmem:[#allocation2 + $0x860] sm:$0xff]
    %v4623 = vld [vmem:[#allocation2 + $0x868] sm:$0xff]
    %v4624 = vld [vmem:[#allocation2 + $0x870] sm:$0xff]
    %v4625 = vld [vmem:[#allocation2 + $0x878] sm:$0xff]
    %v4626 = vld [vmem:[#allocation2 + $0x880] sm:$0xff]
    %v4627 = vld [vmem:[#allocation2 + $0x888] sm:$0xff]
    %v4628 = vld [vmem:[#allocation2 + $0x890] sm:$0xff]
    %v4629 = vld [vmem:[#allocation2 + $0x898] sm:$0xff]
    %v4630 = vld [vmem:[#allocation2 + $0x8a0] sm:$0xff]
    %v4631 = vld [vmem:[#allocation2 + $0x8a8] sm:$0xff]
    %v4632 = vld [vmem:[#allocation2 + $0x8b0] sm:$0xff]
    %v4633 = vld [vmem:[#allocation2 + $0x8b8] sm:$0xff]
    %v4634 = vld [vmem:[#allocation2 + $0x8c0] sm:$0xff]
    %v4635 = vld [vmem:[#allocation2 + $0x8c8] sm:$0xff]
    %v4636 = vld [vmem:[#allocation2 + $0x8d0] sm:$0xff]
    %v4637 = vld [vmem:[#allocation2 + $0x8d8] sm:$0xff]
    %v4638 = vld [vmem:[#allocation2 + $0x8e0] sm:$0xff]
    %v4639 = vld [vmem:[#allocation2 + $0x8e8] sm:$0xff]
    %v4640 = vld [vmem:[#allocation2 + $0x8f0] sm:$0xff]
    %v4641 = vld [vmem:[#allocation2 + $0x8f8] sm:$0xff]
    %v4642 = vld [vmem:[#allocation2 + $0x900] sm:$0xff]
    %v4643 = vld [vmem:[#allocation2 + $0x908] sm:$0xff]
    %v4644 = vld [vmem:[#allocation2 + $0x910] sm:$0xff]
    %v4645 = vld [vmem:[#allocation2 + $0x918] sm:$0xff]
    %v4646 = vld [vmem:[#allocation2 + $0x920] sm:$0xff]
    %v4647 = vld [vmem:[#allocation2 + $0x928] sm:$0xff]
    %v4648 = vld [vmem:[#allocation2 + $0x930] sm:$0xff]
    %v4649 = vld [vmem:[#allocation2 + $0x938] sm:$0xff]
    %v4650 = vld [vmem:[#allocation2 + $0x940] sm:$0xff]
    %v4651 = vld [vmem:[#allocation2 + $0x948] sm:$0xff]
    %v4652 = vld [vmem:[#allocation2 + $0x950] sm:$0xff]
    %v4653 = vld [vmem:[#allocation2 + $0x958] sm:$0xff]
    %v4654 = vld [vmem:[#allocation2 + $0x960] sm:$0xff]
    %v4655 = vld [vmem:[#allocation2 + $0x968] sm:$0xff]
    %v4656 = vld [vmem:[#allocation2 + $0x970] sm:$0xff]
    %v4657 = vld [vmem:[#allocation2 + $0x978] sm:$0xff]
    %v4658 = vld [vmem:[#allocation2 + $0x980] sm:$0xff]
    %v4659 = vld [vmem:[#allocation2 + $0x988] sm:$0xff]
    %v4660 = vld [vmem:[#allocation2 + $0x990] sm:$0xff]
    %v4661 = vld [vmem:[#allocation2 + $0x998] sm:$0xff]
    %v4662 = vld [vmem:[#allocation2 + $0x9a0] sm:$0xff]
    %v4663 = vld [vmem:[#allocation2 + $0x9a8] sm:$0xff]
    %v4664 = vld [vmem:[#allocation2 + $0x9b0] sm:$0xff]
    %v4665 = vld [vmem:[#allocation2 + $0x9b8] sm:$0xff]
    %v4666 = vld [vmem:[#allocation2 + $0x9c0] sm:$0xff]
    %v4667 = vld [vmem:[#allocation2 + $0x9c8] sm:$0xff]
    %v4668 = vld [vmem:[#allocation2 + $0x9d0] sm:$0xff]
    %v4669 = vld [vmem:[#allocation2 + $0x9d8] sm:$0xff]
    %v4670 = vld [vmem:[#allocation2 + $0x9e0] sm:$0xff]
    %v4671 = vld [vmem:[#allocation2 + $0x9e8] sm:$0xff]
    %v4672 = vld [vmem:[#allocation2 + $0x9f0] sm:$0xff]
    %v4673 = vld [vmem:[#allocation2 + $0x9f8] sm:$0xff]
    %v4674 = vld [vmem:[#allocation2 + $0xa00] sm:$0xff]
    %v4675 = vld [vmem:[#allocation2 + $0xa08] sm:$0xff]
    %v4676 = vld [vmem:[#allocation2 + $0xa10] sm:$0xff]
    %v4677 = vld [vmem:[#allocation2 + $0xa18] sm:$0xff]
    %v4678 = vld [vmem:[#allocation2 + $0xa20] sm:$0xff]
    %v4679 = vld [vmem:[#allocation2 + $0xa28] sm:$0xff]
    %v4680 = vld [vmem:[#allocation2 + $0xa30] sm:$0xff]
    %v4681 = vld [vmem:[#allocation2 + $0xa38] sm:$0xff]
    %v4682 = vld [vmem:[#allocation2 + $0xa40] sm:$0xff]
    %v4683 = vld [vmem:[#allocation2 + $0xa48] sm:$0xff]
    %v4684 = vld [vmem:[#allocation2 + $0xa50] sm:$0xff]
    %v4685 = vld [vmem:[#allocation2 + $0xa58] sm:$0xff]
    %v4686 = vld [vmem:[#allocation2 + $0xa60] sm:$0xff]
    %v4687 = vld [vmem:[#allocation2 + $0xa68] sm:$0xff]
    %v4688 = vld [vmem:[#allocation2 + $0xa70] sm:$0xff]
    %v4689 = vld [vmem:[#allocation2 + $0xa78] sm:$0xff]
    %v4690 = vlaneseq
    %v4691 = vshrl.u32 %v4690, 7
    %v4692 = vsub.s32 3, %v4691
    %v4693 = vrot.slane %v252, %v4692
    %v4694 = vlaneseq
    %v4695 = vshrl.u32 %v4694, 7
    %v4696 = vsub.s32 7, %v4695
    %v4697 = vrot.slane %v252, %v4696
    %v4698 = vlaneseq
    %v4699 = vshrl.u32 %v4698, 7
    %v4700 = vsub.s32 3, %v4699
    %v4701 = vrot.slane %v253, %v4700
    %v4702 = vlaneseq
    %v4703 = vshrl.u32 %v4702, 7
    %v4704 = vsub.s32 7, %v4703
    %v4705 = vrot.slane %v253, %v4704
    %v4706 = vlaneseq
    %v4707 = vshrl.u32 %v4706, 7
    %v4708 = vsub.s32 3, %v4707
    %v4709 = vrot.slane %v254, %v4708
    %v4710 = vlaneseq
    %v4711 = vshrl.u32 %v4710, 7
    %v4712 = vsub.s32 7, %v4711
    %v4713 = vrot.slane %v254, %v4712
    %v4720 = vlaneseq
    %v4721 = vshrl.u32 %v4720, 7
    %v4722 = vsub.s32 3, %v4721
    %v4723 = vrot.slane %v4693, %v4722
    %v4724 = vlaneseq
    %v4725 = vshrl.u32 %v4724, 7
    %v4726 = vsub.s32 3, %v4725
    %v4727 = vrot.slane %v4697, %v4726
    %v4728 = vlaneseq
    %v4729 = vshrl.u32 %v4728, 7
    %v4730 = vsub.s32 3, %v4729
    %v4731 = vrot.slane %v4701, %v4730
    %v4732 = vlaneseq
    %v4733 = vshrl.u32 %v4732, 7
    %v4734 = vsub.s32 3, %v4733
    %v4735 = vrot.slane %v4705, %v4734
    %v4736 = vlaneseq
    %v4737 = vshrl.u32 %v4736, 7
    %v4738 = vsub.s32 3, %v4737
    %v4739 = vrot.slane %v4709, %v4738
    %v4740 = vlaneseq
    %v4741 = vshrl.u32 %v4740, 7
    %v4742 = vsub.s32 3, %v4741
    %v4743 = vrot.slane %v4713, %v4742
    %4744 = vmatprep.subr.bf16.mxu0 %v4595
    %4745 = vmatpush1.bf16.msra.mxu0 %v4594
    %4746 = vmatprep.subr.bf16.mxu0 %v4601
    %4747 = vmatpush1.bf16.msra.mxu0 %v4600
    %4748 = vmatprep.subr.bf16.mxu0 %v4607
    %4749 = vmatpush1.bf16.msra.mxu0 %v4606
    %4750 = vmatprep.subr.bf16.mxu0 %v4613
    %4751 = vmatpush1.bf16.msra.mxu0 %v4612
    %4752 = vmatprep.subr.bf16.mxu0 %v4619
    %4753 = vmatpush1.bf16.msra.mxu0 %v4618
    %4754 = vmatprep.subr.bf16.mxu0 %v4625
    %4755 = vmatpush1.bf16.msra.mxu0 %v4624
    %4756 = vmatprep.subr.bf16.mxu0 %v4631
    %4757 = vmatpush1.bf16.msra.mxu0 %v4630
    %4758 = vmatprep.subr.bf16.mxu0 %v4637
    %4759 = vmatpush1.bf16.msra.mxu0 %v4636
    %4760 = vmatprep.subr.bf16.mxu0 %v4643
    %4761 = vmatpush1.bf16.msra.mxu0 %v4642
    %4762 = vmatprep.subr.bf16.mxu0 %v4649
    %4763 = vmatpush1.bf16.msra.mxu0 %v4648
    %4764 = vmatprep.subr.bf16.mxu0 %v4655
    %4765 = vmatpush1.bf16.msra.mxu0 %v4654
    %4766 = vmatprep.subr.bf16.mxu0 %v4661
    %4767 = vmatpush1.bf16.msra.mxu0 %v4660
    %4768 = vmatprep.subr.bf16.mxu0 %v4667
    %4769 = vmatpush1.bf16.msra.mxu0 %v4666
    %4770 = vmatprep.subr.bf16.mxu0 %v4673
    %4771 = vmatpush1.bf16.msra.mxu0 %v4672
    %4772 = vmatprep.subr.bf16.mxu0 %v4679
    %4773 = vmatpush1.bf16.msra.mxu0 %v4678
    %4774 = vmatprep.subr.bf16.mxu0 %v4685
    %4775 = vmatpush1.bf16.msra.mxu0 %v4684
    %4776 = vmatprep.mubr.bf16.mxu0 0
    %4777 = vmatmul.mubr.bf16.gmra.mrb[0].mxu0 0
    %v4778 = vpop.f32.mrb[0].mxu0
    %v4779 = vadd.f32 %v4723, %v4778
    %v4780 = vpop.f32.mrb[0].mxu0
    %v4781 = vadd.f32 %v4727, %v4780
    %v4782 = vpop.f32.mrb[0].mxu0
    %v4783 = vpop.f32.mrb[0].mxu0
    %4784 = vdwg.mxu0
    %4785 = vmatprep.subr.bf16.mxu0 %v4597
    %4786 = vmatpush1.bf16.msra.mxu0 %v4596
    %4787 = vmatprep.subr.bf16.mxu0 %v4603
    %4788 = vmatpush1.bf16.msra.mxu0 %v4602
    %4789 = vmatprep.subr.bf16.mxu0 %v4609
    %4790 = vmatpush1.bf16.msra.mxu0 %v4608
    %4791 = vmatprep.subr.bf16.mxu0 %v4615
    %4792 = vmatpush1.bf16.msra.mxu0 %v4614
    %4793 = vmatprep.subr.bf16.mxu0 %v4621
    %4794 = vmatpush1.bf16.msra.mxu0 %v4620
    %4795 = vmatprep.subr.bf16.mxu0 %v4627
    %4796 = vmatpush1.bf16.msra.mxu0 %v4626
    %4797 = vmatprep.subr.bf16.mxu0 %v4633
    %4798 = vmatpush1.bf16.msra.mxu0 %v4632
    %4799 = vmatprep.subr.bf16.mxu0 %v4639
    %4800 = vmatpush1.bf16.msra.mxu0 %v4638
    %4801 = vmatprep.subr.bf16.mxu0 %v4645
    %4802 = vmatpush1.bf16.msra.mxu0 %v4644
    %4803 = vmatprep.subr.bf16.mxu0 %v4651
    %4804 = vmatpush1.bf16.msra.mxu0 %v4650
    %4805 = vmatprep.subr.bf16.mxu0 %v4657
    %4806 = vmatpush1.bf16.msra.mxu0 %v4656
    %4807 = vmatprep.subr.bf16.mxu0 %v4663
    %4808 = vmatpush1.bf16.msra.mxu0 %v4662
    %4809 = vmatprep.subr.bf16.mxu0 %v4669
    %4810 = vmatpush1.bf16.msra.mxu0 %v4668
    %4811 = vmatprep.subr.bf16.mxu0 %v4675
    %4812 = vmatpush1.bf16.msra.mxu0 %v4674
    %4813 = vmatprep.subr.bf16.mxu0 %v4681
    %4814 = vmatpush1.bf16.msra.mxu0 %v4680
    %4815 = vmatprep.subr.bf16.mxu0 %v4687
    %4816 = vmatpush1.bf16.msra.mxu0 %v4686
    %4817 = vmatprep.mubr.bf16.mxu0 0
    %4818 = vmatmul.mubr.bf16.gmra.mrb[0].mxu0 0
    %v4819 = vpop.f32.mrb[0].mxu0
    %v4820 = vadd.f32 %v4731, %v4819
    %v4821 = vpop.f32.mrb[0].mxu0
    %v4822 = vadd.f32 %v4735, %v4821
    %v4823 = vpop.f32.mrb[0].mxu0
    %v4824 = vpop.f32.mrb[0].mxu0
    %4825 = vdwg.mxu0
    %4826 = vmatprep.subr.bf16.mxu0 %v4599
    %4827 = vmatpush1.bf16.msra.mxu0 %v4598
    %4828 = vmatprep.subr.bf16.mxu0 %v4605
    %4829 = vmatpush1.bf16.msra.mxu0 %v4604
    %4830 = vmatprep.subr.bf16.mxu0 %v4611
    %4831 = vmatpush1.bf16.msra.mxu0 %v4610
    %4832 = vmatprep.subr.bf16.mxu0 %v4617
    %4833 = vmatpush1.bf16.msra.mxu0 %v4616
    %4834 = vmatprep.subr.bf16.mxu0 %v4623
    %4835 = vmatpush1.bf16.msra.mxu0 %v4622
    %4836 = vmatprep.subr.bf16.mxu0 %v4629
    %4837 = vmatpush1.bf16.msra.mxu0 %v4628
    %4838 = vmatprep.subr.bf16.mxu0 %v4635
    %4839 = vmatpush1.bf16.msra.mxu0 %v4634
    %4840 = vmatprep.subr.bf16.mxu0 %v4641
    %4841 = vmatpush1.bf16.msra.mxu0 %v4640
    %4842 = vmatprep.subr.bf16.mxu0 %v4647
    %4843 = vmatpush1.bf16.msra.mxu0 %v4646
    %4844 = vmatprep.subr.bf16.mxu0 %v4653
    %4845 = vmatpush1.bf16.msra.mxu0 %v4652
    %4846 = vmatprep.subr.bf16.mxu0 %v4659
    %4847 = vmatpush1.bf16.msra.mxu0 %v4658
    %4848 = vmatprep.subr.bf16.mxu0 %v4665
    %4849 = vmatpush1.bf16.msra.mxu0 %v4664
    %4850 = vmatprep.subr.bf16.mxu0 %v4671
    %4851 = vmatpush1.bf16.msra.mxu0 %v4670
    %4852 = vmatprep.subr.bf16.mxu0 %v4677
    %4853 = vmatpush1.bf16.msra.mxu0 %v4676
    %4854 = vmatprep.subr.bf16.mxu0 %v4683
    %4855 = vmatpush1.bf16.msra.mxu0 %v4682
    %4856 = vmatprep.subr.bf16.mxu0 %v4689
    %4857 = vmatpush1.bf16.msra.mxu0 %v4688
    %4858 = vmatprep.mubr.bf16.mxu0 0
    %4859 = vmatmul.mubr.bf16.gmra.mrb[0].mxu0 0
    %v4860 = vpop.f32.mrb[0].mxu0
    %v4861 = vadd.f32 %v4739, %v4860
    %v4862 = vpop.f32.mrb[0].mxu0
    %v4863 = vadd.f32 %v4743, %v4862
    %v4864 = vpop.f32.mrb[0].mxu0
    %v4865 = vpop.f32.mrb[0].mxu0
    %4866 = vdwg.mxu0
    %v4867 = vadd.f32 %v4476, %v4779
    %v4868 = vxor.u32 %v4867, 2147483648
    %v4869 = vmul.f32 %v4868, 1.442695
    %v4870 = vpow.pop %v4869
    %v4871 = vadd.f32 %v4870, 1.0
    %v4872 = vrcp.pop %v4871
    %v4873 = vmul.f32 1.0, %v4872
    %v4874 = vadd.f32 %v4478, %v4781
    %v4875 = vxor.u32 %v4874, 2147483648
    %v4876 = vmul.f32 %v4875, 1.442695
    %v4877 = vpow.pop %v4876
    %v4878 = vadd.f32 %v4877, 1.0
    %v4879 = vrcp.pop %v4878
    %v4880 = vmul.f32 1.0, %v4879
    %v4881 = vmul.f32 %v4873, %v4820
    %v4882 = vadd.f32 %v4527, %v4881
    %v4883 = vtanh.pop %v4882
    %v4884 = vsub.f32 1.0, %v4880
    %v4885 = vmul.f32 %v4884, %v4883
    %v4886 = vmul.f32 %v4880, 0.0
    %v4887 = vadd.f32 %v4885, %v4886
    %v4888 = vadd.f32 %v4539, %v4822
    %v4889 = vxor.u32 %v4888, 2147483648
    %v4890 = vmul.f32 %v4889, 1.442695
    %v4891 = vpow.pop %v4890
    %v4892 = vadd.f32 %v4891, 1.0
    %v4893 = vrcp.pop %v4892
    %v4894 = vmul.f32 1.0, %v4893
    %v4895 = vadd.f32 %v4588, %v4861
    %v4896 = vxor.u32 %v4895, 2147483648
    %v4897 = vmul.f32 %v4896, 1.442695
    %v4898 = vpow.pop %v4897
    %v4899 = vadd.f32 %v4898, 1.0
    %v4900 = vrcp.pop %v4899
    %v4901 = vmul.f32 1.0, %v4900
    %v4902 = vmul.f32 %v4894, %v4863
    %v4903 = vadd.f32 %v4590, %v4902
    %v4904 = vtanh.pop %v4903
    %v4905 = vsub.f32 1.0, %v4901
    %v4906 = vmul.f32 %v4905, %v4904
    %v4907 = vmul.f32 %v4901, 0.0
    %v4908 = vadd.f32 %v4906, %v4907
    %v4909 = vpack.c.bf16 %v4887, %v4887
    %v4910 = vpack.c.bf16 %v4908, %v4908
    %4911 = vmatprep.subr.bf16.mxu0 %v4595
    %4912 = vmatpush1.bf16.msra.mxu0 %v4594
    %4913 = vmatprep.subr.bf16.mxu0 %v4601
    %4914 = vmatpush1.bf16.msra.mxu0 %v4600
    %4915 = vmatprep.subr.bf16.mxu0 %v4607
    %4916 = vmatpush1.bf16.msra.mxu0 %v4606
    %4917 = vmatprep.subr.bf16.mxu0 %v4613
    %4918 = vmatpush1.bf16.msra.mxu0 %v4612
    %4919 = vmatprep.subr.bf16.mxu0 %v4619
    %4920 = vmatpush1.bf16.msra.mxu0 %v4618
    %4921 = vmatprep.subr.bf16.mxu0 %v4625
    %4922 = vmatpush1.bf16.msra.mxu0 %v4624
    %4923 = vmatprep.subr.bf16.mxu0 %v4631
    %4924 = vmatpush1.bf16.msra.mxu0 %v4630
    %4925 = vmatprep.subr.bf16.mxu0 %v4637
    %4926 = vmatpush1.bf16.msra.mxu0 %v4636
    %4927 = vmatprep.subr.bf16.mxu0 %v4643
    %4928 = vmatpush1.bf16.msra.mxu0 %v4642
    %4929 = vmatprep.subr.bf16.mxu0 %v4649
    %4930 = vmatpush1.bf16.msra.mxu0 %v4648
    %4931 = vmatprep.subr.bf16.mxu0 %v4655
    %4932 = vmatpush1.bf16.msra.mxu0 %v4654
    %4933 = vmatprep.subr.bf16.mxu0 %v4661
    %4934 = vmatpush1.bf16.msra.mxu0 %v4660
    %4935 = vmatprep.subr.bf16.mxu0 %v4667
    %4936 = vmatpush1.bf16.msra.mxu0 %v4666
    %4937 = vmatprep.subr.bf16.mxu0 %v4673
    %4938 = vmatpush1.bf16.msra.mxu0 %v4672
    %4939 = vmatprep.subr.bf16.mxu0 %v4679
    %4940 = vmatpush1.bf16.msra.mxu0 %v4678
    %4941 = vmatprep.subr.bf16.mxu0 %v4685
    %4942 = vmatpush1.bf16.msra.mxu0 %v4684
    %4943 = vmatprep.mubr.bf16.mxu0 %v4910
    %4944 = vmatmul.mubr.bf16.gmra.mrb[0].mxu0 %v4909
    %v4945 = vpop.f32.mrb[0].mxu0
    %v4946 = vadd.f32 %v4723, %v4945
    %v4947 = vpop.f32.mrb[0].mxu0
    %v4948 = vadd.f32 %v4727, %v4947
    %v4949 = vpop.f32.mrb[0].mxu0
    %v4950 = vpop.f32.mrb[0].mxu0
    %4951 = vdwg.mxu0
    %4952 = vmatprep.subr.bf16.mxu0 %v4597
    %4953 = vmatpush1.bf16.msra.mxu0 %v4596
    %4954 = vmatprep.subr.bf16.mxu0 %v4603
    %4955 = vmatpush1.bf16.msra.mxu0 %v4602
    %4956 = vmatprep.subr.bf16.mxu0 %v4609
    %4957 = vmatpush1.bf16.msra.mxu0 %v4608
    %4958 = vmatprep.subr.bf16.mxu0 %v4615
    %4959 = vmatpush1.bf16.msra.mxu0 %v4614
    %4960 = vmatprep.subr.bf16.mxu0 %v4621
    %4961 = vmatpush1.bf16.msra.mxu0 %v4620
    %4962 = vmatprep.subr.bf16.mxu0 %v4627
    %4963 = vmatpush1.bf16.msra.mxu0 %v4626
    %4964 = vmatprep.subr.bf16.mxu0 %v4633
    %4965 = vmatpush1.bf16.msra.mxu0 %v4632
    %4966 = vmatprep.subr.bf16.mxu0 %v4639
    %4967 = vmatpush1.bf16.msra.mxu0 %v4638
    %4968 = vmatprep.subr.bf16.mxu0 %v4645
    %4969 = vmatpush1.bf16.msra.mxu0 %v4644
    %4970 = vmatprep.subr.bf16.mxu0 %v4651
    %4971 = vmatpush1.bf16.msra.mxu0 %v4650
    %4972 = vmatprep.subr.bf16.mxu0 %v4657
    %4973 = vmatpush1.bf16.msra.mxu0 %v4656
    %4974 = vmatprep.subr.bf16.mxu0 %v4663
    %4975 = vmatpush1.bf16.msra.mxu0 %v4662
    %4976 = vmatprep.subr.bf16.mxu0 %v4669
    %4977 = vmatpush1.bf16.msra.mxu0 %v4668
    %4978 = vmatprep.subr.bf16.mxu0 %v4675
    %4979 = vmatpush1.bf16.msra.mxu0 %v4674
    %4980 = vmatprep.subr.bf16.mxu0 %v4681
    %4981 = vmatpush1.bf16.msra.mxu0 %v4680
    %4982 = vmatprep.subr.bf16.mxu0 %v4687
    %4983 = vmatpush1.bf16.msra.mxu0 %v4686
    %4984 = vmatprep.mubr.bf16.mxu0 %v4910
    %4985 = vmatmul.mubr.bf16.gmra.mrb[0].mxu0 %v4909
    %v4986 = vpop.f32.mrb[0].mxu0
    %v4987 = vadd.f32 %v4731, %v4986
    %v4988 = vpop.f32.mrb[0].mxu0
    %v4989 = vadd.f32 %v4735, %v4988
    %v4990 = vpop.f32.mrb[0].mxu0
    %v4991 = vpop.f32.mrb[0].mxu0
    %4992 = vdwg.mxu0
    %4993 = vmatprep.subr.bf16.mxu0 %v4599
    %4994 = vmatpush1.bf16.msra.mxu0 %v4598
    %4995 = vmatprep.subr.bf16.mxu0 %v4605
    %4996 = vmatpush1.bf16.msra.mxu0 %v4604
    %4997 = vmatprep.subr.bf16.mxu0 %v4611
    %4998 = vmatpush1.bf16.msra.mxu0 %v4610
    %4999 = vmatprep.subr.bf16.mxu0 %v4617
    %5000 = vmatpush1.bf16.msra.mxu0 %v4616
    %5001 = vmatprep.subr.bf16.mxu0 %v4623
    %5002 = vmatpush1.bf16.msra.mxu0 %v4622
    %5003 = vmatprep.subr.bf16.mxu0 %v4629
    %5004 = vmatpush1.bf16.msra.mxu0 %v4628
    %5005 = vmatprep.subr.bf16.mxu0 %v4635
    %5006 = vmatpush1.bf16.msra.mxu0 %v4634
    %5007 = vmatprep.subr.bf16.mxu0 %v4641
    %5008 = vmatpush1.bf16.msra.mxu0 %v4640
    %5009 = vmatprep.subr.bf16.mxu0 %v4647
    %5010 = vmatpush1.bf16.msra.mxu0 %v4646
    %5011 = vmatprep.subr.bf16.mxu0 %v4653
    %5012 = vmatpush1.bf16.msra.mxu0 %v4652
    %5013 = vmatprep.subr.bf16.mxu0 %v4659
    %5014 = vmatpush1.bf16.msra.mxu0 %v4658
    %5015 = vmatprep.subr.bf16.mxu0 %v4665
    %5016 = vmatpush1.bf16.msra.mxu0 %v4664
    %5017 = vmatprep.subr.bf16.mxu0 %v4671
    %5018 = vmatpush1.bf16.msra.mxu0 %v4670
    %5019 = vmatprep.subr.bf16.mxu0 %v4677
    %5020 = vmatpush1.bf16.msra.mxu0 %v4676
    %5021 = vmatprep.subr.bf16.mxu0 %v4683
    %5022 = vmatpush1.bf16.msra.mxu0 %v4682
    %5023 = vmatprep.subr.bf16.mxu0 %v4689
    %5024 = vmatpush1.bf16.msra.mxu0 %v4688
    %5025 = vmatprep.mubr.bf16.mxu0 %v4910
    %5026 = vmatmul.mubr.bf16.gmra.mrb[0].mxu0 %v4909
    %v5027 = vpop.f32.mrb[0].mxu0
    %v5028 = vadd.f32 %v4739, %v5027
    %v5029 = vpop.f32.mrb[0].mxu0
    %v5030 = vadd.f32 %v4743, %v5029
    %v5031 = vpop.f32.mrb[0].mxu0
    %v5032 = vpop.f32.mrb[0].mxu0
    %5033 = vdwg.mxu0
    %v5034 = vadd.f32 %v4480, %v4946
    %v5035 = vxor.u32 %v5034, 2147483648
    %v5036 = vmul.f32 %v5035, 1.442695
    %v5037 = vpow.pop %v5036
    %v5038 = vadd.f32 %v5037, 1.0
    %v5039 = vrcp.pop %v5038
    %v5040 = vmul.f32 1.0, %v5039
    %v5041 = vadd.f32 %v4482, %v4948
    %v5042 = vxor.u32 %v5041, 2147483648
    %v5043 = vmul.f32 %v5042, 1.442695
    %v5044 = vpow.pop %v5043
    %v5045 = vadd.f32 %v5044, 1.0
    %v5046 = vrcp.pop %v5045
    %v5047 = vmul.f32 1.0, %v5046
    %v5048 = vmul.f32 %v5040, %v4987
    %v5049 = vadd.f32 %v4531, %v5048
    %v5050 = vtanh.pop %v5049
    %v5051 = vsub.f32 1.0, %v5047
    %v5052 = vmul.f32 %v5051, %v5050
    %v5053 = vmul.f32 %v5047, %v4887
    %v5054 = vadd.f32 %v5052, %v5053
    %v5055 = vadd.f32 %v4533, %v4989
    %v5056 = vxor.u32 %v5055, 2147483648
    %v5057 = vmul.f32 %v5056, 1.442695
    %v5058 = vpow.pop %v5057
    %v5059 = vadd.f32 %v5058, 1.0
    %v5060 = vrcp.pop %v5059
    %v5061 = vmul.f32 1.0, %v5060
    %v5062 = vadd.f32 %v4582, %v5028
    %v5063 = vxor.u32 %v5062, 2147483648
    %v5064 = vmul.f32 %v5063, 1.442695
    %v5065 = vpow.pop %v5064
    %v5066 = vadd.f32 %v5065, 1.0
    %v5067 = vrcp.pop %v5066
    %v5068 = vmul.f32 1.0, %v5067
    %v5069 = vmul.f32 %v5061, %v5030
    %v5070 = vadd.f32 %v4584, %v5069
    %v5071 = vtanh.pop %v5070
    %v5072 = vsub.f32 1.0, %v5068
    %v5073 = vmul.f32 %v5072, %v5071
    %v5074 = vmul.f32 %v5068, %v4908
    %v5075 = vadd.f32 %v5073, %v5074
    %v5076 = vpack.c.bf16 %v5054, %v5054
    %v5077 = vpack.c.bf16 %v5075, %v5075
    %5078 = vmatprep.subr.bf16.mxu0 %v4595
    %5079 = vmatpush1.bf16.msra.mxu0 %v4594
    %5080 = vmatprep.subr.bf16.mxu0 %v4601
    %5081 = vmatpush1.bf16.msra.mxu0 %v4600
    %5082 = vmatprep.subr.bf16.mxu0 %v4607
    %5083 = vmatpush1.bf16.msra.mxu0 %v4606
    %5084 = vmatprep.subr.bf16.mxu0 %v4613
    %5085 = vmatpush1.bf16.msra.mxu0 %v4612
    %5086 = vmatprep.subr.bf16.mxu0 %v4619
    %5087 = vmatpush1.bf16.msra.mxu0 %v4618
    %5088 = vmatprep.subr.bf16.mxu0 %v4625
    %5089 = vmatpush1.bf16.msra.mxu0 %v4624
    %5090 = vmatprep.subr.bf16.mxu0 %v4631
    %5091 = vmatpush1.bf16.msra.mxu0 %v4630
    %5092 = vmatprep.subr.bf16.mxu0 %v4637
    %5093 = vmatpush1.bf16.msra.mxu0 %v4636
    %5094 = vmatprep.subr.bf16.mxu0 %v4643
    %5095 = vmatpush1.bf16.msra.mxu0 %v4642
    %5096 = vmatprep.subr.bf16.mxu0 %v4649
    %5097 = vmatpush1.bf16.msra.mxu0 %v4648
    %5098 = vmatprep.subr.bf16.mxu0 %v4655
    %5099 = vmatpush1.bf16.msra.mxu0 %v4654
    %5100 = vmatprep.subr.bf16.mxu0 %v4661
    %5101 = vmatpush1.bf16.msra.mxu0 %v4660
    %5102 = vmatprep.subr.bf16.mxu0 %v4667
    %5103 = vmatpush1.bf16.msra.mxu0 %v4666
    %5104 = vmatprep.subr.bf16.mxu0 %v4673
    %5105 = vmatpush1.bf16.msra.mxu0 %v4672
    %5106 = vmatprep.subr.bf16.mxu0 %v4679
    %5107 = vmatpush1.bf16.msra.mxu0 %v4678
    %5108 = vmatprep.subr.bf16.mxu0 %v4685
    %5109 = vmatpush1.bf16.msra.mxu0 %v4684
    %5110 = vmatprep.mubr.bf16.mxu0 %v5077
    %5111 = vmatmul.mubr.bf16.gmra.mrb[0].mxu0 %v5076
    %v5112 = vpop.f32.mrb[0].mxu0
    %v5113 = vadd.f32 %v4723, %v5112
    %v5114 = vpop.f32.mrb[0].mxu0
    %v5115 = vadd.f32 %v4727, %v5114
    %v5116 = vpop.f32.mrb[0].mxu0
    %v5117 = vpop.f32.mrb[0].mxu0
    %5118 = vdwg.mxu0
    %5119 = vmatprep.subr.bf16.mxu0 %v4597
    %5120 = vmatpush1.bf16.msra.mxu0 %v4596
    %5121 = vmatprep.subr.bf16.mxu0 %v4603
    %5122 = vmatpush1.bf16.msra.mxu0 %v4602
    %5123 = vmatprep.subr.bf16.mxu0 %v4609
    %5124 = vmatpush1.bf16.msra.mxu0 %v4608
    %5125 = vmatprep.subr.bf16.mxu0 %v4615
    %5126 = vmatpush1.bf16.msra.mxu0 %v4614
    %5127 = vmatprep.subr.bf16.mxu0 %v4621
    %5128 = vmatpush1.bf16.msra.mxu0 %v4620
    %5129 = vmatprep.subr.bf16.mxu0 %v4627
    %5130 = vmatpush1.bf16.msra.mxu0 %v4626
    %5131 = vmatprep.subr.bf16.mxu0 %v4633
    %5132 = vmatpush1.bf16.msra.mxu0 %v4632
    %5133 = vmatprep.subr.bf16.mxu0 %v4639
    %5134 = vmatpush1.bf16.msra.mxu0 %v4638
    %5135 = vmatprep.subr.bf16.mxu0 %v4645
    %5136 = vmatpush1.bf16.msra.mxu0 %v4644
    %5137 = vmatprep.subr.bf16.mxu0 %v4651
    %5138 = vmatpush1.bf16.msra.mxu0 %v4650
    %5139 = vmatprep.subr.bf16.mxu0 %v4657
    %5140 = vmatpush1.bf16.msra.mxu0 %v4656
    %5141 = vmatprep.subr.bf16.mxu0 %v4663
    %5142 = vmatpush1.bf16.msra.mxu0 %v4662
    %5143 = vmatprep.subr.bf16.mxu0 %v4669
    %5144 = vmatpush1.bf16.msra.mxu0 %v4668
    %5145 = vmatprep.subr.bf16.mxu0 %v4675
    %5146 = vmatpush1.bf16.msra.mxu0 %v4674
    %5147 = vmatprep.subr.bf16.mxu0 %v4681
    %5148 = vmatpush1.bf16.msra.mxu0 %v4680
    %5149 = vmatprep.subr.bf16.mxu0 %v4687
    %5150 = vmatpush1.bf16.msra.mxu0 %v4686
    %5151 = vmatprep.mubr.bf16.mxu0 %v5077
    %5152 = vmatmul.mubr.bf16.gmra.mrb[0].mxu0 %v5076
    %v5153 = vpop.f32.mrb[0].mxu0
    %v5154 = vadd.f32 %v4731, %v5153
    %v5155 = vpop.f32.mrb[0].mxu0
    %v5156 = vadd.f32 %v4735, %v5155
    %v5157 = vpop.f32.mrb[0].mxu0
    %v5158 = vpop.f32.mrb[0].mxu0
    %5159 = vdwg.mxu0
    %5160 = vmatprep.subr.bf16.mxu0 %v4599
    %5161 = vmatpush1.bf16.msra.mxu0 %v4598
    %5162 = vmatprep.subr.bf16.mxu0 %v4605
    %5163 = vmatpush1.bf16.msra.mxu0 %v4604
    %5164 = vmatprep.subr.bf16.mxu0 %v4611
    %5165 = vmatpush1.bf16.msra.mxu0 %v4610
    %5166 = vmatprep.subr.bf16.mxu0 %v4617
    %5167 = vmatpush1.bf16.msra.mxu0 %v4616
    %5168 = vmatprep.subr.bf16.mxu0 %v4623
    %5169 = vmatpush1.bf16.msra.mxu0 %v4622
    %5170 = vmatprep.subr.bf16.mxu0 %v4629
    %5171 = vmatpush1.bf16.msra.mxu0 %v4628
    %5172 = vmatprep.subr.bf16.mxu0 %v4635
    %5173 = vmatpush1.bf16.msra.mxu0 %v4634
    %5174 = vmatprep.subr.bf16.mxu0 %v4641
    %5175 = vmatpush1.bf16.msra.mxu0 %v4640
    %5176 = vmatprep.subr.bf16.mxu0 %v4647
    %5177 = vmatpush1.bf16.msra.mxu0 %v4646
    %5178 = vmatprep.subr.bf16.mxu0 %v4653
    %5179 = vmatpush1.bf16.msra.mxu0 %v4652
    %5180 = vmatprep.subr.bf16.mxu0 %v4659
    %5181 = vmatpush1.bf16.msra.mxu0 %v4658
    %5182 = vmatprep.subr.bf16.mxu0 %v4665
    %5183 = vmatpush1.bf16.msra.mxu0 %v4664
    %5184 = vmatprep.subr.bf16.mxu0 %v4671
    %5185 = vmatpush1.bf16.msra.mxu0 %v4670
    %5186 = vmatprep.subr.bf16.mxu0 %v4677
    %5187 = vmatpush1.bf16.msra.mxu0 %v4676
    %5188 = vmatprep.subr.bf16.mxu0 %v4683
    %5189 = vmatpush1.bf16.msra.mxu0 %v4682
    %5190 = vmatprep.subr.bf16.mxu0 %v4689
    %5191 = vmatpush1.bf16.msra.mxu0 %v4688
    %5192 = vmatprep.mubr.bf16.mxu0 %v5077
    %5193 = vmatmul.mubr.bf16.gmra.mrb[0].mxu0 %v5076
    %v5194 = vpop.f32.mrb[0].mxu0
    %v5195 = vadd.f32 %v4739, %v5194
    %v5196 = vpop.f32.mrb[0].mxu0
    %v5197 = vadd.f32 %v4743, %v5196
    %v5198 = vpop.f32.mrb[0].mxu0
    %v5199 = vpop.f32.mrb[0].mxu0
    %5200 = vdwg.mxu0
    %v5201 = vadd.f32 %v4486, %v5113
    %v5202 = vxor.u32 %v5201, 2147483648
    %v5203 = vmul.f32 %v5202, 1.442695
    %v5204 = vpow.pop %v5203
    %v5205 = vadd.f32 %v5204, 1.0
    %v5206 = vrcp.pop %v5205
    %v5207 = vmul.f32 1.0, %v5206
    %v5208 = vadd.f32 %v4488, %v5115
    %v5209 = vxor.u32 %v5208, 2147483648
    %v5210 = vmul.f32 %v5209, 1.442695
    %v5211 = vpow.pop %v5210
    %v5212 = vadd.f32 %v5211, 1.0
    %v5213 = vrcp.pop %v5212
    %v5214 = vmul.f32 1.0, %v5213
    %v5215 = vmul.f32 %v5207, %v5154
    %v5216 = vadd.f32 %v4537, %v5215
    %v5217 = vtanh.pop %v5216
    %v5218 = vsub.f32 1.0, %v5214
    %v5219 = vmul.f32 %v5218, %v5217
    %v5220 = vmul.f32 %v5214, %v5054
    %v5221 = vadd.f32 %v5219, %v5220
    %v5222 = vadd.f32 %v4529, %v5156
    %v5223 = vxor.u32 %v5222, 2147483648
    %v5224 = vmul.f32 %v5223, 1.442695
    %v5225 = vpow.pop %v5224
    %v5226 = vadd.f32 %v5225, 1.0
    %v5227 = vrcp.pop %v5226
    %v5228 = vmul.f32 1.0, %v5227
    %v5229 = vadd.f32 %v4578, %v5195
    %v5230 = vxor.u32 %v5229, 2147483648
    %v5231 = vmul.f32 %v5230, 1.442695
    %v5232 = vpow.pop %v5231
    %v5233 = vadd.f32 %v5232, 1.0
    %v5234 = vrcp.pop %v5233
    %v5235 = vmul.f32 1.0, %v5234
    %v5236 = vmul.f32 %v5228, %v5197
    %v5237 = vadd.f32 %v4580, %v5236
    %v5238 = vtanh.pop %v5237
    %v5239 = vsub.f32 1.0, %v5235
    %v5240 = vmul.f32 %v5239, %v5238
    %v5241 = vmul.f32 %v5235, %v5075
    %v5242 = vadd.f32 %v5240, %v5241
    %v5243 = vld [vmem:[#allocation22] sm:$0xff]
    %v5244 = vld [vmem:[#allocation22 + $0x8] sm:$0xff]
    %v5245 = vld [vmem:[#allocation22 + $0x10] sm:$0xff]
    %v5246 = vld [vmem:[#allocation22 + $0x18] sm:$0xff]
    %v5247 = vld [vmem:[#allocation22 + $0x20] sm:$0xff]
    %v5248 = vld [vmem:[#allocation22 + $0x28] sm:$0xff]
    %v5249 = vld [vmem:[#allocation22 + $0x30] sm:$0xff]
    %v5250 = vld [vmem:[#allocation22 + $0x38] sm:$0xff]
    %v5251 = vld [vmem:[#allocation22 + $0x40] sm:$0xff]
    %v5252 = vld [vmem:[#allocation22 + $0x48] sm:$0xff]
    %v5253 = vld [vmem:[#allocation22 + $0x50] sm:$0xff]
    %v5254 = vld [vmem:[#allocation22 + $0x58] sm:$0xff]
    %v5255 = vld [vmem:[#allocation22 + $0x60] sm:$0xff]
    %v5256 = vld [vmem:[#allocation22 + $0x68] sm:$0xff]
    %v5257 = vld [vmem:[#allocation22 + $0x70] sm:$0xff]
    %v5258 = vld [vmem:[#allocation22 + $0x78] sm:$0xff]
    %v5259 = vld [vmem:[#allocation22 + $0x80] sm:$0xff]
    %v5260 = vld [vmem:[#allocation22 + $0x88] sm:$0xff]
    %v5261 = vld [vmem:[#allocation22 + $0x90] sm:$0xff]
    %v5262 = vld [vmem:[#allocation22 + $0x98] sm:$0xff]
    %v5263 = vld [vmem:[#allocation22 + $0xa0] sm:$0xff]
    %v5264 = vld [vmem:[#allocation22 + $0xa8] sm:$0xff]
    %v5265 = vld [vmem:[#allocation22 + $0xb0] sm:$0xff]
    %v5266 = vld [vmem:[#allocation22 + $0xb8] sm:$0xff]
    %v5267 = vld [vmem:[#allocation22 + $0xc0] sm:$0xff]
    %v5268 = vld [vmem:[#allocation22 + $0xc8] sm:$0xff]
    %v5269 = vld [vmem:[#allocation22 + $0xd0] sm:$0xff]
    %v5270 = vld [vmem:[#allocation22 + $0xd8] sm:$0xff]
    %v5271 = vld [vmem:[#allocation22 + $0xe0] sm:$0xff]
    %v5272 = vld [vmem:[#allocation22 + $0xe8] sm:$0xff]
    %v5273 = vld [vmem:[#allocation22 + $0xf0] sm:$0xff]
    %v5274 = vld [vmem:[#allocation22 + $0xf8] sm:$0xff]
    %v5275 = vld [vmem:[#allocation22 + $0x100] sm:$0xff]
    %v5276 = vld [vmem:[#allocation22 + $0x108] sm:$0xff]
    %v5277 = vld [vmem:[#allocation22 + $0x110] sm:$0xff]
    %v5278 = vld [vmem:[#allocation22 + $0x118] sm:$0xff]
    %v5279 = vld [vmem:[#allocation22 + $0x120] sm:$0xff]
    %v5280 = vld [vmem:[#allocation22 + $0x128] sm:$0xff]
    %v5281 = vld [vmem:[#allocation22 + $0x130] sm:$0xff]
    %v5282 = vld [vmem:[#allocation22 + $0x138] sm:$0xff]
    %v5283 = vld [vmem:[#allocation22 + $0x140] sm:$0xff]
    %v5284 = vld [vmem:[#allocation22 + $0x148] sm:$0xff]
    %v5285 = vld [vmem:[#allocation22 + $0x150] sm:$0xff]
    %v5286 = vld [vmem:[#allocation22 + $0x158] sm:$0xff]
    %v5287 = vld [vmem:[#allocation22 + $0x160] sm:$0xff]
    %v5288 = vld [vmem:[#allocation22 + $0x168] sm:$0xff]
    %v5289 = vld [vmem:[#allocation22 + $0x170] sm:$0xff]
    %v5290 = vld [vmem:[#allocation22 + $0x178] sm:$0xff]
    %v5291 = vld [vmem:[#allocation22 + $0x180] sm:$0xff]
    %v5292 = vld [vmem:[#allocation22 + $0x188] sm:$0xff]
    %v5293 = vld [vmem:[#allocation22 + $0x190] sm:$0xff]
    %v5294 = vld [vmem:[#allocation22 + $0x198] sm:$0xff]
    %v5295 = vld [vmem:[#allocation22 + $0x1a0] sm:$0xff]
    %v5296 = vld [vmem:[#allocation22 + $0x1a8] sm:$0xff]
    %v5297 = vld [vmem:[#allocation22 + $0x1b0] sm:$0xff]
    %v5298 = vld [vmem:[#allocation22 + $0x1b8] sm:$0xff]
    %v5299 = vld [vmem:[#allocation22 + $0x1c0] sm:$0xff]
    %v5300 = vld [vmem:[#allocation22 + $0x1c8] sm:$0xff]
    %v5301 = vld [vmem:[#allocation22 + $0x1d0] sm:$0xff]
    %v5302 = vld [vmem:[#allocation22 + $0x1d8] sm:$0xff]
    %v5303 = vld [vmem:[#allocation22 + $0x1e0] sm:$0xff]
    %v5304 = vld [vmem:[#allocation22 + $0x1e8] sm:$0xff]
    %v5305 = vld [vmem:[#allocation22 + $0x1f0] sm:$0xff]
    %v5306 = vld [vmem:[#allocation22 + $0x1f8] sm:$0xff]
    %v5307 = vld [vmem:[#allocation22 + $0x200] sm:$0xff]
    %v5308 = vld [vmem:[#allocation22 + $0x208] sm:$0xff]
    %v5309 = vld [vmem:[#allocation22 + $0x210] sm:$0xff]
    %v5310 = vld [vmem:[#allocation22 + $0x218] sm:$0xff]
    %v5311 = vld [vmem:[#allocation22 + $0x220] sm:$0xff]
    %v5312 = vld [vmem:[#allocation22 + $0x228] sm:$0xff]
    %v5313 = vld [vmem:[#allocation22 + $0x230] sm:$0xff]
    %v5314 = vld [vmem:[#allocation22 + $0x238] sm:$0xff]
    %v5315 = vld [vmem:[#allocation22 + $0x240] sm:$0xff]
    %v5316 = vld [vmem:[#allocation22 + $0x248] sm:$0xff]
    %v5317 = vld [vmem:[#allocation22 + $0x250] sm:$0xff]
    %v5318 = vld [vmem:[#allocation22 + $0x258] sm:$0xff]
    %v5319 = vld [vmem:[#allocation22 + $0x260] sm:$0xff]
    %v5320 = vld [vmem:[#allocation22 + $0x268] sm:$0xff]
    %v5321 = vld [vmem:[#allocation22 + $0x270] sm:$0xff]
    %v5322 = vld [vmem:[#allocation22 + $0x278] sm:$0xff]
    %v5323 = vld [vmem:[#allocation22 + $0x280] sm:$0xff]
    %v5324 = vld [vmem:[#allocation22 + $0x288] sm:$0xff]
    %v5325 = vld [vmem:[#allocation22 + $0x290] sm:$0xff]
    %v5326 = vld [vmem:[#allocation22 + $0x298] sm:$0xff]
    %v5327 = vld [vmem:[#allocation22 + $0x2a0] sm:$0xff]
    %v5328 = vld [vmem:[#allocation22 + $0x2a8] sm:$0xff]
    %v5329 = vld [vmem:[#allocation22 + $0x2b0] sm:$0xff]
    %v5330 = vld [vmem:[#allocation22 + $0x2b8] sm:$0xff]
    %v5331 = vld [vmem:[#allocation22 + $0x2c0] sm:$0xff]
    %v5332 = vld [vmem:[#allocation22 + $0x2c8] sm:$0xff]
    %v5333 = vld [vmem:[#allocation22 + $0x2d0] sm:$0xff]
    %v5334 = vld [vmem:[#allocation22 + $0x2d8] sm:$0xff]
    %v5335 = vld [vmem:[#allocation22 + $0x2e0] sm:$0xff]
    %v5336 = vld [vmem:[#allocation22 + $0x2e8] sm:$0xff]
    %v5337 = vld [vmem:[#allocation22 + $0x2f0] sm:$0xff]
    %v5338 = vld [vmem:[#allocation22 + $0x2f8] sm:$0xff]
    %v5339 = vpack.c.bf16 %v5221, %v5221
    %v5340 = vpack.c.bf16 %v5242, %v5242
    %v5341 = vld [vmem:[#allocation23] sm:$0x3]
    %v5343 = vlaneseq
    %v5344 = vshrl.u32 %v5343, 7
    %v5345 = vsub.s32 0, %v5344
    %v5346 = vrot.slane %v5341, %v5345
    %v5347 = vlaneseq
    %v5348 = vshrl.u32 %v5347, 7
    %v5349 = vsub.s32 1, %v5348
    %v5350 = vrot.slane %v5341, %v5349
    %v5449 = vunpack.c.l.b16 %v5243
    %v5450 = vunpack.c.h.b16 %v5243
    %v5451 = vunpack.c.l.b16 %v5244
    %v5452 = vunpack.c.h.b16 %v5244
    %v5453 = vunpack.c.l.b16 %v5245
    %v5454 = vunpack.c.h.b16 %v5245
    %v5455 = vunpack.c.l.b16 %v5246
    %v5456 = vunpack.c.h.b16 %v5246
    %v5457 = vunpack.c.l.b16 %v5247
    %v5458 = vunpack.c.h.b16 %v5247
    %v5459 = vunpack.c.l.b16 %v5248
    %v5460 = vunpack.c.h.b16 %v5248
    %v5461 = vunpack.c.l.b16 %v5249
    %v5462 = vunpack.c.h.b16 %v5249
    %v5463 = vunpack.c.l.b16 %v5250
    %v5464 = vunpack.c.h.b16 %v5250
    %v5465 = vunpack.c.l.b16 %v5251
    %v5466 = vunpack.c.h.b16 %v5251
    %v5467 = vunpack.c.l.b16 %v5252
    %v5468 = vunpack.c.h.b16 %v5252
    %v5469 = vunpack.c.l.b16 %v5253
    %v5470 = vunpack.c.h.b16 %v5253
    %v5471 = vunpack.c.l.b16 %v5254
    %v5472 = vunpack.c.h.b16 %v5254
    %v5473 = vunpack.c.l.b16 %v5255
    %v5474 = vunpack.c.h.b16 %v5255
    %v5475 = vunpack.c.l.b16 %v5256
    %v5476 = vunpack.c.h.b16 %v5256
    %v5477 = vunpack.c.l.b16 %v5257
    %v5478 = vunpack.c.h.b16 %v5257
    %v5479 = vunpack.c.l.b16 %v5258
    %v5480 = vunpack.c.h.b16 %v5258
    %v5481 = vunpack.c.l.b16 %v5259
    %v5482 = vunpack.c.h.b16 %v5259
    %v5483 = vunpack.c.l.b16 %v5260
    %v5484 = vunpack.c.h.b16 %v5260
    %v5485 = vunpack.c.l.b16 %v5261
    %v5486 = vunpack.c.h.b16 %v5261
    %v5487 = vunpack.c.l.b16 %v5262
    %v5488 = vunpack.c.h.b16 %v5262
    %v5489 = vunpack.c.l.b16 %v5263
    %v5490 = vunpack.c.h.b16 %v5263
    %v5491 = vunpack.c.l.b16 %v5264
    %v5492 = vunpack.c.h.b16 %v5264
    %v5493 = vunpack.c.l.b16 %v5265
    %v5494 = vunpack.c.h.b16 %v5265
    %v5495 = vunpack.c.l.b16 %v5266
    %v5496 = vunpack.c.h.b16 %v5266
    %v5497 = vunpack.c.l.b16 %v5267
    %v5498 = vunpack.c.h.b16 %v5267
    %v5499 = vunpack.c.l.b16 %v5268
    %v5500 = vunpack.c.h.b16 %v5268
    %v5501 = vunpack.c.l.b16 %v5269
    %v5502 = vunpack.c.h.b16 %v5269
    %v5503 = vunpack.c.l.b16 %v5270
    %v5504 = vunpack.c.h.b16 %v5270
    %v5505 = vunpack.c.l.b16 %v5271
    %v5506 = vunpack.c.h.b16 %v5271
    %v5507 = vunpack.c.l.b16 %v5272
    %v5508 = vunpack.c.h.b16 %v5272
    %v5509 = vunpack.c.l.b16 %v5273
    %v5510 = vunpack.c.h.b16 %v5273
    %v5511 = vunpack.c.l.b16 %v5274
    %v5512 = vunpack.c.h.b16 %v5274
    %v5513 = vunpack.c.l.b16 %v5275
    %v5514 = vunpack.c.h.b16 %v5275
    %v5515 = vunpack.c.l.b16 %v5276
    %v5516 = vunpack.c.h.b16 %v5276
    %v5517 = vunpack.c.l.b16 %v5277
    %v5518 = vunpack.c.h.b16 %v5277
    %v5519 = vunpack.c.l.b16 %v5278
    %v5520 = vunpack.c.h.b16 %v5278
    %v5521 = vunpack.c.l.b16 %v5279
    %v5522 = vunpack.c.h.b16 %v5279
    %v5523 = vunpack.c.l.b16 %v5280
    %v5524 = vunpack.c.h.b16 %v5280
    %v5525 = vunpack.c.l.b16 %v5281
    %v5526 = vunpack.c.h.b16 %v5281
    %v5527 = vunpack.c.l.b16 %v5282
    %v5528 = vunpack.c.h.b16 %v5282
    %v5529 = vunpack.c.l.b16 %v5283
    %v5530 = vunpack.c.h.b16 %v5283
    %v5531 = vunpack.c.l.b16 %v5284
    %v5532 = vunpack.c.h.b16 %v5284
    %v5533 = vunpack.c.l.b16 %v5285
    %v5534 = vunpack.c.h.b16 %v5285
    %v5535 = vunpack.c.l.b16 %v5286
    %v5536 = vunpack.c.h.b16 %v5286
    %v5537 = vunpack.c.l.b16 %v5287
    %v5538 = vunpack.c.h.b16 %v5287
    %v5539 = vunpack.c.l.b16 %v5288
    %v5540 = vunpack.c.h.b16 %v5288
    %v5541 = vunpack.c.l.b16 %v5289
    %v5542 = vunpack.c.h.b16 %v5289
    %v5543 = vunpack.c.l.b16 %v5290
    %v5544 = vunpack.c.h.b16 %v5290
    %v5545 = vunpack.c.l.b16 %v5291
    %v5546 = vunpack.c.h.b16 %v5291
    %v5547 = vunpack.c.l.b16 %v5292
    %v5548 = vunpack.c.h.b16 %v5292
    %v5549 = vunpack.c.l.b16 %v5293
    %v5550 = vunpack.c.h.b16 %v5293
    %v5551 = vunpack.c.l.b16 %v5294
    %v5552 = vunpack.c.h.b16 %v5294
    %v5553 = vunpack.c.l.b16 %v5295
    %v5554 = vunpack.c.h.b16 %v5295
    %v5555 = vunpack.c.l.b16 %v5296
    %v5556 = vunpack.c.h.b16 %v5296
    %v5557 = vunpack.c.l.b16 %v5297
    %v5558 = vunpack.c.h.b16 %v5297
    %v5559 = vunpack.c.l.b16 %v5298
    %v5560 = vunpack.c.h.b16 %v5298
    %v5561 = vunpack.c.l.b16 %v5299
    %v5562 = vunpack.c.h.b16 %v5299
    %v5563 = vunpack.c.l.b16 %v5300
    %v5564 = vunpack.c.h.b16 %v5300
    %v5565 = vunpack.c.l.b16 %v5301
    %v5566 = vunpack.c.h.b16 %v5301
    %v5567 = vunpack.c.l.b16 %v5302
    %v5568 = vunpack.c.h.b16 %v5302
    %v5569 = vunpack.c.l.b16 %v5303
    %v5570 = vunpack.c.h.b16 %v5303
    %v5571 = vunpack.c.l.b16 %v5304
    %v5572 = vunpack.c.h.b16 %v5304
    %v5573 = vunpack.c.l.b16 %v5305
    %v5574 = vunpack.c.h.b16 %v5305
    %v5575 = vunpack.c.l.b16 %v5306
    %v5576 = vunpack.c.h.b16 %v5306
    %v5577 = vunpack.c.l.b16 %v5307
    %v5578 = vunpack.c.h.b16 %v5307
    %v5579 = vunpack.c.l.b16 %v5308
    %v5580 = vunpack.c.h.b16 %v5308
    %v5581 = vunpack.c.l.b16 %v5309
    %v5582 = vunpack.c.h.b16 %v5309
    %v5583 = vunpack.c.l.b16 %v5310
    %v5584 = vunpack.c.h.b16 %v5310
    %v5585 = vunpack.c.l.b16 %v5311
    %v5586 = vunpack.c.h.b16 %v5311
    %v5587 = vunpack.c.l.b16 %v5312
    %v5588 = vunpack.c.h.b16 %v5312
    %v5589 = vunpack.c.l.b16 %v5313
    %v5590 = vunpack.c.h.b16 %v5313
    %v5591 = vunpack.c.l.b16 %v5314
    %v5592 = vunpack.c.h.b16 %v5314
    %v5593 = vunpack.c.l.b16 %v5315
    %v5594 = vunpack.c.h.b16 %v5315
    %v5595 = vunpack.c.l.b16 %v5316
    %v5596 = vunpack.c.h.b16 %v5316
    %v5597 = vunpack.c.l.b16 %v5317
    %v5598 = vunpack.c.h.b16 %v5317
    %v5599 = vunpack.c.l.b16 %v5318
    %v5600 = vunpack.c.h.b16 %v5318
    %v5601 = vunpack.c.l.b16 %v5319
    %v5602 = vunpack.c.h.b16 %v5319
    %v5603 = vunpack.c.l.b16 %v5320
    %v5604 = vunpack.c.h.b16 %v5320
    %v5605 = vunpack.c.l.b16 %v5321
    %v5606 = vunpack.c.h.b16 %v5321
    %v5607 = vunpack.c.l.b16 %v5322
    %v5608 = vunpack.c.h.b16 %v5322
    %v5609 = vunpack.c.l.b16 %v5323
    %v5610 = vunpack.c.h.b16 %v5323
    %v5611 = vunpack.c.l.b16 %v5324
    %v5612 = vunpack.c.h.b16 %v5324
    %v5613 = vunpack.c.l.b16 %v5325
    %v5614 = vunpack.c.h.b16 %v5325
    %v5615 = vunpack.c.l.b16 %v5326
    %v5616 = vunpack.c.h.b16 %v5326
    %v5617 = vunpack.c.l.b16 %v5327
    %v5618 = vunpack.c.h.b16 %v5327
    %v5619 = vunpack.c.l.b16 %v5328
    %v5620 = vunpack.c.h.b16 %v5328
    %v5621 = vunpack.c.l.b16 %v5329
    %v5622 = vunpack.c.h.b16 %v5329
    %v5623 = vunpack.c.l.b16 %v5330
    %v5624 = vunpack.c.h.b16 %v5330
    %v5625 = vunpack.c.l.b16 %v5331
    %v5626 = vunpack.c.h.b16 %v5331
    %v5627 = vunpack.c.l.b16 %v5332
    %v5628 = vunpack.c.h.b16 %v5332
    %v5629 = vunpack.c.l.b16 %v5333
    %v5630 = vunpack.c.h.b16 %v5333
    %v5631 = vunpack.c.l.b16 %v5334
    %v5632 = vunpack.c.h.b16 %v5334
    %v5633 = vunpack.c.l.b16 %v5335
    %v5634 = vunpack.c.h.b16 %v5335
    %v5635 = vunpack.c.l.b16 %v5336
    %v5636 = vunpack.c.h.b16 %v5336
    %v5637 = vunpack.c.l.b16 %v5337
    %v5638 = vunpack.c.h.b16 %v5337
    %v5639 = vunpack.c.l.b16 %v5338
    %v5640 = vunpack.c.h.b16 %v5338
    %v5641 = vpack.c.b16 %v5451, %v5449
    %v5642 = vpack.c.b16 %v5452, %v5450
    %v5643 = vpack.c.b16 %v5455, %v5453
    %v5644 = vpack.c.b16 %v5456, %v5454
    %v5645 = vpack.c.b16 %v5459, %v5457
    %v5646 = vpack.c.b16 %v5460, %v5458
    %v5647 = vpack.c.b16 %v5463, %v5461
    %v5648 = vpack.c.b16 %v5464, %v5462
    %v5649 = vpack.c.b16 %v5467, %v5465
    %v5650 = vpack.c.b16 %v5468, %v5466
    %v5651 = vpack.c.b16 %v5471, %v5469
    %v5652 = vpack.c.b16 %v5472, %v5470
    %v5653 = vpack.c.b16 %v5475, %v5473
    %v5654 = vpack.c.b16 %v5476, %v5474
    %v5655 = vpack.c.b16 %v5479, %v5477
    %v5656 = vpack.c.b16 %v5480, %v5478
    %v5657 = vpack.c.b16 %v5483, %v5481
    %v5658 = vpack.c.b16 %v5484, %v5482
    %v5659 = vpack.c.b16 %v5487, %v5485
    %v5660 = vpack.c.b16 %v5488, %v5486
    %v5661 = vpack.c.b16 %v5491, %v5489
    %v5662 = vpack.c.b16 %v5492, %v5490
    %v5663 = vpack.c.b16 %v5495, %v5493
    %v5664 = vpack.c.b16 %v5496, %v5494
    %v5665 = vpack.c.b16 %v5499, %v5497
    %v5666 = vpack.c.b16 %v5500, %v5498
    %v5667 = vpack.c.b16 %v5503, %v5501
    %v5668 = vpack.c.b16 %v5504, %v5502
    %v5669 = vpack.c.b16 %v5507, %v5505
    %v5670 = vpack.c.b16 %v5508, %v5506
    %v5671 = vpack.c.b16 %v5511, %v5509
    %v5672 = vpack.c.b16 %v5512, %v5510
    %v5673 = vpack.c.b16 %v5515, %v5513
    %v5674 = vpack.c.b16 %v5516, %v5514
    %v5675 = vpack.c.b16 %v5519, %v5517
    %v5676 = vpack.c.b16 %v5520, %v5518
    %v5677 = vpack.c.b16 %v5523, %v5521
    %v5678 = vpack.c.b16 %v5524, %v5522
    %v5679 = vpack.c.b16 %v5527, %v5525
    %v5680 = vpack.c.b16 %v5528, %v5526
    %v5681 = vpack.c.b16 %v5531, %v5529
    %v5682 = vpack.c.b16 %v5532, %v5530
    %v5683 = vpack.c.b16 %v5535, %v5533
    %v5684 = vpack.c.b16 %v5536, %v5534
    %v5685 = vpack.c.b16 %v5539, %v5537
    %v5686 = vpack.c.b16 %v5540, %v5538
    %v5687 = vpack.c.b16 %v5543, %v5541
    %v5688 = vpack.c.b16 %v5544, %v5542
    %v5689 = vpack.c.b16 %v5547, %v5545
    %v5690 = vpack.c.b16 %v5548, %v5546
    %v5691 = vpack.c.b16 %v5551, %v5549
    %v5692 = vpack.c.b16 %v5552, %v5550
    %v5693 = vpack.c.b16 %v5555, %v5553
    %v5694 = vpack.c.b16 %v5556, %v5554
    %v5695 = vpack.c.b16 %v5559, %v5557
    %v5696 = vpack.c.b16 %v5560, %v5558
    %v5697 = vpack.c.b16 %v5563, %v5561
    %v5698 = vpack.c.b16 %v5564, %v5562
    %v5699 = vpack.c.b16 %v5567, %v5565
    %v5700 = vpack.c.b16 %v5568, %v5566
    %v5701 = vpack.c.b16 %v5571, %v5569
    %v5702 = vpack.c.b16 %v5572, %v5570
    %v5703 = vpack.c.b16 %v5575, %v5573
    %v5704 = vpack.c.b16 %v5576, %v5574
    %v5705 = vpack.c.b16 %v5579, %v5577
    %v5706 = vpack.c.b16 %v5580, %v5578
    %v5707 = vpack.c.b16 %v5583, %v5581
    %v5708 = vpack.c.b16 %v5584, %v5582
    %v5709 = vpack.c.b16 %v5587, %v5585
    %v5710 = vpack.c.b16 %v5588, %v5586
    %v5711 = vpack.c.b16 %v5591, %v5589
    %v5712 = vpack.c.b16 %v5592, %v5590
    %v5713 = vpack.c.b16 %v5595, %v5593
    %v5714 = vpack.c.b16 %v5596, %v5594
    %v5715 = vpack.c.b16 %v5599, %v5597
    %v5716 = vpack.c.b16 %v5600, %v5598
    %v5717 = vpack.c.b16 %v5603, %v5601
    %v5718 = vpack.c.b16 %v5604, %v5602
    %v5719 = vpack.c.b16 %v5607, %v5605
    %v5720 = vpack.c.b16 %v5608, %v5606
    %v5721 = vpack.c.b16 %v5611, %v5609
    %v5722 = vpack.c.b16 %v5612, %v5610
    %v5723 = vpack.c.b16 %v5615, %v5613
    %v5724 = vpack.c.b16 %v5616, %v5614
    %v5725 = vpack.c.b16 %v5619, %v5617
    %v5726 = vpack.c.b16 %v5620, %v5618
    %v5727 = vpack.c.b16 %v5623, %v5621
    %v5728 = vpack.c.b16 %v5624, %v5622
    %v5729 = vpack.c.b16 %v5627, %v5625
    %v5730 = vpack.c.b16 %v5628, %v5626
    %v5731 = vpack.c.b16 %v5631, %v5629
    %v5732 = vpack.c.b16 %v5632, %v5630
    %v5733 = vpack.c.b16 %v5635, %v5633
    %v5734 = vpack.c.b16 %v5636, %v5634
    %v5735 = vpack.c.b16 %v5639, %v5637
    %v5736 = vpack.c.b16 %v5640, %v5638
    %5833 = vmatprep.subr.bf16.mxu0 %v5642
    %5834 = vmatpush1.bf16.msra.mxu0 %v5641
    %5835 = vmatprep.subr.bf16.mxu0 %v5644
    %5836 = vmatpush1.bf16.msra.mxu0 %v5643
    %5837 = vmatprep.subr.bf16.mxu0 %v5646
    %5838 = vmatpush1.bf16.msra.mxu0 %v5645
    %5839 = vmatprep.subr.bf16.mxu0 %v5648
    %5840 = vmatpush1.bf16.msra.mxu0 %v5647
    %5841 = vmatprep.subr.bf16.mxu0 %v5650
    %5842 = vmatpush1.bf16.msra.mxu0 %v5649
    %5843 = vmatprep.subr.bf16.mxu0 %v5652
    %5844 = vmatpush1.bf16.msra.mxu0 %v5651
    %5845 = vmatprep.subr.bf16.mxu0 %v5654
    %5846 = vmatpush1.bf16.msra.mxu0 %v5653
    %5847 = vmatprep.subr.bf16.mxu0 %v5656
    %5848 = vmatpush1.bf16.msra.mxu0 %v5655
    %5849 = vmatprep.subr.bf16.mxu0 %v5658
    %5850 = vmatpush1.bf16.msra.mxu0 %v5657
    %5851 = vmatprep.subr.bf16.mxu0 %v5660
    %5852 = vmatpush1.bf16.msra.mxu0 %v5659
    %5853 = vmatprep.subr.bf16.mxu0 %v5662
    %5854 = vmatpush1.bf16.msra.mxu0 %v5661
    %5855 = vmatprep.subr.bf16.mxu0 %v5664
    %5856 = vmatpush1.bf16.msra.mxu0 %v5663
    %5857 = vmatprep.subr.bf16.mxu0 %v5666
    %5858 = vmatpush1.bf16.msra.mxu0 %v5665
    %5859 = vmatprep.subr.bf16.mxu0 %v5668
    %5860 = vmatpush1.bf16.msra.mxu0 %v5667
    %5861 = vmatprep.subr.bf16.mxu0 %v5670
    %5862 = vmatpush1.bf16.msra.mxu0 %v5669
    %5863 = vmatprep.subr.bf16.mxu0 %v5672
    %5864 = vmatpush1.bf16.msra.mxu0 %v5671
    %5865 = vmatprep.mubr.bf16.mxu0 %v5076
    %5866 = vmatmul.mubr.bf16.gmra.mrb[0].mxu0 %v4909
    %v5867 = vpop.f32.mrb[0].mxu0
    %v5868 = vadd.f32 %v5346, %v5867
    %v5869 = vpop.f32.mrb[0].mxu0
    %v5870 = vadd.f32 %v5350, %v5869
    %v5871 = vpop.f32.mrb[0].mxu0
    %v5872 = vpop.f32.mrb[0].mxu0
    %5873 = vdwg.mxu0
    %5874 = vmatprep.subr.bf16.mxu0 %v5674
    %5875 = vmatpush1.bf16.msra.mxu0 %v5673
    %5876 = vmatprep.subr.bf16.mxu0 %v5676
    %5877 = vmatpush1.bf16.msra.mxu0 %v5675
    %5878 = vmatprep.subr.bf16.mxu0 %v5678
    %5879 = vmatpush1.bf16.msra.mxu0 %v5677
    %5880 = vmatprep.subr.bf16.mxu0 %v5680
    %5881 = vmatpush1.bf16.msra.mxu0 %v5679
    %5882 = vmatprep.subr.bf16.mxu0 %v5682
    %5883 = vmatpush1.bf16.msra.mxu0 %v5681
    %5884 = vmatprep.subr.bf16.mxu0 %v5684
    %5885 = vmatpush1.bf16.msra.mxu0 %v5683
    %5886 = vmatprep.subr.bf16.mxu0 %v5686
    %5887 = vmatpush1.bf16.msra.mxu0 %v5685
    %5888 = vmatprep.subr.bf16.mxu0 %v5688
    %5889 = vmatpush1.bf16.msra.mxu0 %v5687
    %5890 = vmatprep.subr.bf16.mxu0 %v5690
    %5891 = vmatpush1.bf16.msra.mxu0 %v5689
    %5892 = vmatprep.subr.bf16.mxu0 %v5692
    %5893 = vmatpush1.bf16.msra.mxu0 %v5691
    %5894 = vmatprep.subr.bf16.mxu0 %v5694
    %5895 = vmatpush1.bf16.msra.mxu0 %v5693
    %5896 = vmatprep.subr.bf16.mxu0 %v5696
    %5897 = vmatpush1.bf16.msra.mxu0 %v5695
    %5898 = vmatprep.subr.bf16.mxu0 %v5698
    %5899 = vmatpush1.bf16.msra.mxu0 %v5697
    %5900 = vmatprep.subr.bf16.mxu0 %v5700
    %5901 = vmatpush1.bf16.msra.mxu0 %v5699
    %5902 = vmatprep.subr.bf16.mxu0 %v5702
    %5903 = vmatpush1.bf16.msra.mxu0 %v5701
    %5904 = vmatprep.subr.bf16.mxu0 %v5704
    %5905 = vmatpush1.bf16.msra.mxu0 %v5703
    %5906 = vmatprep.mubr.bf16.mxu0 %v4910
    %5907 = vmatmul.mubr.bf16.gmra.mrb[0].mxu0 %v5339
    %v5908 = vpop.f32.mrb[0].mxu0
    %v5909 = vadd.f32 %v5868, %v5908
    %v5910 = vpop.f32.mrb[0].mxu0
    %v5911 = vadd.f32 %v5870, %v5910
    %v5912 = vpop.f32.mrb[0].mxu0
    %v5913 = vpop.f32.mrb[0].mxu0
    %5914 = vdwg.mxu0
    %5915 = vmatprep.subr.bf16.mxu0 %v5706
    %5916 = vmatpush1.bf16.msra.mxu0 %v5705
    %5917 = vmatprep.subr.bf16.mxu0 %v5708
    %5918 = vmatpush1.bf16.msra.mxu0 %v5707
    %5919 = vmatprep.subr.bf16.mxu0 %v5710
    %5920 = vmatpush1.bf16.msra.mxu0 %v5709
    %5921 = vmatprep.subr.bf16.mxu0 %v5712
    %5922 = vmatpush1.bf16.msra.mxu0 %v5711
    %5923 = vmatprep.subr.bf16.mxu0 %v5714
    %5924 = vmatpush1.bf16.msra.mxu0 %v5713
    %5925 = vmatprep.subr.bf16.mxu0 %v5716
    %5926 = vmatpush1.bf16.msra.mxu0 %v5715
    %5927 = vmatprep.subr.bf16.mxu0 %v5718
    %5928 = vmatpush1.bf16.msra.mxu0 %v5717
    %5929 = vmatprep.subr.bf16.mxu0 %v5720
    %5930 = vmatpush1.bf16.msra.mxu0 %v5719
    %5931 = vmatprep.subr.bf16.mxu0 %v5722
    %5932 = vmatpush1.bf16.msra.mxu0 %v5721
    %5933 = vmatprep.subr.bf16.mxu0 %v5724
    %5934 = vmatpush1.bf16.msra.mxu0 %v5723
    %5935 = vmatprep.subr.bf16.mxu0 %v5726
    %5936 = vmatpush1.bf16.msra.mxu0 %v5725
    %5937 = vmatprep.subr.bf16.mxu0 %v5728
    %5938 = vmatpush1.bf16.msra.mxu0 %v5727
    %5939 = vmatprep.subr.bf16.mxu0 %v5730
    %5940 = vmatpush1.bf16.msra.mxu0 %v5729
    %5941 = vmatprep.subr.bf16.mxu0 %v5732
    %5942 = vmatpush1.bf16.msra.mxu0 %v5731
    %5943 = vmatprep.subr.bf16.mxu0 %v5734
    %5944 = vmatpush1.bf16.msra.mxu0 %v5733
    %5945 = vmatprep.subr.bf16.mxu0 %v5736
    %5946 = vmatpush1.bf16.msra.mxu0 %v5735
    %5947 = vmatprep.mubr.bf16.mxu0 %v5340
    %5948 = vmatmul.mubr.bf16.gmra.mrb[0].mxu0 %v5077
    %v5949 = vpop.f32.mrb[0].mxu0
    %v5950 = vadd.f32 %v5909, %v5949
    %v5951 = vpop.f32.mrb[0].mxu0
    %v5952 = vadd.f32 %v5911, %v5951
    %v5953 = vpop.f32.mrb[0].mxu0
    %v5954 = vpop.f32.mrb[0].mxu0
    %5955 = vdwg.mxu0
    %v5956 = vmax.f32 %v5950, 0.0
    %v5957 = vmax.f32 %v5952, 0.0
    %v5958 = vld [vmem:[#allocation16 + $0x110] sm:$0xf]
    %v5959 = vld [vmem:[#allocation16 + $0x114] sm:$0xf]
    %v5960 = vld [vmem:[#allocation16 + $0x118] sm:$0xf]
    %v5961 = vld [vmem:[#allocation16 + $0x11c] sm:$0xf]
    %v5962 = vld [vmem:[#allocation16 + $0x120] sm:$0xf]
    %v5963 = vld [vmem:[#allocation16 + $0x124] sm:$0xf]
    %v5964 = vld [vmem:[#allocation16 + $0x128] sm:$0xf]
    %v5965 = vld [vmem:[#allocation16 + $0x12c] sm:$0xf]
    %v5966 = vld [vmem:[#allocation16 + $0x130] sm:$0xf]
    %v5967 = vld [vmem:[#allocation16 + $0x134] sm:$0xf]
    %v5968 = vld [vmem:[#allocation16 + $0x138] sm:$0xf]
    %v5969 = vld [vmem:[#allocation16 + $0x13c] sm:$0xf]
    %v5970 = vld [vmem:[#allocation16 + $0x140] sm:$0xf]
    %v5971 = vld [vmem:[#allocation16 + $0x144] sm:$0xf]
    %v5972 = vld [vmem:[#allocation16 + $0x148] sm:$0xf]
    %v5973 = vld [vmem:[#allocation16 + $0x14c] sm:$0xf]
    %v5974 = vld [vmem:[#allocation16 + $0x150] sm:$0xf]
    %v5975 = vld [vmem:[#allocation16 + $0x154] sm:$0xf]
    %v5976 = vld [vmem:[#allocation16 + $0x158] sm:$0xf]
    %v5977 = vld [vmem:[#allocation16 + $0x15c] sm:$0xf]
    %v5978 = vld [vmem:[#allocation16 + $0x160] sm:$0xf]
    %v5979 = vld [vmem:[#allocation16 + $0x164] sm:$0xf]
    %v5980 = vld [vmem:[#allocation16 + $0x168] sm:$0xf]
    %v5981 = vld [vmem:[#allocation16 + $0x16c] sm:$0xf]
    %v5982 = vld [vmem:[#allocation16 + $0x170] sm:$0xf]
    %v5983 = vld [vmem:[#allocation16 + $0x174] sm:$0xf]
    %v5984 = vld [vmem:[#allocation16 + $0x178] sm:$0xf]
    %v5985 = vld [vmem:[#allocation16 + $0x17c] sm:$0xf]
    %v5986 = vld [vmem:[#allocation16 + $0x180] sm:$0xf]
    %v5987 = vld [vmem:[#allocation16 + $0x184] sm:$0xf]
    %v5988 = vld [vmem:[#allocation16 + $0x188] sm:$0xf]
    %v5989 = vld [vmem:[#allocation16 + $0x18c] sm:$0xf]
    %v5990 = vpack.c.bf16 %v5956, %v5956
    %v5991 = vpack.c.bf16 %v5957, %v5957
    %v5992 = vlaneseq
    %v5993 = vshrl.u32 %v5992, 7
    %v5994 = vsub.s32 7, %v5993
    %v5995 = vrot.slane %v251, %v5994
    %v6028 = vunpack.c.l.b16 %v5958
    %v6029 = vunpack.c.l.b16 %v5959
    %v6030 = vunpack.c.l.b16 %v5960
    %v6031 = vunpack.c.l.b16 %v5961
    %v6032 = vunpack.c.l.b16 %v5962
    %v6033 = vunpack.c.l.b16 %v5963
    %v6034 = vunpack.c.l.b16 %v5964
    %v6035 = vunpack.c.l.b16 %v5965
    %v6036 = vunpack.c.l.b16 %v5966
    %v6037 = vunpack.c.l.b16 %v5967
    %v6038 = vunpack.c.l.b16 %v5968
    %v6039 = vunpack.c.l.b16 %v5969
    %v6040 = vunpack.c.l.b16 %v5970
    %v6041 = vunpack.c.l.b16 %v5971
    %v6042 = vunpack.c.l.b16 %v5972
    %v6043 = vunpack.c.l.b16 %v5973
    %v6044 = vunpack.c.l.b16 %v5974
    %v6045 = vunpack.c.l.b16 %v5975
    %v6046 = vunpack.c.l.b16 %v5976
    %v6047 = vunpack.c.l.b16 %v5977
    %v6048 = vunpack.c.l.b16 %v5978
    %v6049 = vunpack.c.l.b16 %v5979
    %v6050 = vunpack.c.l.b16 %v5980
    %v6051 = vunpack.c.l.b16 %v5981
    %v6052 = vunpack.c.l.b16 %v5982
    %v6053 = vunpack.c.l.b16 %v5983
    %v6054 = vunpack.c.l.b16 %v5984
    %v6055 = vunpack.c.l.b16 %v5985
    %v6056 = vunpack.c.l.b16 %v5986
    %v6057 = vunpack.c.l.b16 %v5987
    %v6058 = vunpack.c.l.b16 %v5988
    %v6059 = vunpack.c.l.b16 %v5989
    %v6060 = vpack.c.b16 %v6029, %v6028
    %v6061 = vpack.c.b16 %v6031, %v6030
    %v6062 = vpack.c.b16 %v6033, %v6032
    %v6063 = vpack.c.b16 %v6035, %v6034
    %v6064 = vpack.c.b16 %v6037, %v6036
    %v6065 = vpack.c.b16 %v6039, %v6038
    %v6066 = vpack.c.b16 %v6041, %v6040
    %v6067 = vpack.c.b16 %v6043, %v6042
    %v6068 = vpack.c.b16 %v6045, %v6044
    %v6069 = vpack.c.b16 %v6047, %v6046
    %v6070 = vpack.c.b16 %v6049, %v6048
    %v6071 = vpack.c.b16 %v6051, %v6050
    %v6072 = vpack.c.b16 %v6053, %v6052
    %v6073 = vpack.c.b16 %v6055, %v6054
    %v6074 = vpack.c.b16 %v6057, %v6056
    %v6075 = vpack.c.b16 %v6059, %v6058
    %6092 = vmatprep.subr.bf16.mxu0 0
    %6093 = vmatpush1.bf16.msra.mxu0 %v6060
    %6094 = vmatprep.subr.bf16.mxu0 0
    %6095 = vmatpush1.bf16.msra.mxu0 %v6061
    %6096 = vmatprep.subr.bf16.mxu0 0
    %6097 = vmatpush1.bf16.msra.mxu0 %v6062
    %6098 = vmatprep.subr.bf16.mxu0 0
    %6099 = vmatpush1.bf16.msra.mxu0 %v6063
    %6100 = vmatprep.subr.bf16.mxu0 0
    %6101 = vmatpush1.bf16.msra.mxu0 %v6064
    %6102 = vmatprep.subr.bf16.mxu0 0
    %6103 = vmatpush1.bf16.msra.mxu0 %v6065
    %6104 = vmatprep.subr.bf16.mxu0 0
    %6105 = vmatpush1.bf16.msra.mxu0 %v6066
    %6106 = vmatprep.subr.bf16.mxu0 0
    %6107 = vmatpush1.bf16.msra.mxu0 %v6067
    %6108 = vmatprep.subr.bf16.mxu0 0
    %6109 = vmatpush1.bf16.msra.mxu0 %v6068
    %6110 = vmatprep.subr.bf16.mxu0 0
    %6111 = vmatpush1.bf16.msra.mxu0 %v6069
    %6112 = vmatprep.subr.bf16.mxu0 0
    %6113 = vmatpush1.bf16.msra.mxu0 %v6070
    %6114 = vmatprep.subr.bf16.mxu0 0
    %6115 = vmatpush1.bf16.msra.mxu0 %v6071
    %6116 = vmatprep.subr.bf16.mxu0 0
    %6117 = vmatpush1.bf16.msra.mxu0 %v6072
    %6118 = vmatprep.subr.bf16.mxu0 0
    %6119 = vmatpush1.bf16.msra.mxu0 %v6073
    %6120 = vmatprep.subr.bf16.mxu0 0
    %6121 = vmatpush1.bf16.msra.mxu0 %v6074
    %6122 = vmatprep.subr.bf16.mxu0 0
    %6123 = vmatpush1.bf16.msra.mxu0 %v6075
    %6124 = vmatprep.mubr.bf16.mxu0 %v5991
    %6125 = vmatmul.mubr.bf16.gmra.mrb[0].mxu0 %v5990
    %v6126 = vpop.f32.mrb[0].mxu0
    %v6127 = vadd.f32 %v5995, %v6126
    %v6128 = vpop.f32.mrb[0].mxu0
    %v6129 = vpop.f32.mrb[0].mxu0
    %v6130 = vpop.f32.mrb[0].mxu0
    %6131 = vdwg.mxu0
    %6132 = vst [vmem:[%s16] sm:$0xff] %v6127
    // Predicated region
    $region114: #{union_model_forward.1} parent=1 // pred_check
      _
    $region115: #{union_model_forward.1} parent=1 // pred_check_branch
      %6134 = sbr.rel (0) target = $region117
    $region116: #{union_model_forward.1} parent=1 // pred_region
      _
    $region117: #{union_model_forward.1} parent=1 // pred_fallthru
      _
    // Predicated region
    $region118: #{union_model_forward.1} parent=1 // pred_check
      _
    $region119: #{union_model_forward.1} parent=1 // pred_check_branch
      %6136 = sbr.rel (0) target = $region121
    $region120: #{union_model_forward.1} parent=1 // pred_region
      _
    $region121: #{union_model_forward.1} parent=1 // pred_fallthru
      _
    // Predicated region
    $region122: #{union_model_forward.1} parent=1 // pred_check
      _
    $region123: #{union_model_forward.1} parent=1 // pred_check_branch
      %6138 = sbr.rel (0) target = $region125
    $region124: #{union_model_forward.1} parent=1 // pred_region
      _
    $region125: #{union_model_forward.1} parent=1 // pred_fallthru
      _
    // Predicated region
    $region126: #{union_model_forward.1} parent=1 // pred_check
      _
    $region127: #{union_model_forward.1} parent=1 // pred_check_branch
      %6140 = sbr.rel (0) target = $region129
    $region128: #{union_model_forward.1} parent=1 // pred_region
      _
    $region129: #{union_model_forward.1} parent=1 // pred_fallthru
      _
    %6141 = vsyncpa [#allocation5], 1
    %6142 = vsyncpa [#allocation8], 1
    %6143 = vsyncpa [#allocation12], 1
    %6144 = vsyncpa [#allocation15], 1
    %6145 = vsyncpa [#allocation18], 1
    %6146 = vsyncpa [#allocation21], 1
    %6147 = vsyncpa [#allocation24], 1
    %6148 = vsyncpa [#allocation6], 1
  %6149 = vsyncmov [#allocation3]
  %s6150 = vpop.sfrf %6149
  %p6151 = scmp.eq.s32.totalorder %s6150, 0
  %p6152 = pneg %p6151
  %6154 = shalt.err (%p6152)

</llo_original>
